<compile_context>
chip_gen: v7x
topology: tpu7x:2x2x1
jax: 0.10.0
libtpu: 0.0.40
codegen_flags: <defaults>
</compile_context>

<pallas_src>
import jax
import jax.numpy as jnp
from jax.experimental import pallas as pl
from jax.experimental.pallas import tpu as pltpu

N_LM = 468          # canonical mediapipe face mesh (irises excluded)
N_PAD = 512         # landmark axis padded to a sublane-friendly multiple of 8
POWER_ITERS = 32    # batched power-iteration steps for the 4x4 eigen solve
_EPS_VAR = 1e-12
_EPS_NRM = 1e-30


def _choose_block(batch):
    """(images per grid step, padded batch).  Small batches run as one dense
    block; large batches use 128/256-lane blocks so per-step DMA (>~0.8 MB)
    amortizes the ~0.35us pipeline overhead and >=2 grid steps exist for the
    two v7x TensorCores.  VMEM/step stays ~6 MB at bt=256 (fits every chip)."""
    if batch <= 128:
        return batch, batch
    bt = 128 if batch < 1024 else 256
    padded = -(-batch // bt) * bt
    return bt, padded


# ----------------------------------------------------------------------------
# Fused kernel: per-image stats -> Horn/Umeyama pose solve -> rigid transform
# ----------------------------------------------------------------------------
def _fit_apply_kernel(mean_t_ref, v_ref, tc_ref, vout_ref, mat_ref):
    v = v_ref[...]          # (3, N_PAD, bt): coords x points x images
    tc = tc_ref[...]        # (3, N_PAD, 1):  centered template, zero padded
    bt = v.shape[-1]
    inv_n = jnp.float32(1.0 / N_LM)

    # ---- per-image statistics (points on sublanes -> lane-dense results) ----
    pt = jax.lax.broadcasted_iota(jnp.int32, (1, N_PAD, 1), 1)
    pmask = (pt < N_LM).astype(jnp.float32)            # pads would become -mean

    mean_v = jnp.sum(v, axis=1, keepdims=True) * inv_n           # (3, 1, bt)
    vc = (v - mean_v) * pmask                                    # centered

    # cross-covariance S_ab = sum_k vc[a,k] * tc[b,k] -> nine (1,1,bt) vectors
    c0 = jnp.sum(vc * tc[0:1], axis=1, keepdims=True)            # (3,1,bt)
    c1 = jnp.sum(vc * tc[1:2], axis=1, keepdims=True)
    c2 = jnp.sum(vc * tc[2:3], axis=1, keepdims=True)
    sxx, syx, szx = c0[0:1], c0[1:2], c0[2:3]
    sxy, syy, szy = c1[0:1], c1[1:2], c1[2:3]
    sxz, syz, szz = c2[0:1], c2[1:2], c2[2:3]

    # two-pass (centered, masked) variance + epsilon guard
    var_v = jnp.sum(jnp.sum(vc * vc, axis=1, keepdims=True), axis=0, keepdims=True)
    var_v = jnp.maximum(var_v, jnp.float32(_EPS_VAR))            # (1,1,bt)

    # ---- Kabsch/Umeyama via Horn's quaternion method (no SVD needed) ----
    # 4x4 symmetric N whose dominant eigenvector is the unit quaternion of the
    # rotation mapping detected landmarks onto the template.
    n00 = sxx + syy + szz
    n01 = syz - szy
    n02 = szx - sxz
    n03 = sxy - syx
    n11 = sxx - syy - szz
    n12 = sxy + syx
    n13 = sxz + szx
    n22 = syy - sxx - szz
    n23 = syz + szy
    n33 = szz - sxx - syy

    # Frobenius shift so power iteration locks onto lambda_max even when
    # det(cov) < 0 (where the most-negative eigenvalue dominates in magnitude).
    fro2 = (n00 * n00 + n11 * n11 + n22 * n22 + n33 * n33
            + 2.0 * (n01 * n01 + n02 * n02 + n03 * n03
                     + n12 * n12 + n13 * n13 + n23 * n23))
    shift = jnp.sqrt(fro2) + jnp.float32(1e-6)
    m00 = n00 + shift
    m11 = n11 + shift
    m22 = n22 + shift
    m33 = n33 + shift

    # batched power iteration: every op is a (1,1,bt) lane vector (one image
    # per lane), ~25 VPU/EUP ops per step -> negligible next to the data pass.
    q0 = jnp.full_like(n00, 0.8304548)
    q1 = jnp.full_like(n00, 0.1660910)
    q2 = jnp.full_like(n00, -0.2491364)
    q3 = jnp.full_like(n00, 0.4650546)
    for _ in range(POWER_ITERS):
        y0 = m00 * q0 + n01 * q1 + n02 * q2 + n03 * q3
        y1 = n01 * q0 + m11 * q1 + n12 * q2 + n13 * q3
        y2 = n02 * q0 + n12 * q1 + m22 * q2 + n23 * q3
        y3 = n03 * q0 + n13 * q1 + n23 * q2 + m33 * q3
        inv = jax.lax.rsqrt(y0 * y0 + y1 * y1 + y2 * y2 + y3 * y3
                            + jnp.float32(_EPS_NRM))
        q0, q1, q2, q3 = y0 * inv, y1 * inv, y2 * inv, y3 * inv

    # Rayleigh quotient on the unshifted N = sigma1 + sigma2 +/- sigma3
    z0 = n00 * q0 + n01 * q1 + n02 * q2 + n03 * q3
    z1 = n01 * q0 + n11 * q1 + n12 * q2 + n13 * q3
    z2 = n02 * q0 + n12 * q1 + n22 * q2 + n23 * q3
    z3 = n03 * q0 + n13 * q1 + n23 * q2 + n33 * q3
    lam = q0 * z0 + q1 * z1 + q2 * z2 + q3 * z3
    s = lam / var_v                                              # Umeyama scale

    # quaternion -> scaled rotation (detected -> template/world frame)
    r00 = q0 * q0 + q1 * q1 - q2 * q2 - q3 * q3
    r01 = 2.0 * (q1 * q2 - q0 * q3)
    r02 = 2.0 * (q1 * q3 + q0 * q2)
    r10 = 2.0 * (q1 * q2 + q0 * q3)
    r11 = q0 * q0 - q1 * q1 + q2 * q2 - q3 * q3
    r12 = 2.0 * (q2 * q3 - q0 * q1)
    r20 = 2.0 * (q1 * q3 - q0 * q2)
    r21 = 2.0 * (q2 * q3 + q0 * q1)
    r22 = q0 * q0 - q1 * q1 - q2 * q2 + q3 * q3
    sr = ((s * r00, s * r01, s * r02),
          (s * r10, s * r11, s * r12),
          (s * r20, s * r21, s * r22))

    mv = (mean_v[0:1], mean_v[1:2], mean_v[2:3])                 # (1,1,bt) each
    t = tuple(
        mean_t_ref[i] - (sr[i][0] * mv[0] + sr[i][1] * mv[1] + sr[i][2] * mv[2])
        for i in range(3))

    # ---- apply  out = s*R @ v + t  (broadcasted VPU FMAs, rows stored directly)
    vx, vy, vz = v[0:1], v[1:2], v[2:3]                          # (1, N_PAD, bt)
    for i in range(3):
        vout_ref[i:i + 1, :, :] = (sr[i][0] * vx + sr[i][1] * vy
                                   + sr[i][2] * vz + t[i])

    # ---- packed local-to-world matrices: (16, bt), row r = flat 4x4 entry r ----
    def lane_row(x):
        return x.reshape(1, bt)

    zeros = jnp.zeros((1, bt), jnp.float32)
    ones = jnp.ones((1, bt), jnp.float32)
    mat_ref[...] = jnp.concatenate(
        [lane_row(sr[0][0]), lane_row(sr[0][1]), lane_row(sr[0][2]), lane_row(t[0]),
         lane_row(sr[1][0]), lane_row(sr[1][1]), lane_row(sr[1][2]), lane_row(t[1]),
         lane_row(sr[2][0]), lane_row(sr[2][1]), lane_row(sr[2][2]), lane_row(t[2]),
         zeros, zeros, zeros, ones],
        axis=0)


def _fit_and_apply(v_pad, tc_pad, mean_t, bt):
    """v_pad: (3, N_PAD, B_pad), tc_pad: (3, N_PAD, 1), mean_t: (3,) ->
    (v_world (3, N_PAD, B_pad), mats (16, B_pad))."""
    b_pad = v_pad.shape[-1]
    return pl.pallas_call(
        _fit_apply_kernel,
        out_shape=(
            jax.ShapeDtypeStruct((3, N_PAD, b_pad), jnp.float32),
            jax.ShapeDtypeStruct((16, b_pad), jnp.float32),
        ),
        grid=(b_pad // bt,),
        in_specs=[
            pl.BlockSpec(memory_space=pltpu.MemorySpace.SMEM),       # mean_t (3,)
            pl.BlockSpec((3, N_PAD, bt), lambda b: (0, 0, b)),       # landmarks
            pl.BlockSpec((3, N_PAD, 1), lambda b: (0, 0, 0)),        # template
        ],
        out_specs=(
            pl.BlockSpec((3, N_PAD, bt), lambda b: (0, 0, b)),
            pl.BlockSpec((16, bt), lambda b: (0, b)),
        ),
        compiler_params=pltpu.CompilerParams(
            dimension_semantics=("parallel",),
            vmem_limit_bytes=32 * 1024 * 1024,
        ),
    )(mean_t, v_pad, tc_pad)


# ----------------------------------------------------------------------------
# Mediapipe.forward equivalent
# ----------------------------------------------------------------------------
def mediapipe_forward(imgs, landmarks, template):
    """imgs: (B,3,H,W) or (B,H,W,3); landmarks: (B,468,3); template: (468,3)."""
    del imgs  # only the external detector consumes images; dropping the
              # NCHW->NHWC/uint8 preamble avoids a dead full-image HBM copy.
    # TODO(synk): the mediapipe FaceMesh detector itself (external C++ graph)
    # has no Pallas equivalent; `landmarks` stands in for its per-image output.

    B = landmarks.shape[0]
    bt, b_pad = _choose_block(B)

    # coords-outermost layout: points on sublanes, images on lanes (fully dense)
    v = jnp.transpose(landmarks.astype(jnp.float32), (2, 1, 0))       # (3,468,B)
    v_pad = jnp.pad(v, ((0, 0), (0, N_PAD - N_LM), (0, b_pad - B)))   # (3,512,Bp)

    tmpl = jnp.transpose(template.astype(jnp.float32), (1, 0))        # (3,468)
    mean_t = jnp.mean(tmpl, axis=1)                                   # (3,)
    tc_pad = jnp.pad(tmpl - mean_t[:, None],
                     ((0, 0), (0, N_PAD - N_LM)))[:, :, None]         # (3,512,1)

    v_world, mat_packed = _fit_and_apply(v_pad, tc_pad, mean_t, bt)

    v_out = jnp.transpose(v_world[:, :N_LM, :B], (2, 1, 0))           # (B,468,3)
    mat = jnp.transpose(mat_packed[:, :B], (1, 0)).reshape(B, 4, 4)   # (B,4,4)

    return {
        "v": v_out.astype(jnp.float32),
        "mat": mat.astype(jnp.float32),
        "img_idx": jnp.arange(B, dtype=jnp.float32),
        "n_img": B,
    }


if __name__ == "__main__":
    key = jax.random.PRNGKey(0)
    k_img, k_lm, k_tmpl = jax.random.split(key, 3)

    B, H, W = 2, 16, 16
    imgs = jax.random.uniform(k_img, (B, 3, H, W), minval=0.0, maxval=255.0)
    # synthetic detected landmarks and canonical template (stand-ins)
    landmarks = jax.random.uniform(k_lm, (B, N_LM, 3), dtype=jnp.float32)
    template = jax.random.normal(k_tmpl, (N_LM, 3), dtype=jnp.float32) * 0.1

    out = mediapipe_forward(imgs, landmarks, template)
    jax.block_until_ready(out["v"])
    jax.block_until_ready(out["mat"])

    assert out["v"].shape == (B, N_LM, 3)
    assert out["mat"].shape == (B, 4, 4)
    assert out["img_idx"].shape == (B,)
    assert bool(jnp.all(jnp.isfinite(out["v"])))
    assert bool(jnp.all(jnp.isfinite(out["mat"])))
    print("KERNEL_OK")
</pallas_src>

<mosaic_0001>
module attributes {stable_mosaic.version = 11 : i64} {
  func.func @_fit_apply_kernel(%arg0: i32, %arg1: memref<3xf32, #tpu.memory_space<smem>>, %arg2: memref<3x512x2xf32, #tpu.memory_space<vmem>>, %arg3: memref<3x512x1xf32, #tpu.memory_space<vmem>>, %arg4: memref<3x512x2xf32, #tpu.memory_space<vmem>>, %arg5: memref<16x2xf32, #tpu.memory_space<vmem>>) attributes {dimension_semantics = [#tpu.dimension_semantics<parallel>], iteration_bounds = array<i64: 1>, scalar_prefetch = 0 : i64, scratch_operands = 0 : i64, tpu.core_type = #tpu.core_type<tc>, window_params = [{transform_indices = @transform_0, window_bounds = array<i64: 3>}, {transform_indices = @transform_1, window_bounds = array<i64: 3, 512, 2>}, {pipeline_mode = #tpu.pipeline_mode<synchronous>, transform_indices = @transform_2, window_bounds = array<i64: 3, 512, 1>}, {transform_indices = @transform_3, window_bounds = array<i64: 3, 512, 2>}, {transform_indices = @transform_4, window_bounds = array<i64: 16, 2>}]} {
    %c0 = arith.constant 0 : index
    %c0_0 = arith.constant 0 : index
    %c0_1 = arith.constant 0 : index
    %0 = vector.load %arg2[%c0, %c0_0, %c0_1] : memref<3x512x2xf32, #tpu.memory_space<vmem>>, vector<3x512x2xf32>
    %c0_2 = arith.constant 0 : index
    %c0_3 = arith.constant 0 : index
    %c0_4 = arith.constant 0 : index
    %1 = vector.load %arg3[%c0_2, %c0_3, %c0_4] : memref<3x512x1xf32, #tpu.memory_space<vmem>>, vector<3x512x1xf32>
    %2 = tpu.iota {dimensions = array<i32: 1>} : vector<1x512x1xi32>
    %c468_i32 = arith.constant 468 : i32
    %3 = vector.broadcast %c468_i32 : i32 to vector<1x512x1xi32>
    %4 = arith.cmpi slt, %2, %3 : vector<1x512x1xi32>
    %5 = arith.extui %4 : vector<1x512x1xi1> to vector<1x512x1xi32>
    %6 = arith.sitofp %5 : vector<1x512x1xi32> to vector<1x512x1xf32>
    %cst = arith.constant dense<0.000000e+00> : vector<3x2xf32>
    %7 = vector.multi_reduction <add>, %0, %cst [1] : vector<3x512x2xf32> to vector<3x2xf32>
    %8 = vector.shape_cast %7 : vector<3x2xf32> to vector<3x1x2xf32>
    %cst_5 = arith.constant 0.00213675224 : f32
    %9 = vector.broadcast %cst_5 : f32 to vector<3x1x2xf32>
    %10 = arith.mulf %8, %9 : vector<3x1x2xf32>
    %11 = vector.broadcast %10 : vector<3x1x2xf32> to vector<3x512x2xf32>
    %12 = arith.subf %0, %11 : vector<3x512x2xf32>
    %13 = vector.broadcast %6 : vector<1x512x1xf32> to vector<3x512x2xf32>
    %14 = arith.mulf %12, %13 : vector<3x512x2xf32>
    %15 = vector.extract_strided_slice %1 {offsets = [0, 0, 0], sizes = [1, 512, 1], strides = [1, 1, 1]} : vector<3x512x1xf32> to vector<1x512x1xf32>
    %16 = vector.broadcast %15 : vector<1x512x1xf32> to vector<3x512x2xf32>
    %17 = arith.mulf %14, %16 : vector<3x512x2xf32>
    %cst_6 = arith.constant dense<0.000000e+00> : vector<3x2xf32>
    %18 = vector.multi_reduction <add>, %17, %cst_6 [1] : vector<3x512x2xf32> to vector<3x2xf32>
    %19 = vector.shape_cast %18 : vector<3x2xf32> to vector<3x1x2xf32>
    %20 = vector.extract_strided_slice %1 {offsets = [1, 0, 0], sizes = [1, 512, 1], strides = [1, 1, 1]} : vector<3x512x1xf32> to vector<1x512x1xf32>
    %21 = vector.broadcast %20 : vector<1x512x1xf32> to vector<3x512x2xf32>
    %22 = arith.mulf %14, %21 : vector<3x512x2xf32>
    %cst_7 = arith.constant dense<0.000000e+00> : vector<3x2xf32>
    %23 = vector.multi_reduction <add>, %22, %cst_7 [1] : vector<3x512x2xf32> to vector<3x2xf32>
    %24 = vector.shape_cast %23 : vector<3x2xf32> to vector<3x1x2xf32>
    %25 = vector.extract_strided_slice %1 {offsets = [2, 0, 0], sizes = [1, 512, 1], strides = [1, 1, 1]} : vector<3x512x1xf32> to vector<1x512x1xf32>
    %26 = vector.broadcast %25 : vector<1x512x1xf32> to vector<3x512x2xf32>
    %27 = arith.mulf %14, %26 : vector<3x512x2xf32>
    %cst_8 = arith.constant dense<0.000000e+00> : vector<3x2xf32>
    %28 = vector.multi_reduction <add>, %27, %cst_8 [1] : vector<3x512x2xf32> to vector<3x2xf32>
    %29 = vector.shape_cast %28 : vector<3x2xf32> to vector<3x1x2xf32>
    %30 = vector.extract_strided_slice %19 {offsets = [0, 0, 0], sizes = [1, 1, 2], strides = [1, 1, 1]} : vector<3x1x2xf32> to vector<1x1x2xf32>
    %31 = vector.extract_strided_slice %19 {offsets = [1, 0, 0], sizes = [1, 1, 2], strides = [1, 1, 1]} : vector<3x1x2xf32> to vector<1x1x2xf32>
    %32 = vector.extract_strided_slice %19 {offsets = [2, 0, 0], sizes = [1, 1, 2], strides = [1, 1, 1]} : vector<3x1x2xf32> to vector<1x1x2xf32>
    %33 = vector.extract_strided_slice %24 {offsets = [0, 0, 0], sizes = [1, 1, 2], strides = [1, 1, 1]} : vector<3x1x2xf32> to vector<1x1x2xf32>
    %34 = vector.extract_strided_slice %24 {offsets = [1, 0, 0], sizes = [1, 1, 2], strides = [1, 1, 1]} : vector<3x1x2xf32> to vector<1x1x2xf32>
    %35 = vector.extract_strided_slice %24 {offsets = [2, 0, 0], sizes = [1, 1, 2], strides = [1, 1, 1]} : vector<3x1x2xf32> to vector<1x1x2xf32>
    %36 = vector.extract_strided_slice %29 {offsets = [0, 0, 0], sizes = [1, 1, 2], strides = [1, 1, 1]} : vector<3x1x2xf32> to vector<1x1x2xf32>
    %37 = vector.extract_strided_slice %29 {offsets = [1, 0, 0], sizes = [1, 1, 2], strides = [1, 1, 1]} : vector<3x1x2xf32> to vector<1x1x2xf32>
    %38 = vector.extract_strided_slice %29 {offsets = [2, 0, 0], sizes = [1, 1, 2], strides = [1, 1, 1]} : vector<3x1x2xf32> to vector<1x1x2xf32>
    %39 = arith.mulf %14, %14 : vector<3x512x2xf32>
    %cst_9 = arith.constant dense<0.000000e+00> : vector<3x2xf32>
    %40 = vector.multi_reduction <add>, %39, %cst_9 [1] : vector<3x512x2xf32> to vector<3x2xf32>
    %41 = vector.shape_cast %40 : vector<3x2xf32> to vector<3x1x2xf32>
    %cst_10 = arith.constant dense<0.000000e+00> : vector<1x2xf32>
    %42 = vector.multi_reduction <add>, %41, %cst_10 [0] : vector<3x1x2xf32> to vector<1x2xf32>
    %43 = vector.shape_cast %42 : vector<1x2xf32> to vector<1x1x2xf32>
    %cst_11 = arith.constant 9.99999996E-13 : f32
    %44 = vector.broadcast %cst_11 : f32 to vector<1x1x2xf32>
    %45 = arith.maximumf %43, %44 : vector<1x1x2xf32>
    %46 = arith.addf %30, %34 : vector<1x1x2xf32>
    %47 = arith.addf %46, %38 : vector<1x1x2xf32>
    %48 = arith.subf %37, %35 : vector<1x1x2xf32>
    %49 = arith.subf %32, %36 : vector<1x1x2xf32>
    %50 = arith.subf %33, %31 : vector<1x1x2xf32>
    %51 = arith.subf %30, %34 : vector<1x1x2xf32>
    %52 = arith.subf %51, %38 : vector<1x1x2xf32>
    %53 = arith.addf %33, %31 : vector<1x1x2xf32>
    %54 = arith.addf %36, %32 : vector<1x1x2xf32>
    %55 = arith.subf %34, %30 : vector<1x1x2xf32>
    %56 = arith.subf %55, %38 : vector<1x1x2xf32>
    %57 = arith.addf %37, %35 : vector<1x1x2xf32>
    %58 = arith.subf %38, %30 : vector<1x1x2xf32>
    %59 = arith.subf %58, %34 : vector<1x1x2xf32>
    %60 = arith.mulf %47, %47 : vector<1x1x2xf32>
    %61 = arith.mulf %52, %52 : vector<1x1x2xf32>
    %62 = arith.addf %60, %61 : vector<1x1x2xf32>
    %63 = arith.mulf %56, %56 : vector<1x1x2xf32>
    %64 = arith.addf %62, %63 : vector<1x1x2xf32>
    %65 = arith.mulf %59, %59 : vector<1x1x2xf32>
    %66 = arith.addf %64, %65 : vector<1x1x2xf32>
    %67 = arith.mulf %48, %48 : vector<1x1x2xf32>
    %68 = arith.mulf %49, %49 : vector<1x1x2xf32>
    %69 = arith.addf %67, %68 : vector<1x1x2xf32>
    %70 = arith.mulf %50, %50 : vector<1x1x2xf32>
    %71 = arith.addf %69, %70 : vector<1x1x2xf32>
    %72 = arith.mulf %53, %53 : vector<1x1x2xf32>
    %73 = arith.addf %71, %72 : vector<1x1x2xf32>
    %74 = arith.mulf %54, %54 : vector<1x1x2xf32>
    %75 = arith.addf %73, %74 : vector<1x1x2xf32>
    %76 = arith.mulf %57, %57 : vector<1x1x2xf32>
    %77 = arith.addf %75, %76 : vector<1x1x2xf32>
    %cst_12 = arith.constant 2.000000e+00 : f32
    %78 = vector.broadcast %cst_12 : f32 to vector<1x1x2xf32>
    %79 = arith.mulf %78, %77 : vector<1x1x2xf32>
    %80 = arith.addf %66, %79 : vector<1x1x2xf32>
    %81 = math.sqrt %80 : vector<1x1x2xf32>
    %cst_13 = arith.constant 9.99999997E-7 : f32
    %82 = vector.broadcast %cst_13 : f32 to vector<1x1x2xf32>
    %83 = arith.addf %81, %82 : vector<1x1x2xf32>
    %84 = arith.addf %47, %83 : vector<1x1x2xf32>
    %85 = arith.addf %52, %83 : vector<1x1x2xf32>
    %86 = arith.addf %56, %83 : vector<1x1x2xf32>
    %87 = arith.addf %59, %83 : vector<1x1x2xf32>
    %cst_14 = arith.constant 0.830454826 : f32
    %88 = vector.broadcast %cst_14 : f32 to vector<1x1x2xf32>
    %cst_15 = arith.constant 1.660910e-01 : f32
    %89 = vector.broadcast %cst_15 : f32 to vector<1x1x2xf32>
    %cst_16 = arith.constant -0.249136403 : f32
    %90 = vector.broadcast %cst_16 : f32 to vector<1x1x2xf32>
    %cst_17 = arith.constant 0.465054601 : f32
    %91 = vector.broadcast %cst_17 : f32 to vector<1x1x2xf32>
    %92 = arith.mulf %84, %88 : vector<1x1x2xf32>
    %93 = arith.mulf %48, %89 : vector<1x1x2xf32>
    %94 = arith.addf %92, %93 : vector<1x1x2xf32>
    %95 = arith.mulf %49, %90 : vector<1x1x2xf32>
    %96 = arith.addf %94, %95 : vector<1x1x2xf32>
    %97 = arith.mulf %50, %91 : vector<1x1x2xf32>
    %98 = arith.addf %96, %97 : vector<1x1x2xf32>
    %99 = arith.mulf %48, %88 : vector<1x1x2xf32>
    %100 = arith.mulf %85, %89 : vector<1x1x2xf32>
    %101 = arith.addf %99, %100 : vector<1x1x2xf32>
    %102 = arith.mulf %53, %90 : vector<1x1x2xf32>
    %103 = arith.addf %101, %102 : vector<1x1x2xf32>
    %104 = arith.mulf %54, %91 : vector<1x1x2xf32>
    %105 = arith.addf %103, %104 : vector<1x1x2xf32>
    %106 = arith.mulf %49, %88 : vector<1x1x2xf32>
    %107 = arith.mulf %53, %89 : vector<1x1x2xf32>
    %108 = arith.addf %106, %107 : vector<1x1x2xf32>
    %109 = arith.mulf %86, %90 : vector<1x1x2xf32>
    %110 = arith.addf %108, %109 : vector<1x1x2xf32>
    %111 = arith.mulf %57, %91 : vector<1x1x2xf32>
    %112 = arith.addf %110, %111 : vector<1x1x2xf32>
    %113 = arith.mulf %50, %88 : vector<1x1x2xf32>
    %114 = arith.mulf %54, %89 : vector<1x1x2xf32>
    %115 = arith.addf %113, %114 : vector<1x1x2xf32>
    %116 = arith.mulf %57, %90 : vector<1x1x2xf32>
    %117 = arith.addf %115, %116 : vector<1x1x2xf32>
    %118 = arith.mulf %87, %91 : vector<1x1x2xf32>
    %119 = arith.addf %117, %118 : vector<1x1x2xf32>
    %120 = arith.mulf %98, %98 : vector<1x1x2xf32>
    %121 = arith.mulf %105, %105 : vector<1x1x2xf32>
    %122 = arith.addf %120, %121 : vector<1x1x2xf32>
    %123 = arith.mulf %112, %112 : vector<1x1x2xf32>
    %124 = arith.addf %122, %123 : vector<1x1x2xf32>
    %125 = arith.mulf %119, %119 : vector<1x1x2xf32>
    %126 = arith.addf %124, %125 : vector<1x1x2xf32>
    %cst_18 = arith.constant 1.000000e-30 : f32
    %127 = vector.broadcast %cst_18 : f32 to vector<1x1x2xf32>
    %128 = arith.addf %126, %127 : vector<1x1x2xf32>
    %129 = math.rsqrt %128 : vector<1x1x2xf32>
    %130 = arith.mulf %98, %129 : vector<1x1x2xf32>
    %131 = arith.mulf %105, %129 : vector<1x1x2xf32>
    %132 = arith.mulf %112, %129 : vector<1x1x2xf32>
    %133 = arith.mulf %119, %129 : vector<1x1x2xf32>
    %134 = arith.mulf %84, %130 : vector<1x1x2xf32>
    %135 = arith.mulf %48, %131 : vector<1x1x2xf32>
    %136 = arith.addf %134, %135 : vector<1x1x2xf32>
    %137 = arith.mulf %49, %132 : vector<1x1x2xf32>
    %138 = arith.addf %136, %137 : vector<1x1x2xf32>
    %139 = arith.mulf %50, %133 : vector<1x1x2xf32>
    %140 = arith.addf %138, %139 : vector<1x1x2xf32>
    %141 = arith.mulf %48, %130 : vector<1x1x2xf32>
    %142 = arith.mulf %85, %131 : vector<1x1x2xf32>
    %143 = arith.addf %141, %142 : vector<1x1x2xf32>
    %144 = arith.mulf %53, %132 : vector<1x1x2xf32>
    %145 = arith.addf %143, %144 : vector<1x1x2xf32>
    %146 = arith.mulf %54, %133 : vector<1x1x2xf32>
    %147 = arith.addf %145, %146 : vector<1x1x2xf32>
    %148 = arith.mulf %49, %130 : vector<1x1x2xf32>
    %149 = arith.mulf %53, %131 : vector<1x1x2xf32>
    %150 = arith.addf %148, %149 : vector<1x1x2xf32>
    %151 = arith.mulf %86, %132 : vector<1x1x2xf32>
    %152 = arith.addf %150, %151 : vector<1x1x2xf32>
    %153 = arith.mulf %57, %133 : vector<1x1x2xf32>
    %154 = arith.addf %152, %153 : vector<1x1x2xf32>
    %155 = arith.mulf %50, %130 : vector<1x1x2xf32>
    %156 = arith.mulf %54, %131 : vector<1x1x2xf32>
    %157 = arith.addf %155, %156 : vector<1x1x2xf32>
    %158 = arith.mulf %57, %132 : vector<1x1x2xf32>
    %159 = arith.addf %157, %158 : vector<1x1x2xf32>
    %160 = arith.mulf %87, %133 : vector<1x1x2xf32>
    %161 = arith.addf %159, %160 : vector<1x1x2xf32>
    %162 = arith.mulf %140, %140 : vector<1x1x2xf32>
    %163 = arith.mulf %147, %147 : vector<1x1x2xf32>
    %164 = arith.addf %162, %163 : vector<1x1x2xf32>
    %165 = arith.mulf %154, %154 : vector<1x1x2xf32>
    %166 = arith.addf %164, %165 : vector<1x1x2xf32>
    %167 = arith.mulf %161, %161 : vector<1x1x2xf32>
    %168 = arith.addf %166, %167 : vector<1x1x2xf32>
    %cst_19 = arith.constant 1.000000e-30 : f32
    %169 = vector.broadcast %cst_19 : f32 to vector<1x1x2xf32>
    %170 = arith.addf %168, %169 : vector<1x1x2xf32>
    %171 = math.rsqrt %170 : vector<1x1x2xf32>
    %172 = arith.mulf %140, %171 : vector<1x1x2xf32>
    %173 = arith.mulf %147, %171 : vector<1x1x2xf32>
    %174 = arith.mulf %154, %171 : vector<1x1x2xf32>
    %175 = arith.mulf %161, %171 : vector<1x1x2xf32>
    %176 = arith.mulf %84, %172 : vector<1x1x2xf32>
    %177 = arith.mulf %48, %173 : vector<1x1x2xf32>
    %178 = arith.addf %176, %177 : vector<1x1x2xf32>
    %179 = arith.mulf %49, %174 : vector<1x1x2xf32>
    %180 = arith.addf %178, %179 : vector<1x1x2xf32>
    %181 = arith.mulf %50, %175 : vector<1x1x2xf32>
    %182 = arith.addf %180, %181 : vector<1x1x2xf32>
    %183 = arith.mulf %48, %172 : vector<1x1x2xf32>
    %184 = arith.mulf %85, %173 : vector<1x1x2xf32>
    %185 = arith.addf %183, %184 : vector<1x1x2xf32>
    %186 = arith.mulf %53, %174 : vector<1x1x2xf32>
    %187 = arith.addf %185, %186 : vector<1x1x2xf32>
    %188 = arith.mulf %54, %175 : vector<1x1x2xf32>
    %189 = arith.addf %187, %188 : vector<1x1x2xf32>
    %190 = arith.mulf %49, %172 : vector<1x1x2xf32>
    %191 = arith.mulf %53, %173 : vector<1x1x2xf32>
    %192 = arith.addf %190, %191 : vector<1x1x2xf32>
    %193 = arith.mulf %86, %174 : vector<1x1x2xf32>
    %194 = arith.addf %192, %193 : vector<1x1x2xf32>
    %195 = arith.mulf %57, %175 : vector<1x1x2xf32>
    %196 = arith.addf %194, %195 : vector<1x1x2xf32>
    %197 = arith.mulf %50, %172 : vector<1x1x2xf32>
    %198 = arith.mulf %54, %173 : vector<1x1x2xf32>
    %199 = arith.addf %197, %198 : vector<1x1x2xf32>
    %200 = arith.mulf %57, %174 : vector<1x1x2xf32>
    %201 = arith.addf %199, %200 : vector<1x1x2xf32>
    %202 = arith.mulf %87, %175 : vector<1x1x2xf32>
    %203 = arith.addf %201, %202 : vector<1x1x2xf32>
    %204 = arith.mulf %182, %182 : vector<1x1x2xf32>
    %205 = arith.mulf %189, %189 : vector<1x1x2xf32>
    %206 = arith.addf %204, %205 : vector<1x1x2xf32>
    %207 = arith.mulf %196, %196 : vector<1x1x2xf32>
    %208 = arith.addf %206, %207 : vector<1x1x2xf32>
    %209 = arith.mulf %203, %203 : vector<1x1x2xf32>
    %210 = arith.addf %208, %209 : vector<1x1x2xf32>
    %cst_20 = arith.constant 1.000000e-30 : f32
    %211 = vector.broadcast %cst_20 : f32 to vector<1x1x2xf32>
    %212 = arith.addf %210, %211 : vector<1x1x2xf32>
    %213 = math.rsqrt %212 : vector<1x1x2xf32>
    %214 = arith.mulf %182, %213 : vector<1x1x2xf32>
    %215 = arith.mulf %189, %213 : vector<1x1x2xf32>
    %216 = arith.mulf %196, %213 : vector<1x1x2xf32>
    %217 = arith.mulf %203, %213 : vector<1x1x2xf32>
    %218 = arith.mulf %84, %214 : vector<1x1x2xf32>
    %219 = arith.mulf %48, %215 : vector<1x1x2xf32>
    %220 = arith.addf %218, %219 : vector<1x1x2xf32>
    %221 = arith.mulf %49, %216 : vector<1x1x2xf32>
    %222 = arith.addf %220, %221 : vector<1x1x2xf32>
    %223 = arith.mulf %50, %217 : vector<1x1x2xf32>
    %224 = arith.addf %222, %223 : vector<1x1x2xf32>
    %225 = arith.mulf %48, %214 : vector<1x1x2xf32>
    %226 = arith.mulf %85, %215 : vector<1x1x2xf32>
    %227 = arith.addf %225, %226 : vector<1x1x2xf32>
    %228 = arith.mulf %53, %216 : vector<1x1x2xf32>
    %229 = arith.addf %227, %228 : vector<1x1x2xf32>
    %230 = arith.mulf %54, %217 : vector<1x1x2xf32>
    %231 = arith.addf %229, %230 : vector<1x1x2xf32>
    %232 = arith.mulf %49, %214 : vector<1x1x2xf32>
    %233 = arith.mulf %53, %215 : vector<1x1x2xf32>
    %234 = arith.addf %232, %233 : vector<1x1x2xf32>
    %235 = arith.mulf %86, %216 : vector<1x1x2xf32>
    %236 = arith.addf %234, %235 : vector<1x1x2xf32>
    %237 = arith.mulf %57, %217 : vector<1x1x2xf32>
    %238 = arith.addf %236, %237 : vector<1x1x2xf32>
    %239 = arith.mulf %50, %214 : vector<1x1x2xf32>
    %240 = arith.mulf %54, %215 : vector<1x1x2xf32>
    %241 = arith.addf %239, %240 : vector<1x1x2xf32>
    %242 = arith.mulf %57, %216 : vector<1x1x2xf32>
    %243 = arith.addf %241, %242 : vector<1x1x2xf32>
    %244 = arith.mulf %87, %217 : vector<1x1x2xf32>
    %245 = arith.addf %243, %244 : vector<1x1x2xf32>
    %246 = arith.mulf %224, %224 : vector<1x1x2xf32>
    %247 = arith.mulf %231, %231 : vector<1x1x2xf32>
    %248 = arith.addf %246, %247 : vector<1x1x2xf32>
    %249 = arith.mulf %238, %238 : vector<1x1x2xf32>
    %250 = arith.addf %248, %249 : vector<1x1x2xf32>
    %251 = arith.mulf %245, %245 : vector<1x1x2xf32>
    %252 = arith.addf %250, %251 : vector<1x1x2xf32>
    %cst_21 = arith.constant 1.000000e-30 : f32
    %253 = vector.broadcast %cst_21 : f32 to vector<1x1x2xf32>
    %254 = arith.addf %252, %253 : vector<1x1x2xf32>
    %255 = math.rsqrt %254 : vector<1x1x2xf32>
    %256 = arith.mulf %224, %255 : vector<1x1x2xf32>
    %257 = arith.mulf %231, %255 : vector<1x1x2xf32>
    %258 = arith.mulf %238, %255 : vector<1x1x2xf32>
    %259 = arith.mulf %245, %255 : vector<1x1x2xf32>
    %260 = arith.mulf %84, %256 : vector<1x1x2xf32>
    %261 = arith.mulf %48, %257 : vector<1x1x2xf32>
    %262 = arith.addf %260, %261 : vector<1x1x2xf32>
    %263 = arith.mulf %49, %258 : vector<1x1x2xf32>
    %264 = arith.addf %262, %263 : vector<1x1x2xf32>
    %265 = arith.mulf %50, %259 : vector<1x1x2xf32>
    %266 = arith.addf %264, %265 : vector<1x1x2xf32>
    %267 = arith.mulf %48, %256 : vector<1x1x2xf32>
    %268 = arith.mulf %85, %257 : vector<1x1x2xf32>
    %269 = arith.addf %267, %268 : vector<1x1x2xf32>
    %270 = arith.mulf %53, %258 : vector<1x1x2xf32>
    %271 = arith.addf %269, %270 : vector<1x1x2xf32>
    %272 = arith.mulf %54, %259 : vector<1x1x2xf32>
    %273 = arith.addf %271, %272 : vector<1x1x2xf32>
    %274 = arith.mulf %49, %256 : vector<1x1x2xf32>
    %275 = arith.mulf %53, %257 : vector<1x1x2xf32>
    %276 = arith.addf %274, %275 : vector<1x1x2xf32>
    %277 = arith.mulf %86, %258 : vector<1x1x2xf32>
    %278 = arith.addf %276, %277 : vector<1x1x2xf32>
    %279 = arith.mulf %57, %259 : vector<1x1x2xf32>
    %280 = arith.addf %278, %279 : vector<1x1x2xf32>
    %281 = arith.mulf %50, %256 : vector<1x1x2xf32>
    %282 = arith.mulf %54, %257 : vector<1x1x2xf32>
    %283 = arith.addf %281, %282 : vector<1x1x2xf32>
    %284 = arith.mulf %57, %258 : vector<1x1x2xf32>
    %285 = arith.addf %283, %284 : vector<1x1x2xf32>
    %286 = arith.mulf %87, %259 : vector<1x1x2xf32>
    %287 = arith.addf %285, %286 : vector<1x1x2xf32>
    %288 = arith.mulf %266, %266 : vector<1x1x2xf32>
    %289 = arith.mulf %273, %273 : vector<1x1x2xf32>
    %290 = arith.addf %288, %289 : vector<1x1x2xf32>
    %291 = arith.mulf %280, %280 : vector<1x1x2xf32>
    %292 = arith.addf %290, %291 : vector<1x1x2xf32>
    %293 = arith.mulf %287, %287 : vector<1x1x2xf32>
    %294 = arith.addf %292, %293 : vector<1x1x2xf32>
    %cst_22 = arith.constant 1.000000e-30 : f32
    %295 = vector.broadcast %cst_22 : f32 to vector<1x1x2xf32>
    %296 = arith.addf %294, %295 : vector<1x1x2xf32>
    %297 = math.rsqrt %296 : vector<1x1x2xf32>
    %298 = arith.mulf %266, %297 : vector<1x1x2xf32>
    %299 = arith.mulf %273, %297 : vector<1x1x2xf32>
    %300 = arith.mulf %280, %297 : vector<1x1x2xf32>
    %301 = arith.mulf %287, %297 : vector<1x1x2xf32>
    %302 = arith.mulf %84, %298 : vector<1x1x2xf32>
    %303 = arith.mulf %48, %299 : vector<1x1x2xf32>
    %304 = arith.addf %302, %303 : vector<1x1x2xf32>
    %305 = arith.mulf %49, %300 : vector<1x1x2xf32>
    %306 = arith.addf %304, %305 : vector<1x1x2xf32>
    %307 = arith.mulf %50, %301 : vector<1x1x2xf32>
    %308 = arith.addf %306, %307 : vector<1x1x2xf32>
    %309 = arith.mulf %48, %298 : vector<1x1x2xf32>
    %310 = arith.mulf %85, %299 : vector<1x1x2xf32>
    %311 = arith.addf %309, %310 : vector<1x1x2xf32>
    %312 = arith.mulf %53, %300 : vector<1x1x2xf32>
    %313 = arith.addf %311, %312 : vector<1x1x2xf32>
    %314 = arith.mulf %54, %301 : vector<1x1x2xf32>
    %315 = arith.addf %313, %314 : vector<1x1x2xf32>
    %316 = arith.mulf %49, %298 : vector<1x1x2xf32>
    %317 = arith.mulf %53, %299 : vector<1x1x2xf32>
    %318 = arith.addf %316, %317 : vector<1x1x2xf32>
    %319 = arith.mulf %86, %300 : vector<1x1x2xf32>
    %320 = arith.addf %318, %319 : vector<1x1x2xf32>
    %321 = arith.mulf %57, %301 : vector<1x1x2xf32>
    %322 = arith.addf %320, %321 : vector<1x1x2xf32>
    %323 = arith.mulf %50, %298 : vector<1x1x2xf32>
    %324 = arith.mulf %54, %299 : vector<1x1x2xf32>
    %325 = arith.addf %323, %324 : vector<1x1x2xf32>
    %326 = arith.mulf %57, %300 : vector<1x1x2xf32>
    %327 = arith.addf %325, %326 : vector<1x1x2xf32>
    %328 = arith.mulf %87, %301 : vector<1x1x2xf32>
    %329 = arith.addf %327, %328 : vector<1x1x2xf32>
    %330 = arith.mulf %308, %308 : vector<1x1x2xf32>
    %331 = arith.mulf %315, %315 : vector<1x1x2xf32>
    %332 = arith.addf %330, %331 : vector<1x1x2xf32>
    %333 = arith.mulf %322, %322 : vector<1x1x2xf32>
    %334 = arith.addf %332, %333 : vector<1x1x2xf32>
    %335 = arith.mulf %329, %329 : vector<1x1x2xf32>
    %336 = arith.addf %334, %335 : vector<1x1x2xf32>
    %cst_23 = arith.constant 1.000000e-30 : f32
    %337 = vector.broadcast %cst_23 : f32 to vector<1x1x2xf32>
    %338 = arith.addf %336, %337 : vector<1x1x2xf32>
    %339 = math.rsqrt %338 : vector<1x1x2xf32>
    %340 = arith.mulf %308, %339 : vector<1x1x2xf32>
    %341 = arith.mulf %315, %339 : vector<1x1x2xf32>
    %342 = arith.mulf %322, %339 : vector<1x1x2xf32>
    %343 = arith.mulf %329, %339 : vector<1x1x2xf32>
    %344 = arith.mulf %84, %340 : vector<1x1x2xf32>
    %345 = arith.mulf %48, %341 : vector<1x1x2xf32>
    %346 = arith.addf %344, %345 : vector<1x1x2xf32>
    %347 = arith.mulf %49, %342 : vector<1x1x2xf32>
    %348 = arith.addf %346, %347 : vector<1x1x2xf32>
    %349 = arith.mulf %50, %343 : vector<1x1x2xf32>
    %350 = arith.addf %348, %349 : vector<1x1x2xf32>
    %351 = arith.mulf %48, %340 : vector<1x1x2xf32>
    %352 = arith.mulf %85, %341 : vector<1x1x2xf32>
    %353 = arith.addf %351, %352 : vector<1x1x2xf32>
    %354 = arith.mulf %53, %342 : vector<1x1x2xf32>
    %355 = arith.addf %353, %354 : vector<1x1x2xf32>
    %356 = arith.mulf %54, %343 : vector<1x1x2xf32>
    %357 = arith.addf %355, %356 : vector<1x1x2xf32>
    %358 = arith.mulf %49, %340 : vector<1x1x2xf32>
    %359 = arith.mulf %53, %341 : vector<1x1x2xf32>
    %360 = arith.addf %358, %359 : vector<1x1x2xf32>
    %361 = arith.mulf %86, %342 : vector<1x1x2xf32>
    %362 = arith.addf %360, %361 : vector<1x1x2xf32>
    %363 = arith.mulf %57, %343 : vector<1x1x2xf32>
    %364 = arith.addf %362, %363 : vector<1x1x2xf32>
    %365 = arith.mulf %50, %340 : vector<1x1x2xf32>
    %366 = arith.mulf %54, %341 : vector<1x1x2xf32>
    %367 = arith.addf %365, %366 : vector<1x1x2xf32>
    %368 = arith.mulf %57, %342 : vector<1x1x2xf32>
    %369 = arith.addf %367, %368 : vector<1x1x2xf32>
    %370 = arith.mulf %87, %343 : vector<1x1x2xf32>
    %371 = arith.addf %369, %370 : vector<1x1x2xf32>
    %372 = arith.mulf %350, %350 : vector<1x1x2xf32>
    %373 = arith.mulf %357, %357 : vector<1x1x2xf32>
    %374 = arith.addf %372, %373 : vector<1x1x2xf32>
    %375 = arith.mulf %364, %364 : vector<1x1x2xf32>
    %376 = arith.addf %374, %375 : vector<1x1x2xf32>
    %377 = arith.mulf %371, %371 : vector<1x1x2xf32>
    %378 = arith.addf %376, %377 : vector<1x1x2xf32>
    %cst_24 = arith.constant 1.000000e-30 : f32
    %379 = vector.broadcast %cst_24 : f32 to vector<1x1x2xf32>
    %380 = arith.addf %378, %379 : vector<1x1x2xf32>
    %381 = math.rsqrt %380 : vector<1x1x2xf32>
    %382 = arith.mulf %350, %381 : vector<1x1x2xf32>
    %383 = arith.mulf %357, %381 : vector<1x1x2xf32>
    %384 = arith.mulf %364, %381 : vector<1x1x2xf32>
    %385 = arith.mulf %371, %381 : vector<1x1x2xf32>
    %386 = arith.mulf %84, %382 : vector<1x1x2xf32>
    %387 = arith.mulf %48, %383 : vector<1x1x2xf32>
    %388 = arith.addf %386, %387 : vector<1x1x2xf32>
    %389 = arith.mulf %49, %384 : vector<1x1x2xf32>
    %390 = arith.addf %388, %389 : vector<1x1x2xf32>
    %391 = arith.mulf %50, %385 : vector<1x1x2xf32>
    %392 = arith.addf %390, %391 : vector<1x1x2xf32>
    %393 = arith.mulf %48, %382 : vector<1x1x2xf32>
    %394 = arith.mulf %85, %383 : vector<1x1x2xf32>
    %395 = arith.addf %393, %394 : vector<1x1x2xf32>
    %396 = arith.mulf %53, %384 : vector<1x1x2xf32>
    %397 = arith.addf %395, %396 : vector<1x1x2xf32>
    %398 = arith.mulf %54, %385 : vector<1x1x2xf32>
    %399 = arith.addf %397, %398 : vector<1x1x2xf32>
    %400 = arith.mulf %49, %382 : vector<1x1x2xf32>
    %401 = arith.mulf %53, %383 : vector<1x1x2xf32>
    %402 = arith.addf %400, %401 : vector<1x1x2xf32>
    %403 = arith.mulf %86, %384 : vector<1x1x2xf32>
    %404 = arith.addf %402, %403 : vector<1x1x2xf32>
    %405 = arith.mulf %57, %385 : vector<1x1x2xf32>
    %406 = arith.addf %404, %405 : vector<1x1x2xf32>
    %407 = arith.mulf %50, %382 : vector<1x1x2xf32>
    %408 = arith.mulf %54, %383 : vector<1x1x2xf32>
    %409 = arith.addf %407, %408 : vector<1x1x2xf32>
    %410 = arith.mulf %57, %384 : vector<1x1x2xf32>
    %411 = arith.addf %409, %410 : vector<1x1x2xf32>
    %412 = arith.mulf %87, %385 : vector<1x1x2xf32>
    %413 = arith.addf %411, %412 : vector<1x1x2xf32>
    %414 = arith.mulf %392, %392 : vector<1x1x2xf32>
    %415 = arith.mulf %399, %399 : vector<1x1x2xf32>
    %416 = arith.addf %414, %415 : vector<1x1x2xf32>
    %417 = arith.mulf %406, %406 : vector<1x1x2xf32>
    %418 = arith.addf %416, %417 : vector<1x1x2xf32>
    %419 = arith.mulf %413, %413 : vector<1x1x2xf32>
    %420 = arith.addf %418, %419 : vector<1x1x2xf32>
    %cst_25 = arith.constant 1.000000e-30 : f32
    %421 = vector.broadcast %cst_25 : f32 to vector<1x1x2xf32>
    %422 = arith.addf %420, %421 : vector<1x1x2xf32>
    %423 = math.rsqrt %422 : vector<1x1x2xf32>
    %424 = arith.mulf %392, %423 : vector<1x1x2xf32>
    %425 = arith.mulf %399, %423 : vector<1x1x2xf32>
    %426 = arith.mulf %406, %423 : vector<1x1x2xf32>
    %427 = arith.mulf %413, %423 : vector<1x1x2xf32>
    %428 = arith.mulf %84, %424 : vector<1x1x2xf32>
    %429 = arith.mulf %48, %425 : vector<1x1x2xf32>
    %430 = arith.addf %428, %429 : vector<1x1x2xf32>
    %431 = arith.mulf %49, %426 : vector<1x1x2xf32>
    %432 = arith.addf %430, %431 : vector<1x1x2xf32>
    %433 = arith.mulf %50, %427 : vector<1x1x2xf32>
    %434 = arith.addf %432, %433 : vector<1x1x2xf32>
    %435 = arith.mulf %48, %424 : vector<1x1x2xf32>
    %436 = arith.mulf %85, %425 : vector<1x1x2xf32>
    %437 = arith.addf %435, %436 : vector<1x1x2xf32>
    %438 = arith.mulf %53, %426 : vector<1x1x2xf32>
    %439 = arith.addf %437, %438 : vector<1x1x2xf32>
    %440 = arith.mulf %54, %427 : vector<1x1x2xf32>
    %441 = arith.addf %439, %440 : vector<1x1x2xf32>
    %442 = arith.mulf %49, %424 : vector<1x1x2xf32>
    %443 = arith.mulf %53, %425 : vector<1x1x2xf32>
    %444 = arith.addf %442, %443 : vector<1x1x2xf32>
    %445 = arith.mulf %86, %426 : vector<1x1x2xf32>
    %446 = arith.addf %444, %445 : vector<1x1x2xf32>
    %447 = arith.mulf %57, %427 : vector<1x1x2xf32>
    %448 = arith.addf %446, %447 : vector<1x1x2xf32>
    %449 = arith.mulf %50, %424 : vector<1x1x2xf32>
    %450 = arith.mulf %54, %425 : vector<1x1x2xf32>
    %451 = arith.addf %449, %450 : vector<1x1x2xf32>
    %452 = arith.mulf %57, %426 : vector<1x1x2xf32>
    %453 = arith.addf %451, %452 : vector<1x1x2xf32>
    %454 = arith.mulf %87, %427 : vector<1x1x2xf32>
    %455 = arith.addf %453, %454 : vector<1x1x2xf32>
    %456 = arith.mulf %434, %434 : vector<1x1x2xf32>
    %457 = arith.mulf %441, %441 : vector<1x1x2xf32>
    %458 = arith.addf %456, %457 : vector<1x1x2xf32>
    %459 = arith.mulf %448, %448 : vector<1x1x2xf32>
    %460 = arith.addf %458, %459 : vector<1x1x2xf32>
    %461 = arith.mulf %455, %455 : vector<1x1x2xf32>
    %462 = arith.addf %460, %461 : vector<1x1x2xf32>
    %cst_26 = arith.constant 1.000000e-30 : f32
    %463 = vector.broadcast %cst_26 : f32 to vector<1x1x2xf32>
    %464 = arith.addf %462, %463 : vector<1x1x2xf32>
    %465 = math.rsqrt %464 : vector<1x1x2xf32>
    %466 = arith.mulf %434, %465 : vector<1x1x2xf32>
    %467 = arith.mulf %441, %465 : vector<1x1x2xf32>
    %468 = arith.mulf %448, %465 : vector<1x1x2xf32>
    %469 = arith.mulf %455, %465 : vector<1x1x2xf32>
    %470 = arith.mulf %84, %466 : vector<1x1x2xf32>
    %471 = arith.mulf %48, %467 : vector<1x1x2xf32>
    %472 = arith.addf %470, %471 : vector<1x1x2xf32>
    %473 = arith.mulf %49, %468 : vector<1x1x2xf32>
    %474 = arith.addf %472, %473 : vector<1x1x2xf32>
    %475 = arith.mulf %50, %469 : vector<1x1x2xf32>
    %476 = arith.addf %474, %475 : vector<1x1x2xf32>
    %477 = arith.mulf %48, %466 : vector<1x1x2xf32>
    %478 = arith.mulf %85, %467 : vector<1x1x2xf32>
    %479 = arith.addf %477, %478 : vector<1x1x2xf32>
    %480 = arith.mulf %53, %468 : vector<1x1x2xf32>
    %481 = arith.addf %479, %480 : vector<1x1x2xf32>
    %482 = arith.mulf %54, %469 : vector<1x1x2xf32>
    %483 = arith.addf %481, %482 : vector<1x1x2xf32>
    %484 = arith.mulf %49, %466 : vector<1x1x2xf32>
    %485 = arith.mulf %53, %467 : vector<1x1x2xf32>
    %486 = arith.addf %484, %485 : vector<1x1x2xf32>
    %487 = arith.mulf %86, %468 : vector<1x1x2xf32>
    %488 = arith.addf %486, %487 : vector<1x1x2xf32>
    %489 = arith.mulf %57, %469 : vector<1x1x2xf32>
    %490 = arith.addf %488, %489 : vector<1x1x2xf32>
    %491 = arith.mulf %50, %466 : vector<1x1x2xf32>
    %492 = arith.mulf %54, %467 : vector<1x1x2xf32>
    %493 = arith.addf %491, %492 : vector<1x1x2xf32>
    %494 = arith.mulf %57, %468 : vector<1x1x2xf32>
    %495 = arith.addf %493, %494 : vector<1x1x2xf32>
    %496 = arith.mulf %87, %469 : vector<1x1x2xf32>
    %497 = arith.addf %495, %496 : vector<1x1x2xf32>
    %498 = arith.mulf %476, %476 : vector<1x1x2xf32>
    %499 = arith.mulf %483, %483 : vector<1x1x2xf32>
    %500 = arith.addf %498, %499 : vector<1x1x2xf32>
    %501 = arith.mulf %490, %490 : vector<1x1x2xf32>
    %502 = arith.addf %500, %501 : vector<1x1x2xf32>
    %503 = arith.mulf %497, %497 : vector<1x1x2xf32>
    %504 = arith.addf %502, %503 : vector<1x1x2xf32>
    %cst_27 = arith.constant 1.000000e-30 : f32
    %505 = vector.broadcast %cst_27 : f32 to vector<1x1x2xf32>
    %506 = arith.addf %504, %505 : vector<1x1x2xf32>
    %507 = math.rsqrt %506 : vector<1x1x2xf32>
    %508 = arith.mulf %476, %507 : vector<1x1x2xf32>
    %509 = arith.mulf %483, %507 : vector<1x1x2xf32>
    %510 = arith.mulf %490, %507 : vector<1x1x2xf32>
    %511 = arith.mulf %497, %507 : vector<1x1x2xf32>
    %512 = arith.mulf %84, %508 : vector<1x1x2xf32>
    %513 = arith.mulf %48, %509 : vector<1x1x2xf32>
    %514 = arith.addf %512, %513 : vector<1x1x2xf32>
    %515 = arith.mulf %49, %510 : vector<1x1x2xf32>
    %516 = arith.addf %514, %515 : vector<1x1x2xf32>
    %517 = arith.mulf %50, %511 : vector<1x1x2xf32>
    %518 = arith.addf %516, %517 : vector<1x1x2xf32>
    %519 = arith.mulf %48, %508 : vector<1x1x2xf32>
    %520 = arith.mulf %85, %509 : vector<1x1x2xf32>
    %521 = arith.addf %519, %520 : vector<1x1x2xf32>
    %522 = arith.mulf %53, %510 : vector<1x1x2xf32>
    %523 = arith.addf %521, %522 : vector<1x1x2xf32>
    %524 = arith.mulf %54, %511 : vector<1x1x2xf32>
    %525 = arith.addf %523, %524 : vector<1x1x2xf32>
    %526 = arith.mulf %49, %508 : vector<1x1x2xf32>
    %527 = arith.mulf %53, %509 : vector<1x1x2xf32>
    %528 = arith.addf %526, %527 : vector<1x1x2xf32>
    %529 = arith.mulf %86, %510 : vector<1x1x2xf32>
    %530 = arith.addf %528, %529 : vector<1x1x2xf32>
    %531 = arith.mulf %57, %511 : vector<1x1x2xf32>
    %532 = arith.addf %530, %531 : vector<1x1x2xf32>
    %533 = arith.mulf %50, %508 : vector<1x1x2xf32>
    %534 = arith.mulf %54, %509 : vector<1x1x2xf32>
    %535 = arith.addf %533, %534 : vector<1x1x2xf32>
    %536 = arith.mulf %57, %510 : vector<1x1x2xf32>
    %537 = arith.addf %535, %536 : vector<1x1x2xf32>
    %538 = arith.mulf %87, %511 : vector<1x1x2xf32>
    %539 = arith.addf %537, %538 : vector<1x1x2xf32>
    %540 = arith.mulf %518, %518 : vector<1x1x2xf32>
    %541 = arith.mulf %525, %525 : vector<1x1x2xf32>
    %542 = arith.addf %540, %541 : vector<1x1x2xf32>
    %543 = arith.mulf %532, %532 : vector<1x1x2xf32>
    %544 = arith.addf %542, %543 : vector<1x1x2xf32>
    %545 = arith.mulf %539, %539 : vector<1x1x2xf32>
    %546 = arith.addf %544, %545 : vector<1x1x2xf32>
    %cst_28 = arith.constant 1.000000e-30 : f32
    %547 = vector.broadcast %cst_28 : f32 to vector<1x1x2xf32>
    %548 = arith.addf %546, %547 : vector<1x1x2xf32>
    %549 = math.rsqrt %548 : vector<1x1x2xf32>
    %550 = arith.mulf %518, %549 : vector<1x1x2xf32>
    %551 = arith.mulf %525, %549 : vector<1x1x2xf32>
    %552 = arith.mulf %532, %549 : vector<1x1x2xf32>
    %553 = arith.mulf %539, %549 : vector<1x1x2xf32>
    %554 = arith.mulf %84, %550 : vector<1x1x2xf32>
    %555 = arith.mulf %48, %551 : vector<1x1x2xf32>
    %556 = arith.addf %554, %555 : vector<1x1x2xf32>
    %557 = arith.mulf %49, %552 : vector<1x1x2xf32>
    %558 = arith.addf %556, %557 : vector<1x1x2xf32>
    %559 = arith.mulf %50, %553 : vector<1x1x2xf32>
    %560 = arith.addf %558, %559 : vector<1x1x2xf32>
    %561 = arith.mulf %48, %550 : vector<1x1x2xf32>
    %562 = arith.mulf %85, %551 : vector<1x1x2xf32>
    %563 = arith.addf %561, %562 : vector<1x1x2xf32>
    %564 = arith.mulf %53, %552 : vector<1x1x2xf32>
    %565 = arith.addf %563, %564 : vector<1x1x2xf32>
    %566 = arith.mulf %54, %553 : vector<1x1x2xf32>
    %567 = arith.addf %565, %566 : vector<1x1x2xf32>
    %568 = arith.mulf %49, %550 : vector<1x1x2xf32>
    %569 = arith.mulf %53, %551 : vector<1x1x2xf32>
    %570 = arith.addf %568, %569 : vector<1x1x2xf32>
    %571 = arith.mulf %86, %552 : vector<1x1x2xf32>
    %572 = arith.addf %570, %571 : vector<1x1x2xf32>
    %573 = arith.mulf %57, %553 : vector<1x1x2xf32>
    %574 = arith.addf %572, %573 : vector<1x1x2xf32>
    %575 = arith.mulf %50, %550 : vector<1x1x2xf32>
    %576 = arith.mulf %54, %551 : vector<1x1x2xf32>
    %577 = arith.addf %575, %576 : vector<1x1x2xf32>
    %578 = arith.mulf %57, %552 : vector<1x1x2xf32>
    %579 = arith.addf %577, %578 : vector<1x1x2xf32>
    %580 = arith.mulf %87, %553 : vector<1x1x2xf32>
    %581 = arith.addf %579, %580 : vector<1x1x2xf32>
    %582 = arith.mulf %560, %560 : vector<1x1x2xf32>
    %583 = arith.mulf %567, %567 : vector<1x1x2xf32>
    %584 = arith.addf %582, %583 : vector<1x1x2xf32>
    %585 = arith.mulf %574, %574 : vector<1x1x2xf32>
    %586 = arith.addf %584, %585 : vector<1x1x2xf32>
    %587 = arith.mulf %581, %581 : vector<1x1x2xf32>
    %588 = arith.addf %586, %587 : vector<1x1x2xf32>
    %cst_29 = arith.constant 1.000000e-30 : f32
    %589 = vector.broadcast %cst_29 : f32 to vector<1x1x2xf32>
    %590 = arith.addf %588, %589 : vector<1x1x2xf32>
    %591 = math.rsqrt %590 : vector<1x1x2xf32>
    %592 = arith.mulf %560, %591 : vector<1x1x2xf32>
    %593 = arith.mulf %567, %591 : vector<1x1x2xf32>
    %594 = arith.mulf %574, %591 : vector<1x1x2xf32>
    %595 = arith.mulf %581, %591 : vector<1x1x2xf32>
    %596 = arith.mulf %84, %592 : vector<1x1x2xf32>
    %597 = arith.mulf %48, %593 : vector<1x1x2xf32>
    %598 = arith.addf %596, %597 : vector<1x1x2xf32>
    %599 = arith.mulf %49, %594 : vector<1x1x2xf32>
    %600 = arith.addf %598, %599 : vector<1x1x2xf32>
    %601 = arith.mulf %50, %595 : vector<1x1x2xf32>
    %602 = arith.addf %600, %601 : vector<1x1x2xf32>
    %603 = arith.mulf %48, %592 : vector<1x1x2xf32>
    %604 = arith.mulf %85, %593 : vector<1x1x2xf32>
    %605 = arith.addf %603, %604 : vector<1x1x2xf32>
    %606 = arith.mulf %53, %594 : vector<1x1x2xf32>
    %607 = arith.addf %605, %606 : vector<1x1x2xf32>
    %608 = arith.mulf %54, %595 : vector<1x1x2xf32>
    %609 = arith.addf %607, %608 : vector<1x1x2xf32>
    %610 = arith.mulf %49, %592 : vector<1x1x2xf32>
    %611 = arith.mulf %53, %593 : vector<1x1x2xf32>
    %612 = arith.addf %610, %611 : vector<1x1x2xf32>
    %613 = arith.mulf %86, %594 : vector<1x1x2xf32>
    %614 = arith.addf %612, %613 : vector<1x1x2xf32>
    %615 = arith.mulf %57, %595 : vector<1x1x2xf32>
    %616 = arith.addf %614, %615 : vector<1x1x2xf32>
    %617 = arith.mulf %50, %592 : vector<1x1x2xf32>
    %618 = arith.mulf %54, %593 : vector<1x1x2xf32>
    %619 = arith.addf %617, %618 : vector<1x1x2xf32>
    %620 = arith.mulf %57, %594 : vector<1x1x2xf32>
    %621 = arith.addf %619, %620 : vector<1x1x2xf32>
    %622 = arith.mulf %87, %595 : vector<1x1x2xf32>
    %623 = arith.addf %621, %622 : vector<1x1x2xf32>
    %624 = arith.mulf %602, %602 : vector<1x1x2xf32>
    %625 = arith.mulf %609, %609 : vector<1x1x2xf32>
    %626 = arith.addf %624, %625 : vector<1x1x2xf32>
    %627 = arith.mulf %616, %616 : vector<1x1x2xf32>
    %628 = arith.addf %626, %627 : vector<1x1x2xf32>
    %629 = arith.mulf %623, %623 : vector<1x1x2xf32>
    %630 = arith.addf %628, %629 : vector<1x1x2xf32>
    %cst_30 = arith.constant 1.000000e-30 : f32
    %631 = vector.broadcast %cst_30 : f32 to vector<1x1x2xf32>
    %632 = arith.addf %630, %631 : vector<1x1x2xf32>
    %633 = math.rsqrt %632 : vector<1x1x2xf32>
    %634 = arith.mulf %602, %633 : vector<1x1x2xf32>
    %635 = arith.mulf %609, %633 : vector<1x1x2xf32>
    %636 = arith.mulf %616, %633 : vector<1x1x2xf32>
    %637 = arith.mulf %623, %633 : vector<1x1x2xf32>
    %638 = arith.mulf %84, %634 : vector<1x1x2xf32>
    %639 = arith.mulf %48, %635 : vector<1x1x2xf32>
    %640 = arith.addf %638, %639 : vector<1x1x2xf32>
    %641 = arith.mulf %49, %636 : vector<1x1x2xf32>
    %642 = arith.addf %640, %641 : vector<1x1x2xf32>
    %643 = arith.mulf %50, %637 : vector<1x1x2xf32>
    %644 = arith.addf %642, %643 : vector<1x1x2xf32>
    %645 = arith.mulf %48, %634 : vector<1x1x2xf32>
    %646 = arith.mulf %85, %635 : vector<1x1x2xf32>
    %647 = arith.addf %645, %646 : vector<1x1x2xf32>
    %648 = arith.mulf %53, %636 : vector<1x1x2xf32>
    %649 = arith.addf %647, %648 : vector<1x1x2xf32>
    %650 = arith.mulf %54, %637 : vector<1x1x2xf32>
    %651 = arith.addf %649, %650 : vector<1x1x2xf32>
    %652 = arith.mulf %49, %634 : vector<1x1x2xf32>
    %653 = arith.mulf %53, %635 : vector<1x1x2xf32>
    %654 = arith.addf %652, %653 : vector<1x1x2xf32>
    %655 = arith.mulf %86, %636 : vector<1x1x2xf32>
    %656 = arith.addf %654, %655 : vector<1x1x2xf32>
    %657 = arith.mulf %57, %637 : vector<1x1x2xf32>
    %658 = arith.addf %656, %657 : vector<1x1x2xf32>
    %659 = arith.mulf %50, %634 : vector<1x1x2xf32>
    %660 = arith.mulf %54, %635 : vector<1x1x2xf32>
    %661 = arith.addf %659, %660 : vector<1x1x2xf32>
    %662 = arith.mulf %57, %636 : vector<1x1x2xf32>
    %663 = arith.addf %661, %662 : vector<1x1x2xf32>
    %664 = arith.mulf %87, %637 : vector<1x1x2xf32>
    %665 = arith.addf %663, %664 : vector<1x1x2xf32>
    %666 = arith.mulf %644, %644 : vector<1x1x2xf32>
    %667 = arith.mulf %651, %651 : vector<1x1x2xf32>
    %668 = arith.addf %666, %667 : vector<1x1x2xf32>
    %669 = arith.mulf %658, %658 : vector<1x1x2xf32>
    %670 = arith.addf %668, %669 : vector<1x1x2xf32>
    %671 = arith.mulf %665, %665 : vector<1x1x2xf32>
    %672 = arith.addf %670, %671 : vector<1x1x2xf32>
    %cst_31 = arith.constant 1.000000e-30 : f32
    %673 = vector.broadcast %cst_31 : f32 to vector<1x1x2xf32>
    %674 = arith.addf %672, %673 : vector<1x1x2xf32>
    %675 = math.rsqrt %674 : vector<1x1x2xf32>
    %676 = arith.mulf %644, %675 : vector<1x1x2xf32>
    %677 = arith.mulf %651, %675 : vector<1x1x2xf32>
    %678 = arith.mulf %658, %675 : vector<1x1x2xf32>
    %679 = arith.mulf %665, %675 : vector<1x1x2xf32>
    %680 = arith.mulf %84, %676 : vector<1x1x2xf32>
    %681 = arith.mulf %48, %677 : vector<1x1x2xf32>
    %682 = arith.addf %680, %681 : vector<1x1x2xf32>
    %683 = arith.mulf %49, %678 : vector<1x1x2xf32>
    %684 = arith.addf %682, %683 : vector<1x1x2xf32>
    %685 = arith.mulf %50, %679 : vector<1x1x2xf32>
    %686 = arith.addf %684, %685 : vector<1x1x2xf32>
    %687 = arith.mulf %48, %676 : vector<1x1x2xf32>
    %688 = arith.mulf %85, %677 : vector<1x1x2xf32>
    %689 = arith.addf %687, %688 : vector<1x1x2xf32>
    %690 = arith.mulf %53, %678 : vector<1x1x2xf32>
    %691 = arith.addf %689, %690 : vector<1x1x2xf32>
    %692 = arith.mulf %54, %679 : vector<1x1x2xf32>
    %693 = arith.addf %691, %692 : vector<1x1x2xf32>
    %694 = arith.mulf %49, %676 : vector<1x1x2xf32>
    %695 = arith.mulf %53, %677 : vector<1x1x2xf32>
    %696 = arith.addf %694, %695 : vector<1x1x2xf32>
    %697 = arith.mulf %86, %678 : vector<1x1x2xf32>
    %698 = arith.addf %696, %697 : vector<1x1x2xf32>
    %699 = arith.mulf %57, %679 : vector<1x1x2xf32>
    %700 = arith.addf %698, %699 : vector<1x1x2xf32>
    %701 = arith.mulf %50, %676 : vector<1x1x2xf32>
    %702 = arith.mulf %54, %677 : vector<1x1x2xf32>
    %703 = arith.addf %701, %702 : vector<1x1x2xf32>
    %704 = arith.mulf %57, %678 : vector<1x1x2xf32>
    %705 = arith.addf %703, %704 : vector<1x1x2xf32>
    %706 = arith.mulf %87, %679 : vector<1x1x2xf32>
    %707 = arith.addf %705, %706 : vector<1x1x2xf32>
    %708 = arith.mulf %686, %686 : vector<1x1x2xf32>
    %709 = arith.mulf %693, %693 : vector<1x1x2xf32>
    %710 = arith.addf %708, %709 : vector<1x1x2xf32>
    %711 = arith.mulf %700, %700 : vector<1x1x2xf32>
    %712 = arith.addf %710, %711 : vector<1x1x2xf32>
    %713 = arith.mulf %707, %707 : vector<1x1x2xf32>
    %714 = arith.addf %712, %713 : vector<1x1x2xf32>
    %cst_32 = arith.constant 1.000000e-30 : f32
    %715 = vector.broadcast %cst_32 : f32 to vector<1x1x2xf32>
    %716 = arith.addf %714, %715 : vector<1x1x2xf32>
    %717 = math.rsqrt %716 : vector<1x1x2xf32>
    %718 = arith.mulf %686, %717 : vector<1x1x2xf32>
    %719 = arith.mulf %693, %717 : vector<1x1x2xf32>
    %720 = arith.mulf %700, %717 : vector<1x1x2xf32>
    %721 = arith.mulf %707, %717 : vector<1x1x2xf32>
    %722 = arith.mulf %84, %718 : vector<1x1x2xf32>
    %723 = arith.mulf %48, %719 : vector<1x1x2xf32>
    %724 = arith.addf %722, %723 : vector<1x1x2xf32>
    %725 = arith.mulf %49, %720 : vector<1x1x2xf32>
    %726 = arith.addf %724, %725 : vector<1x1x2xf32>
    %727 = arith.mulf %50, %721 : vector<1x1x2xf32>
    %728 = arith.addf %726, %727 : vector<1x1x2xf32>
    %729 = arith.mulf %48, %718 : vector<1x1x2xf32>
    %730 = arith.mulf %85, %719 : vector<1x1x2xf32>
    %731 = arith.addf %729, %730 : vector<1x1x2xf32>
    %732 = arith.mulf %53, %720 : vector<1x1x2xf32>
    %733 = arith.addf %731, %732 : vector<1x1x2xf32>
    %734 = arith.mulf %54, %721 : vector<1x1x2xf32>
    %735 = arith.addf %733, %734 : vector<1x1x2xf32>
    %736 = arith.mulf %49, %718 : vector<1x1x2xf32>
    %737 = arith.mulf %53, %719 : vector<1x1x2xf32>
    %738 = arith.addf %736, %737 : vector<1x1x2xf32>
    %739 = arith.mulf %86, %720 : vector<1x1x2xf32>
    %740 = arith.addf %738, %739 : vector<1x1x2xf32>
    %741 = arith.mulf %57, %721 : vector<1x1x2xf32>
    %742 = arith.addf %740, %741 : vector<1x1x2xf32>
    %743 = arith.mulf %50, %718 : vector<1x1x2xf32>
    %744 = arith.mulf %54, %719 : vector<1x1x2xf32>
    %745 = arith.addf %743, %744 : vector<1x1x2xf32>
    %746 = arith.mulf %57, %720 : vector<1x1x2xf32>
    %747 = arith.addf %745, %746 : vector<1x1x2xf32>
    %748 = arith.mulf %87, %721 : vector<1x1x2xf32>
    %749 = arith.addf %747, %748 : vector<1x1x2xf32>
    %750 = arith.mulf %728, %728 : vector<1x1x2xf32>
    %751 = arith.mulf %735, %735 : vector<1x1x2xf32>
    %752 = arith.addf %750, %751 : vector<1x1x2xf32>
    %753 = arith.mulf %742, %742 : vector<1x1x2xf32>
    %754 = arith.addf %752, %753 : vector<1x1x2xf32>
    %755 = arith.mulf %749, %749 : vector<1x1x2xf32>
    %756 = arith.addf %754, %755 : vector<1x1x2xf32>
    %cst_33 = arith.constant 1.000000e-30 : f32
    %757 = vector.broadcast %cst_33 : f32 to vector<1x1x2xf32>
    %758 = arith.addf %756, %757 : vector<1x1x2xf32>
    %759 = math.rsqrt %758 : vector<1x1x2xf32>
    %760 = arith.mulf %728, %759 : vector<1x1x2xf32>
    %761 = arith.mulf %735, %759 : vector<1x1x2xf32>
    %762 = arith.mulf %742, %759 : vector<1x1x2xf32>
    %763 = arith.mulf %749, %759 : vector<1x1x2xf32>
    %764 = arith.mulf %84, %760 : vector<1x1x2xf32>
    %765 = arith.mulf %48, %761 : vector<1x1x2xf32>
    %766 = arith.addf %764, %765 : vector<1x1x2xf32>
    %767 = arith.mulf %49, %762 : vector<1x1x2xf32>
    %768 = arith.addf %766, %767 : vector<1x1x2xf32>
    %769 = arith.mulf %50, %763 : vector<1x1x2xf32>
    %770 = arith.addf %768, %769 : vector<1x1x2xf32>
    %771 = arith.mulf %48, %760 : vector<1x1x2xf32>
    %772 = arith.mulf %85, %761 : vector<1x1x2xf32>
    %773 = arith.addf %771, %772 : vector<1x1x2xf32>
    %774 = arith.mulf %53, %762 : vector<1x1x2xf32>
    %775 = arith.addf %773, %774 : vector<1x1x2xf32>
    %776 = arith.mulf %54, %763 : vector<1x1x2xf32>
    %777 = arith.addf %775, %776 : vector<1x1x2xf32>
    %778 = arith.mulf %49, %760 : vector<1x1x2xf32>
    %779 = arith.mulf %53, %761 : vector<1x1x2xf32>
    %780 = arith.addf %778, %779 : vector<1x1x2xf32>
    %781 = arith.mulf %86, %762 : vector<1x1x2xf32>
    %782 = arith.addf %780, %781 : vector<1x1x2xf32>
    %783 = arith.mulf %57, %763 : vector<1x1x2xf32>
    %784 = arith.addf %782, %783 : vector<1x1x2xf32>
    %785 = arith.mulf %50, %760 : vector<1x1x2xf32>
    %786 = arith.mulf %54, %761 : vector<1x1x2xf32>
    %787 = arith.addf %785, %786 : vector<1x1x2xf32>
    %788 = arith.mulf %57, %762 : vector<1x1x2xf32>
    %789 = arith.addf %787, %788 : vector<1x1x2xf32>
    %790 = arith.mulf %87, %763 : vector<1x1x2xf32>
    %791 = arith.addf %789, %790 : vector<1x1x2xf32>
    %792 = arith.mulf %770, %770 : vector<1x1x2xf32>
    %793 = arith.mulf %777, %777 : vector<1x1x2xf32>
    %794 = arith.addf %792, %793 : vector<1x1x2xf32>
    %795 = arith.mulf %784, %784 : vector<1x1x2xf32>
    %796 = arith.addf %794, %795 : vector<1x1x2xf32>
    %797 = arith.mulf %791, %791 : vector<1x1x2xf32>
    %798 = arith.addf %796, %797 : vector<1x1x2xf32>
    %cst_34 = arith.constant 1.000000e-30 : f32
    %799 = vector.broadcast %cst_34 : f32 to vector<1x1x2xf32>
    %800 = arith.addf %798, %799 : vector<1x1x2xf32>
    %801 = math.rsqrt %800 : vector<1x1x2xf32>
    %802 = arith.mulf %770, %801 : vector<1x1x2xf32>
    %803 = arith.mulf %777, %801 : vector<1x1x2xf32>
    %804 = arith.mulf %784, %801 : vector<1x1x2xf32>
    %805 = arith.mulf %791, %801 : vector<1x1x2xf32>
    %806 = arith.mulf %84, %802 : vector<1x1x2xf32>
    %807 = arith.mulf %48, %803 : vector<1x1x2xf32>
    %808 = arith.addf %806, %807 : vector<1x1x2xf32>
    %809 = arith.mulf %49, %804 : vector<1x1x2xf32>
    %810 = arith.addf %808, %809 : vector<1x1x2xf32>
    %811 = arith.mulf %50, %805 : vector<1x1x2xf32>
    %812 = arith.addf %810, %811 : vector<1x1x2xf32>
    %813 = arith.mulf %48, %802 : vector<1x1x2xf32>
    %814 = arith.mulf %85, %803 : vector<1x1x2xf32>
    %815 = arith.addf %813, %814 : vector<1x1x2xf32>
    %816 = arith.mulf %53, %804 : vector<1x1x2xf32>
    %817 = arith.addf %815, %816 : vector<1x1x2xf32>
    %818 = arith.mulf %54, %805 : vector<1x1x2xf32>
    %819 = arith.addf %817, %818 : vector<1x1x2xf32>
    %820 = arith.mulf %49, %802 : vector<1x1x2xf32>
    %821 = arith.mulf %53, %803 : vector<1x1x2xf32>
    %822 = arith.addf %820, %821 : vector<1x1x2xf32>
    %823 = arith.mulf %86, %804 : vector<1x1x2xf32>
    %824 = arith.addf %822, %823 : vector<1x1x2xf32>
    %825 = arith.mulf %57, %805 : vector<1x1x2xf32>
    %826 = arith.addf %824, %825 : vector<1x1x2xf32>
    %827 = arith.mulf %50, %802 : vector<1x1x2xf32>
    %828 = arith.mulf %54, %803 : vector<1x1x2xf32>
    %829 = arith.addf %827, %828 : vector<1x1x2xf32>
    %830 = arith.mulf %57, %804 : vector<1x1x2xf32>
    %831 = arith.addf %829, %830 : vector<1x1x2xf32>
    %832 = arith.mulf %87, %805 : vector<1x1x2xf32>
    %833 = arith.addf %831, %832 : vector<1x1x2xf32>
    %834 = arith.mulf %812, %812 : vector<1x1x2xf32>
    %835 = arith.mulf %819, %819 : vector<1x1x2xf32>
    %836 = arith.addf %834, %835 : vector<1x1x2xf32>
    %837 = arith.mulf %826, %826 : vector<1x1x2xf32>
    %838 = arith.addf %836, %837 : vector<1x1x2xf32>
    %839 = arith.mulf %833, %833 : vector<1x1x2xf32>
    %840 = arith.addf %838, %839 : vector<1x1x2xf32>
    %cst_35 = arith.constant 1.000000e-30 : f32
    %841 = vector.broadcast %cst_35 : f32 to vector<1x1x2xf32>
    %842 = arith.addf %840, %841 : vector<1x1x2xf32>
    %843 = math.rsqrt %842 : vector<1x1x2xf32>
    %844 = arith.mulf %812, %843 : vector<1x1x2xf32>
    %845 = arith.mulf %819, %843 : vector<1x1x2xf32>
    %846 = arith.mulf %826, %843 : vector<1x1x2xf32>
    %847 = arith.mulf %833, %843 : vector<1x1x2xf32>
    %848 = arith.mulf %84, %844 : vector<1x1x2xf32>
    %849 = arith.mulf %48, %845 : vector<1x1x2xf32>
    %850 = arith.addf %848, %849 : vector<1x1x2xf32>
    %851 = arith.mulf %49, %846 : vector<1x1x2xf32>
    %852 = arith.addf %850, %851 : vector<1x1x2xf32>
    %853 = arith.mulf %50, %847 : vector<1x1x2xf32>
    %854 = arith.addf %852, %853 : vector<1x1x2xf32>
    %855 = arith.mulf %48, %844 : vector<1x1x2xf32>
    %856 = arith.mulf %85, %845 : vector<1x1x2xf32>
    %857 = arith.addf %855, %856 : vector<1x1x2xf32>
    %858 = arith.mulf %53, %846 : vector<1x1x2xf32>
    %859 = arith.addf %857, %858 : vector<1x1x2xf32>
    %860 = arith.mulf %54, %847 : vector<1x1x2xf32>
    %861 = arith.addf %859, %860 : vector<1x1x2xf32>
    %862 = arith.mulf %49, %844 : vector<1x1x2xf32>
    %863 = arith.mulf %53, %845 : vector<1x1x2xf32>
    %864 = arith.addf %862, %863 : vector<1x1x2xf32>
    %865 = arith.mulf %86, %846 : vector<1x1x2xf32>
    %866 = arith.addf %864, %865 : vector<1x1x2xf32>
    %867 = arith.mulf %57, %847 : vector<1x1x2xf32>
    %868 = arith.addf %866, %867 : vector<1x1x2xf32>
    %869 = arith.mulf %50, %844 : vector<1x1x2xf32>
    %870 = arith.mulf %54, %845 : vector<1x1x2xf32>
    %871 = arith.addf %869, %870 : vector<1x1x2xf32>
    %872 = arith.mulf %57, %846 : vector<1x1x2xf32>
    %873 = arith.addf %871, %872 : vector<1x1x2xf32>
    %874 = arith.mulf %87, %847 : vector<1x1x2xf32>
    %875 = arith.addf %873, %874 : vector<1x1x2xf32>
    %876 = arith.mulf %854, %854 : vector<1x1x2xf32>
    %877 = arith.mulf %861, %861 : vector<1x1x2xf32>
    %878 = arith.addf %876, %877 : vector<1x1x2xf32>
    %879 = arith.mulf %868, %868 : vector<1x1x2xf32>
    %880 = arith.addf %878, %879 : vector<1x1x2xf32>
    %881 = arith.mulf %875, %875 : vector<1x1x2xf32>
    %882 = arith.addf %880, %881 : vector<1x1x2xf32>
    %cst_36 = arith.constant 1.000000e-30 : f32
    %883 = vector.broadcast %cst_36 : f32 to vector<1x1x2xf32>
    %884 = arith.addf %882, %883 : vector<1x1x2xf32>
    %885 = math.rsqrt %884 : vector<1x1x2xf32>
    %886 = arith.mulf %854, %885 : vector<1x1x2xf32>
    %887 = arith.mulf %861, %885 : vector<1x1x2xf32>
    %888 = arith.mulf %868, %885 : vector<1x1x2xf32>
    %889 = arith.mulf %875, %885 : vector<1x1x2xf32>
    %890 = arith.mulf %84, %886 : vector<1x1x2xf32>
    %891 = arith.mulf %48, %887 : vector<1x1x2xf32>
    %892 = arith.addf %890, %891 : vector<1x1x2xf32>
    %893 = arith.mulf %49, %888 : vector<1x1x2xf32>
    %894 = arith.addf %892, %893 : vector<1x1x2xf32>
    %895 = arith.mulf %50, %889 : vector<1x1x2xf32>
    %896 = arith.addf %894, %895 : vector<1x1x2xf32>
    %897 = arith.mulf %48, %886 : vector<1x1x2xf32>
    %898 = arith.mulf %85, %887 : vector<1x1x2xf32>
    %899 = arith.addf %897, %898 : vector<1x1x2xf32>
    %900 = arith.mulf %53, %888 : vector<1x1x2xf32>
    %901 = arith.addf %899, %900 : vector<1x1x2xf32>
    %902 = arith.mulf %54, %889 : vector<1x1x2xf32>
    %903 = arith.addf %901, %902 : vector<1x1x2xf32>
    %904 = arith.mulf %49, %886 : vector<1x1x2xf32>
    %905 = arith.mulf %53, %887 : vector<1x1x2xf32>
    %906 = arith.addf %904, %905 : vector<1x1x2xf32>
    %907 = arith.mulf %86, %888 : vector<1x1x2xf32>
    %908 = arith.addf %906, %907 : vector<1x1x2xf32>
    %909 = arith.mulf %57, %889 : vector<1x1x2xf32>
    %910 = arith.addf %908, %909 : vector<1x1x2xf32>
    %911 = arith.mulf %50, %886 : vector<1x1x2xf32>
    %912 = arith.mulf %54, %887 : vector<1x1x2xf32>
    %913 = arith.addf %911, %912 : vector<1x1x2xf32>
    %914 = arith.mulf %57, %888 : vector<1x1x2xf32>
    %915 = arith.addf %913, %914 : vector<1x1x2xf32>
    %916 = arith.mulf %87, %889 : vector<1x1x2xf32>
    %917 = arith.addf %915, %916 : vector<1x1x2xf32>
    %918 = arith.mulf %896, %896 : vector<1x1x2xf32>
    %919 = arith.mulf %903, %903 : vector<1x1x2xf32>
    %920 = arith.addf %918, %919 : vector<1x1x2xf32>
    %921 = arith.mulf %910, %910 : vector<1x1x2xf32>
    %922 = arith.addf %920, %921 : vector<1x1x2xf32>
    %923 = arith.mulf %917, %917 : vector<1x1x2xf32>
    %924 = arith.addf %922, %923 : vector<1x1x2xf32>
    %cst_37 = arith.constant 1.000000e-30 : f32
    %925 = vector.broadcast %cst_37 : f32 to vector<1x1x2xf32>
    %926 = arith.addf %924, %925 : vector<1x1x2xf32>
    %927 = math.rsqrt %926 : vector<1x1x2xf32>
    %928 = arith.mulf %896, %927 : vector<1x1x2xf32>
    %929 = arith.mulf %903, %927 : vector<1x1x2xf32>
    %930 = arith.mulf %910, %927 : vector<1x1x2xf32>
    %931 = arith.mulf %917, %927 : vector<1x1x2xf32>
    %932 = arith.mulf %84, %928 : vector<1x1x2xf32>
    %933 = arith.mulf %48, %929 : vector<1x1x2xf32>
    %934 = arith.addf %932, %933 : vector<1x1x2xf32>
    %935 = arith.mulf %49, %930 : vector<1x1x2xf32>
    %936 = arith.addf %934, %935 : vector<1x1x2xf32>
    %937 = arith.mulf %50, %931 : vector<1x1x2xf32>
    %938 = arith.addf %936, %937 : vector<1x1x2xf32>
    %939 = arith.mulf %48, %928 : vector<1x1x2xf32>
    %940 = arith.mulf %85, %929 : vector<1x1x2xf32>
    %941 = arith.addf %939, %940 : vector<1x1x2xf32>
    %942 = arith.mulf %53, %930 : vector<1x1x2xf32>
    %943 = arith.addf %941, %942 : vector<1x1x2xf32>
    %944 = arith.mulf %54, %931 : vector<1x1x2xf32>
    %945 = arith.addf %943, %944 : vector<1x1x2xf32>
    %946 = arith.mulf %49, %928 : vector<1x1x2xf32>
    %947 = arith.mulf %53, %929 : vector<1x1x2xf32>
    %948 = arith.addf %946, %947 : vector<1x1x2xf32>
    %949 = arith.mulf %86, %930 : vector<1x1x2xf32>
    %950 = arith.addf %948, %949 : vector<1x1x2xf32>
    %951 = arith.mulf %57, %931 : vector<1x1x2xf32>
    %952 = arith.addf %950, %951 : vector<1x1x2xf32>
    %953 = arith.mulf %50, %928 : vector<1x1x2xf32>
    %954 = arith.mulf %54, %929 : vector<1x1x2xf32>
    %955 = arith.addf %953, %954 : vector<1x1x2xf32>
    %956 = arith.mulf %57, %930 : vector<1x1x2xf32>
    %957 = arith.addf %955, %956 : vector<1x1x2xf32>
    %958 = arith.mulf %87, %931 : vector<1x1x2xf32>
    %959 = arith.addf %957, %958 : vector<1x1x2xf32>
    %960 = arith.mulf %938, %938 : vector<1x1x2xf32>
    %961 = arith.mulf %945, %945 : vector<1x1x2xf32>
    %962 = arith.addf %960, %961 : vector<1x1x2xf32>
    %963 = arith.mulf %952, %952 : vector<1x1x2xf32>
    %964 = arith.addf %962, %963 : vector<1x1x2xf32>
    %965 = arith.mulf %959, %959 : vector<1x1x2xf32>
    %966 = arith.addf %964, %965 : vector<1x1x2xf32>
    %cst_38 = arith.constant 1.000000e-30 : f32
    %967 = vector.broadcast %cst_38 : f32 to vector<1x1x2xf32>
    %968 = arith.addf %966, %967 : vector<1x1x2xf32>
    %969 = math.rsqrt %968 : vector<1x1x2xf32>
    %970 = arith.mulf %938, %969 : vector<1x1x2xf32>
    %971 = arith.mulf %945, %969 : vector<1x1x2xf32>
    %972 = arith.mulf %952, %969 : vector<1x1x2xf32>
    %973 = arith.mulf %959, %969 : vector<1x1x2xf32>
    %974 = arith.mulf %84, %970 : vector<1x1x2xf32>
    %975 = arith.mulf %48, %971 : vector<1x1x2xf32>
    %976 = arith.addf %974, %975 : vector<1x1x2xf32>
    %977 = arith.mulf %49, %972 : vector<1x1x2xf32>
    %978 = arith.addf %976, %977 : vector<1x1x2xf32>
    %979 = arith.mulf %50, %973 : vector<1x1x2xf32>
    %980 = arith.addf %978, %979 : vector<1x1x2xf32>
    %981 = arith.mulf %48, %970 : vector<1x1x2xf32>
    %982 = arith.mulf %85, %971 : vector<1x1x2xf32>
    %983 = arith.addf %981, %982 : vector<1x1x2xf32>
    %984 = arith.mulf %53, %972 : vector<1x1x2xf32>
    %985 = arith.addf %983, %984 : vector<1x1x2xf32>
    %986 = arith.mulf %54, %973 : vector<1x1x2xf32>
    %987 = arith.addf %985, %986 : vector<1x1x2xf32>
    %988 = arith.mulf %49, %970 : vector<1x1x2xf32>
    %989 = arith.mulf %53, %971 : vector<1x1x2xf32>
    %990 = arith.addf %988, %989 : vector<1x1x2xf32>
    %991 = arith.mulf %86, %972 : vector<1x1x2xf32>
    %992 = arith.addf %990, %991 : vector<1x1x2xf32>
    %993 = arith.mulf %57, %973 : vector<1x1x2xf32>
    %994 = arith.addf %992, %993 : vector<1x1x2xf32>
    %995 = arith.mulf %50, %970 : vector<1x1x2xf32>
    %996 = arith.mulf %54, %971 : vector<1x1x2xf32>
    %997 = arith.addf %995, %996 : vector<1x1x2xf32>
    %998 = arith.mulf %57, %972 : vector<1x1x2xf32>
    %999 = arith.addf %997, %998 : vector<1x1x2xf32>
    %1000 = arith.mulf %87, %973 : vector<1x1x2xf32>
    %1001 = arith.addf %999, %1000 : vector<1x1x2xf32>
    %1002 = arith.mulf %980, %980 : vector<1x1x2xf32>
    %1003 = arith.mulf %987, %987 : vector<1x1x2xf32>
    %1004 = arith.addf %1002, %1003 : vector<1x1x2xf32>
    %1005 = arith.mulf %994, %994 : vector<1x1x2xf32>
    %1006 = arith.addf %1004, %1005 : vector<1x1x2xf32>
    %1007 = arith.mulf %1001, %1001 : vector<1x1x2xf32>
    %1008 = arith.addf %1006, %1007 : vector<1x1x2xf32>
    %cst_39 = arith.constant 1.000000e-30 : f32
    %1009 = vector.broadcast %cst_39 : f32 to vector<1x1x2xf32>
    %1010 = arith.addf %1008, %1009 : vector<1x1x2xf32>
    %1011 = math.rsqrt %1010 : vector<1x1x2xf32>
    %1012 = arith.mulf %980, %1011 : vector<1x1x2xf32>
    %1013 = arith.mulf %987, %1011 : vector<1x1x2xf32>
    %1014 = arith.mulf %994, %1011 : vector<1x1x2xf32>
    %1015 = arith.mulf %1001, %1011 : vector<1x1x2xf32>
    %1016 = arith.mulf %84, %1012 : vector<1x1x2xf32>
    %1017 = arith.mulf %48, %1013 : vector<1x1x2xf32>
    %1018 = arith.addf %1016, %1017 : vector<1x1x2xf32>
    %1019 = arith.mulf %49, %1014 : vector<1x1x2xf32>
    %1020 = arith.addf %1018, %1019 : vector<1x1x2xf32>
    %1021 = arith.mulf %50, %1015 : vector<1x1x2xf32>
    %1022 = arith.addf %1020, %1021 : vector<1x1x2xf32>
    %1023 = arith.mulf %48, %1012 : vector<1x1x2xf32>
    %1024 = arith.mulf %85, %1013 : vector<1x1x2xf32>
    %1025 = arith.addf %1023, %1024 : vector<1x1x2xf32>
    %1026 = arith.mulf %53, %1014 : vector<1x1x2xf32>
    %1027 = arith.addf %1025, %1026 : vector<1x1x2xf32>
    %1028 = arith.mulf %54, %1015 : vector<1x1x2xf32>
    %1029 = arith.addf %1027, %1028 : vector<1x1x2xf32>
    %1030 = arith.mulf %49, %1012 : vector<1x1x2xf32>
    %1031 = arith.mulf %53, %1013 : vector<1x1x2xf32>
    %1032 = arith.addf %1030, %1031 : vector<1x1x2xf32>
    %1033 = arith.mulf %86, %1014 : vector<1x1x2xf32>
    %1034 = arith.addf %1032, %1033 : vector<1x1x2xf32>
    %1035 = arith.mulf %57, %1015 : vector<1x1x2xf32>
    %1036 = arith.addf %1034, %1035 : vector<1x1x2xf32>
    %1037 = arith.mulf %50, %1012 : vector<1x1x2xf32>
    %1038 = arith.mulf %54, %1013 : vector<1x1x2xf32>
    %1039 = arith.addf %1037, %1038 : vector<1x1x2xf32>
    %1040 = arith.mulf %57, %1014 : vector<1x1x2xf32>
    %1041 = arith.addf %1039, %1040 : vector<1x1x2xf32>
    %1042 = arith.mulf %87, %1015 : vector<1x1x2xf32>
    %1043 = arith.addf %1041, %1042 : vector<1x1x2xf32>
    %1044 = arith.mulf %1022, %1022 : vector<1x1x2xf32>
    %1045 = arith.mulf %1029, %1029 : vector<1x1x2xf32>
    %1046 = arith.addf %1044, %1045 : vector<1x1x2xf32>
    %1047 = arith.mulf %1036, %1036 : vector<1x1x2xf32>
    %1048 = arith.addf %1046, %1047 : vector<1x1x2xf32>
    %1049 = arith.mulf %1043, %1043 : vector<1x1x2xf32>
    %1050 = arith.addf %1048, %1049 : vector<1x1x2xf32>
    %cst_40 = arith.constant 1.000000e-30 : f32
    %1051 = vector.broadcast %cst_40 : f32 to vector<1x1x2xf32>
    %1052 = arith.addf %1050, %1051 : vector<1x1x2xf32>
    %1053 = math.rsqrt %1052 : vector<1x1x2xf32>
    %1054 = arith.mulf %1022, %1053 : vector<1x1x2xf32>
    %1055 = arith.mulf %1029, %1053 : vector<1x1x2xf32>
    %1056 = arith.mulf %1036, %1053 : vector<1x1x2xf32>
    %1057 = arith.mulf %1043, %1053 : vector<1x1x2xf32>
    %1058 = arith.mulf %84, %1054 : vector<1x1x2xf32>
    %1059 = arith.mulf %48, %1055 : vector<1x1x2xf32>
    %1060 = arith.addf %1058, %1059 : vector<1x1x2xf32>
    %1061 = arith.mulf %49, %1056 : vector<1x1x2xf32>
    %1062 = arith.addf %1060, %1061 : vector<1x1x2xf32>
    %1063 = arith.mulf %50, %1057 : vector<1x1x2xf32>
    %1064 = arith.addf %1062, %1063 : vector<1x1x2xf32>
    %1065 = arith.mulf %48, %1054 : vector<1x1x2xf32>
    %1066 = arith.mulf %85, %1055 : vector<1x1x2xf32>
    %1067 = arith.addf %1065, %1066 : vector<1x1x2xf32>
    %1068 = arith.mulf %53, %1056 : vector<1x1x2xf32>
    %1069 = arith.addf %1067, %1068 : vector<1x1x2xf32>
    %1070 = arith.mulf %54, %1057 : vector<1x1x2xf32>
    %1071 = arith.addf %1069, %1070 : vector<1x1x2xf32>
    %1072 = arith.mulf %49, %1054 : vector<1x1x2xf32>
    %1073 = arith.mulf %53, %1055 : vector<1x1x2xf32>
    %1074 = arith.addf %1072, %1073 : vector<1x1x2xf32>
    %1075 = arith.mulf %86, %1056 : vector<1x1x2xf32>
    %1076 = arith.addf %1074, %1075 : vector<1x1x2xf32>
    %1077 = arith.mulf %57, %1057 : vector<1x1x2xf32>
    %1078 = arith.addf %1076, %1077 : vector<1x1x2xf32>
    %1079 = arith.mulf %50, %1054 : vector<1x1x2xf32>
    %1080 = arith.mulf %54, %1055 : vector<1x1x2xf32>
    %1081 = arith.addf %1079, %1080 : vector<1x1x2xf32>
    %1082 = arith.mulf %57, %1056 : vector<1x1x2xf32>
    %1083 = arith.addf %1081, %1082 : vector<1x1x2xf32>
    %1084 = arith.mulf %87, %1057 : vector<1x1x2xf32>
    %1085 = arith.addf %1083, %1084 : vector<1x1x2xf32>
    %1086 = arith.mulf %1064, %1064 : vector<1x1x2xf32>
    %1087 = arith.mulf %1071, %1071 : vector<1x1x2xf32>
    %1088 = arith.addf %1086, %1087 : vector<1x1x2xf32>
    %1089 = arith.mulf %1078, %1078 : vector<1x1x2xf32>
    %1090 = arith.addf %1088, %1089 : vector<1x1x2xf32>
    %1091 = arith.mulf %1085, %1085 : vector<1x1x2xf32>
    %1092 = arith.addf %1090, %1091 : vector<1x1x2xf32>
    %cst_41 = arith.constant 1.000000e-30 : f32
    %1093 = vector.broadcast %cst_41 : f32 to vector<1x1x2xf32>
    %1094 = arith.addf %1092, %1093 : vector<1x1x2xf32>
    %1095 = math.rsqrt %1094 : vector<1x1x2xf32>
    %1096 = arith.mulf %1064, %1095 : vector<1x1x2xf32>
    %1097 = arith.mulf %1071, %1095 : vector<1x1x2xf32>
    %1098 = arith.mulf %1078, %1095 : vector<1x1x2xf32>
    %1099 = arith.mulf %1085, %1095 : vector<1x1x2xf32>
    %1100 = arith.mulf %84, %1096 : vector<1x1x2xf32>
    %1101 = arith.mulf %48, %1097 : vector<1x1x2xf32>
    %1102 = arith.addf %1100, %1101 : vector<1x1x2xf32>
    %1103 = arith.mulf %49, %1098 : vector<1x1x2xf32>
    %1104 = arith.addf %1102, %1103 : vector<1x1x2xf32>
    %1105 = arith.mulf %50, %1099 : vector<1x1x2xf32>
    %1106 = arith.addf %1104, %1105 : vector<1x1x2xf32>
    %1107 = arith.mulf %48, %1096 : vector<1x1x2xf32>
    %1108 = arith.mulf %85, %1097 : vector<1x1x2xf32>
    %1109 = arith.addf %1107, %1108 : vector<1x1x2xf32>
    %1110 = arith.mulf %53, %1098 : vector<1x1x2xf32>
    %1111 = arith.addf %1109, %1110 : vector<1x1x2xf32>
    %1112 = arith.mulf %54, %1099 : vector<1x1x2xf32>
    %1113 = arith.addf %1111, %1112 : vector<1x1x2xf32>
    %1114 = arith.mulf %49, %1096 : vector<1x1x2xf32>
    %1115 = arith.mulf %53, %1097 : vector<1x1x2xf32>
    %1116 = arith.addf %1114, %1115 : vector<1x1x2xf32>
    %1117 = arith.mulf %86, %1098 : vector<1x1x2xf32>
    %1118 = arith.addf %1116, %1117 : vector<1x1x2xf32>
    %1119 = arith.mulf %57, %1099 : vector<1x1x2xf32>
    %1120 = arith.addf %1118, %1119 : vector<1x1x2xf32>
    %1121 = arith.mulf %50, %1096 : vector<1x1x2xf32>
    %1122 = arith.mulf %54, %1097 : vector<1x1x2xf32>
    %1123 = arith.addf %1121, %1122 : vector<1x1x2xf32>
    %1124 = arith.mulf %57, %1098 : vector<1x1x2xf32>
    %1125 = arith.addf %1123, %1124 : vector<1x1x2xf32>
    %1126 = arith.mulf %87, %1099 : vector<1x1x2xf32>
    %1127 = arith.addf %1125, %1126 : vector<1x1x2xf32>
    %1128 = arith.mulf %1106, %1106 : vector<1x1x2xf32>
    %1129 = arith.mulf %1113, %1113 : vector<1x1x2xf32>
    %1130 = arith.addf %1128, %1129 : vector<1x1x2xf32>
    %1131 = arith.mulf %1120, %1120 : vector<1x1x2xf32>
    %1132 = arith.addf %1130, %1131 : vector<1x1x2xf32>
    %1133 = arith.mulf %1127, %1127 : vector<1x1x2xf32>
    %1134 = arith.addf %1132, %1133 : vector<1x1x2xf32>
    %cst_42 = arith.constant 1.000000e-30 : f32
    %1135 = vector.broadcast %cst_42 : f32 to vector<1x1x2xf32>
    %1136 = arith.addf %1134, %1135 : vector<1x1x2xf32>
    %1137 = math.rsqrt %1136 : vector<1x1x2xf32>
    %1138 = arith.mulf %1106, %1137 : vector<1x1x2xf32>
    %1139 = arith.mulf %1113, %1137 : vector<1x1x2xf32>
    %1140 = arith.mulf %1120, %1137 : vector<1x1x2xf32>
    %1141 = arith.mulf %1127, %1137 : vector<1x1x2xf32>
    %1142 = arith.mulf %84, %1138 : vector<1x1x2xf32>
    %1143 = arith.mulf %48, %1139 : vector<1x1x2xf32>
    %1144 = arith.addf %1142, %1143 : vector<1x1x2xf32>
    %1145 = arith.mulf %49, %1140 : vector<1x1x2xf32>
    %1146 = arith.addf %1144, %1145 : vector<1x1x2xf32>
    %1147 = arith.mulf %50, %1141 : vector<1x1x2xf32>
    %1148 = arith.addf %1146, %1147 : vector<1x1x2xf32>
    %1149 = arith.mulf %48, %1138 : vector<1x1x2xf32>
    %1150 = arith.mulf %85, %1139 : vector<1x1x2xf32>
    %1151 = arith.addf %1149, %1150 : vector<1x1x2xf32>
    %1152 = arith.mulf %53, %1140 : vector<1x1x2xf32>
    %1153 = arith.addf %1151, %1152 : vector<1x1x2xf32>
    %1154 = arith.mulf %54, %1141 : vector<1x1x2xf32>
    %1155 = arith.addf %1153, %1154 : vector<1x1x2xf32>
    %1156 = arith.mulf %49, %1138 : vector<1x1x2xf32>
    %1157 = arith.mulf %53, %1139 : vector<1x1x2xf32>
    %1158 = arith.addf %1156, %1157 : vector<1x1x2xf32>
    %1159 = arith.mulf %86, %1140 : vector<1x1x2xf32>
    %1160 = arith.addf %1158, %1159 : vector<1x1x2xf32>
    %1161 = arith.mulf %57, %1141 : vector<1x1x2xf32>
    %1162 = arith.addf %1160, %1161 : vector<1x1x2xf32>
    %1163 = arith.mulf %50, %1138 : vector<1x1x2xf32>
    %1164 = arith.mulf %54, %1139 : vector<1x1x2xf32>
    %1165 = arith.addf %1163, %1164 : vector<1x1x2xf32>
    %1166 = arith.mulf %57, %1140 : vector<1x1x2xf32>
    %1167 = arith.addf %1165, %1166 : vector<1x1x2xf32>
    %1168 = arith.mulf %87, %1141 : vector<1x1x2xf32>
    %1169 = arith.addf %1167, %1168 : vector<1x1x2xf32>
    %1170 = arith.mulf %1148, %1148 : vector<1x1x2xf32>
    %1171 = arith.mulf %1155, %1155 : vector<1x1x2xf32>
    %1172 = arith.addf %1170, %1171 : vector<1x1x2xf32>
    %1173 = arith.mulf %1162, %1162 : vector<1x1x2xf32>
    %1174 = arith.addf %1172, %1173 : vector<1x1x2xf32>
    %1175 = arith.mulf %1169, %1169 : vector<1x1x2xf32>
    %1176 = arith.addf %1174, %1175 : vector<1x1x2xf32>
    %cst_43 = arith.constant 1.000000e-30 : f32
    %1177 = vector.broadcast %cst_43 : f32 to vector<1x1x2xf32>
    %1178 = arith.addf %1176, %1177 : vector<1x1x2xf32>
    %1179 = math.rsqrt %1178 : vector<1x1x2xf32>
    %1180 = arith.mulf %1148, %1179 : vector<1x1x2xf32>
    %1181 = arith.mulf %1155, %1179 : vector<1x1x2xf32>
    %1182 = arith.mulf %1162, %1179 : vector<1x1x2xf32>
    %1183 = arith.mulf %1169, %1179 : vector<1x1x2xf32>
    %1184 = arith.mulf %84, %1180 : vector<1x1x2xf32>
    %1185 = arith.mulf %48, %1181 : vector<1x1x2xf32>
    %1186 = arith.addf %1184, %1185 : vector<1x1x2xf32>
    %1187 = arith.mulf %49, %1182 : vector<1x1x2xf32>
    %1188 = arith.addf %1186, %1187 : vector<1x1x2xf32>
    %1189 = arith.mulf %50, %1183 : vector<1x1x2xf32>
    %1190 = arith.addf %1188, %1189 : vector<1x1x2xf32>
    %1191 = arith.mulf %48, %1180 : vector<1x1x2xf32>
    %1192 = arith.mulf %85, %1181 : vector<1x1x2xf32>
    %1193 = arith.addf %1191, %1192 : vector<1x1x2xf32>
    %1194 = arith.mulf %53, %1182 : vector<1x1x2xf32>
    %1195 = arith.addf %1193, %1194 : vector<1x1x2xf32>
    %1196 = arith.mulf %54, %1183 : vector<1x1x2xf32>
    %1197 = arith.addf %1195, %1196 : vector<1x1x2xf32>
    %1198 = arith.mulf %49, %1180 : vector<1x1x2xf32>
    %1199 = arith.mulf %53, %1181 : vector<1x1x2xf32>
    %1200 = arith.addf %1198, %1199 : vector<1x1x2xf32>
    %1201 = arith.mulf %86, %1182 : vector<1x1x2xf32>
    %1202 = arith.addf %1200, %1201 : vector<1x1x2xf32>
    %1203 = arith.mulf %57, %1183 : vector<1x1x2xf32>
    %1204 = arith.addf %1202, %1203 : vector<1x1x2xf32>
    %1205 = arith.mulf %50, %1180 : vector<1x1x2xf32>
    %1206 = arith.mulf %54, %1181 : vector<1x1x2xf32>
    %1207 = arith.addf %1205, %1206 : vector<1x1x2xf32>
    %1208 = arith.mulf %57, %1182 : vector<1x1x2xf32>
    %1209 = arith.addf %1207, %1208 : vector<1x1x2xf32>
    %1210 = arith.mulf %87, %1183 : vector<1x1x2xf32>
    %1211 = arith.addf %1209, %1210 : vector<1x1x2xf32>
    %1212 = arith.mulf %1190, %1190 : vector<1x1x2xf32>
    %1213 = arith.mulf %1197, %1197 : vector<1x1x2xf32>
    %1214 = arith.addf %1212, %1213 : vector<1x1x2xf32>
    %1215 = arith.mulf %1204, %1204 : vector<1x1x2xf32>
    %1216 = arith.addf %1214, %1215 : vector<1x1x2xf32>
    %1217 = arith.mulf %1211, %1211 : vector<1x1x2xf32>
    %1218 = arith.addf %1216, %1217 : vector<1x1x2xf32>
    %cst_44 = arith.constant 1.000000e-30 : f32
    %1219 = vector.broadcast %cst_44 : f32 to vector<1x1x2xf32>
    %1220 = arith.addf %1218, %1219 : vector<1x1x2xf32>
    %1221 = math.rsqrt %1220 : vector<1x1x2xf32>
    %1222 = arith.mulf %1190, %1221 : vector<1x1x2xf32>
    %1223 = arith.mulf %1197, %1221 : vector<1x1x2xf32>
    %1224 = arith.mulf %1204, %1221 : vector<1x1x2xf32>
    %1225 = arith.mulf %1211, %1221 : vector<1x1x2xf32>
    %1226 = arith.mulf %84, %1222 : vector<1x1x2xf32>
    %1227 = arith.mulf %48, %1223 : vector<1x1x2xf32>
    %1228 = arith.addf %1226, %1227 : vector<1x1x2xf32>
    %1229 = arith.mulf %49, %1224 : vector<1x1x2xf32>
    %1230 = arith.addf %1228, %1229 : vector<1x1x2xf32>
    %1231 = arith.mulf %50, %1225 : vector<1x1x2xf32>
    %1232 = arith.addf %1230, %1231 : vector<1x1x2xf32>
    %1233 = arith.mulf %48, %1222 : vector<1x1x2xf32>
    %1234 = arith.mulf %85, %1223 : vector<1x1x2xf32>
    %1235 = arith.addf %1233, %1234 : vector<1x1x2xf32>
    %1236 = arith.mulf %53, %1224 : vector<1x1x2xf32>
    %1237 = arith.addf %1235, %1236 : vector<1x1x2xf32>
    %1238 = arith.mulf %54, %1225 : vector<1x1x2xf32>
    %1239 = arith.addf %1237, %1238 : vector<1x1x2xf32>
    %1240 = arith.mulf %49, %1222 : vector<1x1x2xf32>
    %1241 = arith.mulf %53, %1223 : vector<1x1x2xf32>
    %1242 = arith.addf %1240, %1241 : vector<1x1x2xf32>
    %1243 = arith.mulf %86, %1224 : vector<1x1x2xf32>
    %1244 = arith.addf %1242, %1243 : vector<1x1x2xf32>
    %1245 = arith.mulf %57, %1225 : vector<1x1x2xf32>
    %1246 = arith.addf %1244, %1245 : vector<1x1x2xf32>
    %1247 = arith.mulf %50, %1222 : vector<1x1x2xf32>
    %1248 = arith.mulf %54, %1223 : vector<1x1x2xf32>
    %1249 = arith.addf %1247, %1248 : vector<1x1x2xf32>
    %1250 = arith.mulf %57, %1224 : vector<1x1x2xf32>
    %1251 = arith.addf %1249, %1250 : vector<1x1x2xf32>
    %1252 = arith.mulf %87, %1225 : vector<1x1x2xf32>
    %1253 = arith.addf %1251, %1252 : vector<1x1x2xf32>
    %1254 = arith.mulf %1232, %1232 : vector<1x1x2xf32>
    %1255 = arith.mulf %1239, %1239 : vector<1x1x2xf32>
    %1256 = arith.addf %1254, %1255 : vector<1x1x2xf32>
    %1257 = arith.mulf %1246, %1246 : vector<1x1x2xf32>
    %1258 = arith.addf %1256, %1257 : vector<1x1x2xf32>
    %1259 = arith.mulf %1253, %1253 : vector<1x1x2xf32>
    %1260 = arith.addf %1258, %1259 : vector<1x1x2xf32>
    %cst_45 = arith.constant 1.000000e-30 : f32
    %1261 = vector.broadcast %cst_45 : f32 to vector<1x1x2xf32>
    %1262 = arith.addf %1260, %1261 : vector<1x1x2xf32>
    %1263 = math.rsqrt %1262 : vector<1x1x2xf32>
    %1264 = arith.mulf %1232, %1263 : vector<1x1x2xf32>
    %1265 = arith.mulf %1239, %1263 : vector<1x1x2xf32>
    %1266 = arith.mulf %1246, %1263 : vector<1x1x2xf32>
    %1267 = arith.mulf %1253, %1263 : vector<1x1x2xf32>
    %1268 = arith.mulf %84, %1264 : vector<1x1x2xf32>
    %1269 = arith.mulf %48, %1265 : vector<1x1x2xf32>
    %1270 = arith.addf %1268, %1269 : vector<1x1x2xf32>
    %1271 = arith.mulf %49, %1266 : vector<1x1x2xf32>
    %1272 = arith.addf %1270, %1271 : vector<1x1x2xf32>
    %1273 = arith.mulf %50, %1267 : vector<1x1x2xf32>
    %1274 = arith.addf %1272, %1273 : vector<1x1x2xf32>
    %1275 = arith.mulf %48, %1264 : vector<1x1x2xf32>
    %1276 = arith.mulf %85, %1265 : vector<1x1x2xf32>
    %1277 = arith.addf %1275, %1276 : vector<1x1x2xf32>
    %1278 = arith.mulf %53, %1266 : vector<1x1x2xf32>
    %1279 = arith.addf %1277, %1278 : vector<1x1x2xf32>
    %1280 = arith.mulf %54, %1267 : vector<1x1x2xf32>
    %1281 = arith.addf %1279, %1280 : vector<1x1x2xf32>
    %1282 = arith.mulf %49, %1264 : vector<1x1x2xf32>
    %1283 = arith.mulf %53, %1265 : vector<1x1x2xf32>
    %1284 = arith.addf %1282, %1283 : vector<1x1x2xf32>
    %1285 = arith.mulf %86, %1266 : vector<1x1x2xf32>
    %1286 = arith.addf %1284, %1285 : vector<1x1x2xf32>
    %1287 = arith.mulf %57, %1267 : vector<1x1x2xf32>
    %1288 = arith.addf %1286, %1287 : vector<1x1x2xf32>
    %1289 = arith.mulf %50, %1264 : vector<1x1x2xf32>
    %1290 = arith.mulf %54, %1265 : vector<1x1x2xf32>
    %1291 = arith.addf %1289, %1290 : vector<1x1x2xf32>
    %1292 = arith.mulf %57, %1266 : vector<1x1x2xf32>
    %1293 = arith.addf %1291, %1292 : vector<1x1x2xf32>
    %1294 = arith.mulf %87, %1267 : vector<1x1x2xf32>
    %1295 = arith.addf %1293, %1294 : vector<1x1x2xf32>
    %1296 = arith.mulf %1274, %1274 : vector<1x1x2xf32>
    %1297 = arith.mulf %1281, %1281 : vector<1x1x2xf32>
    %1298 = arith.addf %1296, %1297 : vector<1x1x2xf32>
    %1299 = arith.mulf %1288, %1288 : vector<1x1x2xf32>
    %1300 = arith.addf %1298, %1299 : vector<1x1x2xf32>
    %1301 = arith.mulf %1295, %1295 : vector<1x1x2xf32>
    %1302 = arith.addf %1300, %1301 : vector<1x1x2xf32>
    %cst_46 = arith.constant 1.000000e-30 : f32
    %1303 = vector.broadcast %cst_46 : f32 to vector<1x1x2xf32>
    %1304 = arith.addf %1302, %1303 : vector<1x1x2xf32>
    %1305 = math.rsqrt %1304 : vector<1x1x2xf32>
    %1306 = arith.mulf %1274, %1305 : vector<1x1x2xf32>
    %1307 = arith.mulf %1281, %1305 : vector<1x1x2xf32>
    %1308 = arith.mulf %1288, %1305 : vector<1x1x2xf32>
    %1309 = arith.mulf %1295, %1305 : vector<1x1x2xf32>
    %1310 = arith.mulf %84, %1306 : vector<1x1x2xf32>
    %1311 = arith.mulf %48, %1307 : vector<1x1x2xf32>
    %1312 = arith.addf %1310, %1311 : vector<1x1x2xf32>
    %1313 = arith.mulf %49, %1308 : vector<1x1x2xf32>
    %1314 = arith.addf %1312, %1313 : vector<1x1x2xf32>
    %1315 = arith.mulf %50, %1309 : vector<1x1x2xf32>
    %1316 = arith.addf %1314, %1315 : vector<1x1x2xf32>
    %1317 = arith.mulf %48, %1306 : vector<1x1x2xf32>
    %1318 = arith.mulf %85, %1307 : vector<1x1x2xf32>
    %1319 = arith.addf %1317, %1318 : vector<1x1x2xf32>
    %1320 = arith.mulf %53, %1308 : vector<1x1x2xf32>
    %1321 = arith.addf %1319, %1320 : vector<1x1x2xf32>
    %1322 = arith.mulf %54, %1309 : vector<1x1x2xf32>
    %1323 = arith.addf %1321, %1322 : vector<1x1x2xf32>
    %1324 = arith.mulf %49, %1306 : vector<1x1x2xf32>
    %1325 = arith.mulf %53, %1307 : vector<1x1x2xf32>
    %1326 = arith.addf %1324, %1325 : vector<1x1x2xf32>
    %1327 = arith.mulf %86, %1308 : vector<1x1x2xf32>
    %1328 = arith.addf %1326, %1327 : vector<1x1x2xf32>
    %1329 = arith.mulf %57, %1309 : vector<1x1x2xf32>
    %1330 = arith.addf %1328, %1329 : vector<1x1x2xf32>
    %1331 = arith.mulf %50, %1306 : vector<1x1x2xf32>
    %1332 = arith.mulf %54, %1307 : vector<1x1x2xf32>
    %1333 = arith.addf %1331, %1332 : vector<1x1x2xf32>
    %1334 = arith.mulf %57, %1308 : vector<1x1x2xf32>
    %1335 = arith.addf %1333, %1334 : vector<1x1x2xf32>
    %1336 = arith.mulf %87, %1309 : vector<1x1x2xf32>
    %1337 = arith.addf %1335, %1336 : vector<1x1x2xf32>
    %1338 = arith.mulf %1316, %1316 : vector<1x1x2xf32>
    %1339 = arith.mulf %1323, %1323 : vector<1x1x2xf32>
    %1340 = arith.addf %1338, %1339 : vector<1x1x2xf32>
    %1341 = arith.mulf %1330, %1330 : vector<1x1x2xf32>
    %1342 = arith.addf %1340, %1341 : vector<1x1x2xf32>
    %1343 = arith.mulf %1337, %1337 : vector<1x1x2xf32>
    %1344 = arith.addf %1342, %1343 : vector<1x1x2xf32>
    %cst_47 = arith.constant 1.000000e-30 : f32
    %1345 = vector.broadcast %cst_47 : f32 to vector<1x1x2xf32>
    %1346 = arith.addf %1344, %1345 : vector<1x1x2xf32>
    %1347 = math.rsqrt %1346 : vector<1x1x2xf32>
    %1348 = arith.mulf %1316, %1347 : vector<1x1x2xf32>
    %1349 = arith.mulf %1323, %1347 : vector<1x1x2xf32>
    %1350 = arith.mulf %1330, %1347 : vector<1x1x2xf32>
    %1351 = arith.mulf %1337, %1347 : vector<1x1x2xf32>
    %1352 = arith.mulf %84, %1348 : vector<1x1x2xf32>
    %1353 = arith.mulf %48, %1349 : vector<1x1x2xf32>
    %1354 = arith.addf %1352, %1353 : vector<1x1x2xf32>
    %1355 = arith.mulf %49, %1350 : vector<1x1x2xf32>
    %1356 = arith.addf %1354, %1355 : vector<1x1x2xf32>
    %1357 = arith.mulf %50, %1351 : vector<1x1x2xf32>
    %1358 = arith.addf %1356, %1357 : vector<1x1x2xf32>
    %1359 = arith.mulf %48, %1348 : vector<1x1x2xf32>
    %1360 = arith.mulf %85, %1349 : vector<1x1x2xf32>
    %1361 = arith.addf %1359, %1360 : vector<1x1x2xf32>
    %1362 = arith.mulf %53, %1350 : vector<1x1x2xf32>
    %1363 = arith.addf %1361, %1362 : vector<1x1x2xf32>
    %1364 = arith.mulf %54, %1351 : vector<1x1x2xf32>
    %1365 = arith.addf %1363, %1364 : vector<1x1x2xf32>
    %1366 = arith.mulf %49, %1348 : vector<1x1x2xf32>
    %1367 = arith.mulf %53, %1349 : vector<1x1x2xf32>
    %1368 = arith.addf %1366, %1367 : vector<1x1x2xf32>
    %1369 = arith.mulf %86, %1350 : vector<1x1x2xf32>
    %1370 = arith.addf %1368, %1369 : vector<1x1x2xf32>
    %1371 = arith.mulf %57, %1351 : vector<1x1x2xf32>
    %1372 = arith.addf %1370, %1371 : vector<1x1x2xf32>
    %1373 = arith.mulf %50, %1348 : vector<1x1x2xf32>
    %1374 = arith.mulf %54, %1349 : vector<1x1x2xf32>
    %1375 = arith.addf %1373, %1374 : vector<1x1x2xf32>
    %1376 = arith.mulf %57, %1350 : vector<1x1x2xf32>
    %1377 = arith.addf %1375, %1376 : vector<1x1x2xf32>
    %1378 = arith.mulf %87, %1351 : vector<1x1x2xf32>
    %1379 = arith.addf %1377, %1378 : vector<1x1x2xf32>
    %1380 = arith.mulf %1358, %1358 : vector<1x1x2xf32>
    %1381 = arith.mulf %1365, %1365 : vector<1x1x2xf32>
    %1382 = arith.addf %1380, %1381 : vector<1x1x2xf32>
    %1383 = arith.mulf %1372, %1372 : vector<1x1x2xf32>
    %1384 = arith.addf %1382, %1383 : vector<1x1x2xf32>
    %1385 = arith.mulf %1379, %1379 : vector<1x1x2xf32>
    %1386 = arith.addf %1384, %1385 : vector<1x1x2xf32>
    %cst_48 = arith.constant 1.000000e-30 : f32
    %1387 = vector.broadcast %cst_48 : f32 to vector<1x1x2xf32>
    %1388 = arith.addf %1386, %1387 : vector<1x1x2xf32>
    %1389 = math.rsqrt %1388 : vector<1x1x2xf32>
    %1390 = arith.mulf %1358, %1389 : vector<1x1x2xf32>
    %1391 = arith.mulf %1365, %1389 : vector<1x1x2xf32>
    %1392 = arith.mulf %1372, %1389 : vector<1x1x2xf32>
    %1393 = arith.mulf %1379, %1389 : vector<1x1x2xf32>
    %1394 = arith.mulf %84, %1390 : vector<1x1x2xf32>
    %1395 = arith.mulf %48, %1391 : vector<1x1x2xf32>
    %1396 = arith.addf %1394, %1395 : vector<1x1x2xf32>
    %1397 = arith.mulf %49, %1392 : vector<1x1x2xf32>
    %1398 = arith.addf %1396, %1397 : vector<1x1x2xf32>
    %1399 = arith.mulf %50, %1393 : vector<1x1x2xf32>
    %1400 = arith.addf %1398, %1399 : vector<1x1x2xf32>
    %1401 = arith.mulf %48, %1390 : vector<1x1x2xf32>
    %1402 = arith.mulf %85, %1391 : vector<1x1x2xf32>
    %1403 = arith.addf %1401, %1402 : vector<1x1x2xf32>
    %1404 = arith.mulf %53, %1392 : vector<1x1x2xf32>
    %1405 = arith.addf %1403, %1404 : vector<1x1x2xf32>
    %1406 = arith.mulf %54, %1393 : vector<1x1x2xf32>
    %1407 = arith.addf %1405, %1406 : vector<1x1x2xf32>
    %1408 = arith.mulf %49, %1390 : vector<1x1x2xf32>
    %1409 = arith.mulf %53, %1391 : vector<1x1x2xf32>
    %1410 = arith.addf %1408, %1409 : vector<1x1x2xf32>
    %1411 = arith.mulf %86, %1392 : vector<1x1x2xf32>
    %1412 = arith.addf %1410, %1411 : vector<1x1x2xf32>
    %1413 = arith.mulf %57, %1393 : vector<1x1x2xf32>
    %1414 = arith.addf %1412, %1413 : vector<1x1x2xf32>
    %1415 = arith.mulf %50, %1390 : vector<1x1x2xf32>
    %1416 = arith.mulf %54, %1391 : vector<1x1x2xf32>
    %1417 = arith.addf %1415, %1416 : vector<1x1x2xf32>
    %1418 = arith.mulf %57, %1392 : vector<1x1x2xf32>
    %1419 = arith.addf %1417, %1418 : vector<1x1x2xf32>
    %1420 = arith.mulf %87, %1393 : vector<1x1x2xf32>
    %1421 = arith.addf %1419, %1420 : vector<1x1x2xf32>
    %1422 = arith.mulf %1400, %1400 : vector<1x1x2xf32>
    %1423 = arith.mulf %1407, %1407 : vector<1x1x2xf32>
    %1424 = arith.addf %1422, %1423 : vector<1x1x2xf32>
    %1425 = arith.mulf %1414, %1414 : vector<1x1x2xf32>
    %1426 = arith.addf %1424, %1425 : vector<1x1x2xf32>
    %1427 = arith.mulf %1421, %1421 : vector<1x1x2xf32>
    %1428 = arith.addf %1426, %1427 : vector<1x1x2xf32>
    %cst_49 = arith.constant 1.000000e-30 : f32
    %1429 = vector.broadcast %cst_49 : f32 to vector<1x1x2xf32>
    %1430 = arith.addf %1428, %1429 : vector<1x1x2xf32>
    %1431 = math.rsqrt %1430 : vector<1x1x2xf32>
    %1432 = arith.mulf %1400, %1431 : vector<1x1x2xf32>
    %1433 = arith.mulf %1407, %1431 : vector<1x1x2xf32>
    %1434 = arith.mulf %1414, %1431 : vector<1x1x2xf32>
    %1435 = arith.mulf %1421, %1431 : vector<1x1x2xf32>
    %1436 = arith.mulf %47, %1432 : vector<1x1x2xf32>
    %1437 = arith.mulf %48, %1433 : vector<1x1x2xf32>
    %1438 = arith.addf %1436, %1437 : vector<1x1x2xf32>
    %1439 = arith.mulf %49, %1434 : vector<1x1x2xf32>
    %1440 = arith.addf %1438, %1439 : vector<1x1x2xf32>
    %1441 = arith.mulf %50, %1435 : vector<1x1x2xf32>
    %1442 = arith.addf %1440, %1441 : vector<1x1x2xf32>
    %1443 = arith.mulf %48, %1432 : vector<1x1x2xf32>
    %1444 = arith.mulf %52, %1433 : vector<1x1x2xf32>
    %1445 = arith.addf %1443, %1444 : vector<1x1x2xf32>
    %1446 = arith.mulf %53, %1434 : vector<1x1x2xf32>
    %1447 = arith.addf %1445, %1446 : vector<1x1x2xf32>
    %1448 = arith.mulf %54, %1435 : vector<1x1x2xf32>
    %1449 = arith.addf %1447, %1448 : vector<1x1x2xf32>
    %1450 = arith.mulf %49, %1432 : vector<1x1x2xf32>
    %1451 = arith.mulf %53, %1433 : vector<1x1x2xf32>
    %1452 = arith.addf %1450, %1451 : vector<1x1x2xf32>
    %1453 = arith.mulf %56, %1434 : vector<1x1x2xf32>
    %1454 = arith.addf %1452, %1453 : vector<1x1x2xf32>
    %1455 = arith.mulf %57, %1435 : vector<1x1x2xf32>
    %1456 = arith.addf %1454, %1455 : vector<1x1x2xf32>
    %1457 = arith.mulf %50, %1432 : vector<1x1x2xf32>
    %1458 = arith.mulf %54, %1433 : vector<1x1x2xf32>
    %1459 = arith.addf %1457, %1458 : vector<1x1x2xf32>
    %1460 = arith.mulf %57, %1434 : vector<1x1x2xf32>
    %1461 = arith.addf %1459, %1460 : vector<1x1x2xf32>
    %1462 = arith.mulf %59, %1435 : vector<1x1x2xf32>
    %1463 = arith.addf %1461, %1462 : vector<1x1x2xf32>
    %1464 = arith.mulf %1432, %1442 : vector<1x1x2xf32>
    %1465 = arith.mulf %1433, %1449 : vector<1x1x2xf32>
    %1466 = arith.addf %1464, %1465 : vector<1x1x2xf32>
    %1467 = arith.mulf %1434, %1456 : vector<1x1x2xf32>
    %1468 = arith.addf %1466, %1467 : vector<1x1x2xf32>
    %1469 = arith.mulf %1435, %1463 : vector<1x1x2xf32>
    %1470 = arith.addf %1468, %1469 : vector<1x1x2xf32>
    %1471 = arith.divf %1470, %45 : vector<1x1x2xf32>
    %1472 = arith.mulf %1432, %1432 : vector<1x1x2xf32>
    %1473 = arith.mulf %1433, %1433 : vector<1x1x2xf32>
    %1474 = arith.addf %1472, %1473 : vector<1x1x2xf32>
    %1475 = arith.mulf %1434, %1434 : vector<1x1x2xf32>
    %1476 = arith.subf %1474, %1475 : vector<1x1x2xf32>
    %1477 = arith.mulf %1435, %1435 : vector<1x1x2xf32>
    %1478 = arith.subf %1476, %1477 : vector<1x1x2xf32>
    %1479 = arith.mulf %1433, %1434 : vector<1x1x2xf32>
    %1480 = arith.mulf %1432, %1435 : vector<1x1x2xf32>
    %1481 = arith.subf %1479, %1480 : vector<1x1x2xf32>
    %cst_50 = arith.constant 2.000000e+00 : f32
    %1482 = vector.broadcast %cst_50 : f32 to vector<1x1x2xf32>
    %1483 = arith.mulf %1482, %1481 : vector<1x1x2xf32>
    %1484 = arith.mulf %1433, %1435 : vector<1x1x2xf32>
    %1485 = arith.mulf %1432, %1434 : vector<1x1x2xf32>
    %1486 = arith.addf %1484, %1485 : vector<1x1x2xf32>
    %cst_51 = arith.constant 2.000000e+00 : f32
    %1487 = vector.broadcast %cst_51 : f32 to vector<1x1x2xf32>
    %1488 = arith.mulf %1487, %1486 : vector<1x1x2xf32>
    %1489 = arith.mulf %1433, %1434 : vector<1x1x2xf32>
    %1490 = arith.mulf %1432, %1435 : vector<1x1x2xf32>
    %1491 = arith.addf %1489, %1490 : vector<1x1x2xf32>
    %cst_52 = arith.constant 2.000000e+00 : f32
    %1492 = vector.broadcast %cst_52 : f32 to vector<1x1x2xf32>
    %1493 = arith.mulf %1492, %1491 : vector<1x1x2xf32>
    %1494 = arith.mulf %1432, %1432 : vector<1x1x2xf32>
    %1495 = arith.mulf %1433, %1433 : vector<1x1x2xf32>
    %1496 = arith.subf %1494, %1495 : vector<1x1x2xf32>
    %1497 = arith.mulf %1434, %1434 : vector<1x1x2xf32>
    %1498 = arith.addf %1496, %1497 : vector<1x1x2xf32>
    %1499 = arith.mulf %1435, %1435 : vector<1x1x2xf32>
    %1500 = arith.subf %1498, %1499 : vector<1x1x2xf32>
    %1501 = arith.mulf %1434, %1435 : vector<1x1x2xf32>
    %1502 = arith.mulf %1432, %1433 : vector<1x1x2xf32>
    %1503 = arith.subf %1501, %1502 : vector<1x1x2xf32>
    %cst_53 = arith.constant 2.000000e+00 : f32
    %1504 = vector.broadcast %cst_53 : f32 to vector<1x1x2xf32>
    %1505 = arith.mulf %1504, %1503 : vector<1x1x2xf32>
    %1506 = arith.mulf %1433, %1435 : vector<1x1x2xf32>
    %1507 = arith.mulf %1432, %1434 : vector<1x1x2xf32>
    %1508 = arith.subf %1506, %1507 : vector<1x1x2xf32>
    %cst_54 = arith.constant 2.000000e+00 : f32
    %1509 = vector.broadcast %cst_54 : f32 to vector<1x1x2xf32>
    %1510 = arith.mulf %1509, %1508 : vector<1x1x2xf32>
    %1511 = arith.mulf %1434, %1435 : vector<1x1x2xf32>
    %1512 = arith.mulf %1432, %1433 : vector<1x1x2xf32>
    %1513 = arith.addf %1511, %1512 : vector<1x1x2xf32>
    %cst_55 = arith.constant 2.000000e+00 : f32
    %1514 = vector.broadcast %cst_55 : f32 to vector<1x1x2xf32>
    %1515 = arith.mulf %1514, %1513 : vector<1x1x2xf32>
    %1516 = arith.mulf %1432, %1432 : vector<1x1x2xf32>
    %1517 = arith.mulf %1433, %1433 : vector<1x1x2xf32>
    %1518 = arith.subf %1516, %1517 : vector<1x1x2xf32>
    %1519 = arith.mulf %1434, %1434 : vector<1x1x2xf32>
    %1520 = arith.subf %1518, %1519 : vector<1x1x2xf32>
    %1521 = arith.mulf %1435, %1435 : vector<1x1x2xf32>
    %1522 = arith.addf %1520, %1521 : vector<1x1x2xf32>
    %1523 = arith.mulf %1471, %1478 : vector<1x1x2xf32>
    %1524 = arith.mulf %1471, %1483 : vector<1x1x2xf32>
    %1525 = arith.mulf %1471, %1488 : vector<1x1x2xf32>
    %1526 = arith.mulf %1471, %1493 : vector<1x1x2xf32>
    %1527 = arith.mulf %1471, %1500 : vector<1x1x2xf32>
    %1528 = arith.mulf %1471, %1505 : vector<1x1x2xf32>
    %1529 = arith.mulf %1471, %1510 : vector<1x1x2xf32>
    %1530 = arith.mulf %1471, %1515 : vector<1x1x2xf32>
    %1531 = arith.mulf %1471, %1522 : vector<1x1x2xf32>
    %1532 = vector.extract_strided_slice %10 {offsets = [0, 0, 0], sizes = [1, 1, 2], strides = [1, 1, 1]} : vector<3x1x2xf32> to vector<1x1x2xf32>
    %1533 = vector.extract_strided_slice %10 {offsets = [1, 0, 0], sizes = [1, 1, 2], strides = [1, 1, 1]} : vector<3x1x2xf32> to vector<1x1x2xf32>
    %1534 = vector.extract_strided_slice %10 {offsets = [2, 0, 0], sizes = [1, 1, 2], strides = [1, 1, 1]} : vector<3x1x2xf32> to vector<1x1x2xf32>
    %c0_56 = arith.constant 0 : index
    %1535 = memref.load %arg1[%c0_56] : memref<3xf32, #tpu.memory_space<smem>>
    %1536 = arith.mulf %1523, %1532 : vector<1x1x2xf32>
    %1537 = arith.mulf %1524, %1533 : vector<1x1x2xf32>
    %1538 = arith.addf %1536, %1537 : vector<1x1x2xf32>
    %1539 = arith.mulf %1525, %1534 : vector<1x1x2xf32>
    %1540 = arith.addf %1538, %1539 : vector<1x1x2xf32>
    %1541 = vector.broadcast %1535 : f32 to vector<1x1x2xf32>
    %1542 = arith.subf %1541, %1540 : vector<1x1x2xf32>
    %c1 = arith.constant 1 : index
    %1543 = memref.load %arg1[%c1] : memref<3xf32, #tpu.memory_space<smem>>
    %1544 = arith.mulf %1526, %1532 : vector<1x1x2xf32>
    %1545 = arith.mulf %1527, %1533 : vector<1x1x2xf32>
    %1546 = arith.addf %1544, %1545 : vector<1x1x2xf32>
    %1547 = arith.mulf %1528, %1534 : vector<1x1x2xf32>
    %1548 = arith.addf %1546, %1547 : vector<1x1x2xf32>
    %1549 = vector.broadcast %1543 : f32 to vector<1x1x2xf32>
    %1550 = arith.subf %1549, %1548 : vector<1x1x2xf32>
    %c2 = arith.constant 2 : index
    %1551 = memref.load %arg1[%c2] : memref<3xf32, #tpu.memory_space<smem>>
    %1552 = arith.mulf %1529, %1532 : vector<1x1x2xf32>
    %1553 = arith.mulf %1530, %1533 : vector<1x1x2xf32>
    %1554 = arith.addf %1552, %1553 : vector<1x1x2xf32>
    %1555 = arith.mulf %1531, %1534 : vector<1x1x2xf32>
    %1556 = arith.addf %1554, %1555 : vector<1x1x2xf32>
    %1557 = vector.broadcast %1551 : f32 to vector<1x1x2xf32>
    %1558 = arith.subf %1557, %1556 : vector<1x1x2xf32>
    %1559 = vector.extract_strided_slice %0 {offsets = [0, 0, 0], sizes = [1, 512, 2], strides = [1, 1, 1]} : vector<3x512x2xf32> to vector<1x512x2xf32>
    %1560 = vector.extract_strided_slice %0 {offsets = [1, 0, 0], sizes = [1, 512, 2], strides = [1, 1, 1]} : vector<3x512x2xf32> to vector<1x512x2xf32>
    %1561 = vector.extract_strided_slice %0 {offsets = [2, 0, 0], sizes = [1, 512, 2], strides = [1, 1, 1]} : vector<3x512x2xf32> to vector<1x512x2xf32>
    %1562 = vector.broadcast %1523 : vector<1x1x2xf32> to vector<1x512x2xf32>
    %1563 = arith.mulf %1562, %1559 : vector<1x512x2xf32>
    %1564 = vector.broadcast %1524 : vector<1x1x2xf32> to vector<1x512x2xf32>
    %1565 = arith.mulf %1564, %1560 : vector<1x512x2xf32>
    %1566 = arith.addf %1563, %1565 : vector<1x512x2xf32>
    %1567 = vector.broadcast %1525 : vector<1x1x2xf32> to vector<1x512x2xf32>
    %1568 = arith.mulf %1567, %1561 : vector<1x512x2xf32>
    %1569 = arith.addf %1566, %1568 : vector<1x512x2xf32>
    %1570 = vector.broadcast %1542 : vector<1x1x2xf32> to vector<1x512x2xf32>
    %1571 = arith.addf %1569, %1570 : vector<1x512x2xf32>
    %c0_57 = arith.constant 0 : index
    %c0_58 = arith.constant 0 : index
    %c0_59 = arith.constant 0 : index
    %1572 = vector.load %arg4[%c0_57, %c0_58, %c0_59] : memref<3x512x2xf32, #tpu.memory_space<vmem>>, vector<1x512x2xf32>
    tpu.vector_store %arg4[%c0_57, %c0_58, %c0_59], %1571 {strides = array<i32>} : memref<3x512x2xf32, #tpu.memory_space<vmem>>, vector<1x512x2xf32>,
    %1573 = vector.broadcast %1526 : vector<1x1x2xf32> to vector<1x512x2xf32>
    %1574 = arith.mulf %1573, %1559 : vector<1x512x2xf32>
    %1575 = vector.broadcast %1527 : vector<1x1x2xf32> to vector<1x512x2xf32>
    %1576 = arith.mulf %1575, %1560 : vector<1x512x2xf32>
    %1577 = arith.addf %1574, %1576 : vector<1x512x2xf32>
    %1578 = vector.broadcast %1528 : vector<1x1x2xf32> to vector<1x512x2xf32>
    %1579 = arith.mulf %1578, %1561 : vector<1x512x2xf32>
    %1580 = arith.addf %1577, %1579 : vector<1x512x2xf32>
    %1581 = vector.broadcast %1550 : vector<1x1x2xf32> to vector<1x512x2xf32>
    %1582 = arith.addf %1580, %1581 : vector<1x512x2xf32>
    %c1_60 = arith.constant 1 : index
    %c0_61 = arith.constant 0 : index
    %c0_62 = arith.constant 0 : index
    %1583 = vector.load %arg4[%c1_60, %c0_61, %c0_62] : memref<3x512x2xf32, #tpu.memory_space<vmem>>, vector<1x512x2xf32>
    tpu.vector_store %arg4[%c1_60, %c0_61, %c0_62], %1582 {strides = array<i32>} : memref<3x512x2xf32, #tpu.memory_space<vmem>>, vector<1x512x2xf32>,
    %1584 = vector.broadcast %1529 : vector<1x1x2xf32> to vector<1x512x2xf32>
    %1585 = arith.mulf %1584, %1559 : vector<1x512x2xf32>
    %1586 = vector.broadcast %1530 : vector<1x1x2xf32> to vector<1x512x2xf32>
    %1587 = arith.mulf %1586, %1560 : vector<1x512x2xf32>
    %1588 = arith.addf %1585, %1587 : vector<1x512x2xf32>
    %1589 = vector.broadcast %1531 : vector<1x1x2xf32> to vector<1x512x2xf32>
    %1590 = arith.mulf %1589, %1561 : vector<1x512x2xf32>
    %1591 = arith.addf %1588, %1590 : vector<1x512x2xf32>
    %1592 = vector.broadcast %1558 : vector<1x1x2xf32> to vector<1x512x2xf32>
    %1593 = arith.addf %1591, %1592 : vector<1x512x2xf32>
    %c2_63 = arith.constant 2 : index
    %c0_64 = arith.constant 0 : index
    %c0_65 = arith.constant 0 : index
    %1594 = vector.load %arg4[%c2_63, %c0_64, %c0_65] : memref<3x512x2xf32, #tpu.memory_space<vmem>>, vector<1x512x2xf32>
    tpu.vector_store %arg4[%c2_63, %c0_64, %c0_65], %1593 {strides = array<i32>} : memref<3x512x2xf32, #tpu.memory_space<vmem>>, vector<1x512x2xf32>,
    %cst_66 = arith.constant 0.000000e+00 : f32
    %1595 = vector.broadcast %cst_66 : f32 to vector<1x2xf32>
    %cst_67 = arith.constant 1.000000e+00 : f32
    %1596 = vector.broadcast %cst_67 : f32 to vector<1x2xf32>
    %1597 = vector.shape_cast %1523 : vector<1x1x2xf32> to vector<1x2xf32>
    %1598 = vector.shape_cast %1524 : vector<1x1x2xf32> to vector<1x2xf32>
    %1599 = vector.shape_cast %1525 : vector<1x1x2xf32> to vector<1x2xf32>
    %1600 = vector.shape_cast %1542 : vector<1x1x2xf32> to vector<1x2xf32>
    %1601 = vector.shape_cast %1526 : vector<1x1x2xf32> to vector<1x2xf32>
    %1602 = vector.shape_cast %1527 : vector<1x1x2xf32> to vector<1x2xf32>
    %1603 = vector.shape_cast %1528 : vector<1x1x2xf32> to vector<1x2xf32>
    %1604 = vector.shape_cast %1550 : vector<1x1x2xf32> to vector<1x2xf32>
    %1605 = vector.shape_cast %1529 : vector<1x1x2xf32> to vector<1x2xf32>
    %1606 = vector.shape_cast %1530 : vector<1x1x2xf32> to vector<1x2xf32>
    %1607 = vector.shape_cast %1531 : vector<1x1x2xf32> to vector<1x2xf32>
    %1608 = vector.shape_cast %1558 : vector<1x1x2xf32> to vector<1x2xf32>
    %1609 = tpu.concatenate %1597, %1598, %1599, %1600, %1601, %1602, %1603, %1604, %1605, %1606, %1607, %1608, %1595, %1595, %1595, %1596 in 0 : vector<1x2xf32>, vector<1x2xf32>, vector<1x2xf32>, vector<1x2xf32>, vector<1x2xf32>, vector<1x2xf32>, vector<1x2xf32>, vector<1x2xf32>, vector<1x2xf32>, vector<1x2xf32>, vector<1x2xf32>, vector<1x2xf32>, vector<1x2xf32>, vector<1x2xf32>, vector<1x2xf32>, vector<1x2xf32> -> vector<16x2xf32>
    %c0_68 = arith.constant 0 : index
    %c0_69 = arith.constant 0 : index
    %1610 = vector.load %arg5[%c0_68, %c0_69] : memref<16x2xf32, #tpu.memory_space<vmem>>, vector<16x2xf32>
    tpu.vector_store %arg5[%c0_68, %c0_69], %1609 {strides = array<i32>} : memref<16x2xf32, #tpu.memory_space<vmem>>, vector<16x2xf32>,
    return
  }
  func.func @transform_0(%arg0: i32) -> i32 {
    %c0_i32 = arith.constant 0 : i32
    %c0_i32_0 = arith.constant 0 : i32
    return %c0_i32 : i32
  }
  func.func @transform_1(%arg0: i32) -> (i32, i32, i32) {
    %c0_i32 = arith.constant 0 : i32
    %c0_i32_0 = arith.constant 0 : i32
    %c0_i32_1 = arith.constant 0 : i32
    return %c0_i32, %c0_i32_0, %arg0 : i32, i32, i32
  }
  func.func @transform_2(%arg0: i32) -> (i32, i32, i32) {
    %c0_i32 = arith.constant 0 : i32
    %c0_i32_0 = arith.constant 0 : i32
    %c0_i32_1 = arith.constant 0 : i32
    %c0_i32_2 = arith.constant 0 : i32
    return %c0_i32, %c0_i32_0, %c0_i32_1 : i32, i32, i32
  }
  func.func @transform_3(%arg0: i32) -> (i32, i32, i32) {
    %c0_i32 = arith.constant 0 : i32
    %c0_i32_0 = arith.constant 0 : i32
    %c0_i32_1 = arith.constant 0 : i32
    return %c0_i32, %c0_i32_0, %arg0 : i32, i32, i32
  }
  func.func @transform_4(%arg0: i32) -> (i32, i32) {
    %c0_i32 = arith.constant 0 : i32
    %c0_i32_0 = arith.constant 0 : i32
    return %c0_i32, %arg0 : i32, i32
  }
}

</mosaic_0001>

<llo_original>
// kernel: tpu_custom_call.1
$region0: #{tpu_custom_call.1}
  #allocation0 [shape = 'u32[]', space=smem, size = 0x4, offset = 0x4, fixed_abs, tag = 'smem constant byte address 0x4 - core index']
  #allocation1 [shape = 'u32[144,128]{1,0:T(1,128)}', space=vmem, size = 0x12000, scoped, tag = 'internal scratch']
  %s0 = inlined_call_operand.vmem [shape: f32[3], index: 0, kind: input, shape index: {}]
  %s1 = inlined_call_operand.vmem [shape: f32[3,512,2], index: 1, kind: input, shape index: {}]
  %s2 = inlined_call_operand.vmem [shape: f32[3,512,1], index: 2, kind: input, shape index: {}]
  %s3 = inlined_call_operand.vmem [shape: f32[3,512,2], index: 3, kind: output, shape index: {0}]
  %s4 = inlined_call_operand.vmem [shape: f32[16,2], index: 4, kind: output, shape index: {1}]
  %5 = xla_tuple %s3, %s4
  %s6 = sld [smem:[#allocation0]]
  $region34: #{tpu_custom_call.1} parent=0
    _
  %s8 = ssub.s32 1, %s6
  %s9 = scalar_select 0, %s8, %s6
  $region1: #{tpu_custom_call.1} parent=0
    #allocation2 [shape = 'u8[512]{0}', space=smem, size = 0x200, scoped, tag = 'input window, operand 0, single buffered']
    #allocation3 [shape = 's32[1]{0}', space=sflag, size = 0x4, scoped, tag = 'scoped memory for tpu_custom_call.1']
    %10 = vsyncpa [#allocation3], 0
    // Predicated region
    $region2: #{tpu_custom_call.1} parent=1 // pred_check
      _
    $region3: #{tpu_custom_call.1} parent=1 // pred_check_branch
      %12 = sbr.rel (0) target = $region5
    $region4: #{tpu_custom_call.1} parent=1 // pred_region
      %s14 = ssub.s32 16, 16
      %15 = vsyncadd [#allocation3], %s14
      %s17 = sshll.u32 %s0, 4
      %s18 = int_to_ptr.vmem [resolvable:$true] %s17
      %20 = dma.vmem_to_smem %s18, 16, [#allocation2], [#allocation3]
    $region5: #{tpu_custom_call.1} parent=1 // pred_fallthru
      _
    // Predicated region
    $region6: #{tpu_custom_call.1} parent=1 // pred_check
      _
    $region7: #{tpu_custom_call.1} parent=1 // pred_check_branch
      %22 = sbr.rel (0) target = $region9
    $region8: #{tpu_custom_call.1} parent=1 // pred_region
      _
    $region9: #{tpu_custom_call.1} parent=1 // pred_fallthru
      _
    // Predicated region
    $region10: #{tpu_custom_call.1} parent=1 // pred_check
      _
    $region11: #{tpu_custom_call.1} parent=1 // pred_check_branch
      %24 = sbr.rel (0) target = $region13
    $region12: #{tpu_custom_call.1} parent=1 // pred_region
      _
    $region13: #{tpu_custom_call.1} parent=1 // pred_fallthru
      _
    // Predicated region
    $region14: #{tpu_custom_call.1} parent=1 // pred_check
      _
    $region15: #{tpu_custom_call.1} parent=1 // pred_check_branch
      %26 = sbr.rel (0) target = $region17
    $region16: #{tpu_custom_call.1} parent=1 // pred_region
      %27 = dma.done [#allocation3], 16
    $region17: #{tpu_custom_call.1} parent=1 // pred_fallthru
      _
    %28 = sfence
    %v29 = vld [vmem:[%s1] sm:$0xff]
    %v30 = vld [vmem:[%s1 + $0x8] sm:$0xff]
    %v31 = vld [vmem:[%s1 + $0x10] sm:$0xff]
    %v32 = vld [vmem:[%s1 + $0x18] sm:$0xff]
    %v33 = vld [vmem:[%s1 + $0x20] sm:$0xff]
    %v34 = vld [vmem:[%s1 + $0x28] sm:$0xff]
    %v35 = vld [vmem:[%s1 + $0x30] sm:$0xff]
    %v36 = vld [vmem:[%s1 + $0x38] sm:$0xff]
    %v37 = vld [vmem:[%s1 + $0x40] sm:$0xff]
    %v38 = vld [vmem:[%s1 + $0x48] sm:$0xff]
    %v39 = vld [vmem:[%s1 + $0x50] sm:$0xff]
    %v40 = vld [vmem:[%s1 + $0x58] sm:$0xff]
    %v41 = vld [vmem:[%s1 + $0x60] sm:$0xff]
    %v42 = vld [vmem:[%s1 + $0x68] sm:$0xff]
    %v43 = vld [vmem:[%s1 + $0x70] sm:$0xff]
    %v44 = vld [vmem:[%s1 + $0x78] sm:$0xff]
    %v45 = vld [vmem:[%s1 + $0x80] sm:$0xff]
    %v46 = vld [vmem:[%s1 + $0x88] sm:$0xff]
    %v47 = vld [vmem:[%s1 + $0x90] sm:$0xff]
    %v48 = vld [vmem:[%s1 + $0x98] sm:$0xff]
    %v49 = vld [vmem:[%s1 + $0xa0] sm:$0xff]
    %v50 = vld [vmem:[%s1 + $0xa8] sm:$0xff]
    %v51 = vld [vmem:[%s1 + $0xb0] sm:$0xff]
    %v52 = vld [vmem:[%s1 + $0xb8] sm:$0xff]
    %v53 = vld [vmem:[%s1 + $0xc0] sm:$0xff]
    %v54 = vld [vmem:[%s1 + $0xc8] sm:$0xff]
    %v55 = vld [vmem:[%s1 + $0xd0] sm:$0xff]
    %v56 = vld [vmem:[%s1 + $0xd8] sm:$0xff]
    %v57 = vld [vmem:[%s1 + $0xe0] sm:$0xff]
    %v58 = vld [vmem:[%s1 + $0xe8] sm:$0xff]
    %v59 = vld [vmem:[%s1 + $0xf0] sm:$0xff]
    %v60 = vld [vmem:[%s1 + $0xf8] sm:$0xff]
    %v61 = vld [vmem:[%s1 + $0x100] sm:$0xff]
    %v62 = vld [vmem:[%s1 + $0x108] sm:$0xff]
    %v63 = vld [vmem:[%s1 + $0x110] sm:$0xff]
    %v64 = vld [vmem:[%s1 + $0x118] sm:$0xff]
    %v65 = vld [vmem:[%s1 + $0x120] sm:$0xff]
    %v66 = vld [vmem:[%s1 + $0x128] sm:$0xff]
    %v67 = vld [vmem:[%s1 + $0x130] sm:$0xff]
    %v68 = vld [vmem:[%s1 + $0x138] sm:$0xff]
    %v69 = vld [vmem:[%s1 + $0x140] sm:$0xff]
    %v70 = vld [vmem:[%s1 + $0x148] sm:$0xff]
    %v71 = vld [vmem:[%s1 + $0x150] sm:$0xff]
    %v72 = vld [vmem:[%s1 + $0x158] sm:$0xff]
    %v73 = vld [vmem:[%s1 + $0x160] sm:$0xff]
    %v74 = vld [vmem:[%s1 + $0x168] sm:$0xff]
    %v75 = vld [vmem:[%s1 + $0x170] sm:$0xff]
    %v76 = vld [vmem:[%s1 + $0x178] sm:$0xff]
    %v77 = vld [vmem:[%s1 + $0x180] sm:$0xff]
    %v78 = vld [vmem:[%s1 + $0x188] sm:$0xff]
    %v79 = vld [vmem:[%s1 + $0x190] sm:$0xff]
    %v80 = vld [vmem:[%s1 + $0x198] sm:$0xff]
    %v81 = vld [vmem:[%s1 + $0x1a0] sm:$0xff]
    %v82 = vld [vmem:[%s1 + $0x1a8] sm:$0xff]
    %v83 = vld [vmem:[%s1 + $0x1b0] sm:$0xff]
    %v84 = vld [vmem:[%s1 + $0x1b8] sm:$0xff]
    %v85 = vld [vmem:[%s1 + $0x1c0] sm:$0xff]
    %v86 = vld [vmem:[%s1 + $0x1c8] sm:$0xff]
    %v87 = vld [vmem:[%s1 + $0x1d0] sm:$0xff]
    %v88 = vld [vmem:[%s1 + $0x1d8] sm:$0xff]
    %v89 = vld [vmem:[%s1 + $0x1e0] sm:$0xff]
    %v90 = vld [vmem:[%s1 + $0x1e8] sm:$0xff]
    %v91 = vld [vmem:[%s1 + $0x1f0] sm:$0xff]
    %v92 = vld [vmem:[%s1 + $0x1f8] sm:$0xff]
    %v93 = vld [vmem:[%s1 + $0x200] sm:$0xff]
    %v94 = vld [vmem:[%s1 + $0x208] sm:$0xff]
    %v95 = vld [vmem:[%s1 + $0x210] sm:$0xff]
    %v96 = vld [vmem:[%s1 + $0x218] sm:$0xff]
    %v97 = vld [vmem:[%s1 + $0x220] sm:$0xff]
    %v98 = vld [vmem:[%s1 + $0x228] sm:$0xff]
    %v99 = vld [vmem:[%s1 + $0x230] sm:$0xff]
    %v100 = vld [vmem:[%s1 + $0x238] sm:$0xff]
    %v101 = vld [vmem:[%s1 + $0x240] sm:$0xff]
    %v102 = vld [vmem:[%s1 + $0x248] sm:$0xff]
    %v103 = vld [vmem:[%s1 + $0x250] sm:$0xff]
    %v104 = vld [vmem:[%s1 + $0x258] sm:$0xff]
    %v105 = vld [vmem:[%s1 + $0x260] sm:$0xff]
    %v106 = vld [vmem:[%s1 + $0x268] sm:$0xff]
    %v107 = vld [vmem:[%s1 + $0x270] sm:$0xff]
    %v108 = vld [vmem:[%s1 + $0x278] sm:$0xff]
    %v109 = vld [vmem:[%s1 + $0x280] sm:$0xff]
    %v110 = vld [vmem:[%s1 + $0x288] sm:$0xff]
    %v111 = vld [vmem:[%s1 + $0x290] sm:$0xff]
    %v112 = vld [vmem:[%s1 + $0x298] sm:$0xff]
    %v113 = vld [vmem:[%s1 + $0x2a0] sm:$0xff]
    %v114 = vld [vmem:[%s1 + $0x2a8] sm:$0xff]
    %v115 = vld [vmem:[%s1 + $0x2b0] sm:$0xff]
    %v116 = vld [vmem:[%s1 + $0x2b8] sm:$0xff]
    %v117 = vld [vmem:[%s1 + $0x2c0] sm:$0xff]
    %v118 = vld [vmem:[%s1 + $0x2c8] sm:$0xff]
    %v119 = vld [vmem:[%s1 + $0x2d0] sm:$0xff]
    %v120 = vld [vmem:[%s1 + $0x2d8] sm:$0xff]
    %v121 = vld [vmem:[%s1 + $0x2e0] sm:$0xff]
    %v122 = vld [vmem:[%s1 + $0x2e8] sm:$0xff]
    %v123 = vld [vmem:[%s1 + $0x2f0] sm:$0xff]
    %v124 = vld [vmem:[%s1 + $0x2f8] sm:$0xff]
    %v125 = vld [vmem:[%s1 + $0x300] sm:$0xff]
    %v126 = vld [vmem:[%s1 + $0x308] sm:$0xff]
    %v127 = vld [vmem:[%s1 + $0x310] sm:$0xff]
    %v128 = vld [vmem:[%s1 + $0x318] sm:$0xff]
    %v129 = vld [vmem:[%s1 + $0x320] sm:$0xff]
    %v130 = vld [vmem:[%s1 + $0x328] sm:$0xff]
    %v131 = vld [vmem:[%s1 + $0x330] sm:$0xff]
    %v132 = vld [vmem:[%s1 + $0x338] sm:$0xff]
    %v133 = vld [vmem:[%s1 + $0x340] sm:$0xff]
    %v134 = vld [vmem:[%s1 + $0x348] sm:$0xff]
    %v135 = vld [vmem:[%s1 + $0x350] sm:$0xff]
    %v136 = vld [vmem:[%s1 + $0x358] sm:$0xff]
    %v137 = vld [vmem:[%s1 + $0x360] sm:$0xff]
    %v138 = vld [vmem:[%s1 + $0x368] sm:$0xff]
    %v139 = vld [vmem:[%s1 + $0x370] sm:$0xff]
    %v140 = vld [vmem:[%s1 + $0x378] sm:$0xff]
    %v141 = vld [vmem:[%s1 + $0x380] sm:$0xff]
    %v142 = vld [vmem:[%s1 + $0x388] sm:$0xff]
    %v143 = vld [vmem:[%s1 + $0x390] sm:$0xff]
    %v144 = vld [vmem:[%s1 + $0x398] sm:$0xff]
    %v145 = vld [vmem:[%s1 + $0x3a0] sm:$0xff]
    %v146 = vld [vmem:[%s1 + $0x3a8] sm:$0xff]
    %v147 = vld [vmem:[%s1 + $0x3b0] sm:$0xff]
    %v148 = vld [vmem:[%s1 + $0x3b8] sm:$0xff]
    %v149 = vld [vmem:[%s1 + $0x3c0] sm:$0xff]
    %v150 = vld [vmem:[%s1 + $0x3c8] sm:$0xff]
    %v151 = vld [vmem:[%s1 + $0x3d0] sm:$0xff]
    %v152 = vld [vmem:[%s1 + $0x3d8] sm:$0xff]
    %v153 = vld [vmem:[%s1 + $0x3e0] sm:$0xff]
    %v154 = vld [vmem:[%s1 + $0x3e8] sm:$0xff]
    %v155 = vld [vmem:[%s1 + $0x3f0] sm:$0xff]
    %v156 = vld [vmem:[%s1 + $0x3f8] sm:$0xff]
    %v157 = vld [vmem:[%s1 + $0x400] sm:$0xff]
    %v158 = vld [vmem:[%s1 + $0x408] sm:$0xff]
    %v159 = vld [vmem:[%s1 + $0x410] sm:$0xff]
    %v160 = vld [vmem:[%s1 + $0x418] sm:$0xff]
    %v161 = vld [vmem:[%s1 + $0x420] sm:$0xff]
    %v162 = vld [vmem:[%s1 + $0x428] sm:$0xff]
    %v163 = vld [vmem:[%s1 + $0x430] sm:$0xff]
    %v164 = vld [vmem:[%s1 + $0x438] sm:$0xff]
    %v165 = vld [vmem:[%s1 + $0x440] sm:$0xff]
    %v166 = vld [vmem:[%s1 + $0x448] sm:$0xff]
    %v167 = vld [vmem:[%s1 + $0x450] sm:$0xff]
    %v168 = vld [vmem:[%s1 + $0x458] sm:$0xff]
    %v169 = vld [vmem:[%s1 + $0x460] sm:$0xff]
    %v170 = vld [vmem:[%s1 + $0x468] sm:$0xff]
    %v171 = vld [vmem:[%s1 + $0x470] sm:$0xff]
    %v172 = vld [vmem:[%s1 + $0x478] sm:$0xff]
    %v173 = vld [vmem:[%s1 + $0x480] sm:$0xff]
    %v174 = vld [vmem:[%s1 + $0x488] sm:$0xff]
    %v175 = vld [vmem:[%s1 + $0x490] sm:$0xff]
    %v176 = vld [vmem:[%s1 + $0x498] sm:$0xff]
    %v177 = vld [vmem:[%s1 + $0x4a0] sm:$0xff]
    %v178 = vld [vmem:[%s1 + $0x4a8] sm:$0xff]
    %v179 = vld [vmem:[%s1 + $0x4b0] sm:$0xff]
    %v180 = vld [vmem:[%s1 + $0x4b8] sm:$0xff]
    %v181 = vld [vmem:[%s1 + $0x4c0] sm:$0xff]
    %v182 = vld [vmem:[%s1 + $0x4c8] sm:$0xff]
    %v183 = vld [vmem:[%s1 + $0x4d0] sm:$0xff]
    %v184 = vld [vmem:[%s1 + $0x4d8] sm:$0xff]
    %v185 = vld [vmem:[%s1 + $0x4e0] sm:$0xff]
    %v186 = vld [vmem:[%s1 + $0x4e8] sm:$0xff]
    %v187 = vld [vmem:[%s1 + $0x4f0] sm:$0xff]
    %v188 = vld [vmem:[%s1 + $0x4f8] sm:$0xff]
    %v189 = vld [vmem:[%s1 + $0x500] sm:$0xff]
    %v190 = vld [vmem:[%s1 + $0x508] sm:$0xff]
    %v191 = vld [vmem:[%s1 + $0x510] sm:$0xff]
    %v192 = vld [vmem:[%s1 + $0x518] sm:$0xff]
    %v193 = vld [vmem:[%s1 + $0x520] sm:$0xff]
    %v194 = vld [vmem:[%s1 + $0x528] sm:$0xff]
    %v195 = vld [vmem:[%s1 + $0x530] sm:$0xff]
    %v196 = vld [vmem:[%s1 + $0x538] sm:$0xff]
    %v197 = vld [vmem:[%s1 + $0x540] sm:$0xff]
    %v198 = vld [vmem:[%s1 + $0x548] sm:$0xff]
    %v199 = vld [vmem:[%s1 + $0x550] sm:$0xff]
    %v200 = vld [vmem:[%s1 + $0x558] sm:$0xff]
    %v201 = vld [vmem:[%s1 + $0x560] sm:$0xff]
    %v202 = vld [vmem:[%s1 + $0x568] sm:$0xff]
    %v203 = vld [vmem:[%s1 + $0x570] sm:$0xff]
    %v204 = vld [vmem:[%s1 + $0x578] sm:$0xff]
    %v205 = vld [vmem:[%s1 + $0x580] sm:$0xff]
    %v206 = vld [vmem:[%s1 + $0x588] sm:$0xff]
    %v207 = vld [vmem:[%s1 + $0x590] sm:$0xff]
    %v208 = vld [vmem:[%s1 + $0x598] sm:$0xff]
    %v209 = vld [vmem:[%s1 + $0x5a0] sm:$0xff]
    %v210 = vld [vmem:[%s1 + $0x5a8] sm:$0xff]
    %v211 = vld [vmem:[%s1 + $0x5b0] sm:$0xff]
    %v212 = vld [vmem:[%s1 + $0x5b8] sm:$0xff]
    %v213 = vld [vmem:[%s1 + $0x5c0] sm:$0xff]
    %v214 = vld [vmem:[%s1 + $0x5c8] sm:$0xff]
    %v215 = vld [vmem:[%s1 + $0x5d0] sm:$0xff]
    %v216 = vld [vmem:[%s1 + $0x5d8] sm:$0xff]
    %v217 = vld [vmem:[%s1 + $0x5e0] sm:$0xff]
    %v218 = vld [vmem:[%s1 + $0x5e8] sm:$0xff]
    %v219 = vld [vmem:[%s1 + $0x5f0] sm:$0xff]
    %v220 = vld [vmem:[%s1 + $0x5f8] sm:$0xff]
    %v221 = vld [vmem:[%s2] sm:$0xff]
    %v222 = vld [vmem:[%s2 + $0x8] sm:$0xff]
    %v223 = vld [vmem:[%s2 + $0x10] sm:$0xff]
    %v224 = vld [vmem:[%s2 + $0x18] sm:$0xff]
    %v225 = vld [vmem:[%s2 + $0x20] sm:$0xff]
    %v226 = vld [vmem:[%s2 + $0x28] sm:$0xff]
    %v227 = vld [vmem:[%s2 + $0x30] sm:$0xff]
    %v228 = vld [vmem:[%s2 + $0x38] sm:$0xff]
    %v229 = vld [vmem:[%s2 + $0x40] sm:$0xff]
    %v230 = vld [vmem:[%s2 + $0x48] sm:$0xff]
    %v231 = vld [vmem:[%s2 + $0x50] sm:$0xff]
    %v232 = vld [vmem:[%s2 + $0x58] sm:$0xff]
    %v233 = vld [vmem:[%s2 + $0x60] sm:$0xff]
    %v234 = vld [vmem:[%s2 + $0x68] sm:$0xff]
    %v235 = vld [vmem:[%s2 + $0x70] sm:$0xff]
    %v236 = vld [vmem:[%s2 + $0x78] sm:$0xff]
    %v237 = vld [vmem:[%s2 + $0x80] sm:$0xff]
    %v238 = vld [vmem:[%s2 + $0x88] sm:$0xff]
    %v239 = vld [vmem:[%s2 + $0x90] sm:$0xff]
    %v240 = vld [vmem:[%s2 + $0x98] sm:$0xff]
    %v241 = vld [vmem:[%s2 + $0xa0] sm:$0xff]
    %v242 = vld [vmem:[%s2 + $0xa8] sm:$0xff]
    %v243 = vld [vmem:[%s2 + $0xb0] sm:$0xff]
    %v244 = vld [vmem:[%s2 + $0xb8] sm:$0xff]
    %v245 = vld [vmem:[%s2 + $0xc0] sm:$0xff]
    %v246 = vld [vmem:[%s2 + $0xc8] sm:$0xff]
    %v247 = vld [vmem:[%s2 + $0xd0] sm:$0xff]
    %v248 = vld [vmem:[%s2 + $0xd8] sm:$0xff]
    %v249 = vld [vmem:[%s2 + $0xe0] sm:$0xff]
    %v250 = vld [vmem:[%s2 + $0xe8] sm:$0xff]
    %v251 = vld [vmem:[%s2 + $0xf0] sm:$0xff]
    %v252 = vld [vmem:[%s2 + $0xf8] sm:$0xff]
    %v253 = vld [vmem:[%s2 + $0x100] sm:$0xff]
    %v254 = vld [vmem:[%s2 + $0x108] sm:$0xff]
    %v255 = vld [vmem:[%s2 + $0x110] sm:$0xff]
    %v256 = vld [vmem:[%s2 + $0x118] sm:$0xff]
    %v257 = vld [vmem:[%s2 + $0x120] sm:$0xff]
    %v258 = vld [vmem:[%s2 + $0x128] sm:$0xff]
    %v259 = vld [vmem:[%s2 + $0x130] sm:$0xff]
    %v260 = vld [vmem:[%s2 + $0x138] sm:$0xff]
    %v261 = vld [vmem:[%s2 + $0x140] sm:$0xff]
    %v262 = vld [vmem:[%s2 + $0x148] sm:$0xff]
    %v263 = vld [vmem:[%s2 + $0x150] sm:$0xff]
    %v264 = vld [vmem:[%s2 + $0x158] sm:$0xff]
    %v265 = vld [vmem:[%s2 + $0x160] sm:$0xff]
    %v266 = vld [vmem:[%s2 + $0x168] sm:$0xff]
    %v267 = vld [vmem:[%s2 + $0x170] sm:$0xff]
    %v268 = vld [vmem:[%s2 + $0x178] sm:$0xff]
    %v269 = vld [vmem:[%s2 + $0x180] sm:$0xff]
    %v270 = vld [vmem:[%s2 + $0x188] sm:$0xff]
    %v271 = vld [vmem:[%s2 + $0x190] sm:$0xff]
    %v272 = vld [vmem:[%s2 + $0x198] sm:$0xff]
    %v273 = vld [vmem:[%s2 + $0x1a0] sm:$0xff]
    %v274 = vld [vmem:[%s2 + $0x1a8] sm:$0xff]
    %v275 = vld [vmem:[%s2 + $0x1b0] sm:$0xff]
    %v276 = vld [vmem:[%s2 + $0x1b8] sm:$0xff]
    %v277 = vld [vmem:[%s2 + $0x1c0] sm:$0xff]
    %v278 = vld [vmem:[%s2 + $0x1c8] sm:$0xff]
    %v279 = vld [vmem:[%s2 + $0x1d0] sm:$0xff]
    %v280 = vld [vmem:[%s2 + $0x1d8] sm:$0xff]
    %v281 = vld [vmem:[%s2 + $0x1e0] sm:$0xff]
    %v282 = vld [vmem:[%s2 + $0x1e8] sm:$0xff]
    %v283 = vld [vmem:[%s2 + $0x1f0] sm:$0xff]
    %v284 = vld [vmem:[%s2 + $0x1f8] sm:$0xff]
    %v285 = vld [vmem:[%s2 + $0x200] sm:$0xff]
    %v286 = vld [vmem:[%s2 + $0x208] sm:$0xff]
    %v287 = vld [vmem:[%s2 + $0x210] sm:$0xff]
    %v288 = vld [vmem:[%s2 + $0x218] sm:$0xff]
    %v289 = vld [vmem:[%s2 + $0x220] sm:$0xff]
    %v290 = vld [vmem:[%s2 + $0x228] sm:$0xff]
    %v291 = vld [vmem:[%s2 + $0x230] sm:$0xff]
    %v292 = vld [vmem:[%s2 + $0x238] sm:$0xff]
    %v293 = vld [vmem:[%s2 + $0x240] sm:$0xff]
    %v294 = vld [vmem:[%s2 + $0x248] sm:$0xff]
    %v295 = vld [vmem:[%s2 + $0x250] sm:$0xff]
    %v296 = vld [vmem:[%s2 + $0x258] sm:$0xff]
    %v297 = vld [vmem:[%s2 + $0x260] sm:$0xff]
    %v298 = vld [vmem:[%s2 + $0x268] sm:$0xff]
    %v299 = vld [vmem:[%s2 + $0x270] sm:$0xff]
    %v300 = vld [vmem:[%s2 + $0x278] sm:$0xff]
    %v301 = vld [vmem:[%s2 + $0x280] sm:$0xff]
    %v302 = vld [vmem:[%s2 + $0x288] sm:$0xff]
    %v303 = vld [vmem:[%s2 + $0x290] sm:$0xff]
    %v304 = vld [vmem:[%s2 + $0x298] sm:$0xff]
    %v305 = vld [vmem:[%s2 + $0x2a0] sm:$0xff]
    %v306 = vld [vmem:[%s2 + $0x2a8] sm:$0xff]
    %v307 = vld [vmem:[%s2 + $0x2b0] sm:$0xff]
    %v308 = vld [vmem:[%s2 + $0x2b8] sm:$0xff]
    %v309 = vld [vmem:[%s2 + $0x2c0] sm:$0xff]
    %v310 = vld [vmem:[%s2 + $0x2c8] sm:$0xff]
    %v311 = vld [vmem:[%s2 + $0x2d0] sm:$0xff]
    %v312 = vld [vmem:[%s2 + $0x2d8] sm:$0xff]
    %v313 = vld [vmem:[%s2 + $0x2e0] sm:$0xff]
    %v314 = vld [vmem:[%s2 + $0x2e8] sm:$0xff]
    %v315 = vld [vmem:[%s2 + $0x2f0] sm:$0xff]
    %v316 = vld [vmem:[%s2 + $0x2f8] sm:$0xff]
    %v317 = vld [vmem:[%s2 + $0x300] sm:$0xff]
    %v318 = vld [vmem:[%s2 + $0x308] sm:$0xff]
    %v319 = vld [vmem:[%s2 + $0x310] sm:$0xff]
    %v320 = vld [vmem:[%s2 + $0x318] sm:$0xff]
    %v321 = vld [vmem:[%s2 + $0x320] sm:$0xff]
    %v322 = vld [vmem:[%s2 + $0x328] sm:$0xff]
    %v323 = vld [vmem:[%s2 + $0x330] sm:$0xff]
    %v324 = vld [vmem:[%s2 + $0x338] sm:$0xff]
    %v325 = vld [vmem:[%s2 + $0x340] sm:$0xff]
    %v326 = vld [vmem:[%s2 + $0x348] sm:$0xff]
    %v327 = vld [vmem:[%s2 + $0x350] sm:$0xff]
    %v328 = vld [vmem:[%s2 + $0x358] sm:$0xff]
    %v329 = vld [vmem:[%s2 + $0x360] sm:$0xff]
    %v330 = vld [vmem:[%s2 + $0x368] sm:$0xff]
    %v331 = vld [vmem:[%s2 + $0x370] sm:$0xff]
    %v332 = vld [vmem:[%s2 + $0x378] sm:$0xff]
    %v333 = vld [vmem:[%s2 + $0x380] sm:$0xff]
    %v334 = vld [vmem:[%s2 + $0x388] sm:$0xff]
    %v335 = vld [vmem:[%s2 + $0x390] sm:$0xff]
    %v336 = vld [vmem:[%s2 + $0x398] sm:$0xff]
    %v337 = vld [vmem:[%s2 + $0x3a0] sm:$0xff]
    %v338 = vld [vmem:[%s2 + $0x3a8] sm:$0xff]
    %v339 = vld [vmem:[%s2 + $0x3b0] sm:$0xff]
    %v340 = vld [vmem:[%s2 + $0x3b8] sm:$0xff]
    %v341 = vld [vmem:[%s2 + $0x3c0] sm:$0xff]
    %v342 = vld [vmem:[%s2 + $0x3c8] sm:$0xff]
    %v343 = vld [vmem:[%s2 + $0x3d0] sm:$0xff]
    %v344 = vld [vmem:[%s2 + $0x3d8] sm:$0xff]
    %v345 = vld [vmem:[%s2 + $0x3e0] sm:$0xff]
    %v346 = vld [vmem:[%s2 + $0x3e8] sm:$0xff]
    %v347 = vld [vmem:[%s2 + $0x3f0] sm:$0xff]
    %v348 = vld [vmem:[%s2 + $0x3f8] sm:$0xff]
    %v349 = vld [vmem:[%s2 + $0x400] sm:$0xff]
    %v350 = vld [vmem:[%s2 + $0x408] sm:$0xff]
    %v351 = vld [vmem:[%s2 + $0x410] sm:$0xff]
    %v352 = vld [vmem:[%s2 + $0x418] sm:$0xff]
    %v353 = vld [vmem:[%s2 + $0x420] sm:$0xff]
    %v354 = vld [vmem:[%s2 + $0x428] sm:$0xff]
    %v355 = vld [vmem:[%s2 + $0x430] sm:$0xff]
    %v356 = vld [vmem:[%s2 + $0x438] sm:$0xff]
    %v357 = vld [vmem:[%s2 + $0x440] sm:$0xff]
    %v358 = vld [vmem:[%s2 + $0x448] sm:$0xff]
    %v359 = vld [vmem:[%s2 + $0x450] sm:$0xff]
    %v360 = vld [vmem:[%s2 + $0x458] sm:$0xff]
    %v361 = vld [vmem:[%s2 + $0x460] sm:$0xff]
    %v362 = vld [vmem:[%s2 + $0x468] sm:$0xff]
    %v363 = vld [vmem:[%s2 + $0x470] sm:$0xff]
    %v364 = vld [vmem:[%s2 + $0x478] sm:$0xff]
    %v365 = vld [vmem:[%s2 + $0x480] sm:$0xff]
    %v366 = vld [vmem:[%s2 + $0x488] sm:$0xff]
    %v367 = vld [vmem:[%s2 + $0x490] sm:$0xff]
    %v368 = vld [vmem:[%s2 + $0x498] sm:$0xff]
    %v369 = vld [vmem:[%s2 + $0x4a0] sm:$0xff]
    %v370 = vld [vmem:[%s2 + $0x4a8] sm:$0xff]
    %v371 = vld [vmem:[%s2 + $0x4b0] sm:$0xff]
    %v372 = vld [vmem:[%s2 + $0x4b8] sm:$0xff]
    %v373 = vld [vmem:[%s2 + $0x4c0] sm:$0xff]
    %v374 = vld [vmem:[%s2 + $0x4c8] sm:$0xff]
    %v375 = vld [vmem:[%s2 + $0x4d0] sm:$0xff]
    %v376 = vld [vmem:[%s2 + $0x4d8] sm:$0xff]
    %v377 = vld [vmem:[%s2 + $0x4e0] sm:$0xff]
    %v378 = vld [vmem:[%s2 + $0x4e8] sm:$0xff]
    %v379 = vld [vmem:[%s2 + $0x4f0] sm:$0xff]
    %v380 = vld [vmem:[%s2 + $0x4f8] sm:$0xff]
    %v381 = vld [vmem:[%s2 + $0x500] sm:$0xff]
    %v382 = vld [vmem:[%s2 + $0x508] sm:$0xff]
    %v383 = vld [vmem:[%s2 + $0x510] sm:$0xff]
    %v384 = vld [vmem:[%s2 + $0x518] sm:$0xff]
    %v385 = vld [vmem:[%s2 + $0x520] sm:$0xff]
    %v386 = vld [vmem:[%s2 + $0x528] sm:$0xff]
    %v387 = vld [vmem:[%s2 + $0x530] sm:$0xff]
    %v388 = vld [vmem:[%s2 + $0x538] sm:$0xff]
    %v389 = vld [vmem:[%s2 + $0x540] sm:$0xff]
    %v390 = vld [vmem:[%s2 + $0x548] sm:$0xff]
    %v391 = vld [vmem:[%s2 + $0x550] sm:$0xff]
    %v392 = vld [vmem:[%s2 + $0x558] sm:$0xff]
    %v393 = vld [vmem:[%s2 + $0x560] sm:$0xff]
    %v394 = vld [vmem:[%s2 + $0x568] sm:$0xff]
    %v395 = vld [vmem:[%s2 + $0x570] sm:$0xff]
    %v396 = vld [vmem:[%s2 + $0x578] sm:$0xff]
    %v397 = vld [vmem:[%s2 + $0x580] sm:$0xff]
    %v398 = vld [vmem:[%s2 + $0x588] sm:$0xff]
    %v399 = vld [vmem:[%s2 + $0x590] sm:$0xff]
    %v400 = vld [vmem:[%s2 + $0x598] sm:$0xff]
    %v401 = vld [vmem:[%s2 + $0x5a0] sm:$0xff]
    %v402 = vld [vmem:[%s2 + $0x5a8] sm:$0xff]
    %v403 = vld [vmem:[%s2 + $0x5b0] sm:$0xff]
    %v404 = vld [vmem:[%s2 + $0x5b8] sm:$0xff]
    %v405 = vld [vmem:[%s2 + $0x5c0] sm:$0xff]
    %v406 = vld [vmem:[%s2 + $0x5c8] sm:$0xff]
    %v407 = vld [vmem:[%s2 + $0x5d0] sm:$0xff]
    %v408 = vld [vmem:[%s2 + $0x5d8] sm:$0xff]
    %v409 = vld [vmem:[%s2 + $0x5e0] sm:$0xff]
    %v410 = vld [vmem:[%s2 + $0x5e8] sm:$0xff]
    %v411 = vld [vmem:[%s2 + $0x5f0] sm:$0xff]
    %v412 = vld [vmem:[%s2 + $0x5f8] sm:$0xff]
    %v413 = vlaneseq
    %v414 = vshrl.u32 %v413, 7
    %v415 = vadd.s32 %v414, 8
    %v416 = vadd.s32 %v414, 16
    %v417 = vadd.s32 %v414, 24
    %v418 = vadd.s32 %v414, 32
    %v419 = vadd.s32 %v414, 40
    %v420 = vadd.s32 %v414, 48
    %v421 = vadd.s32 %v414, 56
    %v422 = vadd.s32 %v414, 64
    %v423 = vadd.s32 %v414, 72
    %v424 = vadd.s32 %v414, 80
    %v425 = vadd.s32 %v414, 88
    %v426 = vadd.s32 %v414, 96
    %v427 = vadd.s32 %v414, 104
    %v428 = vadd.s32 %v414, 112
    %v429 = vadd.s32 %v414, 120
    %v430 = vadd.s32 %v414, 128
    %v431 = vadd.s32 %v414, 136
    %v432 = vadd.s32 %v414, 144
    %v433 = vadd.s32 %v414, 152
    %v434 = vadd.s32 %v414, 160
    %v435 = vadd.s32 %v414, 168
    %v436 = vadd.s32 %v414, 176
    %v437 = vadd.s32 %v414, 184
    %v438 = vadd.s32 %v414, 192
    %v439 = vadd.s32 %v414, 200
    %v440 = vadd.s32 %v414, 208
    %v441 = vadd.s32 %v414, 216
    %v442 = vadd.s32 %v414, 224
    %v443 = vadd.s32 %v414, 232
    %v444 = vadd.s32 %v414, 240
    %v445 = vadd.s32 %v414, 248
    %v446 = vadd.s32 %v414, 256
    %v447 = vadd.s32 %v414, 264
    %v448 = vadd.s32 %v414, 272
    %v449 = vadd.s32 %v414, 280
    %v450 = vadd.s32 %v414, 288
    %v451 = vadd.s32 %v414, 296
    %v452 = vadd.s32 %v414, 304
    %v453 = vadd.s32 %v414, 312
    %v454 = vadd.s32 %v414, 320
    %v455 = vadd.s32 %v414, 328
    %v456 = vadd.s32 %v414, 336
    %v457 = vadd.s32 %v414, 344
    %v458 = vadd.s32 %v414, 352
    %v459 = vadd.s32 %v414, 360
    %v460 = vadd.s32 %v414, 368
    %v461 = vadd.s32 %v414, 376
    %v462 = vadd.s32 %v414, 384
    %v463 = vadd.s32 %v414, 392
    %v464 = vadd.s32 %v414, 400
    %v465 = vadd.s32 %v414, 408
    %v466 = vadd.s32 %v414, 416
    %v467 = vadd.s32 %v414, 424
    %v468 = vadd.s32 %v414, 432
    %v469 = vadd.s32 %v414, 440
    %v470 = vadd.s32 %v414, 448
    %v471 = vadd.s32 %v414, 456
    %v472 = vadd.s32 %v414, 464
    %v473 = vadd.s32 %v414, 472
    %v474 = vadd.s32 %v414, 480
    %v475 = vadd.s32 %v414, 488
    %v476 = vadd.s32 %v414, 496
    %v477 = vadd.s32 %v414, 504
    %vm478 = vcmp.lt.s32.totalorder %v414, 468
    %vm479 = vcmp.lt.s32.totalorder %v415, 468
    %vm480 = vcmp.lt.s32.totalorder %v416, 468
    %vm481 = vcmp.lt.s32.totalorder %v417, 468
    %vm482 = vcmp.lt.s32.totalorder %v418, 468
    %vm483 = vcmp.lt.s32.totalorder %v419, 468
    %vm484 = vcmp.lt.s32.totalorder %v420, 468
    %vm485 = vcmp.lt.s32.totalorder %v421, 468
    %vm486 = vcmp.lt.s32.totalorder %v422, 468
    %vm487 = vcmp.lt.s32.totalorder %v423, 468
    %vm488 = vcmp.lt.s32.totalorder %v424, 468
    %vm489 = vcmp.lt.s32.totalorder %v425, 468
    %vm490 = vcmp.lt.s32.totalorder %v426, 468
    %vm491 = vcmp.lt.s32.totalorder %v427, 468
    %vm492 = vcmp.lt.s32.totalorder %v428, 468
    %vm493 = vcmp.lt.s32.totalorder %v429, 468
    %vm494 = vcmp.lt.s32.totalorder %v430, 468
    %vm495 = vcmp.lt.s32.totalorder %v431, 468
    %vm496 = vcmp.lt.s32.totalorder %v432, 468
    %vm497 = vcmp.lt.s32.totalorder %v433, 468
    %vm498 = vcmp.lt.s32.totalorder %v434, 468
    %vm499 = vcmp.lt.s32.totalorder %v435, 468
    %vm500 = vcmp.lt.s32.totalorder %v436, 468
    %vm501 = vcmp.lt.s32.totalorder %v437, 468
    %vm502 = vcmp.lt.s32.totalorder %v438, 468
    %vm503 = vcmp.lt.s32.totalorder %v439, 468
    %vm504 = vcmp.lt.s32.totalorder %v440, 468
    %vm505 = vcmp.lt.s32.totalorder %v441, 468
    %vm506 = vcmp.lt.s32.totalorder %v442, 468
    %vm507 = vcmp.lt.s32.totalorder %v443, 468
    %vm508 = vcmp.lt.s32.totalorder %v444, 468
    %vm509 = vcmp.lt.s32.totalorder %v445, 468
    %vm510 = vcmp.lt.s32.totalorder %v446, 468
    %vm511 = vcmp.lt.s32.totalorder %v447, 468
    %vm512 = vcmp.lt.s32.totalorder %v448, 468
    %vm513 = vcmp.lt.s32.totalorder %v449, 468
    %vm514 = vcmp.lt.s32.totalorder %v450, 468
    %vm515 = vcmp.lt.s32.totalorder %v451, 468
    %vm516 = vcmp.lt.s32.totalorder %v452, 468
    %vm517 = vcmp.lt.s32.totalorder %v453, 468
    %vm518 = vcmp.lt.s32.totalorder %v454, 468
    %vm519 = vcmp.lt.s32.totalorder %v455, 468
    %vm520 = vcmp.lt.s32.totalorder %v456, 468
    %vm521 = vcmp.lt.s32.totalorder %v457, 468
    %vm522 = vcmp.lt.s32.totalorder %v458, 468
    %vm523 = vcmp.lt.s32.totalorder %v459, 468
    %vm524 = vcmp.lt.s32.totalorder %v460, 468
    %vm525 = vcmp.lt.s32.totalorder %v461, 468
    %vm526 = vcmp.lt.s32.totalorder %v462, 468
    %vm527 = vcmp.lt.s32.totalorder %v463, 468
    %vm528 = vcmp.lt.s32.totalorder %v464, 468
    %vm529 = vcmp.lt.s32.totalorder %v465, 468
    %vm530 = vcmp.lt.s32.totalorder %v466, 468
    %vm531 = vcmp.lt.s32.totalorder %v467, 468
    %vm532 = vcmp.lt.s32.totalorder %v468, 468
    %vm533 = vcmp.lt.s32.totalorder %v469, 468
    %vm534 = vcmp.lt.s32.totalorder %v470, 468
    %vm535 = vcmp.lt.s32.totalorder %v471, 468
    %vm536 = vcmp.lt.s32.totalorder %v472, 468
    %vm537 = vcmp.lt.s32.totalorder %v473, 468
    %vm538 = vcmp.lt.s32.totalorder %v474, 468
    %vm539 = vcmp.lt.s32.totalorder %v475, 468
    %vm540 = vcmp.lt.s32.totalorder %v476, 468
    %vm541 = vcmp.lt.s32.totalorder %v477, 468
    %v542 = vsel %vm478, 1, 0
    %v543 = vsel %vm479, 1, 0
    %v544 = vsel %vm480, 1, 0
    %v545 = vsel %vm481, 1, 0
    %v546 = vsel %vm482, 1, 0
    %v547 = vsel %vm483, 1, 0
    %v548 = vsel %vm484, 1, 0
    %v549 = vsel %vm485, 1, 0
    %v550 = vsel %vm486, 1, 0
    %v551 = vsel %vm487, 1, 0
    %v552 = vsel %vm488, 1, 0
    %v553 = vsel %vm489, 1, 0
    %v554 = vsel %vm490, 1, 0
    %v555 = vsel %vm491, 1, 0
    %v556 = vsel %vm492, 1, 0
    %v557 = vsel %vm493, 1, 0
    %v558 = vsel %vm494, 1, 0
    %v559 = vsel %vm495, 1, 0
    %v560 = vsel %vm496, 1, 0
    %v561 = vsel %vm497, 1, 0
    %v562 = vsel %vm498, 1, 0
    %v563 = vsel %vm499, 1, 0
    %v564 = vsel %vm500, 1, 0
    %v565 = vsel %vm501, 1, 0
    %v566 = vsel %vm502, 1, 0
    %v567 = vsel %vm503, 1, 0
    %v568 = vsel %vm504, 1, 0
    %v569 = vsel %vm505, 1, 0
    %v570 = vsel %vm506, 1, 0
    %v571 = vsel %vm507, 1, 0
    %v572 = vsel %vm508, 1, 0
    %v573 = vsel %vm509, 1, 0
    %v574 = vsel %vm510, 1, 0
    %v575 = vsel %vm511, 1, 0
    %v576 = vsel %vm512, 1, 0
    %v577 = vsel %vm513, 1, 0
    %v578 = vsel %vm514, 1, 0
    %v579 = vsel %vm515, 1, 0
    %v580 = vsel %vm516, 1, 0
    %v581 = vsel %vm517, 1, 0
    %v582 = vsel %vm518, 1, 0
    %v583 = vsel %vm519, 1, 0
    %v584 = vsel %vm520, 1, 0
    %v585 = vsel %vm521, 1, 0
    %v586 = vsel %vm522, 1, 0
    %v587 = vsel %vm523, 1, 0
    %v588 = vsel %vm524, 1, 0
    %v589 = vsel %vm525, 1, 0
    %v590 = vsel %vm526, 1, 0
    %v591 = vsel %vm527, 1, 0
    %v592 = vsel %vm528, 1, 0
    %v593 = vsel %vm529, 1, 0
    %v594 = vsel %vm530, 1, 0
    %v595 = vsel %vm531, 1, 0
    %v596 = vsel %vm532, 1, 0
    %v597 = vsel %vm533, 1, 0
    %v598 = vsel %vm534, 1, 0
    %v599 = vsel %vm535, 1, 0
    %v600 = vsel %vm536, 1, 0
    %v601 = vsel %vm537, 1, 0
    %v602 = vsel %vm538, 1, 0
    %v603 = vsel %vm539, 1, 0
    %v604 = vsel %vm540, 1, 0
    %v605 = vsel %vm541, 1, 0
    %v606 = vcvt.s32.f32 %v542
    %v607 = vcvt.s32.f32 %v543
    %v608 = vcvt.s32.f32 %v544
    %v609 = vcvt.s32.f32 %v545
    %v610 = vcvt.s32.f32 %v546
    %v611 = vcvt.s32.f32 %v547
    %v612 = vcvt.s32.f32 %v548
    %v613 = vcvt.s32.f32 %v549
    %v614 = vcvt.s32.f32 %v550
    %v615 = vcvt.s32.f32 %v551
    %v616 = vcvt.s32.f32 %v552
    %v617 = vcvt.s32.f32 %v553
    %v618 = vcvt.s32.f32 %v554
    %v619 = vcvt.s32.f32 %v555
    %v620 = vcvt.s32.f32 %v556
    %v621 = vcvt.s32.f32 %v557
    %v622 = vcvt.s32.f32 %v558
    %v623 = vcvt.s32.f32 %v559
    %v624 = vcvt.s32.f32 %v560
    %v625 = vcvt.s32.f32 %v561
    %v626 = vcvt.s32.f32 %v562
    %v627 = vcvt.s32.f32 %v563
    %v628 = vcvt.s32.f32 %v564
    %v629 = vcvt.s32.f32 %v565
    %v630 = vcvt.s32.f32 %v566
    %v631 = vcvt.s32.f32 %v567
    %v632 = vcvt.s32.f32 %v568
    %v633 = vcvt.s32.f32 %v569
    %v634 = vcvt.s32.f32 %v570
    %v635 = vcvt.s32.f32 %v571
    %v636 = vcvt.s32.f32 %v572
    %v637 = vcvt.s32.f32 %v573
    %v638 = vcvt.s32.f32 %v574
    %v639 = vcvt.s32.f32 %v575
    %v640 = vcvt.s32.f32 %v576
    %v641 = vcvt.s32.f32 %v577
    %v642 = vcvt.s32.f32 %v578
    %v643 = vcvt.s32.f32 %v579
    %v644 = vcvt.s32.f32 %v580
    %v645 = vcvt.s32.f32 %v581
    %v646 = vcvt.s32.f32 %v582
    %v647 = vcvt.s32.f32 %v583
    %v648 = vcvt.s32.f32 %v584
    %v649 = vcvt.s32.f32 %v585
    %v650 = vcvt.s32.f32 %v586
    %v651 = vcvt.s32.f32 %v587
    %v652 = vcvt.s32.f32 %v588
    %v653 = vcvt.s32.f32 %v589
    %v654 = vcvt.s32.f32 %v590
    %v655 = vcvt.s32.f32 %v591
    %v656 = vcvt.s32.f32 %v592
    %v657 = vcvt.s32.f32 %v593
    %v658 = vcvt.s32.f32 %v594
    %v659 = vcvt.s32.f32 %v595
    %v660 = vcvt.s32.f32 %v596
    %v661 = vcvt.s32.f32 %v597
    %v662 = vcvt.s32.f32 %v598
    %v663 = vcvt.s32.f32 %v599
    %v664 = vcvt.s32.f32 %v600
    %v665 = vcvt.s32.f32 %v601
    %v666 = vcvt.s32.f32 %v602
    %v667 = vcvt.s32.f32 %v603
    %v668 = vcvt.s32.f32 %v604
    %v669 = vcvt.s32.f32 %v605
    %vm670 = vcmask 15360
    %v671 = vsel %vm670, %v29, 0.0
    %v672 = vsel %vm670, %v30, 0.0
    %v673 = vadd.f32 %v671, %v672
    %v674 = vsel %vm670, %v31, 0.0
    %v675 = vadd.f32 %v673, %v674
    %v676 = vsel %vm670, %v32, 0.0
    %v677 = vadd.f32 %v675, %v676
    %v678 = vsel %vm670, %v33, 0.0
    %v679 = vadd.f32 %v677, %v678
    %v680 = vsel %vm670, %v34, 0.0
    %v681 = vadd.f32 %v679, %v680
    %v682 = vsel %vm670, %v35, 0.0
    %v683 = vadd.f32 %v681, %v682
    %v684 = vsel %vm670, %v36, 0.0
    %v685 = vadd.f32 %v683, %v684
    %v686 = vsel %vm670, %v37, 0.0
    %v687 = vadd.f32 %v685, %v686
    %v688 = vsel %vm670, %v38, 0.0
    %v689 = vadd.f32 %v687, %v688
    %v690 = vsel %vm670, %v39, 0.0
    %v691 = vadd.f32 %v689, %v690
    %v692 = vsel %vm670, %v40, 0.0
    %v693 = vadd.f32 %v691, %v692
    %v694 = vsel %vm670, %v41, 0.0
    %v695 = vadd.f32 %v693, %v694
    %v696 = vsel %vm670, %v42, 0.0
    %v697 = vadd.f32 %v695, %v696
    %v698 = vsel %vm670, %v43, 0.0
    %v699 = vadd.f32 %v697, %v698
    %v700 = vsel %vm670, %v44, 0.0
    %v701 = vadd.f32 %v699, %v700
    %v702 = vsel %vm670, %v45, 0.0
    %v703 = vadd.f32 %v701, %v702
    %v704 = vsel %vm670, %v46, 0.0
    %v705 = vadd.f32 %v703, %v704
    %v706 = vsel %vm670, %v47, 0.0
    %v707 = vadd.f32 %v705, %v706
    %v708 = vsel %vm670, %v48, 0.0
    %v709 = vadd.f32 %v707, %v708
    %v710 = vsel %vm670, %v49, 0.0
    %v711 = vadd.f32 %v709, %v710
    %v712 = vsel %vm670, %v50, 0.0
    %v713 = vadd.f32 %v711, %v712
    %v714 = vsel %vm670, %v51, 0.0
    %v715 = vadd.f32 %v713, %v714
    %v716 = vsel %vm670, %v52, 0.0
    %v717 = vadd.f32 %v715, %v716
    %v718 = vsel %vm670, %v53, 0.0
    %v719 = vadd.f32 %v717, %v718
    %v720 = vsel %vm670, %v54, 0.0
    %v721 = vadd.f32 %v719, %v720
    %v722 = vsel %vm670, %v55, 0.0
    %v723 = vadd.f32 %v721, %v722
    %v724 = vsel %vm670, %v56, 0.0
    %v725 = vadd.f32 %v723, %v724
    %v726 = vsel %vm670, %v57, 0.0
    %v727 = vadd.f32 %v725, %v726
    %v728 = vsel %vm670, %v58, 0.0
    %v729 = vadd.f32 %v727, %v728
    %v730 = vsel %vm670, %v59, 0.0
    %v731 = vadd.f32 %v729, %v730
    %v732 = vsel %vm670, %v60, 0.0
    %v733 = vadd.f32 %v731, %v732
    %v734 = vsel %vm670, %v61, 0.0
    %v735 = vadd.f32 %v733, %v734
    %v736 = vsel %vm670, %v62, 0.0
    %v737 = vadd.f32 %v735, %v736
    %v738 = vsel %vm670, %v63, 0.0
    %v739 = vadd.f32 %v737, %v738
    %v740 = vsel %vm670, %v64, 0.0
    %v741 = vadd.f32 %v739, %v740
    %v742 = vsel %vm670, %v65, 0.0
    %v743 = vadd.f32 %v741, %v742
    %v744 = vsel %vm670, %v66, 0.0
    %v745 = vadd.f32 %v743, %v744
    %v746 = vsel %vm670, %v67, 0.0
    %v747 = vadd.f32 %v745, %v746
    %v748 = vsel %vm670, %v68, 0.0
    %v749 = vadd.f32 %v747, %v748
    %v750 = vsel %vm670, %v69, 0.0
    %v751 = vadd.f32 %v749, %v750
    %v752 = vsel %vm670, %v70, 0.0
    %v753 = vadd.f32 %v751, %v752
    %v754 = vsel %vm670, %v71, 0.0
    %v755 = vadd.f32 %v753, %v754
    %v756 = vsel %vm670, %v72, 0.0
    %v757 = vadd.f32 %v755, %v756
    %v758 = vsel %vm670, %v73, 0.0
    %v759 = vadd.f32 %v757, %v758
    %v760 = vsel %vm670, %v74, 0.0
    %v761 = vadd.f32 %v759, %v760
    %v762 = vsel %vm670, %v75, 0.0
    %v763 = vadd.f32 %v761, %v762
    %v764 = vsel %vm670, %v76, 0.0
    %v765 = vadd.f32 %v763, %v764
    %v766 = vsel %vm670, %v77, 0.0
    %v767 = vadd.f32 %v765, %v766
    %v768 = vsel %vm670, %v78, 0.0
    %v769 = vadd.f32 %v767, %v768
    %v770 = vsel %vm670, %v79, 0.0
    %v771 = vadd.f32 %v769, %v770
    %v772 = vsel %vm670, %v80, 0.0
    %v773 = vadd.f32 %v771, %v772
    %v774 = vsel %vm670, %v81, 0.0
    %v775 = vadd.f32 %v773, %v774
    %v776 = vsel %vm670, %v82, 0.0
    %v777 = vadd.f32 %v775, %v776
    %v778 = vsel %vm670, %v83, 0.0
    %v779 = vadd.f32 %v777, %v778
    %v780 = vsel %vm670, %v84, 0.0
    %v781 = vadd.f32 %v779, %v780
    %v782 = vsel %vm670, %v85, 0.0
    %v783 = vadd.f32 %v781, %v782
    %v784 = vsel %vm670, %v86, 0.0
    %v785 = vadd.f32 %v783, %v784
    %v786 = vsel %vm670, %v87, 0.0
    %v787 = vadd.f32 %v785, %v786
    %v788 = vsel %vm670, %v88, 0.0
    %v789 = vadd.f32 %v787, %v788
    %v790 = vsel %vm670, %v89, 0.0
    %v791 = vadd.f32 %v789, %v790
    %v792 = vsel %vm670, %v90, 0.0
    %v793 = vadd.f32 %v791, %v792
    %v794 = vsel %vm670, %v91, 0.0
    %v795 = vadd.f32 %v793, %v794
    %v796 = vsel %vm670, %v92, 0.0
    %v797 = vadd.f32 %v795, %v796
    %v798 = vrot.slane %v797, 4
    %v799 = vadd.f32 %v797, %v798
    %v800 = vrot.slane %v799, 2
    %v801 = vadd.f32 %v799, %v800
    %v802 = vrot.slane %v801, 1
    %v803 = vadd.f32 %v801, %v802
    %v804 = vsel %vm670, %v93, 0.0
    %v805 = vsel %vm670, %v94, 0.0
    %v806 = vadd.f32 %v804, %v805
    %v807 = vsel %vm670, %v95, 0.0
    %v808 = vadd.f32 %v806, %v807
    %v809 = vsel %vm670, %v96, 0.0
    %v810 = vadd.f32 %v808, %v809
    %v811 = vsel %vm670, %v97, 0.0
    %v812 = vadd.f32 %v810, %v811
    %v813 = vsel %vm670, %v98, 0.0
    %v814 = vadd.f32 %v812, %v813
    %v815 = vsel %vm670, %v99, 0.0
    %v816 = vadd.f32 %v814, %v815
    %v817 = vsel %vm670, %v100, 0.0
    %v818 = vadd.f32 %v816, %v817
    %v819 = vsel %vm670, %v101, 0.0
    %v820 = vadd.f32 %v818, %v819
    %v821 = vsel %vm670, %v102, 0.0
    %v822 = vadd.f32 %v820, %v821
    %v823 = vsel %vm670, %v103, 0.0
    %v824 = vadd.f32 %v822, %v823
    %v825 = vsel %vm670, %v104, 0.0
    %v826 = vadd.f32 %v824, %v825
    %v827 = vsel %vm670, %v105, 0.0
    %v828 = vadd.f32 %v826, %v827
    %v829 = vsel %vm670, %v106, 0.0
    %v830 = vadd.f32 %v828, %v829
    %v831 = vsel %vm670, %v107, 0.0
    %v832 = vadd.f32 %v830, %v831
    %v833 = vsel %vm670, %v108, 0.0
    %v834 = vadd.f32 %v832, %v833
    %v835 = vsel %vm670, %v109, 0.0
    %v836 = vadd.f32 %v834, %v835
    %v837 = vsel %vm670, %v110, 0.0
    %v838 = vadd.f32 %v836, %v837
    %v839 = vsel %vm670, %v111, 0.0
    %v840 = vadd.f32 %v838, %v839
    %v841 = vsel %vm670, %v112, 0.0
    %v842 = vadd.f32 %v840, %v841
    %v843 = vsel %vm670, %v113, 0.0
    %v844 = vadd.f32 %v842, %v843
    %v845 = vsel %vm670, %v114, 0.0
    %v846 = vadd.f32 %v844, %v845
    %v847 = vsel %vm670, %v115, 0.0
    %v848 = vadd.f32 %v846, %v847
    %v849 = vsel %vm670, %v116, 0.0
    %v850 = vadd.f32 %v848, %v849
    %v851 = vsel %vm670, %v117, 0.0
    %v852 = vadd.f32 %v850, %v851
    %v853 = vsel %vm670, %v118, 0.0
    %v854 = vadd.f32 %v852, %v853
    %v855 = vsel %vm670, %v119, 0.0
    %v856 = vadd.f32 %v854, %v855
    %v857 = vsel %vm670, %v120, 0.0
    %v858 = vadd.f32 %v856, %v857
    %v859 = vsel %vm670, %v121, 0.0
    %v860 = vadd.f32 %v858, %v859
    %v861 = vsel %vm670, %v122, 0.0
    %v862 = vadd.f32 %v860, %v861
    %v863 = vsel %vm670, %v123, 0.0
    %v864 = vadd.f32 %v862, %v863
    %v865 = vsel %vm670, %v124, 0.0
    %v866 = vadd.f32 %v864, %v865
    %v867 = vsel %vm670, %v125, 0.0
    %v868 = vadd.f32 %v866, %v867
    %v869 = vsel %vm670, %v126, 0.0
    %v870 = vadd.f32 %v868, %v869
    %v871 = vsel %vm670, %v127, 0.0
    %v872 = vadd.f32 %v870, %v871
    %v873 = vsel %vm670, %v128, 0.0
    %v874 = vadd.f32 %v872, %v873
    %v875 = vsel %vm670, %v129, 0.0
    %v876 = vadd.f32 %v874, %v875
    %v877 = vsel %vm670, %v130, 0.0
    %v878 = vadd.f32 %v876, %v877
    %v879 = vsel %vm670, %v131, 0.0
    %v880 = vadd.f32 %v878, %v879
    %v881 = vsel %vm670, %v132, 0.0
    %v882 = vadd.f32 %v880, %v881
    %v883 = vsel %vm670, %v133, 0.0
    %v884 = vadd.f32 %v882, %v883
    %v885 = vsel %vm670, %v134, 0.0
    %v886 = vadd.f32 %v884, %v885
    %v887 = vsel %vm670, %v135, 0.0
    %v888 = vadd.f32 %v886, %v887
    %v889 = vsel %vm670, %v136, 0.0
    %v890 = vadd.f32 %v888, %v889
    %v891 = vsel %vm670, %v137, 0.0
    %v892 = vadd.f32 %v890, %v891
    %v893 = vsel %vm670, %v138, 0.0
    %v894 = vadd.f32 %v892, %v893
    %v895 = vsel %vm670, %v139, 0.0
    %v896 = vadd.f32 %v894, %v895
    %v897 = vsel %vm670, %v140, 0.0
    %v898 = vadd.f32 %v896, %v897
    %v899 = vsel %vm670, %v141, 0.0
    %v900 = vadd.f32 %v898, %v899
    %v901 = vsel %vm670, %v142, 0.0
    %v902 = vadd.f32 %v900, %v901
    %v903 = vsel %vm670, %v143, 0.0
    %v904 = vadd.f32 %v902, %v903
    %v905 = vsel %vm670, %v144, 0.0
    %v906 = vadd.f32 %v904, %v905
    %v907 = vsel %vm670, %v145, 0.0
    %v908 = vadd.f32 %v906, %v907
    %v909 = vsel %vm670, %v146, 0.0
    %v910 = vadd.f32 %v908, %v909
    %v911 = vsel %vm670, %v147, 0.0
    %v912 = vadd.f32 %v910, %v911
    %v913 = vsel %vm670, %v148, 0.0
    %v914 = vadd.f32 %v912, %v913
    %v915 = vsel %vm670, %v149, 0.0
    %v916 = vadd.f32 %v914, %v915
    %v917 = vsel %vm670, %v150, 0.0
    %v918 = vadd.f32 %v916, %v917
    %v919 = vsel %vm670, %v151, 0.0
    %v920 = vadd.f32 %v918, %v919
    %v921 = vsel %vm670, %v152, 0.0
    %v922 = vadd.f32 %v920, %v921
    %v923 = vsel %vm670, %v153, 0.0
    %v924 = vadd.f32 %v922, %v923
    %v925 = vsel %vm670, %v154, 0.0
    %v926 = vadd.f32 %v924, %v925
    %v927 = vsel %vm670, %v155, 0.0
    %v928 = vadd.f32 %v926, %v927
    %v929 = vsel %vm670, %v156, 0.0
    %v930 = vadd.f32 %v928, %v929
    %v931 = vrot.slane %v930, 4
    %v932 = vadd.f32 %v930, %v931
    %v933 = vrot.slane %v932, 2
    %v934 = vadd.f32 %v932, %v933
    %v935 = vrot.slane %v934, 1
    %v936 = vadd.f32 %v934, %v935
    %v937 = vsel %vm670, %v157, 0.0
    %v938 = vsel %vm670, %v158, 0.0
    %v939 = vadd.f32 %v937, %v938
    %v940 = vsel %vm670, %v159, 0.0
    %v941 = vadd.f32 %v939, %v940
    %v942 = vsel %vm670, %v160, 0.0
    %v943 = vadd.f32 %v941, %v942
    %v944 = vsel %vm670, %v161, 0.0
    %v945 = vadd.f32 %v943, %v944
    %v946 = vsel %vm670, %v162, 0.0
    %v947 = vadd.f32 %v945, %v946
    %v948 = vsel %vm670, %v163, 0.0
    %v949 = vadd.f32 %v947, %v948
    %v950 = vsel %vm670, %v164, 0.0
    %v951 = vadd.f32 %v949, %v950
    %v952 = vsel %vm670, %v165, 0.0
    %v953 = vadd.f32 %v951, %v952
    %v954 = vsel %vm670, %v166, 0.0
    %v955 = vadd.f32 %v953, %v954
    %v956 = vsel %vm670, %v167, 0.0
    %v957 = vadd.f32 %v955, %v956
    %v958 = vsel %vm670, %v168, 0.0
    %v959 = vadd.f32 %v957, %v958
    %v960 = vsel %vm670, %v169, 0.0
    %v961 = vadd.f32 %v959, %v960
    %v962 = vsel %vm670, %v170, 0.0
    %v963 = vadd.f32 %v961, %v962
    %v964 = vsel %vm670, %v171, 0.0
    %v965 = vadd.f32 %v963, %v964
    %v966 = vsel %vm670, %v172, 0.0
    %v967 = vadd.f32 %v965, %v966
    %v968 = vsel %vm670, %v173, 0.0
    %v969 = vadd.f32 %v967, %v968
    %v970 = vsel %vm670, %v174, 0.0
    %v971 = vadd.f32 %v969, %v970
    %v972 = vsel %vm670, %v175, 0.0
    %v973 = vadd.f32 %v971, %v972
    %v974 = vsel %vm670, %v176, 0.0
    %v975 = vadd.f32 %v973, %v974
    %v976 = vsel %vm670, %v177, 0.0
    %v977 = vadd.f32 %v975, %v976
    %v978 = vsel %vm670, %v178, 0.0
    %v979 = vadd.f32 %v977, %v978
    %v980 = vsel %vm670, %v179, 0.0
    %v981 = vadd.f32 %v979, %v980
    %v982 = vsel %vm670, %v180, 0.0
    %v983 = vadd.f32 %v981, %v982
    %v984 = vsel %vm670, %v181, 0.0
    %v985 = vadd.f32 %v983, %v984
    %v986 = vsel %vm670, %v182, 0.0
    %v987 = vadd.f32 %v985, %v986
    %v988 = vsel %vm670, %v183, 0.0
    %v989 = vadd.f32 %v987, %v988
    %v990 = vsel %vm670, %v184, 0.0
    %v991 = vadd.f32 %v989, %v990
    %v992 = vsel %vm670, %v185, 0.0
    %v993 = vadd.f32 %v991, %v992
    %v994 = vsel %vm670, %v186, 0.0
    %v995 = vadd.f32 %v993, %v994
    %v996 = vsel %vm670, %v187, 0.0
    %v997 = vadd.f32 %v995, %v996
    %v998 = vsel %vm670, %v188, 0.0
    %v999 = vadd.f32 %v997, %v998
    %v1000 = vsel %vm670, %v189, 0.0
    %v1001 = vadd.f32 %v999, %v1000
    %v1002 = vsel %vm670, %v190, 0.0
    %v1003 = vadd.f32 %v1001, %v1002
    %v1004 = vsel %vm670, %v191, 0.0
    %v1005 = vadd.f32 %v1003, %v1004
    %v1006 = vsel %vm670, %v192, 0.0
    %v1007 = vadd.f32 %v1005, %v1006
    %v1008 = vsel %vm670, %v193, 0.0
    %v1009 = vadd.f32 %v1007, %v1008
    %v1010 = vsel %vm670, %v194, 0.0
    %v1011 = vadd.f32 %v1009, %v1010
    %v1012 = vsel %vm670, %v195, 0.0
    %v1013 = vadd.f32 %v1011, %v1012
    %v1014 = vsel %vm670, %v196, 0.0
    %v1015 = vadd.f32 %v1013, %v1014
    %v1016 = vsel %vm670, %v197, 0.0
    %v1017 = vadd.f32 %v1015, %v1016
    %v1018 = vsel %vm670, %v198, 0.0
    %v1019 = vadd.f32 %v1017, %v1018
    %v1020 = vsel %vm670, %v199, 0.0
    %v1021 = vadd.f32 %v1019, %v1020
    %v1022 = vsel %vm670, %v200, 0.0
    %v1023 = vadd.f32 %v1021, %v1022
    %v1024 = vsel %vm670, %v201, 0.0
    %v1025 = vadd.f32 %v1023, %v1024
    %v1026 = vsel %vm670, %v202, 0.0
    %v1027 = vadd.f32 %v1025, %v1026
    %v1028 = vsel %vm670, %v203, 0.0
    %v1029 = vadd.f32 %v1027, %v1028
    %v1030 = vsel %vm670, %v204, 0.0
    %v1031 = vadd.f32 %v1029, %v1030
    %v1032 = vsel %vm670, %v205, 0.0
    %v1033 = vadd.f32 %v1031, %v1032
    %v1034 = vsel %vm670, %v206, 0.0
    %v1035 = vadd.f32 %v1033, %v1034
    %v1036 = vsel %vm670, %v207, 0.0
    %v1037 = vadd.f32 %v1035, %v1036
    %v1038 = vsel %vm670, %v208, 0.0
    %v1039 = vadd.f32 %v1037, %v1038
    %v1040 = vsel %vm670, %v209, 0.0
    %v1041 = vadd.f32 %v1039, %v1040
    %v1042 = vsel %vm670, %v210, 0.0
    %v1043 = vadd.f32 %v1041, %v1042
    %v1044 = vsel %vm670, %v211, 0.0
    %v1045 = vadd.f32 %v1043, %v1044
    %v1046 = vsel %vm670, %v212, 0.0
    %v1047 = vadd.f32 %v1045, %v1046
    %v1048 = vsel %vm670, %v213, 0.0
    %v1049 = vadd.f32 %v1047, %v1048
    %v1050 = vsel %vm670, %v214, 0.0
    %v1051 = vadd.f32 %v1049, %v1050
    %v1052 = vsel %vm670, %v215, 0.0
    %v1053 = vadd.f32 %v1051, %v1052
    %v1054 = vsel %vm670, %v216, 0.0
    %v1055 = vadd.f32 %v1053, %v1054
    %v1056 = vsel %vm670, %v217, 0.0
    %v1057 = vadd.f32 %v1055, %v1056
    %v1058 = vsel %vm670, %v218, 0.0
    %v1059 = vadd.f32 %v1057, %v1058
    %v1060 = vsel %vm670, %v219, 0.0
    %v1061 = vadd.f32 %v1059, %v1060
    %v1062 = vsel %vm670, %v220, 0.0
    %v1063 = vadd.f32 %v1061, %v1062
    %v1064 = vrot.slane %v1063, 4
    %v1065 = vadd.f32 %v1063, %v1064
    %v1066 = vrot.slane %v1065, 2
    %v1067 = vadd.f32 %v1065, %v1066
    %v1068 = vrot.slane %v1067, 1
    %v1069 = vadd.f32 %v1067, %v1068
    %v1070 = vmul.f32 %v803, 0.0021367522
    %v1071 = vmul.f32 %v936, 0.0021367522
    %v1072 = vmul.f32 %v1069, 0.0021367522
    %v1073 = vsub.f32 %v29, %v1070
    %v1074 = vsub.f32 %v30, %v1070
    %v1075 = vsub.f32 %v31, %v1070
    %v1076 = vsub.f32 %v32, %v1070
    %v1077 = vsub.f32 %v33, %v1070
    %v1078 = vsub.f32 %v34, %v1070
    %v1079 = vsub.f32 %v35, %v1070
    %v1080 = vsub.f32 %v36, %v1070
    %v1081 = vsub.f32 %v37, %v1070
    %v1082 = vsub.f32 %v38, %v1070
    %v1083 = vsub.f32 %v39, %v1070
    %v1084 = vsub.f32 %v40, %v1070
    %v1085 = vsub.f32 %v41, %v1070
    %v1086 = vsub.f32 %v42, %v1070
    %v1087 = vsub.f32 %v43, %v1070
    %v1088 = vsub.f32 %v44, %v1070
    %v1089 = vsub.f32 %v45, %v1070
    %v1090 = vsub.f32 %v46, %v1070
    %v1091 = vsub.f32 %v47, %v1070
    %v1092 = vsub.f32 %v48, %v1070
    %v1093 = vsub.f32 %v49, %v1070
    %v1094 = vsub.f32 %v50, %v1070
    %v1095 = vsub.f32 %v51, %v1070
    %v1096 = vsub.f32 %v52, %v1070
    %v1097 = vsub.f32 %v53, %v1070
    %v1098 = vsub.f32 %v54, %v1070
    %v1099 = vsub.f32 %v55, %v1070
    %v1100 = vsub.f32 %v56, %v1070
    %v1101 = vsub.f32 %v57, %v1070
    %v1102 = vsub.f32 %v58, %v1070
    %v1103 = vsub.f32 %v59, %v1070
    %v1104 = vsub.f32 %v60, %v1070
    %v1105 = vsub.f32 %v61, %v1070
    %v1106 = vsub.f32 %v62, %v1070
    %v1107 = vsub.f32 %v63, %v1070
    %v1108 = vsub.f32 %v64, %v1070
    %v1109 = vsub.f32 %v65, %v1070
    %v1110 = vsub.f32 %v66, %v1070
    %v1111 = vsub.f32 %v67, %v1070
    %v1112 = vsub.f32 %v68, %v1070
    %v1113 = vsub.f32 %v69, %v1070
    %v1114 = vsub.f32 %v70, %v1070
    %v1115 = vsub.f32 %v71, %v1070
    %v1116 = vsub.f32 %v72, %v1070
    %v1117 = vsub.f32 %v73, %v1070
    %v1118 = vsub.f32 %v74, %v1070
    %v1119 = vsub.f32 %v75, %v1070
    %v1120 = vsub.f32 %v76, %v1070
    %v1121 = vsub.f32 %v77, %v1070
    %v1122 = vsub.f32 %v78, %v1070
    %v1123 = vsub.f32 %v79, %v1070
    %v1124 = vsub.f32 %v80, %v1070
    %v1125 = vsub.f32 %v81, %v1070
    %v1126 = vsub.f32 %v82, %v1070
    %v1127 = vsub.f32 %v83, %v1070
    %v1128 = vsub.f32 %v84, %v1070
    %v1129 = vsub.f32 %v85, %v1070
    %v1130 = vsub.f32 %v86, %v1070
    %v1131 = vsub.f32 %v87, %v1070
    %v1132 = vsub.f32 %v88, %v1070
    %v1133 = vsub.f32 %v89, %v1070
    %v1134 = vsub.f32 %v90, %v1070
    %v1135 = vsub.f32 %v91, %v1070
    %v1136 = vsub.f32 %v92, %v1070
    %v1137 = vsub.f32 %v93, %v1071
    %v1138 = vsub.f32 %v94, %v1071
    %v1139 = vsub.f32 %v95, %v1071
    %v1140 = vsub.f32 %v96, %v1071
    %v1141 = vsub.f32 %v97, %v1071
    %v1142 = vsub.f32 %v98, %v1071
    %v1143 = vsub.f32 %v99, %v1071
    %v1144 = vsub.f32 %v100, %v1071
    %v1145 = vsub.f32 %v101, %v1071
    %v1146 = vsub.f32 %v102, %v1071
    %v1147 = vsub.f32 %v103, %v1071
    %v1148 = vsub.f32 %v104, %v1071
    %v1149 = vsub.f32 %v105, %v1071
    %v1150 = vsub.f32 %v106, %v1071
    %v1151 = vsub.f32 %v107, %v1071
    %v1152 = vsub.f32 %v108, %v1071
    %v1153 = vsub.f32 %v109, %v1071
    %v1154 = vsub.f32 %v110, %v1071
    %v1155 = vsub.f32 %v111, %v1071
    %v1156 = vsub.f32 %v112, %v1071
    %v1157 = vsub.f32 %v113, %v1071
    %v1158 = vsub.f32 %v114, %v1071
    %v1159 = vsub.f32 %v115, %v1071
    %v1160 = vsub.f32 %v116, %v1071
    %v1161 = vsub.f32 %v117, %v1071
    %v1162 = vsub.f32 %v118, %v1071
    %v1163 = vsub.f32 %v119, %v1071
    %v1164 = vsub.f32 %v120, %v1071
    %v1165 = vsub.f32 %v121, %v1071
    %v1166 = vsub.f32 %v122, %v1071
    %v1167 = vsub.f32 %v123, %v1071
    %v1168 = vsub.f32 %v124, %v1071
    %v1169 = vsub.f32 %v125, %v1071
    %v1170 = vsub.f32 %v126, %v1071
    %v1171 = vsub.f32 %v127, %v1071
    %v1172 = vsub.f32 %v128, %v1071
    %v1173 = vsub.f32 %v129, %v1071
    %v1174 = vsub.f32 %v130, %v1071
    %v1175 = vsub.f32 %v131, %v1071
    %v1176 = vsub.f32 %v132, %v1071
    %v1177 = vsub.f32 %v133, %v1071
    %v1178 = vsub.f32 %v134, %v1071
    %v1179 = vsub.f32 %v135, %v1071
    %v1180 = vsub.f32 %v136, %v1071
    %v1181 = vsub.f32 %v137, %v1071
    %v1182 = vsub.f32 %v138, %v1071
    %v1183 = vsub.f32 %v139, %v1071
    %v1184 = vsub.f32 %v140, %v1071
    %v1185 = vsub.f32 %v141, %v1071
    %v1186 = vsub.f32 %v142, %v1071
    %v1187 = vsub.f32 %v143, %v1071
    %v1188 = vsub.f32 %v144, %v1071
    %v1189 = vsub.f32 %v145, %v1071
    %v1190 = vsub.f32 %v146, %v1071
    %v1191 = vsub.f32 %v147, %v1071
    %v1192 = vsub.f32 %v148, %v1071
    %v1193 = vsub.f32 %v149, %v1071
    %v1194 = vsub.f32 %v150, %v1071
    %v1195 = vsub.f32 %v151, %v1071
    %v1196 = vsub.f32 %v152, %v1071
    %v1197 = vsub.f32 %v153, %v1071
    %v1198 = vsub.f32 %v154, %v1071
    %v1199 = vsub.f32 %v155, %v1071
    %v1200 = vsub.f32 %v156, %v1071
    %v1201 = vsub.f32 %v157, %v1072
    %v1202 = vsub.f32 %v158, %v1072
    %v1203 = vsub.f32 %v159, %v1072
    %v1204 = vsub.f32 %v160, %v1072
    %v1205 = vsub.f32 %v161, %v1072
    %v1206 = vsub.f32 %v162, %v1072
    %v1207 = vsub.f32 %v163, %v1072
    %v1208 = vsub.f32 %v164, %v1072
    %v1209 = vsub.f32 %v165, %v1072
    %v1210 = vsub.f32 %v166, %v1072
    %v1211 = vsub.f32 %v167, %v1072
    %v1212 = vsub.f32 %v168, %v1072
    %v1213 = vsub.f32 %v169, %v1072
    %v1214 = vsub.f32 %v170, %v1072
    %v1215 = vsub.f32 %v171, %v1072
    %v1216 = vsub.f32 %v172, %v1072
    %v1217 = vsub.f32 %v173, %v1072
    %v1218 = vsub.f32 %v174, %v1072
    %v1219 = vsub.f32 %v175, %v1072
    %v1220 = vsub.f32 %v176, %v1072
    %v1221 = vsub.f32 %v177, %v1072
    %v1222 = vsub.f32 %v178, %v1072
    %v1223 = vsub.f32 %v179, %v1072
    %v1224 = vsub.f32 %v180, %v1072
    %v1225 = vsub.f32 %v181, %v1072
    %v1226 = vsub.f32 %v182, %v1072
    %v1227 = vsub.f32 %v183, %v1072
    %v1228 = vsub.f32 %v184, %v1072
    %v1229 = vsub.f32 %v185, %v1072
    %v1230 = vsub.f32 %v186, %v1072
    %v1231 = vsub.f32 %v187, %v1072
    %v1232 = vsub.f32 %v188, %v1072
    %v1233 = vsub.f32 %v189, %v1072
    %v1234 = vsub.f32 %v190, %v1072
    %v1235 = vsub.f32 %v191, %v1072
    %v1236 = vsub.f32 %v192, %v1072
    %v1237 = vsub.f32 %v193, %v1072
    %v1238 = vsub.f32 %v194, %v1072
    %v1239 = vsub.f32 %v195, %v1072
    %v1240 = vsub.f32 %v196, %v1072
    %v1241 = vsub.f32 %v197, %v1072
    %v1242 = vsub.f32 %v198, %v1072
    %v1243 = vsub.f32 %v199, %v1072
    %v1244 = vsub.f32 %v200, %v1072
    %v1245 = vsub.f32 %v201, %v1072
    %v1246 = vsub.f32 %v202, %v1072
    %v1247 = vsub.f32 %v203, %v1072
    %v1248 = vsub.f32 %v204, %v1072
    %v1249 = vsub.f32 %v205, %v1072
    %v1250 = vsub.f32 %v206, %v1072
    %v1251 = vsub.f32 %v207, %v1072
    %v1252 = vsub.f32 %v208, %v1072
    %v1253 = vsub.f32 %v209, %v1072
    %v1254 = vsub.f32 %v210, %v1072
    %v1255 = vsub.f32 %v211, %v1072
    %v1256 = vsub.f32 %v212, %v1072
    %v1257 = vsub.f32 %v213, %v1072
    %v1258 = vsub.f32 %v214, %v1072
    %v1259 = vsub.f32 %v215, %v1072
    %v1260 = vsub.f32 %v216, %v1072
    %v1261 = vsub.f32 %v217, %v1072
    %v1262 = vsub.f32 %v218, %v1072
    %v1263 = vsub.f32 %v219, %v1072
    %v1264 = vsub.f32 %v220, %v1072
    %v1265 = vmul.f32 %v1073, %v606
    %v1266 = vmul.f32 %v1074, %v607
    %v1267 = vmul.f32 %v1075, %v608
    %v1268 = vmul.f32 %v1076, %v609
    %v1269 = vmul.f32 %v1077, %v610
    %v1270 = vmul.f32 %v1078, %v611
    %v1271 = vmul.f32 %v1079, %v612
    %v1272 = vmul.f32 %v1080, %v613
    %v1273 = vmul.f32 %v1081, %v614
    %v1274 = vmul.f32 %v1082, %v615
    %v1275 = vmul.f32 %v1083, %v616
    %v1276 = vmul.f32 %v1084, %v617
    %v1277 = vmul.f32 %v1085, %v618
    %v1278 = vmul.f32 %v1086, %v619
    %v1279 = vmul.f32 %v1087, %v620
    %v1280 = vmul.f32 %v1088, %v621
    %v1281 = vmul.f32 %v1089, %v622
    %v1282 = vmul.f32 %v1090, %v623
    %v1283 = vmul.f32 %v1091, %v624
    %v1284 = vmul.f32 %v1092, %v625
    %v1285 = vmul.f32 %v1093, %v626
    %v1286 = vmul.f32 %v1094, %v627
    %v1287 = vmul.f32 %v1095, %v628
    %v1288 = vmul.f32 %v1096, %v629
    %v1289 = vmul.f32 %v1097, %v630
    %v1290 = vmul.f32 %v1098, %v631
    %v1291 = vmul.f32 %v1099, %v632
    %v1292 = vmul.f32 %v1100, %v633
    %v1293 = vmul.f32 %v1101, %v634
    %v1294 = vmul.f32 %v1102, %v635
    %v1295 = vmul.f32 %v1103, %v636
    %v1296 = vmul.f32 %v1104, %v637
    %v1297 = vmul.f32 %v1105, %v638
    %v1298 = vmul.f32 %v1106, %v639
    %v1299 = vmul.f32 %v1107, %v640
    %v1300 = vmul.f32 %v1108, %v641
    %v1301 = vmul.f32 %v1109, %v642
    %v1302 = vmul.f32 %v1110, %v643
    %v1303 = vmul.f32 %v1111, %v644
    %v1304 = vmul.f32 %v1112, %v645
    %v1305 = vmul.f32 %v1113, %v646
    %v1306 = vmul.f32 %v1114, %v647
    %v1307 = vmul.f32 %v1115, %v648
    %v1308 = vmul.f32 %v1116, %v649
    %v1309 = vmul.f32 %v1117, %v650
    %v1310 = vmul.f32 %v1118, %v651
    %v1311 = vmul.f32 %v1119, %v652
    %v1312 = vmul.f32 %v1120, %v653
    %v1313 = vmul.f32 %v1121, %v654
    %v1314 = vmul.f32 %v1122, %v655
    %v1315 = vmul.f32 %v1123, %v656
    %v1316 = vmul.f32 %v1124, %v657
    %v1317 = vmul.f32 %v1125, %v658
    %v1318 = vmul.f32 %v1126, %v659
    %v1319 = vmul.f32 %v1127, %v660
    %v1320 = vmul.f32 %v1128, %v661
    %v1321 = vmul.f32 %v1129, %v662
    %v1322 = vmul.f32 %v1130, %v663
    %v1323 = vmul.f32 %v1131, %v664
    %v1324 = vmul.f32 %v1132, %v665
    %v1325 = vmul.f32 %v1133, %v666
    %v1326 = vmul.f32 %v1134, %v667
    %v1327 = vmul.f32 %v1135, %v668
    %v1328 = vmul.f32 %v1136, %v669
    %v1329 = vmul.f32 %v1137, %v606
    %v1330 = vmul.f32 %v1138, %v607
    %v1331 = vmul.f32 %v1139, %v608
    %v1332 = vmul.f32 %v1140, %v609
    %v1333 = vmul.f32 %v1141, %v610
    %v1334 = vmul.f32 %v1142, %v611
    %v1335 = vmul.f32 %v1143, %v612
    %v1336 = vmul.f32 %v1144, %v613
    %v1337 = vmul.f32 %v1145, %v614
    %v1338 = vmul.f32 %v1146, %v615
    %v1339 = vmul.f32 %v1147, %v616
    %v1340 = vmul.f32 %v1148, %v617
    %v1341 = vmul.f32 %v1149, %v618
    %v1342 = vmul.f32 %v1150, %v619
    %v1343 = vmul.f32 %v1151, %v620
    %v1344 = vmul.f32 %v1152, %v621
    %v1345 = vmul.f32 %v1153, %v622
    %v1346 = vmul.f32 %v1154, %v623
    %v1347 = vmul.f32 %v1155, %v624
    %v1348 = vmul.f32 %v1156, %v625
    %v1349 = vmul.f32 %v1157, %v626
    %v1350 = vmul.f32 %v1158, %v627
    %v1351 = vmul.f32 %v1159, %v628
    %v1352 = vmul.f32 %v1160, %v629
    %v1353 = vmul.f32 %v1161, %v630
    %v1354 = vmul.f32 %v1162, %v631
    %v1355 = vmul.f32 %v1163, %v632
    %v1356 = vmul.f32 %v1164, %v633
    %v1357 = vmul.f32 %v1165, %v634
    %v1358 = vmul.f32 %v1166, %v635
    %v1359 = vmul.f32 %v1167, %v636
    %v1360 = vmul.f32 %v1168, %v637
    %v1361 = vmul.f32 %v1169, %v638
    %v1362 = vmul.f32 %v1170, %v639
    %v1363 = vmul.f32 %v1171, %v640
    %v1364 = vmul.f32 %v1172, %v641
    %v1365 = vmul.f32 %v1173, %v642
    %v1366 = vmul.f32 %v1174, %v643
    %v1367 = vmul.f32 %v1175, %v644
    %v1368 = vmul.f32 %v1176, %v645
    %v1369 = vmul.f32 %v1177, %v646
    %v1370 = vmul.f32 %v1178, %v647
    %v1371 = vmul.f32 %v1179, %v648
    %v1372 = vmul.f32 %v1180, %v649
    %v1373 = vmul.f32 %v1181, %v650
    %v1374 = vmul.f32 %v1182, %v651
    %v1375 = vmul.f32 %v1183, %v652
    %v1376 = vmul.f32 %v1184, %v653
    %v1377 = vmul.f32 %v1185, %v654
    %v1378 = vmul.f32 %v1186, %v655
    %v1379 = vmul.f32 %v1187, %v656
    %v1380 = vmul.f32 %v1188, %v657
    %v1381 = vmul.f32 %v1189, %v658
    %v1382 = vmul.f32 %v1190, %v659
    %v1383 = vmul.f32 %v1191, %v660
    %v1384 = vmul.f32 %v1192, %v661
    %v1385 = vmul.f32 %v1193, %v662
    %v1386 = vmul.f32 %v1194, %v663
    %v1387 = vmul.f32 %v1195, %v664
    %v1388 = vmul.f32 %v1196, %v665
    %v1389 = vmul.f32 %v1197, %v666
    %v1390 = vmul.f32 %v1198, %v667
    %v1391 = vmul.f32 %v1199, %v668
    %v1392 = vmul.f32 %v1200, %v669
    %v1393 = vmul.f32 %v1201, %v606
    %v1394 = vmul.f32 %v1202, %v607
    %v1395 = vmul.f32 %v1203, %v608
    %v1396 = vmul.f32 %v1204, %v609
    %v1397 = vmul.f32 %v1205, %v610
    %v1398 = vmul.f32 %v1206, %v611
    %v1399 = vmul.f32 %v1207, %v612
    %v1400 = vmul.f32 %v1208, %v613
    %v1401 = vmul.f32 %v1209, %v614
    %v1402 = vmul.f32 %v1210, %v615
    %v1403 = vmul.f32 %v1211, %v616
    %v1404 = vmul.f32 %v1212, %v617
    %v1405 = vmul.f32 %v1213, %v618
    %v1406 = vmul.f32 %v1214, %v619
    %v1407 = vmul.f32 %v1215, %v620
    %v1408 = vmul.f32 %v1216, %v621
    %v1409 = vmul.f32 %v1217, %v622
    %v1410 = vmul.f32 %v1218, %v623
    %v1411 = vmul.f32 %v1219, %v624
    %v1412 = vmul.f32 %v1220, %v625
    %v1413 = vmul.f32 %v1221, %v626
    %v1414 = vmul.f32 %v1222, %v627
    %v1415 = vmul.f32 %v1223, %v628
    %v1416 = vmul.f32 %v1224, %v629
    %v1417 = vmul.f32 %v1225, %v630
    %v1418 = vmul.f32 %v1226, %v631
    %v1419 = vmul.f32 %v1227, %v632
    %v1420 = vmul.f32 %v1228, %v633
    %v1421 = vmul.f32 %v1229, %v634
    %v1422 = vmul.f32 %v1230, %v635
    %v1423 = vmul.f32 %v1231, %v636
    %v1424 = vmul.f32 %v1232, %v637
    %v1425 = vmul.f32 %v1233, %v638
    %v1426 = vmul.f32 %v1234, %v639
    %v1427 = vmul.f32 %v1235, %v640
    %v1428 = vmul.f32 %v1236, %v641
    %v1429 = vmul.f32 %v1237, %v642
    %v1430 = vmul.f32 %v1238, %v643
    %v1431 = vmul.f32 %v1239, %v644
    %v1432 = vmul.f32 %v1240, %v645
    %v1433 = vmul.f32 %v1241, %v646
    %v1434 = vmul.f32 %v1242, %v647
    %v1435 = vmul.f32 %v1243, %v648
    %v1436 = vmul.f32 %v1244, %v649
    %v1437 = vmul.f32 %v1245, %v650
    %v1438 = vmul.f32 %v1246, %v651
    %v1439 = vmul.f32 %v1247, %v652
    %v1440 = vmul.f32 %v1248, %v653
    %v1441 = vmul.f32 %v1249, %v654
    %v1442 = vmul.f32 %v1250, %v655
    %v1443 = vmul.f32 %v1251, %v656
    %v1444 = vmul.f32 %v1252, %v657
    %v1445 = vmul.f32 %v1253, %v658
    %v1446 = vmul.f32 %v1254, %v659
    %v1447 = vmul.f32 %v1255, %v660
    %v1448 = vmul.f32 %v1256, %v661
    %v1449 = vmul.f32 %v1257, %v662
    %v1450 = vmul.f32 %v1258, %v663
    %v1451 = vmul.f32 %v1259, %v664
    %v1452 = vmul.f32 %v1260, %v665
    %v1453 = vmul.f32 %v1261, %v666
    %v1454 = vmul.f32 %v1262, %v667
    %v1455 = vmul.f32 %v1263, %v668
    %v1456 = vmul.f32 %v1264, %v669
    %1458 = vset.pattern.permute.xlu0 0
    %1459 = vperm.xlu0 %1458, %v221
    %v1460 = vpop.permute.xlu0 %1459
    %1463 = vset.pattern.permute.xlu0 0
    %1464 = vperm.xlu0 %1463, %v222
    %v1465 = vpop.permute.xlu0 %1464
    %1468 = vset.pattern.permute.xlu0 0
    %1469 = vperm.xlu0 %1468, %v223
    %v1470 = vpop.permute.xlu0 %1469
    %1473 = vset.pattern.permute.xlu0 0
    %1474 = vperm.xlu0 %1473, %v224
    %v1475 = vpop.permute.xlu0 %1474
    %1478 = vset.pattern.permute.xlu0 0
    %1479 = vperm.xlu0 %1478, %v225
    %v1480 = vpop.permute.xlu0 %1479
    %1483 = vset.pattern.permute.xlu0 0
    %1484 = vperm.xlu0 %1483, %v226
    %v1485 = vpop.permute.xlu0 %1484
    %1488 = vset.pattern.permute.xlu0 0
    %1489 = vperm.xlu0 %1488, %v227
    %v1490 = vpop.permute.xlu0 %1489
    %1493 = vset.pattern.permute.xlu0 0
    %1494 = vperm.xlu0 %1493, %v228
    %v1495 = vpop.permute.xlu0 %1494
    %1498 = vset.pattern.permute.xlu0 0
    %1499 = vperm.xlu0 %1498, %v229
    %v1500 = vpop.permute.xlu0 %1499
    %1503 = vset.pattern.permute.xlu0 0
    %1504 = vperm.xlu0 %1503, %v230
    %v1505 = vpop.permute.xlu0 %1504
    %1508 = vset.pattern.permute.xlu0 0
    %1509 = vperm.xlu0 %1508, %v231
    %v1510 = vpop.permute.xlu0 %1509
    %1513 = vset.pattern.permute.xlu0 0
    %1514 = vperm.xlu0 %1513, %v232
    %v1515 = vpop.permute.xlu0 %1514
    %1518 = vset.pattern.permute.xlu0 0
    %1519 = vperm.xlu0 %1518, %v233
    %v1520 = vpop.permute.xlu0 %1519
    %1523 = vset.pattern.permute.xlu0 0
    %1524 = vperm.xlu0 %1523, %v234
    %v1525 = vpop.permute.xlu0 %1524
    %1528 = vset.pattern.permute.xlu0 0
    %1529 = vperm.xlu0 %1528, %v235
    %v1530 = vpop.permute.xlu0 %1529
    %1533 = vset.pattern.permute.xlu0 0
    %1534 = vperm.xlu0 %1533, %v236
    %v1535 = vpop.permute.xlu0 %1534
    %1538 = vset.pattern.permute.xlu0 0
    %1539 = vperm.xlu0 %1538, %v237
    %v1540 = vpop.permute.xlu0 %1539
    %1543 = vset.pattern.permute.xlu0 0
    %1544 = vperm.xlu0 %1543, %v238
    %v1545 = vpop.permute.xlu0 %1544
    %1548 = vset.pattern.permute.xlu0 0
    %1549 = vperm.xlu0 %1548, %v239
    %v1550 = vpop.permute.xlu0 %1549
    %1553 = vset.pattern.permute.xlu0 0
    %1554 = vperm.xlu0 %1553, %v240
    %v1555 = vpop.permute.xlu0 %1554
    %1558 = vset.pattern.permute.xlu0 0
    %1559 = vperm.xlu0 %1558, %v241
    %v1560 = vpop.permute.xlu0 %1559
    %1563 = vset.pattern.permute.xlu0 0
    %1564 = vperm.xlu0 %1563, %v242
    %v1565 = vpop.permute.xlu0 %1564
    %1568 = vset.pattern.permute.xlu0 0
    %1569 = vperm.xlu0 %1568, %v243
    %v1570 = vpop.permute.xlu0 %1569
    %1573 = vset.pattern.permute.xlu0 0
    %1574 = vperm.xlu0 %1573, %v244
    %v1575 = vpop.permute.xlu0 %1574
    %1578 = vset.pattern.permute.xlu0 0
    %1579 = vperm.xlu0 %1578, %v245
    %v1580 = vpop.permute.xlu0 %1579
    %1583 = vset.pattern.permute.xlu0 0
    %1584 = vperm.xlu0 %1583, %v246
    %v1585 = vpop.permute.xlu0 %1584
    %1588 = vset.pattern.permute.xlu0 0
    %1589 = vperm.xlu0 %1588, %v247
    %v1590 = vpop.permute.xlu0 %1589
    %1593 = vset.pattern.permute.xlu0 0
    %1594 = vperm.xlu0 %1593, %v248
    %v1595 = vpop.permute.xlu0 %1594
    %1598 = vset.pattern.permute.xlu0 0
    %1599 = vperm.xlu0 %1598, %v249
    %v1600 = vpop.permute.xlu0 %1599
    %1603 = vset.pattern.permute.xlu0 0
    %1604 = vperm.xlu0 %1603, %v250
    %v1605 = vpop.permute.xlu0 %1604
    %1608 = vset.pattern.permute.xlu0 0
    %1609 = vperm.xlu0 %1608, %v251
    %v1610 = vpop.permute.xlu0 %1609
    %1613 = vset.pattern.permute.xlu0 0
    %1614 = vperm.xlu0 %1613, %v252
    %v1615 = vpop.permute.xlu0 %1614
    %1618 = vset.pattern.permute.xlu0 0
    %1619 = vperm.xlu0 %1618, %v253
    %v1620 = vpop.permute.xlu0 %1619
    %1623 = vset.pattern.permute.xlu0 0
    %1624 = vperm.xlu0 %1623, %v254
    %v1625 = vpop.permute.xlu0 %1624
    %1628 = vset.pattern.permute.xlu0 0
    %1629 = vperm.xlu0 %1628, %v255
    %v1630 = vpop.permute.xlu0 %1629
    %1633 = vset.pattern.permute.xlu0 0
    %1634 = vperm.xlu0 %1633, %v256
    %v1635 = vpop.permute.xlu0 %1634
    %1638 = vset.pattern.permute.xlu0 0
    %1639 = vperm.xlu0 %1638, %v257
    %v1640 = vpop.permute.xlu0 %1639
    %1643 = vset.pattern.permute.xlu0 0
    %1644 = vperm.xlu0 %1643, %v258
    %v1645 = vpop.permute.xlu0 %1644
    %1648 = vset.pattern.permute.xlu0 0
    %1649 = vperm.xlu0 %1648, %v259
    %v1650 = vpop.permute.xlu0 %1649
    %1653 = vset.pattern.permute.xlu0 0
    %1654 = vperm.xlu0 %1653, %v260
    %v1655 = vpop.permute.xlu0 %1654
    %1658 = vset.pattern.permute.xlu0 0
    %1659 = vperm.xlu0 %1658, %v261
    %v1660 = vpop.permute.xlu0 %1659
    %1663 = vset.pattern.permute.xlu0 0
    %1664 = vperm.xlu0 %1663, %v262
    %v1665 = vpop.permute.xlu0 %1664
    %1668 = vset.pattern.permute.xlu0 0
    %1669 = vperm.xlu0 %1668, %v263
    %v1670 = vpop.permute.xlu0 %1669
    %1673 = vset.pattern.permute.xlu0 0
    %1674 = vperm.xlu0 %1673, %v264
    %v1675 = vpop.permute.xlu0 %1674
    %1678 = vset.pattern.permute.xlu0 0
    %1679 = vperm.xlu0 %1678, %v265
    %v1680 = vpop.permute.xlu0 %1679
    %1683 = vset.pattern.permute.xlu0 0
    %1684 = vperm.xlu0 %1683, %v266
    %v1685 = vpop.permute.xlu0 %1684
    %1688 = vset.pattern.permute.xlu0 0
    %1689 = vperm.xlu0 %1688, %v267
    %v1690 = vpop.permute.xlu0 %1689
    %1693 = vset.pattern.permute.xlu0 0
    %1694 = vperm.xlu0 %1693, %v268
    %v1695 = vpop.permute.xlu0 %1694
    %1698 = vset.pattern.permute.xlu0 0
    %1699 = vperm.xlu0 %1698, %v269
    %v1700 = vpop.permute.xlu0 %1699
    %1703 = vset.pattern.permute.xlu0 0
    %1704 = vperm.xlu0 %1703, %v270
    %v1705 = vpop.permute.xlu0 %1704
    %1708 = vset.pattern.permute.xlu0 0
    %1709 = vperm.xlu0 %1708, %v271
    %v1710 = vpop.permute.xlu0 %1709
    %1713 = vset.pattern.permute.xlu0 0
    %1714 = vperm.xlu0 %1713, %v272
    %v1715 = vpop.permute.xlu0 %1714
    %1718 = vset.pattern.permute.xlu0 0
    %1719 = vperm.xlu0 %1718, %v273
    %v1720 = vpop.permute.xlu0 %1719
    %1723 = vset.pattern.permute.xlu0 0
    %1724 = vperm.xlu0 %1723, %v274
    %v1725 = vpop.permute.xlu0 %1724
    %1728 = vset.pattern.permute.xlu0 0
    %1729 = vperm.xlu0 %1728, %v275
    %v1730 = vpop.permute.xlu0 %1729
    %1733 = vset.pattern.permute.xlu0 0
    %1734 = vperm.xlu0 %1733, %v276
    %v1735 = vpop.permute.xlu0 %1734
    %1738 = vset.pattern.permute.xlu0 0
    %1739 = vperm.xlu0 %1738, %v277
    %v1740 = vpop.permute.xlu0 %1739
    %1743 = vset.pattern.permute.xlu0 0
    %1744 = vperm.xlu0 %1743, %v278
    %v1745 = vpop.permute.xlu0 %1744
    %1748 = vset.pattern.permute.xlu0 0
    %1749 = vperm.xlu0 %1748, %v279
    %v1750 = vpop.permute.xlu0 %1749
    %1753 = vset.pattern.permute.xlu0 0
    %1754 = vperm.xlu0 %1753, %v280
    %v1755 = vpop.permute.xlu0 %1754
    %1758 = vset.pattern.permute.xlu0 0
    %1759 = vperm.xlu0 %1758, %v281
    %v1760 = vpop.permute.xlu0 %1759
    %1763 = vset.pattern.permute.xlu0 0
    %1764 = vperm.xlu0 %1763, %v282
    %v1765 = vpop.permute.xlu0 %1764
    %1768 = vset.pattern.permute.xlu0 0
    %1769 = vperm.xlu0 %1768, %v283
    %v1770 = vpop.permute.xlu0 %1769
    %1773 = vset.pattern.permute.xlu0 0
    %1774 = vperm.xlu0 %1773, %v284
    %v1775 = vpop.permute.xlu0 %1774
    %v1777 = vmul.f32 %v1265, %v1460
    %v1778 = vmul.f32 %v1266, %v1465
    %v1779 = vmul.f32 %v1267, %v1470
    %v1780 = vmul.f32 %v1268, %v1475
    %v1781 = vmul.f32 %v1269, %v1480
    %v1782 = vmul.f32 %v1270, %v1485
    %v1783 = vmul.f32 %v1271, %v1490
    %v1784 = vmul.f32 %v1272, %v1495
    %v1785 = vmul.f32 %v1273, %v1500
    %v1786 = vmul.f32 %v1274, %v1505
    %v1787 = vmul.f32 %v1275, %v1510
    %v1788 = vmul.f32 %v1276, %v1515
    %v1789 = vmul.f32 %v1277, %v1520
    %v1790 = vmul.f32 %v1278, %v1525
    %v1791 = vmul.f32 %v1279, %v1530
    %v1792 = vmul.f32 %v1280, %v1535
    %v1793 = vmul.f32 %v1281, %v1540
    %v1794 = vmul.f32 %v1282, %v1545
    %v1795 = vmul.f32 %v1283, %v1550
    %v1796 = vmul.f32 %v1284, %v1555
    %v1797 = vmul.f32 %v1285, %v1560
    %v1798 = vmul.f32 %v1286, %v1565
    %v1799 = vmul.f32 %v1287, %v1570
    %v1800 = vmul.f32 %v1288, %v1575
    %v1801 = vmul.f32 %v1289, %v1580
    %v1802 = vmul.f32 %v1290, %v1585
    %v1803 = vmul.f32 %v1291, %v1590
    %v1804 = vmul.f32 %v1292, %v1595
    %v1805 = vmul.f32 %v1293, %v1600
    %v1806 = vmul.f32 %v1294, %v1605
    %v1807 = vmul.f32 %v1295, %v1610
    %v1808 = vmul.f32 %v1296, %v1615
    %v1809 = vmul.f32 %v1297, %v1620
    %v1810 = vmul.f32 %v1298, %v1625
    %v1811 = vmul.f32 %v1299, %v1630
    %v1812 = vmul.f32 %v1300, %v1635
    %v1813 = vmul.f32 %v1301, %v1640
    %v1814 = vmul.f32 %v1302, %v1645
    %v1815 = vmul.f32 %v1303, %v1650
    %v1816 = vmul.f32 %v1304, %v1655
    %v1817 = vmul.f32 %v1305, %v1660
    %v1818 = vmul.f32 %v1306, %v1665
    %v1819 = vmul.f32 %v1307, %v1670
    %v1820 = vmul.f32 %v1308, %v1675
    %v1821 = vmul.f32 %v1309, %v1680
    %v1822 = vmul.f32 %v1310, %v1685
    %v1823 = vmul.f32 %v1311, %v1690
    %v1824 = vmul.f32 %v1312, %v1695
    %v1825 = vmul.f32 %v1313, %v1700
    %v1826 = vmul.f32 %v1314, %v1705
    %v1827 = vmul.f32 %v1315, %v1710
    %v1828 = vmul.f32 %v1316, %v1715
    %v1829 = vmul.f32 %v1317, %v1720
    %v1830 = vmul.f32 %v1318, %v1725
    %v1831 = vmul.f32 %v1319, %v1730
    %v1832 = vmul.f32 %v1320, %v1735
    %v1833 = vmul.f32 %v1321, %v1740
    %v1834 = vmul.f32 %v1322, %v1745
    %v1835 = vmul.f32 %v1323, %v1750
    %v1836 = vmul.f32 %v1324, %v1755
    %v1837 = vmul.f32 %v1325, %v1760
    %v1838 = vmul.f32 %v1326, %v1765
    %v1839 = vmul.f32 %v1327, %v1770
    %v1840 = vmul.f32 %v1328, %v1775
    %v1841 = vmul.f32 %v1329, %v1460
    %v1842 = vmul.f32 %v1330, %v1465
    %v1843 = vmul.f32 %v1331, %v1470
    %v1844 = vmul.f32 %v1332, %v1475
    %v1845 = vmul.f32 %v1333, %v1480
    %v1846 = vmul.f32 %v1334, %v1485
    %v1847 = vmul.f32 %v1335, %v1490
    %v1848 = vmul.f32 %v1336, %v1495
    %v1849 = vmul.f32 %v1337, %v1500
    %v1850 = vmul.f32 %v1338, %v1505
    %v1851 = vmul.f32 %v1339, %v1510
    %v1852 = vmul.f32 %v1340, %v1515
    %v1853 = vmul.f32 %v1341, %v1520
    %v1854 = vmul.f32 %v1342, %v1525
    %v1855 = vmul.f32 %v1343, %v1530
    %v1856 = vmul.f32 %v1344, %v1535
    %v1857 = vmul.f32 %v1345, %v1540
    %v1858 = vmul.f32 %v1346, %v1545
    %v1859 = vmul.f32 %v1347, %v1550
    %v1860 = vmul.f32 %v1348, %v1555
    %v1861 = vmul.f32 %v1349, %v1560
    %v1862 = vmul.f32 %v1350, %v1565
    %v1863 = vmul.f32 %v1351, %v1570
    %v1864 = vmul.f32 %v1352, %v1575
    %v1865 = vmul.f32 %v1353, %v1580
    %v1866 = vmul.f32 %v1354, %v1585
    %v1867 = vmul.f32 %v1355, %v1590
    %v1868 = vmul.f32 %v1356, %v1595
    %v1869 = vmul.f32 %v1357, %v1600
    %v1870 = vmul.f32 %v1358, %v1605
    %v1871 = vmul.f32 %v1359, %v1610
    %v1872 = vmul.f32 %v1360, %v1615
    %v1873 = vmul.f32 %v1361, %v1620
    %v1874 = vmul.f32 %v1362, %v1625
    %v1875 = vmul.f32 %v1363, %v1630
    %v1876 = vmul.f32 %v1364, %v1635
    %v1877 = vmul.f32 %v1365, %v1640
    %v1878 = vmul.f32 %v1366, %v1645
    %v1879 = vmul.f32 %v1367, %v1650
    %v1880 = vmul.f32 %v1368, %v1655
    %v1881 = vmul.f32 %v1369, %v1660
    %v1882 = vmul.f32 %v1370, %v1665
    %v1883 = vmul.f32 %v1371, %v1670
    %v1884 = vmul.f32 %v1372, %v1675
    %v1885 = vmul.f32 %v1373, %v1680
    %v1886 = vmul.f32 %v1374, %v1685
    %v1887 = vmul.f32 %v1375, %v1690
    %v1888 = vmul.f32 %v1376, %v1695
    %v1889 = vmul.f32 %v1377, %v1700
    %v1890 = vmul.f32 %v1378, %v1705
    %v1891 = vmul.f32 %v1379, %v1710
    %v1892 = vmul.f32 %v1380, %v1715
    %v1893 = vmul.f32 %v1381, %v1720
    %v1894 = vmul.f32 %v1382, %v1725
    %v1895 = vmul.f32 %v1383, %v1730
    %v1896 = vmul.f32 %v1384, %v1735
    %v1897 = vmul.f32 %v1385, %v1740
    %v1898 = vmul.f32 %v1386, %v1745
    %v1899 = vmul.f32 %v1387, %v1750
    %v1900 = vmul.f32 %v1388, %v1755
    %v1901 = vmul.f32 %v1389, %v1760
    %v1902 = vmul.f32 %v1390, %v1765
    %v1903 = vmul.f32 %v1391, %v1770
    %v1904 = vmul.f32 %v1392, %v1775
    %v1905 = vmul.f32 %v1393, %v1460
    %v1906 = vmul.f32 %v1394, %v1465
    %v1907 = vmul.f32 %v1395, %v1470
    %v1908 = vmul.f32 %v1396, %v1475
    %v1909 = vmul.f32 %v1397, %v1480
    %v1910 = vmul.f32 %v1398, %v1485
    %v1911 = vmul.f32 %v1399, %v1490
    %v1912 = vmul.f32 %v1400, %v1495
    %v1913 = vmul.f32 %v1401, %v1500
    %v1914 = vmul.f32 %v1402, %v1505
    %v1915 = vmul.f32 %v1403, %v1510
    %v1916 = vmul.f32 %v1404, %v1515
    %v1917 = vmul.f32 %v1405, %v1520
    %v1918 = vmul.f32 %v1406, %v1525
    %v1919 = vmul.f32 %v1407, %v1530
    %v1920 = vmul.f32 %v1408, %v1535
    %v1921 = vmul.f32 %v1409, %v1540
    %v1922 = vmul.f32 %v1410, %v1545
    %v1923 = vmul.f32 %v1411, %v1550
    %v1924 = vmul.f32 %v1412, %v1555
    %v1925 = vmul.f32 %v1413, %v1560
    %v1926 = vmul.f32 %v1414, %v1565
    %v1927 = vmul.f32 %v1415, %v1570
    %v1928 = vmul.f32 %v1416, %v1575
    %v1929 = vmul.f32 %v1417, %v1580
    %v1930 = vmul.f32 %v1418, %v1585
    %v1931 = vmul.f32 %v1419, %v1590
    %v1932 = vmul.f32 %v1420, %v1595
    %v1933 = vmul.f32 %v1421, %v1600
    %v1934 = vmul.f32 %v1422, %v1605
    %v1935 = vmul.f32 %v1423, %v1610
    %v1936 = vmul.f32 %v1424, %v1615
    %v1937 = vmul.f32 %v1425, %v1620
    %v1938 = vmul.f32 %v1426, %v1625
    %v1939 = vmul.f32 %v1427, %v1630
    %v1940 = vmul.f32 %v1428, %v1635
    %v1941 = vmul.f32 %v1429, %v1640
    %v1942 = vmul.f32 %v1430, %v1645
    %v1943 = vmul.f32 %v1431, %v1650
    %v1944 = vmul.f32 %v1432, %v1655
    %v1945 = vmul.f32 %v1433, %v1660
    %v1946 = vmul.f32 %v1434, %v1665
    %v1947 = vmul.f32 %v1435, %v1670
    %v1948 = vmul.f32 %v1436, %v1675
    %v1949 = vmul.f32 %v1437, %v1680
    %v1950 = vmul.f32 %v1438, %v1685
    %v1951 = vmul.f32 %v1439, %v1690
    %v1952 = vmul.f32 %v1440, %v1695
    %v1953 = vmul.f32 %v1441, %v1700
    %v1954 = vmul.f32 %v1442, %v1705
    %v1955 = vmul.f32 %v1443, %v1710
    %v1956 = vmul.f32 %v1444, %v1715
    %v1957 = vmul.f32 %v1445, %v1720
    %v1958 = vmul.f32 %v1446, %v1725
    %v1959 = vmul.f32 %v1447, %v1730
    %v1960 = vmul.f32 %v1448, %v1735
    %v1961 = vmul.f32 %v1449, %v1740
    %v1962 = vmul.f32 %v1450, %v1745
    %v1963 = vmul.f32 %v1451, %v1750
    %v1964 = vmul.f32 %v1452, %v1755
    %v1965 = vmul.f32 %v1453, %v1760
    %v1966 = vmul.f32 %v1454, %v1765
    %v1967 = vmul.f32 %v1455, %v1770
    %v1968 = vmul.f32 %v1456, %v1775
    %v1969 = vsel %vm670, %v1777, 0.0
    %v1970 = vsel %vm670, %v1778, 0.0
    %v1971 = vadd.f32 %v1969, %v1970
    %v1972 = vsel %vm670, %v1779, 0.0
    %v1973 = vadd.f32 %v1971, %v1972
    %v1974 = vsel %vm670, %v1780, 0.0
    %v1975 = vadd.f32 %v1973, %v1974
    %v1976 = vsel %vm670, %v1781, 0.0
    %v1977 = vadd.f32 %v1975, %v1976
    %v1978 = vsel %vm670, %v1782, 0.0
    %v1979 = vadd.f32 %v1977, %v1978
    %v1980 = vsel %vm670, %v1783, 0.0
    %v1981 = vadd.f32 %v1979, %v1980
    %v1982 = vsel %vm670, %v1784, 0.0
    %v1983 = vadd.f32 %v1981, %v1982
    %v1984 = vsel %vm670, %v1785, 0.0
    %v1985 = vadd.f32 %v1983, %v1984
    %v1986 = vsel %vm670, %v1786, 0.0
    %v1987 = vadd.f32 %v1985, %v1986
    %v1988 = vsel %vm670, %v1787, 0.0
    %v1989 = vadd.f32 %v1987, %v1988
    %v1990 = vsel %vm670, %v1788, 0.0
    %v1991 = vadd.f32 %v1989, %v1990
    %v1992 = vsel %vm670, %v1789, 0.0
    %v1993 = vadd.f32 %v1991, %v1992
    %v1994 = vsel %vm670, %v1790, 0.0
    %v1995 = vadd.f32 %v1993, %v1994
    %v1996 = vsel %vm670, %v1791, 0.0
    %v1997 = vadd.f32 %v1995, %v1996
    %v1998 = vsel %vm670, %v1792, 0.0
    %v1999 = vadd.f32 %v1997, %v1998
    %v2000 = vsel %vm670, %v1793, 0.0
    %v2001 = vadd.f32 %v1999, %v2000
    %v2002 = vsel %vm670, %v1794, 0.0
    %v2003 = vadd.f32 %v2001, %v2002
    %v2004 = vsel %vm670, %v1795, 0.0
    %v2005 = vadd.f32 %v2003, %v2004
    %v2006 = vsel %vm670, %v1796, 0.0
    %v2007 = vadd.f32 %v2005, %v2006
    %v2008 = vsel %vm670, %v1797, 0.0
    %v2009 = vadd.f32 %v2007, %v2008
    %v2010 = vsel %vm670, %v1798, 0.0
    %v2011 = vadd.f32 %v2009, %v2010
    %v2012 = vsel %vm670, %v1799, 0.0
    %v2013 = vadd.f32 %v2011, %v2012
    %v2014 = vsel %vm670, %v1800, 0.0
    %v2015 = vadd.f32 %v2013, %v2014
    %v2016 = vsel %vm670, %v1801, 0.0
    %v2017 = vadd.f32 %v2015, %v2016
    %v2018 = vsel %vm670, %v1802, 0.0
    %v2019 = vadd.f32 %v2017, %v2018
    %v2020 = vsel %vm670, %v1803, 0.0
    %v2021 = vadd.f32 %v2019, %v2020
    %v2022 = vsel %vm670, %v1804, 0.0
    %v2023 = vadd.f32 %v2021, %v2022
    %v2024 = vsel %vm670, %v1805, 0.0
    %v2025 = vadd.f32 %v2023, %v2024
    %v2026 = vsel %vm670, %v1806, 0.0
    %v2027 = vadd.f32 %v2025, %v2026
    %v2028 = vsel %vm670, %v1807, 0.0
    %v2029 = vadd.f32 %v2027, %v2028
    %v2030 = vsel %vm670, %v1808, 0.0
    %v2031 = vadd.f32 %v2029, %v2030
    %v2032 = vsel %vm670, %v1809, 0.0
    %v2033 = vadd.f32 %v2031, %v2032
    %v2034 = vsel %vm670, %v1810, 0.0
    %v2035 = vadd.f32 %v2033, %v2034
    %v2036 = vsel %vm670, %v1811, 0.0
    %v2037 = vadd.f32 %v2035, %v2036
    %v2038 = vsel %vm670, %v1812, 0.0
    %v2039 = vadd.f32 %v2037, %v2038
    %v2040 = vsel %vm670, %v1813, 0.0
    %v2041 = vadd.f32 %v2039, %v2040
    %v2042 = vsel %vm670, %v1814, 0.0
    %v2043 = vadd.f32 %v2041, %v2042
    %v2044 = vsel %vm670, %v1815, 0.0
    %v2045 = vadd.f32 %v2043, %v2044
    %v2046 = vsel %vm670, %v1816, 0.0
    %v2047 = vadd.f32 %v2045, %v2046
    %v2048 = vsel %vm670, %v1817, 0.0
    %v2049 = vadd.f32 %v2047, %v2048
    %v2050 = vsel %vm670, %v1818, 0.0
    %v2051 = vadd.f32 %v2049, %v2050
    %v2052 = vsel %vm670, %v1819, 0.0
    %v2053 = vadd.f32 %v2051, %v2052
    %v2054 = vsel %vm670, %v1820, 0.0
    %v2055 = vadd.f32 %v2053, %v2054
    %v2056 = vsel %vm670, %v1821, 0.0
    %v2057 = vadd.f32 %v2055, %v2056
    %v2058 = vsel %vm670, %v1822, 0.0
    %v2059 = vadd.f32 %v2057, %v2058
    %v2060 = vsel %vm670, %v1823, 0.0
    %v2061 = vadd.f32 %v2059, %v2060
    %v2062 = vsel %vm670, %v1824, 0.0
    %v2063 = vadd.f32 %v2061, %v2062
    %v2064 = vsel %vm670, %v1825, 0.0
    %v2065 = vadd.f32 %v2063, %v2064
    %v2066 = vsel %vm670, %v1826, 0.0
    %v2067 = vadd.f32 %v2065, %v2066
    %v2068 = vsel %vm670, %v1827, 0.0
    %v2069 = vadd.f32 %v2067, %v2068
    %v2070 = vsel %vm670, %v1828, 0.0
    %v2071 = vadd.f32 %v2069, %v2070
    %v2072 = vsel %vm670, %v1829, 0.0
    %v2073 = vadd.f32 %v2071, %v2072
    %v2074 = vsel %vm670, %v1830, 0.0
    %v2075 = vadd.f32 %v2073, %v2074
    %v2076 = vsel %vm670, %v1831, 0.0
    %v2077 = vadd.f32 %v2075, %v2076
    %v2078 = vsel %vm670, %v1832, 0.0
    %v2079 = vadd.f32 %v2077, %v2078
    %v2080 = vsel %vm670, %v1833, 0.0
    %v2081 = vadd.f32 %v2079, %v2080
    %v2082 = vsel %vm670, %v1834, 0.0
    %v2083 = vadd.f32 %v2081, %v2082
    %v2084 = vsel %vm670, %v1835, 0.0
    %v2085 = vadd.f32 %v2083, %v2084
    %v2086 = vsel %vm670, %v1836, 0.0
    %v2087 = vadd.f32 %v2085, %v2086
    %v2088 = vsel %vm670, %v1837, 0.0
    %v2089 = vadd.f32 %v2087, %v2088
    %v2090 = vsel %vm670, %v1838, 0.0
    %v2091 = vadd.f32 %v2089, %v2090
    %v2092 = vsel %vm670, %v1839, 0.0
    %v2093 = vadd.f32 %v2091, %v2092
    %v2094 = vsel %vm670, %v1840, 0.0
    %v2095 = vadd.f32 %v2093, %v2094
    %v2096 = vrot.slane %v2095, 4
    %v2097 = vadd.f32 %v2095, %v2096
    %v2098 = vrot.slane %v2097, 2
    %v2099 = vadd.f32 %v2097, %v2098
    %v2100 = vrot.slane %v2099, 1
    %v2101 = vadd.f32 %v2099, %v2100
    %v2102 = vsel %vm670, %v1841, 0.0
    %v2103 = vsel %vm670, %v1842, 0.0
    %v2104 = vadd.f32 %v2102, %v2103
    %v2105 = vsel %vm670, %v1843, 0.0
    %v2106 = vadd.f32 %v2104, %v2105
    %v2107 = vsel %vm670, %v1844, 0.0
    %v2108 = vadd.f32 %v2106, %v2107
    %v2109 = vsel %vm670, %v1845, 0.0
    %v2110 = vadd.f32 %v2108, %v2109
    %v2111 = vsel %vm670, %v1846, 0.0
    %v2112 = vadd.f32 %v2110, %v2111
    %v2113 = vsel %vm670, %v1847, 0.0
    %v2114 = vadd.f32 %v2112, %v2113
    %v2115 = vsel %vm670, %v1848, 0.0
    %v2116 = vadd.f32 %v2114, %v2115
    %v2117 = vsel %vm670, %v1849, 0.0
    %v2118 = vadd.f32 %v2116, %v2117
    %v2119 = vsel %vm670, %v1850, 0.0
    %v2120 = vadd.f32 %v2118, %v2119
    %v2121 = vsel %vm670, %v1851, 0.0
    %v2122 = vadd.f32 %v2120, %v2121
    %v2123 = vsel %vm670, %v1852, 0.0
    %v2124 = vadd.f32 %v2122, %v2123
    %v2125 = vsel %vm670, %v1853, 0.0
    %v2126 = vadd.f32 %v2124, %v2125
    %v2127 = vsel %vm670, %v1854, 0.0
    %v2128 = vadd.f32 %v2126, %v2127
    %v2129 = vsel %vm670, %v1855, 0.0
    %v2130 = vadd.f32 %v2128, %v2129
    %v2131 = vsel %vm670, %v1856, 0.0
    %v2132 = vadd.f32 %v2130, %v2131
    %v2133 = vsel %vm670, %v1857, 0.0
    %v2134 = vadd.f32 %v2132, %v2133
    %v2135 = vsel %vm670, %v1858, 0.0
    %v2136 = vadd.f32 %v2134, %v2135
    %v2137 = vsel %vm670, %v1859, 0.0
    %v2138 = vadd.f32 %v2136, %v2137
    %v2139 = vsel %vm670, %v1860, 0.0
    %v2140 = vadd.f32 %v2138, %v2139
    %v2141 = vsel %vm670, %v1861, 0.0
    %v2142 = vadd.f32 %v2140, %v2141
    %v2143 = vsel %vm670, %v1862, 0.0
    %v2144 = vadd.f32 %v2142, %v2143
    %v2145 = vsel %vm670, %v1863, 0.0
    %v2146 = vadd.f32 %v2144, %v2145
    %v2147 = vsel %vm670, %v1864, 0.0
    %v2148 = vadd.f32 %v2146, %v2147
    %v2149 = vsel %vm670, %v1865, 0.0
    %v2150 = vadd.f32 %v2148, %v2149
    %v2151 = vsel %vm670, %v1866, 0.0
    %v2152 = vadd.f32 %v2150, %v2151
    %v2153 = vsel %vm670, %v1867, 0.0
    %v2154 = vadd.f32 %v2152, %v2153
    %v2155 = vsel %vm670, %v1868, 0.0
    %v2156 = vadd.f32 %v2154, %v2155
    %v2157 = vsel %vm670, %v1869, 0.0
    %v2158 = vadd.f32 %v2156, %v2157
    %v2159 = vsel %vm670, %v1870, 0.0
    %v2160 = vadd.f32 %v2158, %v2159
    %v2161 = vsel %vm670, %v1871, 0.0
    %v2162 = vadd.f32 %v2160, %v2161
    %v2163 = vsel %vm670, %v1872, 0.0
    %v2164 = vadd.f32 %v2162, %v2163
    %v2165 = vsel %vm670, %v1873, 0.0
    %v2166 = vadd.f32 %v2164, %v2165
    %v2167 = vsel %vm670, %v1874, 0.0
    %v2168 = vadd.f32 %v2166, %v2167
    %v2169 = vsel %vm670, %v1875, 0.0
    %v2170 = vadd.f32 %v2168, %v2169
    %v2171 = vsel %vm670, %v1876, 0.0
    %v2172 = vadd.f32 %v2170, %v2171
    %v2173 = vsel %vm670, %v1877, 0.0
    %v2174 = vadd.f32 %v2172, %v2173
    %v2175 = vsel %vm670, %v1878, 0.0
    %v2176 = vadd.f32 %v2174, %v2175
    %v2177 = vsel %vm670, %v1879, 0.0
    %v2178 = vadd.f32 %v2176, %v2177
    %v2179 = vsel %vm670, %v1880, 0.0
    %v2180 = vadd.f32 %v2178, %v2179
    %v2181 = vsel %vm670, %v1881, 0.0
    %v2182 = vadd.f32 %v2180, %v2181
    %v2183 = vsel %vm670, %v1882, 0.0
    %v2184 = vadd.f32 %v2182, %v2183
    %v2185 = vsel %vm670, %v1883, 0.0
    %v2186 = vadd.f32 %v2184, %v2185
    %v2187 = vsel %vm670, %v1884, 0.0
    %v2188 = vadd.f32 %v2186, %v2187
    %v2189 = vsel %vm670, %v1885, 0.0
    %v2190 = vadd.f32 %v2188, %v2189
    %v2191 = vsel %vm670, %v1886, 0.0
    %v2192 = vadd.f32 %v2190, %v2191
    %v2193 = vsel %vm670, %v1887, 0.0
    %v2194 = vadd.f32 %v2192, %v2193
    %v2195 = vsel %vm670, %v1888, 0.0
    %v2196 = vadd.f32 %v2194, %v2195
    %v2197 = vsel %vm670, %v1889, 0.0
    %v2198 = vadd.f32 %v2196, %v2197
    %v2199 = vsel %vm670, %v1890, 0.0
    %v2200 = vadd.f32 %v2198, %v2199
    %v2201 = vsel %vm670, %v1891, 0.0
    %v2202 = vadd.f32 %v2200, %v2201
    %v2203 = vsel %vm670, %v1892, 0.0
    %v2204 = vadd.f32 %v2202, %v2203
    %v2205 = vsel %vm670, %v1893, 0.0
    %v2206 = vadd.f32 %v2204, %v2205
    %v2207 = vsel %vm670, %v1894, 0.0
    %v2208 = vadd.f32 %v2206, %v2207
    %v2209 = vsel %vm670, %v1895, 0.0
    %v2210 = vadd.f32 %v2208, %v2209
    %v2211 = vsel %vm670, %v1896, 0.0
    %v2212 = vadd.f32 %v2210, %v2211
    %v2213 = vsel %vm670, %v1897, 0.0
    %v2214 = vadd.f32 %v2212, %v2213
    %v2215 = vsel %vm670, %v1898, 0.0
    %v2216 = vadd.f32 %v2214, %v2215
    %v2217 = vsel %vm670, %v1899, 0.0
    %v2218 = vadd.f32 %v2216, %v2217
    %v2219 = vsel %vm670, %v1900, 0.0
    %v2220 = vadd.f32 %v2218, %v2219
    %v2221 = vsel %vm670, %v1901, 0.0
    %v2222 = vadd.f32 %v2220, %v2221
    %v2223 = vsel %vm670, %v1902, 0.0
    %v2224 = vadd.f32 %v2222, %v2223
    %v2225 = vsel %vm670, %v1903, 0.0
    %v2226 = vadd.f32 %v2224, %v2225
    %v2227 = vsel %vm670, %v1904, 0.0
    %v2228 = vadd.f32 %v2226, %v2227
    %v2229 = vrot.slane %v2228, 4
    %v2230 = vadd.f32 %v2228, %v2229
    %v2231 = vrot.slane %v2230, 2
    %v2232 = vadd.f32 %v2230, %v2231
    %v2233 = vrot.slane %v2232, 1
    %v2234 = vadd.f32 %v2232, %v2233
    %v2235 = vsel %vm670, %v1905, 0.0
    %v2236 = vsel %vm670, %v1906, 0.0
    %v2237 = vadd.f32 %v2235, %v2236
    %v2238 = vsel %vm670, %v1907, 0.0
    %v2239 = vadd.f32 %v2237, %v2238
    %v2240 = vsel %vm670, %v1908, 0.0
    %v2241 = vadd.f32 %v2239, %v2240
    %v2242 = vsel %vm670, %v1909, 0.0
    %v2243 = vadd.f32 %v2241, %v2242
    %v2244 = vsel %vm670, %v1910, 0.0
    %v2245 = vadd.f32 %v2243, %v2244
    %v2246 = vsel %vm670, %v1911, 0.0
    %v2247 = vadd.f32 %v2245, %v2246
    %v2248 = vsel %vm670, %v1912, 0.0
    %v2249 = vadd.f32 %v2247, %v2248
    %v2250 = vsel %vm670, %v1913, 0.0
    %v2251 = vadd.f32 %v2249, %v2250
    %v2252 = vsel %vm670, %v1914, 0.0
    %v2253 = vadd.f32 %v2251, %v2252
    %v2254 = vsel %vm670, %v1915, 0.0
    %v2255 = vadd.f32 %v2253, %v2254
    %v2256 = vsel %vm670, %v1916, 0.0
    %v2257 = vadd.f32 %v2255, %v2256
    %v2258 = vsel %vm670, %v1917, 0.0
    %v2259 = vadd.f32 %v2257, %v2258
    %v2260 = vsel %vm670, %v1918, 0.0
    %v2261 = vadd.f32 %v2259, %v2260
    %v2262 = vsel %vm670, %v1919, 0.0
    %v2263 = vadd.f32 %v2261, %v2262
    %v2264 = vsel %vm670, %v1920, 0.0
    %v2265 = vadd.f32 %v2263, %v2264
    %v2266 = vsel %vm670, %v1921, 0.0
    %v2267 = vadd.f32 %v2265, %v2266
    %v2268 = vsel %vm670, %v1922, 0.0
    %v2269 = vadd.f32 %v2267, %v2268
    %v2270 = vsel %vm670, %v1923, 0.0
    %v2271 = vadd.f32 %v2269, %v2270
    %v2272 = vsel %vm670, %v1924, 0.0
    %v2273 = vadd.f32 %v2271, %v2272
    %v2274 = vsel %vm670, %v1925, 0.0
    %v2275 = vadd.f32 %v2273, %v2274
    %v2276 = vsel %vm670, %v1926, 0.0
    %v2277 = vadd.f32 %v2275, %v2276
    %v2278 = vsel %vm670, %v1927, 0.0
    %v2279 = vadd.f32 %v2277, %v2278
    %v2280 = vsel %vm670, %v1928, 0.0
    %v2281 = vadd.f32 %v2279, %v2280
    %v2282 = vsel %vm670, %v1929, 0.0
    %v2283 = vadd.f32 %v2281, %v2282
    %v2284 = vsel %vm670, %v1930, 0.0
    %v2285 = vadd.f32 %v2283, %v2284
    %v2286 = vsel %vm670, %v1931, 0.0
    %v2287 = vadd.f32 %v2285, %v2286
    %v2288 = vsel %vm670, %v1932, 0.0
    %v2289 = vadd.f32 %v2287, %v2288
    %v2290 = vsel %vm670, %v1933, 0.0
    %v2291 = vadd.f32 %v2289, %v2290
    %v2292 = vsel %vm670, %v1934, 0.0
    %v2293 = vadd.f32 %v2291, %v2292
    %v2294 = vsel %vm670, %v1935, 0.0
    %v2295 = vadd.f32 %v2293, %v2294
    %v2296 = vsel %vm670, %v1936, 0.0
    %v2297 = vadd.f32 %v2295, %v2296
    %v2298 = vsel %vm670, %v1937, 0.0
    %v2299 = vadd.f32 %v2297, %v2298
    %v2300 = vsel %vm670, %v1938, 0.0
    %v2301 = vadd.f32 %v2299, %v2300
    %v2302 = vsel %vm670, %v1939, 0.0
    %v2303 = vadd.f32 %v2301, %v2302
    %v2304 = vsel %vm670, %v1940, 0.0
    %v2305 = vadd.f32 %v2303, %v2304
    %v2306 = vsel %vm670, %v1941, 0.0
    %v2307 = vadd.f32 %v2305, %v2306
    %v2308 = vsel %vm670, %v1942, 0.0
    %v2309 = vadd.f32 %v2307, %v2308
    %v2310 = vsel %vm670, %v1943, 0.0
    %v2311 = vadd.f32 %v2309, %v2310
    %v2312 = vsel %vm670, %v1944, 0.0
    %v2313 = vadd.f32 %v2311, %v2312
    %v2314 = vsel %vm670, %v1945, 0.0
    %v2315 = vadd.f32 %v2313, %v2314
    %v2316 = vsel %vm670, %v1946, 0.0
    %v2317 = vadd.f32 %v2315, %v2316
    %v2318 = vsel %vm670, %v1947, 0.0
    %v2319 = vadd.f32 %v2317, %v2318
    %v2320 = vsel %vm670, %v1948, 0.0
    %v2321 = vadd.f32 %v2319, %v2320
    %v2322 = vsel %vm670, %v1949, 0.0
    %v2323 = vadd.f32 %v2321, %v2322
    %v2324 = vsel %vm670, %v1950, 0.0
    %v2325 = vadd.f32 %v2323, %v2324
    %v2326 = vsel %vm670, %v1951, 0.0
    %v2327 = vadd.f32 %v2325, %v2326
    %v2328 = vsel %vm670, %v1952, 0.0
    %v2329 = vadd.f32 %v2327, %v2328
    %v2330 = vsel %vm670, %v1953, 0.0
    %v2331 = vadd.f32 %v2329, %v2330
    %v2332 = vsel %vm670, %v1954, 0.0
    %v2333 = vadd.f32 %v2331, %v2332
    %v2334 = vsel %vm670, %v1955, 0.0
    %v2335 = vadd.f32 %v2333, %v2334
    %v2336 = vsel %vm670, %v1956, 0.0
    %v2337 = vadd.f32 %v2335, %v2336
    %v2338 = vsel %vm670, %v1957, 0.0
    %v2339 = vadd.f32 %v2337, %v2338
    %v2340 = vsel %vm670, %v1958, 0.0
    %v2341 = vadd.f32 %v2339, %v2340
    %v2342 = vsel %vm670, %v1959, 0.0
    %v2343 = vadd.f32 %v2341, %v2342
    %v2344 = vsel %vm670, %v1960, 0.0
    %v2345 = vadd.f32 %v2343, %v2344
    %v2346 = vsel %vm670, %v1961, 0.0
    %v2347 = vadd.f32 %v2345, %v2346
    %v2348 = vsel %vm670, %v1962, 0.0
    %v2349 = vadd.f32 %v2347, %v2348
    %v2350 = vsel %vm670, %v1963, 0.0
    %v2351 = vadd.f32 %v2349, %v2350
    %v2352 = vsel %vm670, %v1964, 0.0
    %v2353 = vadd.f32 %v2351, %v2352
    %v2354 = vsel %vm670, %v1965, 0.0
    %v2355 = vadd.f32 %v2353, %v2354
    %v2356 = vsel %vm670, %v1966, 0.0
    %v2357 = vadd.f32 %v2355, %v2356
    %v2358 = vsel %vm670, %v1967, 0.0
    %v2359 = vadd.f32 %v2357, %v2358
    %v2360 = vsel %vm670, %v1968, 0.0
    %v2361 = vadd.f32 %v2359, %v2360
    %v2362 = vrot.slane %v2361, 4
    %v2363 = vadd.f32 %v2361, %v2362
    %v2364 = vrot.slane %v2363, 2
    %v2365 = vadd.f32 %v2363, %v2364
    %v2366 = vrot.slane %v2365, 1
    %v2367 = vadd.f32 %v2365, %v2366
    %2369 = vset.pattern.permute.xlu0 0
    %2370 = vperm.xlu0 %2369, %v285
    %v2371 = vpop.permute.xlu0 %2370
    %2374 = vset.pattern.permute.xlu0 0
    %2375 = vperm.xlu0 %2374, %v286
    %v2376 = vpop.permute.xlu0 %2375
    %2379 = vset.pattern.permute.xlu0 0
    %2380 = vperm.xlu0 %2379, %v287
    %v2381 = vpop.permute.xlu0 %2380
    %2384 = vset.pattern.permute.xlu0 0
    %2385 = vperm.xlu0 %2384, %v288
    %v2386 = vpop.permute.xlu0 %2385
    %2389 = vset.pattern.permute.xlu0 0
    %2390 = vperm.xlu0 %2389, %v289
    %v2391 = vpop.permute.xlu0 %2390
    %2394 = vset.pattern.permute.xlu0 0
    %2395 = vperm.xlu0 %2394, %v290
    %v2396 = vpop.permute.xlu0 %2395
    %2399 = vset.pattern.permute.xlu0 0
    %2400 = vperm.xlu0 %2399, %v291
    %v2401 = vpop.permute.xlu0 %2400
    %2404 = vset.pattern.permute.xlu0 0
    %2405 = vperm.xlu0 %2404, %v292
    %v2406 = vpop.permute.xlu0 %2405
    %2409 = vset.pattern.permute.xlu0 0
    %2410 = vperm.xlu0 %2409, %v293
    %v2411 = vpop.permute.xlu0 %2410
    %2414 = vset.pattern.permute.xlu0 0
    %2415 = vperm.xlu0 %2414, %v294
    %v2416 = vpop.permute.xlu0 %2415
    %2419 = vset.pattern.permute.xlu0 0
    %2420 = vperm.xlu0 %2419, %v295
    %v2421 = vpop.permute.xlu0 %2420
    %2424 = vset.pattern.permute.xlu0 0
    %2425 = vperm.xlu0 %2424, %v296
    %v2426 = vpop.permute.xlu0 %2425
    %2429 = vset.pattern.permute.xlu0 0
    %2430 = vperm.xlu0 %2429, %v297
    %v2431 = vpop.permute.xlu0 %2430
    %2434 = vset.pattern.permute.xlu0 0
    %2435 = vperm.xlu0 %2434, %v298
    %v2436 = vpop.permute.xlu0 %2435
    %2439 = vset.pattern.permute.xlu0 0
    %2440 = vperm.xlu0 %2439, %v299
    %v2441 = vpop.permute.xlu0 %2440
    %2444 = vset.pattern.permute.xlu0 0
    %2445 = vperm.xlu0 %2444, %v300
    %v2446 = vpop.permute.xlu0 %2445
    %2449 = vset.pattern.permute.xlu0 0
    %2450 = vperm.xlu0 %2449, %v301
    %v2451 = vpop.permute.xlu0 %2450
    %2454 = vset.pattern.permute.xlu0 0
    %2455 = vperm.xlu0 %2454, %v302
    %v2456 = vpop.permute.xlu0 %2455
    %2459 = vset.pattern.permute.xlu0 0
    %2460 = vperm.xlu0 %2459, %v303
    %v2461 = vpop.permute.xlu0 %2460
    %2464 = vset.pattern.permute.xlu0 0
    %2465 = vperm.xlu0 %2464, %v304
    %v2466 = vpop.permute.xlu0 %2465
    %2469 = vset.pattern.permute.xlu0 0
    %2470 = vperm.xlu0 %2469, %v305
    %v2471 = vpop.permute.xlu0 %2470
    %2474 = vset.pattern.permute.xlu0 0
    %2475 = vperm.xlu0 %2474, %v306
    %v2476 = vpop.permute.xlu0 %2475
    %2479 = vset.pattern.permute.xlu0 0
    %2480 = vperm.xlu0 %2479, %v307
    %v2481 = vpop.permute.xlu0 %2480
    %2484 = vset.pattern.permute.xlu0 0
    %2485 = vperm.xlu0 %2484, %v308
    %v2486 = vpop.permute.xlu0 %2485
    %2489 = vset.pattern.permute.xlu0 0
    %2490 = vperm.xlu0 %2489, %v309
    %v2491 = vpop.permute.xlu0 %2490
    %2494 = vset.pattern.permute.xlu0 0
    %2495 = vperm.xlu0 %2494, %v310
    %v2496 = vpop.permute.xlu0 %2495
    %2499 = vset.pattern.permute.xlu0 0
    %2500 = vperm.xlu0 %2499, %v311
    %v2501 = vpop.permute.xlu0 %2500
    %2504 = vset.pattern.permute.xlu0 0
    %2505 = vperm.xlu0 %2504, %v312
    %v2506 = vpop.permute.xlu0 %2505
    %2509 = vset.pattern.permute.xlu0 0
    %2510 = vperm.xlu0 %2509, %v313
    %v2511 = vpop.permute.xlu0 %2510
    %2514 = vset.pattern.permute.xlu0 0
    %2515 = vperm.xlu0 %2514, %v314
    %v2516 = vpop.permute.xlu0 %2515
    %2519 = vset.pattern.permute.xlu0 0
    %2520 = vperm.xlu0 %2519, %v315
    %v2521 = vpop.permute.xlu0 %2520
    %2524 = vset.pattern.permute.xlu0 0
    %2525 = vperm.xlu0 %2524, %v316
    %v2526 = vpop.permute.xlu0 %2525
    %2529 = vset.pattern.permute.xlu0 0
    %2530 = vperm.xlu0 %2529, %v317
    %v2531 = vpop.permute.xlu0 %2530
    %2534 = vset.pattern.permute.xlu0 0
    %2535 = vperm.xlu0 %2534, %v318
    %v2536 = vpop.permute.xlu0 %2535
    %2539 = vset.pattern.permute.xlu0 0
    %2540 = vperm.xlu0 %2539, %v319
    %v2541 = vpop.permute.xlu0 %2540
    %2544 = vset.pattern.permute.xlu0 0
    %2545 = vperm.xlu0 %2544, %v320
    %v2546 = vpop.permute.xlu0 %2545
    %2549 = vset.pattern.permute.xlu0 0
    %2550 = vperm.xlu0 %2549, %v321
    %v2551 = vpop.permute.xlu0 %2550
    %2554 = vset.pattern.permute.xlu0 0
    %2555 = vperm.xlu0 %2554, %v322
    %v2556 = vpop.permute.xlu0 %2555
    %2559 = vset.pattern.permute.xlu0 0
    %2560 = vperm.xlu0 %2559, %v323
    %v2561 = vpop.permute.xlu0 %2560
    %2564 = vset.pattern.permute.xlu0 0
    %2565 = vperm.xlu0 %2564, %v324
    %v2566 = vpop.permute.xlu0 %2565
    %2569 = vset.pattern.permute.xlu0 0
    %2570 = vperm.xlu0 %2569, %v325
    %v2571 = vpop.permute.xlu0 %2570
    %2574 = vset.pattern.permute.xlu0 0
    %2575 = vperm.xlu0 %2574, %v326
    %v2576 = vpop.permute.xlu0 %2575
    %2579 = vset.pattern.permute.xlu0 0
    %2580 = vperm.xlu0 %2579, %v327
    %v2581 = vpop.permute.xlu0 %2580
    %2584 = vset.pattern.permute.xlu0 0
    %2585 = vperm.xlu0 %2584, %v328
    %v2586 = vpop.permute.xlu0 %2585
    %2589 = vset.pattern.permute.xlu0 0
    %2590 = vperm.xlu0 %2589, %v329
    %v2591 = vpop.permute.xlu0 %2590
    %2594 = vset.pattern.permute.xlu0 0
    %2595 = vperm.xlu0 %2594, %v330
    %v2596 = vpop.permute.xlu0 %2595
    %2599 = vset.pattern.permute.xlu0 0
    %2600 = vperm.xlu0 %2599, %v331
    %v2601 = vpop.permute.xlu0 %2600
    %2604 = vset.pattern.permute.xlu0 0
    %2605 = vperm.xlu0 %2604, %v332
    %v2606 = vpop.permute.xlu0 %2605
    %2609 = vset.pattern.permute.xlu0 0
    %2610 = vperm.xlu0 %2609, %v333
    %v2611 = vpop.permute.xlu0 %2610
    %2614 = vset.pattern.permute.xlu0 0
    %2615 = vperm.xlu0 %2614, %v334
    %v2616 = vpop.permute.xlu0 %2615
    %2619 = vset.pattern.permute.xlu0 0
    %2620 = vperm.xlu0 %2619, %v335
    %v2621 = vpop.permute.xlu0 %2620
    %2624 = vset.pattern.permute.xlu0 0
    %2625 = vperm.xlu0 %2624, %v336
    %v2626 = vpop.permute.xlu0 %2625
    %2629 = vset.pattern.permute.xlu0 0
    %2630 = vperm.xlu0 %2629, %v337
    %v2631 = vpop.permute.xlu0 %2630
    %2634 = vset.pattern.permute.xlu0 0
    %2635 = vperm.xlu0 %2634, %v338
    %v2636 = vpop.permute.xlu0 %2635
    %2639 = vset.pattern.permute.xlu0 0
    %2640 = vperm.xlu0 %2639, %v339
    %v2641 = vpop.permute.xlu0 %2640
    %2644 = vset.pattern.permute.xlu0 0
    %2645 = vperm.xlu0 %2644, %v340
    %v2646 = vpop.permute.xlu0 %2645
    %2649 = vset.pattern.permute.xlu0 0
    %2650 = vperm.xlu0 %2649, %v341
    %v2651 = vpop.permute.xlu0 %2650
    %2654 = vset.pattern.permute.xlu0 0
    %2655 = vperm.xlu0 %2654, %v342
    %v2656 = vpop.permute.xlu0 %2655
    %2659 = vset.pattern.permute.xlu0 0
    %2660 = vperm.xlu0 %2659, %v343
    %v2661 = vpop.permute.xlu0 %2660
    %2664 = vset.pattern.permute.xlu0 0
    %2665 = vperm.xlu0 %2664, %v344
    %v2666 = vpop.permute.xlu0 %2665
    %2669 = vset.pattern.permute.xlu0 0
    %2670 = vperm.xlu0 %2669, %v345
    %v2671 = vpop.permute.xlu0 %2670
    %2674 = vset.pattern.permute.xlu0 0
    %2675 = vperm.xlu0 %2674, %v346
    %v2676 = vpop.permute.xlu0 %2675
    %2679 = vset.pattern.permute.xlu0 0
    %2680 = vperm.xlu0 %2679, %v347
    %v2681 = vpop.permute.xlu0 %2680
    %2684 = vset.pattern.permute.xlu0 0
    %2685 = vperm.xlu0 %2684, %v348
    %v2686 = vpop.permute.xlu0 %2685
    %v2688 = vmul.f32 %v1265, %v2371
    %v2689 = vmul.f32 %v1266, %v2376
    %v2690 = vmul.f32 %v1267, %v2381
    %v2691 = vmul.f32 %v1268, %v2386
    %v2692 = vmul.f32 %v1269, %v2391
    %v2693 = vmul.f32 %v1270, %v2396
    %v2694 = vmul.f32 %v1271, %v2401
    %v2695 = vmul.f32 %v1272, %v2406
    %v2696 = vmul.f32 %v1273, %v2411
    %v2697 = vmul.f32 %v1274, %v2416
    %v2698 = vmul.f32 %v1275, %v2421
    %v2699 = vmul.f32 %v1276, %v2426
    %v2700 = vmul.f32 %v1277, %v2431
    %v2701 = vmul.f32 %v1278, %v2436
    %v2702 = vmul.f32 %v1279, %v2441
    %v2703 = vmul.f32 %v1280, %v2446
    %v2704 = vmul.f32 %v1281, %v2451
    %v2705 = vmul.f32 %v1282, %v2456
    %v2706 = vmul.f32 %v1283, %v2461
    %v2707 = vmul.f32 %v1284, %v2466
    %v2708 = vmul.f32 %v1285, %v2471
    %v2709 = vmul.f32 %v1286, %v2476
    %v2710 = vmul.f32 %v1287, %v2481
    %v2711 = vmul.f32 %v1288, %v2486
    %v2712 = vmul.f32 %v1289, %v2491
    %v2713 = vmul.f32 %v1290, %v2496
    %v2714 = vmul.f32 %v1291, %v2501
    %v2715 = vmul.f32 %v1292, %v2506
    %v2716 = vmul.f32 %v1293, %v2511
    %v2717 = vmul.f32 %v1294, %v2516
    %v2718 = vmul.f32 %v1295, %v2521
    %v2719 = vmul.f32 %v1296, %v2526
    %v2720 = vmul.f32 %v1297, %v2531
    %v2721 = vmul.f32 %v1298, %v2536
    %v2722 = vmul.f32 %v1299, %v2541
    %v2723 = vmul.f32 %v1300, %v2546
    %v2724 = vmul.f32 %v1301, %v2551
    %v2725 = vmul.f32 %v1302, %v2556
    %v2726 = vmul.f32 %v1303, %v2561
    %v2727 = vmul.f32 %v1304, %v2566
    %v2728 = vmul.f32 %v1305, %v2571
    %v2729 = vmul.f32 %v1306, %v2576
    %v2730 = vmul.f32 %v1307, %v2581
    %v2731 = vmul.f32 %v1308, %v2586
    %v2732 = vmul.f32 %v1309, %v2591
    %v2733 = vmul.f32 %v1310, %v2596
    %v2734 = vmul.f32 %v1311, %v2601
    %v2735 = vmul.f32 %v1312, %v2606
    %v2736 = vmul.f32 %v1313, %v2611
    %v2737 = vmul.f32 %v1314, %v2616
    %v2738 = vmul.f32 %v1315, %v2621
    %v2739 = vmul.f32 %v1316, %v2626
    %v2740 = vmul.f32 %v1317, %v2631
    %v2741 = vmul.f32 %v1318, %v2636
    %v2742 = vmul.f32 %v1319, %v2641
    %v2743 = vmul.f32 %v1320, %v2646
    %v2744 = vmul.f32 %v1321, %v2651
    %v2745 = vmul.f32 %v1322, %v2656
    %v2746 = vmul.f32 %v1323, %v2661
    %v2747 = vmul.f32 %v1324, %v2666
    %v2748 = vmul.f32 %v1325, %v2671
    %v2749 = vmul.f32 %v1326, %v2676
    %v2750 = vmul.f32 %v1327, %v2681
    %v2751 = vmul.f32 %v1328, %v2686
    %v2752 = vmul.f32 %v1329, %v2371
    %v2753 = vmul.f32 %v1330, %v2376
    %v2754 = vmul.f32 %v1331, %v2381
    %v2755 = vmul.f32 %v1332, %v2386
    %v2756 = vmul.f32 %v1333, %v2391
    %v2757 = vmul.f32 %v1334, %v2396
    %v2758 = vmul.f32 %v1335, %v2401
    %v2759 = vmul.f32 %v1336, %v2406
    %v2760 = vmul.f32 %v1337, %v2411
    %v2761 = vmul.f32 %v1338, %v2416
    %v2762 = vmul.f32 %v1339, %v2421
    %v2763 = vmul.f32 %v1340, %v2426
    %v2764 = vmul.f32 %v1341, %v2431
    %v2765 = vmul.f32 %v1342, %v2436
    %v2766 = vmul.f32 %v1343, %v2441
    %v2767 = vmul.f32 %v1344, %v2446
    %v2768 = vmul.f32 %v1345, %v2451
    %v2769 = vmul.f32 %v1346, %v2456
    %v2770 = vmul.f32 %v1347, %v2461
    %v2771 = vmul.f32 %v1348, %v2466
    %v2772 = vmul.f32 %v1349, %v2471
    %v2773 = vmul.f32 %v1350, %v2476
    %v2774 = vmul.f32 %v1351, %v2481
    %v2775 = vmul.f32 %v1352, %v2486
    %v2776 = vmul.f32 %v1353, %v2491
    %v2777 = vmul.f32 %v1354, %v2496
    %v2778 = vmul.f32 %v1355, %v2501
    %v2779 = vmul.f32 %v1356, %v2506
    %v2780 = vmul.f32 %v1357, %v2511
    %v2781 = vmul.f32 %v1358, %v2516
    %v2782 = vmul.f32 %v1359, %v2521
    %v2783 = vmul.f32 %v1360, %v2526
    %v2784 = vmul.f32 %v1361, %v2531
    %v2785 = vmul.f32 %v1362, %v2536
    %v2786 = vmul.f32 %v1363, %v2541
    %v2787 = vmul.f32 %v1364, %v2546
    %v2788 = vmul.f32 %v1365, %v2551
    %v2789 = vmul.f32 %v1366, %v2556
    %v2790 = vmul.f32 %v1367, %v2561
    %v2791 = vmul.f32 %v1368, %v2566
    %v2792 = vmul.f32 %v1369, %v2571
    %v2793 = vmul.f32 %v1370, %v2576
    %v2794 = vmul.f32 %v1371, %v2581
    %v2795 = vmul.f32 %v1372, %v2586
    %v2796 = vmul.f32 %v1373, %v2591
    %v2797 = vmul.f32 %v1374, %v2596
    %v2798 = vmul.f32 %v1375, %v2601
    %v2799 = vmul.f32 %v1376, %v2606
    %v2800 = vmul.f32 %v1377, %v2611
    %v2801 = vmul.f32 %v1378, %v2616
    %v2802 = vmul.f32 %v1379, %v2621
    %v2803 = vmul.f32 %v1380, %v2626
    %v2804 = vmul.f32 %v1381, %v2631
    %v2805 = vmul.f32 %v1382, %v2636
    %v2806 = vmul.f32 %v1383, %v2641
    %v2807 = vmul.f32 %v1384, %v2646
    %v2808 = vmul.f32 %v1385, %v2651
    %v2809 = vmul.f32 %v1386, %v2656
    %v2810 = vmul.f32 %v1387, %v2661
    %v2811 = vmul.f32 %v1388, %v2666
    %v2812 = vmul.f32 %v1389, %v2671
    %v2813 = vmul.f32 %v1390, %v2676
    %v2814 = vmul.f32 %v1391, %v2681
    %v2815 = vmul.f32 %v1392, %v2686
    %v2816 = vmul.f32 %v1393, %v2371
    %v2817 = vmul.f32 %v1394, %v2376
    %v2818 = vmul.f32 %v1395, %v2381
    %v2819 = vmul.f32 %v1396, %v2386
    %v2820 = vmul.f32 %v1397, %v2391
    %v2821 = vmul.f32 %v1398, %v2396
    %v2822 = vmul.f32 %v1399, %v2401
    %v2823 = vmul.f32 %v1400, %v2406
    %v2824 = vmul.f32 %v1401, %v2411
    %v2825 = vmul.f32 %v1402, %v2416
    %v2826 = vmul.f32 %v1403, %v2421
    %v2827 = vmul.f32 %v1404, %v2426
    %v2828 = vmul.f32 %v1405, %v2431
    %v2829 = vmul.f32 %v1406, %v2436
    %v2830 = vmul.f32 %v1407, %v2441
    %v2831 = vmul.f32 %v1408, %v2446
    %v2832 = vmul.f32 %v1409, %v2451
    %v2833 = vmul.f32 %v1410, %v2456
    %v2834 = vmul.f32 %v1411, %v2461
    %v2835 = vmul.f32 %v1412, %v2466
    %v2836 = vmul.f32 %v1413, %v2471
    %v2837 = vmul.f32 %v1414, %v2476
    %v2838 = vmul.f32 %v1415, %v2481
    %v2839 = vmul.f32 %v1416, %v2486
    %v2840 = vmul.f32 %v1417, %v2491
    %v2841 = vmul.f32 %v1418, %v2496
    %v2842 = vmul.f32 %v1419, %v2501
    %v2843 = vmul.f32 %v1420, %v2506
    %v2844 = vmul.f32 %v1421, %v2511
    %v2845 = vmul.f32 %v1422, %v2516
    %v2846 = vmul.f32 %v1423, %v2521
    %v2847 = vmul.f32 %v1424, %v2526
    %v2848 = vmul.f32 %v1425, %v2531
    %v2849 = vmul.f32 %v1426, %v2536
    %v2850 = vmul.f32 %v1427, %v2541
    %v2851 = vmul.f32 %v1428, %v2546
    %v2852 = vmul.f32 %v1429, %v2551
    %v2853 = vmul.f32 %v1430, %v2556
    %v2854 = vmul.f32 %v1431, %v2561
    %v2855 = vmul.f32 %v1432, %v2566
    %v2856 = vmul.f32 %v1433, %v2571
    %v2857 = vmul.f32 %v1434, %v2576
    %v2858 = vmul.f32 %v1435, %v2581
    %v2859 = vmul.f32 %v1436, %v2586
    %v2860 = vmul.f32 %v1437, %v2591
    %v2861 = vmul.f32 %v1438, %v2596
    %v2862 = vmul.f32 %v1439, %v2601
    %v2863 = vmul.f32 %v1440, %v2606
    %v2864 = vmul.f32 %v1441, %v2611
    %v2865 = vmul.f32 %v1442, %v2616
    %v2866 = vmul.f32 %v1443, %v2621
    %v2867 = vmul.f32 %v1444, %v2626
    %v2868 = vmul.f32 %v1445, %v2631
    %v2869 = vmul.f32 %v1446, %v2636
    %v2870 = vmul.f32 %v1447, %v2641
    %v2871 = vmul.f32 %v1448, %v2646
    %v2872 = vmul.f32 %v1449, %v2651
    %v2873 = vmul.f32 %v1450, %v2656
    %v2874 = vmul.f32 %v1451, %v2661
    %v2875 = vmul.f32 %v1452, %v2666
    %v2876 = vmul.f32 %v1453, %v2671
    %v2877 = vmul.f32 %v1454, %v2676
    %v2878 = vmul.f32 %v1455, %v2681
    %v2879 = vmul.f32 %v1456, %v2686
    %v2880 = vsel %vm670, %v2688, 0.0
    %v2881 = vsel %vm670, %v2689, 0.0
    %v2882 = vadd.f32 %v2880, %v2881
    %v2883 = vsel %vm670, %v2690, 0.0
    %v2884 = vadd.f32 %v2882, %v2883
    %v2885 = vsel %vm670, %v2691, 0.0
    %v2886 = vadd.f32 %v2884, %v2885
    %v2887 = vsel %vm670, %v2692, 0.0
    %v2888 = vadd.f32 %v2886, %v2887
    %v2889 = vsel %vm670, %v2693, 0.0
    %v2890 = vadd.f32 %v2888, %v2889
    %v2891 = vsel %vm670, %v2694, 0.0
    %v2892 = vadd.f32 %v2890, %v2891
    %v2893 = vsel %vm670, %v2695, 0.0
    %v2894 = vadd.f32 %v2892, %v2893
    %v2895 = vsel %vm670, %v2696, 0.0
    %v2896 = vadd.f32 %v2894, %v2895
    %v2897 = vsel %vm670, %v2697, 0.0
    %v2898 = vadd.f32 %v2896, %v2897
    %v2899 = vsel %vm670, %v2698, 0.0
    %v2900 = vadd.f32 %v2898, %v2899
    %v2901 = vsel %vm670, %v2699, 0.0
    %v2902 = vadd.f32 %v2900, %v2901
    %v2903 = vsel %vm670, %v2700, 0.0
    %v2904 = vadd.f32 %v2902, %v2903
    %v2905 = vsel %vm670, %v2701, 0.0
    %v2906 = vadd.f32 %v2904, %v2905
    %v2907 = vsel %vm670, %v2702, 0.0
    %v2908 = vadd.f32 %v2906, %v2907
    %v2909 = vsel %vm670, %v2703, 0.0
    %v2910 = vadd.f32 %v2908, %v2909
    %v2911 = vsel %vm670, %v2704, 0.0
    %v2912 = vadd.f32 %v2910, %v2911
    %v2913 = vsel %vm670, %v2705, 0.0
    %v2914 = vadd.f32 %v2912, %v2913
    %v2915 = vsel %vm670, %v2706, 0.0
    %v2916 = vadd.f32 %v2914, %v2915
    %v2917 = vsel %vm670, %v2707, 0.0
    %v2918 = vadd.f32 %v2916, %v2917
    %v2919 = vsel %vm670, %v2708, 0.0
    %v2920 = vadd.f32 %v2918, %v2919
    %v2921 = vsel %vm670, %v2709, 0.0
    %v2922 = vadd.f32 %v2920, %v2921
    %v2923 = vsel %vm670, %v2710, 0.0
    %v2924 = vadd.f32 %v2922, %v2923
    %v2925 = vsel %vm670, %v2711, 0.0
    %v2926 = vadd.f32 %v2924, %v2925
    %v2927 = vsel %vm670, %v2712, 0.0
    %v2928 = vadd.f32 %v2926, %v2927
    %v2929 = vsel %vm670, %v2713, 0.0
    %v2930 = vadd.f32 %v2928, %v2929
    %v2931 = vsel %vm670, %v2714, 0.0
    %v2932 = vadd.f32 %v2930, %v2931
    %v2933 = vsel %vm670, %v2715, 0.0
    %v2934 = vadd.f32 %v2932, %v2933
    %v2935 = vsel %vm670, %v2716, 0.0
    %v2936 = vadd.f32 %v2934, %v2935
    %v2937 = vsel %vm670, %v2717, 0.0
    %v2938 = vadd.f32 %v2936, %v2937
    %v2939 = vsel %vm670, %v2718, 0.0
    %v2940 = vadd.f32 %v2938, %v2939
    %v2941 = vsel %vm670, %v2719, 0.0
    %v2942 = vadd.f32 %v2940, %v2941
    %v2943 = vsel %vm670, %v2720, 0.0
    %v2944 = vadd.f32 %v2942, %v2943
    %v2945 = vsel %vm670, %v2721, 0.0
    %v2946 = vadd.f32 %v2944, %v2945
    %v2947 = vsel %vm670, %v2722, 0.0
    %v2948 = vadd.f32 %v2946, %v2947
    %v2949 = vsel %vm670, %v2723, 0.0
    %v2950 = vadd.f32 %v2948, %v2949
    %v2951 = vsel %vm670, %v2724, 0.0
    %v2952 = vadd.f32 %v2950, %v2951
    %v2953 = vsel %vm670, %v2725, 0.0
    %v2954 = vadd.f32 %v2952, %v2953
    %v2955 = vsel %vm670, %v2726, 0.0
    %v2956 = vadd.f32 %v2954, %v2955
    %v2957 = vsel %vm670, %v2727, 0.0
    %v2958 = vadd.f32 %v2956, %v2957
    %v2959 = vsel %vm670, %v2728, 0.0
    %v2960 = vadd.f32 %v2958, %v2959
    %v2961 = vsel %vm670, %v2729, 0.0
    %v2962 = vadd.f32 %v2960, %v2961
    %v2963 = vsel %vm670, %v2730, 0.0
    %v2964 = vadd.f32 %v2962, %v2963
    %v2965 = vsel %vm670, %v2731, 0.0
    %v2966 = vadd.f32 %v2964, %v2965
    %v2967 = vsel %vm670, %v2732, 0.0
    %v2968 = vadd.f32 %v2966, %v2967
    %v2969 = vsel %vm670, %v2733, 0.0
    %v2970 = vadd.f32 %v2968, %v2969
    %v2971 = vsel %vm670, %v2734, 0.0
    %v2972 = vadd.f32 %v2970, %v2971
    %v2973 = vsel %vm670, %v2735, 0.0
    %v2974 = vadd.f32 %v2972, %v2973
    %v2975 = vsel %vm670, %v2736, 0.0
    %v2976 = vadd.f32 %v2974, %v2975
    %v2977 = vsel %vm670, %v2737, 0.0
    %v2978 = vadd.f32 %v2976, %v2977
    %v2979 = vsel %vm670, %v2738, 0.0
    %v2980 = vadd.f32 %v2978, %v2979
    %v2981 = vsel %vm670, %v2739, 0.0
    %v2982 = vadd.f32 %v2980, %v2981
    %v2983 = vsel %vm670, %v2740, 0.0
    %v2984 = vadd.f32 %v2982, %v2983
    %v2985 = vsel %vm670, %v2741, 0.0
    %v2986 = vadd.f32 %v2984, %v2985
    %v2987 = vsel %vm670, %v2742, 0.0
    %v2988 = vadd.f32 %v2986, %v2987
    %v2989 = vsel %vm670, %v2743, 0.0
    %v2990 = vadd.f32 %v2988, %v2989
    %v2991 = vsel %vm670, %v2744, 0.0
    %v2992 = vadd.f32 %v2990, %v2991
    %v2993 = vsel %vm670, %v2745, 0.0
    %v2994 = vadd.f32 %v2992, %v2993
    %v2995 = vsel %vm670, %v2746, 0.0
    %v2996 = vadd.f32 %v2994, %v2995
    %v2997 = vsel %vm670, %v2747, 0.0
    %v2998 = vadd.f32 %v2996, %v2997
    %v2999 = vsel %vm670, %v2748, 0.0
    %v3000 = vadd.f32 %v2998, %v2999
    %v3001 = vsel %vm670, %v2749, 0.0
    %v3002 = vadd.f32 %v3000, %v3001
    %v3003 = vsel %vm670, %v2750, 0.0
    %v3004 = vadd.f32 %v3002, %v3003
    %v3005 = vsel %vm670, %v2751, 0.0
    %v3006 = vadd.f32 %v3004, %v3005
    %v3007 = vrot.slane %v3006, 4
    %v3008 = vadd.f32 %v3006, %v3007
    %v3009 = vrot.slane %v3008, 2
    %v3010 = vadd.f32 %v3008, %v3009
    %v3011 = vrot.slane %v3010, 1
    %v3012 = vadd.f32 %v3010, %v3011
    %v3013 = vsel %vm670, %v2752, 0.0
    %v3014 = vsel %vm670, %v2753, 0.0
    %v3015 = vadd.f32 %v3013, %v3014
    %v3016 = vsel %vm670, %v2754, 0.0
    %v3017 = vadd.f32 %v3015, %v3016
    %v3018 = vsel %vm670, %v2755, 0.0
    %v3019 = vadd.f32 %v3017, %v3018
    %v3020 = vsel %vm670, %v2756, 0.0
    %v3021 = vadd.f32 %v3019, %v3020
    %v3022 = vsel %vm670, %v2757, 0.0
    %v3023 = vadd.f32 %v3021, %v3022
    %v3024 = vsel %vm670, %v2758, 0.0
    %v3025 = vadd.f32 %v3023, %v3024
    %v3026 = vsel %vm670, %v2759, 0.0
    %v3027 = vadd.f32 %v3025, %v3026
    %v3028 = vsel %vm670, %v2760, 0.0
    %v3029 = vadd.f32 %v3027, %v3028
    %v3030 = vsel %vm670, %v2761, 0.0
    %v3031 = vadd.f32 %v3029, %v3030
    %v3032 = vsel %vm670, %v2762, 0.0
    %v3033 = vadd.f32 %v3031, %v3032
    %v3034 = vsel %vm670, %v2763, 0.0
    %v3035 = vadd.f32 %v3033, %v3034
    %v3036 = vsel %vm670, %v2764, 0.0
    %v3037 = vadd.f32 %v3035, %v3036
    %v3038 = vsel %vm670, %v2765, 0.0
    %v3039 = vadd.f32 %v3037, %v3038
    %v3040 = vsel %vm670, %v2766, 0.0
    %v3041 = vadd.f32 %v3039, %v3040
    %v3042 = vsel %vm670, %v2767, 0.0
    %v3043 = vadd.f32 %v3041, %v3042
    %v3044 = vsel %vm670, %v2768, 0.0
    %v3045 = vadd.f32 %v3043, %v3044
    %v3046 = vsel %vm670, %v2769, 0.0
    %v3047 = vadd.f32 %v3045, %v3046
    %v3048 = vsel %vm670, %v2770, 0.0
    %v3049 = vadd.f32 %v3047, %v3048
    %v3050 = vsel %vm670, %v2771, 0.0
    %v3051 = vadd.f32 %v3049, %v3050
    %v3052 = vsel %vm670, %v2772, 0.0
    %v3053 = vadd.f32 %v3051, %v3052
    %v3054 = vsel %vm670, %v2773, 0.0
    %v3055 = vadd.f32 %v3053, %v3054
    %v3056 = vsel %vm670, %v2774, 0.0
    %v3057 = vadd.f32 %v3055, %v3056
    %v3058 = vsel %vm670, %v2775, 0.0
    %v3059 = vadd.f32 %v3057, %v3058
    %v3060 = vsel %vm670, %v2776, 0.0
    %v3061 = vadd.f32 %v3059, %v3060
    %v3062 = vsel %vm670, %v2777, 0.0
    %v3063 = vadd.f32 %v3061, %v3062
    %v3064 = vsel %vm670, %v2778, 0.0
    %v3065 = vadd.f32 %v3063, %v3064
    %v3066 = vsel %vm670, %v2779, 0.0
    %v3067 = vadd.f32 %v3065, %v3066
    %v3068 = vsel %vm670, %v2780, 0.0
    %v3069 = vadd.f32 %v3067, %v3068
    %v3070 = vsel %vm670, %v2781, 0.0
    %v3071 = vadd.f32 %v3069, %v3070
    %v3072 = vsel %vm670, %v2782, 0.0
    %v3073 = vadd.f32 %v3071, %v3072
    %v3074 = vsel %vm670, %v2783, 0.0
    %v3075 = vadd.f32 %v3073, %v3074
    %v3076 = vsel %vm670, %v2784, 0.0
    %v3077 = vadd.f32 %v3075, %v3076
    %v3078 = vsel %vm670, %v2785, 0.0
    %v3079 = vadd.f32 %v3077, %v3078
    %v3080 = vsel %vm670, %v2786, 0.0
    %v3081 = vadd.f32 %v3079, %v3080
    %v3082 = vsel %vm670, %v2787, 0.0
    %v3083 = vadd.f32 %v3081, %v3082
    %v3084 = vsel %vm670, %v2788, 0.0
    %v3085 = vadd.f32 %v3083, %v3084
    %v3086 = vsel %vm670, %v2789, 0.0
    %v3087 = vadd.f32 %v3085, %v3086
    %v3088 = vsel %vm670, %v2790, 0.0
    %v3089 = vadd.f32 %v3087, %v3088
    %v3090 = vsel %vm670, %v2791, 0.0
    %v3091 = vadd.f32 %v3089, %v3090
    %v3092 = vsel %vm670, %v2792, 0.0
    %v3093 = vadd.f32 %v3091, %v3092
    %v3094 = vsel %vm670, %v2793, 0.0
    %v3095 = vadd.f32 %v3093, %v3094
    %v3096 = vsel %vm670, %v2794, 0.0
    %v3097 = vadd.f32 %v3095, %v3096
    %v3098 = vsel %vm670, %v2795, 0.0
    %v3099 = vadd.f32 %v3097, %v3098
    %v3100 = vsel %vm670, %v2796, 0.0
    %v3101 = vadd.f32 %v3099, %v3100
    %v3102 = vsel %vm670, %v2797, 0.0
    %v3103 = vadd.f32 %v3101, %v3102
    %v3104 = vsel %vm670, %v2798, 0.0
    %v3105 = vadd.f32 %v3103, %v3104
    %v3106 = vsel %vm670, %v2799, 0.0
    %v3107 = vadd.f32 %v3105, %v3106
    %v3108 = vsel %vm670, %v2800, 0.0
    %v3109 = vadd.f32 %v3107, %v3108
    %v3110 = vsel %vm670, %v2801, 0.0
    %v3111 = vadd.f32 %v3109, %v3110
    %v3112 = vsel %vm670, %v2802, 0.0
    %v3113 = vadd.f32 %v3111, %v3112
    %v3114 = vsel %vm670, %v2803, 0.0
    %v3115 = vadd.f32 %v3113, %v3114
    %v3116 = vsel %vm670, %v2804, 0.0
    %v3117 = vadd.f32 %v3115, %v3116
    %v3118 = vsel %vm670, %v2805, 0.0
    %v3119 = vadd.f32 %v3117, %v3118
    %v3120 = vsel %vm670, %v2806, 0.0
    %v3121 = vadd.f32 %v3119, %v3120
    %v3122 = vsel %vm670, %v2807, 0.0
    %v3123 = vadd.f32 %v3121, %v3122
    %v3124 = vsel %vm670, %v2808, 0.0
    %v3125 = vadd.f32 %v3123, %v3124
    %v3126 = vsel %vm670, %v2809, 0.0
    %v3127 = vadd.f32 %v3125, %v3126
    %v3128 = vsel %vm670, %v2810, 0.0
    %v3129 = vadd.f32 %v3127, %v3128
    %v3130 = vsel %vm670, %v2811, 0.0
    %v3131 = vadd.f32 %v3129, %v3130
    %v3132 = vsel %vm670, %v2812, 0.0
    %v3133 = vadd.f32 %v3131, %v3132
    %v3134 = vsel %vm670, %v2813, 0.0
    %v3135 = vadd.f32 %v3133, %v3134
    %v3136 = vsel %vm670, %v2814, 0.0
    %v3137 = vadd.f32 %v3135, %v3136
    %v3138 = vsel %vm670, %v2815, 0.0
    %v3139 = vadd.f32 %v3137, %v3138
    %v3140 = vrot.slane %v3139, 4
    %v3141 = vadd.f32 %v3139, %v3140
    %v3142 = vrot.slane %v3141, 2
    %v3143 = vadd.f32 %v3141, %v3142
    %v3144 = vrot.slane %v3143, 1
    %v3145 = vadd.f32 %v3143, %v3144
    %v3146 = vsel %vm670, %v2816, 0.0
    %v3147 = vsel %vm670, %v2817, 0.0
    %v3148 = vadd.f32 %v3146, %v3147
    %v3149 = vsel %vm670, %v2818, 0.0
    %v3150 = vadd.f32 %v3148, %v3149
    %v3151 = vsel %vm670, %v2819, 0.0
    %v3152 = vadd.f32 %v3150, %v3151
    %v3153 = vsel %vm670, %v2820, 0.0
    %v3154 = vadd.f32 %v3152, %v3153
    %v3155 = vsel %vm670, %v2821, 0.0
    %v3156 = vadd.f32 %v3154, %v3155
    %v3157 = vsel %vm670, %v2822, 0.0
    %v3158 = vadd.f32 %v3156, %v3157
    %v3159 = vsel %vm670, %v2823, 0.0
    %v3160 = vadd.f32 %v3158, %v3159
    %v3161 = vsel %vm670, %v2824, 0.0
    %v3162 = vadd.f32 %v3160, %v3161
    %v3163 = vsel %vm670, %v2825, 0.0
    %v3164 = vadd.f32 %v3162, %v3163
    %v3165 = vsel %vm670, %v2826, 0.0
    %v3166 = vadd.f32 %v3164, %v3165
    %v3167 = vsel %vm670, %v2827, 0.0
    %v3168 = vadd.f32 %v3166, %v3167
    %v3169 = vsel %vm670, %v2828, 0.0
    %v3170 = vadd.f32 %v3168, %v3169
    %v3171 = vsel %vm670, %v2829, 0.0
    %v3172 = vadd.f32 %v3170, %v3171
    %v3173 = vsel %vm670, %v2830, 0.0
    %v3174 = vadd.f32 %v3172, %v3173
    %v3175 = vsel %vm670, %v2831, 0.0
    %v3176 = vadd.f32 %v3174, %v3175
    %v3177 = vsel %vm670, %v2832, 0.0
    %v3178 = vadd.f32 %v3176, %v3177
    %v3179 = vsel %vm670, %v2833, 0.0
    %v3180 = vadd.f32 %v3178, %v3179
    %v3181 = vsel %vm670, %v2834, 0.0
    %v3182 = vadd.f32 %v3180, %v3181
    %v3183 = vsel %vm670, %v2835, 0.0
    %v3184 = vadd.f32 %v3182, %v3183
    %v3185 = vsel %vm670, %v2836, 0.0
    %v3186 = vadd.f32 %v3184, %v3185
    %v3187 = vsel %vm670, %v2837, 0.0
    %v3188 = vadd.f32 %v3186, %v3187
    %v3189 = vsel %vm670, %v2838, 0.0
    %v3190 = vadd.f32 %v3188, %v3189
    %v3191 = vsel %vm670, %v2839, 0.0
    %v3192 = vadd.f32 %v3190, %v3191
    %v3193 = vsel %vm670, %v2840, 0.0
    %v3194 = vadd.f32 %v3192, %v3193
    %v3195 = vsel %vm670, %v2841, 0.0
    %v3196 = vadd.f32 %v3194, %v3195
    %v3197 = vsel %vm670, %v2842, 0.0
    %v3198 = vadd.f32 %v3196, %v3197
    %v3199 = vsel %vm670, %v2843, 0.0
    %v3200 = vadd.f32 %v3198, %v3199
    %v3201 = vsel %vm670, %v2844, 0.0
    %v3202 = vadd.f32 %v3200, %v3201
    %v3203 = vsel %vm670, %v2845, 0.0
    %v3204 = vadd.f32 %v3202, %v3203
    %v3205 = vsel %vm670, %v2846, 0.0
    %v3206 = vadd.f32 %v3204, %v3205
    %v3207 = vsel %vm670, %v2847, 0.0
    %v3208 = vadd.f32 %v3206, %v3207
    %v3209 = vsel %vm670, %v2848, 0.0
    %v3210 = vadd.f32 %v3208, %v3209
    %v3211 = vsel %vm670, %v2849, 0.0
    %v3212 = vadd.f32 %v3210, %v3211
    %v3213 = vsel %vm670, %v2850, 0.0
    %v3214 = vadd.f32 %v3212, %v3213
    %v3215 = vsel %vm670, %v2851, 0.0
    %v3216 = vadd.f32 %v3214, %v3215
    %v3217 = vsel %vm670, %v2852, 0.0
    %v3218 = vadd.f32 %v3216, %v3217
    %v3219 = vsel %vm670, %v2853, 0.0
    %v3220 = vadd.f32 %v3218, %v3219
    %v3221 = vsel %vm670, %v2854, 0.0
    %v3222 = vadd.f32 %v3220, %v3221
    %v3223 = vsel %vm670, %v2855, 0.0
    %v3224 = vadd.f32 %v3222, %v3223
    %v3225 = vsel %vm670, %v2856, 0.0
    %v3226 = vadd.f32 %v3224, %v3225
    %v3227 = vsel %vm670, %v2857, 0.0
    %v3228 = vadd.f32 %v3226, %v3227
    %v3229 = vsel %vm670, %v2858, 0.0
    %v3230 = vadd.f32 %v3228, %v3229
    %v3231 = vsel %vm670, %v2859, 0.0
    %v3232 = vadd.f32 %v3230, %v3231
    %v3233 = vsel %vm670, %v2860, 0.0
    %v3234 = vadd.f32 %v3232, %v3233
    %v3235 = vsel %vm670, %v2861, 0.0
    %v3236 = vadd.f32 %v3234, %v3235
    %v3237 = vsel %vm670, %v2862, 0.0
    %v3238 = vadd.f32 %v3236, %v3237
    %v3239 = vsel %vm670, %v2863, 0.0
    %v3240 = vadd.f32 %v3238, %v3239
    %v3241 = vsel %vm670, %v2864, 0.0
    %v3242 = vadd.f32 %v3240, %v3241
    %v3243 = vsel %vm670, %v2865, 0.0
    %v3244 = vadd.f32 %v3242, %v3243
    %v3245 = vsel %vm670, %v2866, 0.0
    %v3246 = vadd.f32 %v3244, %v3245
    %v3247 = vsel %vm670, %v2867, 0.0
    %v3248 = vadd.f32 %v3246, %v3247
    %v3249 = vsel %vm670, %v2868, 0.0
    %v3250 = vadd.f32 %v3248, %v3249
    %v3251 = vsel %vm670, %v2869, 0.0
    %v3252 = vadd.f32 %v3250, %v3251
    %v3253 = vsel %vm670, %v2870, 0.0
    %v3254 = vadd.f32 %v3252, %v3253
    %v3255 = vsel %vm670, %v2871, 0.0
    %v3256 = vadd.f32 %v3254, %v3255
    %v3257 = vsel %vm670, %v2872, 0.0
    %v3258 = vadd.f32 %v3256, %v3257
    %v3259 = vsel %vm670, %v2873, 0.0
    %v3260 = vadd.f32 %v3258, %v3259
    %v3261 = vsel %vm670, %v2874, 0.0
    %v3262 = vadd.f32 %v3260, %v3261
    %v3263 = vsel %vm670, %v2875, 0.0
    %v3264 = vadd.f32 %v3262, %v3263
    %v3265 = vsel %vm670, %v2876, 0.0
    %v3266 = vadd.f32 %v3264, %v3265
    %v3267 = vsel %vm670, %v2877, 0.0
    %v3268 = vadd.f32 %v3266, %v3267
    %v3269 = vsel %vm670, %v2878, 0.0
    %v3270 = vadd.f32 %v3268, %v3269
    %v3271 = vsel %vm670, %v2879, 0.0
    %v3272 = vadd.f32 %v3270, %v3271
    %v3273 = vrot.slane %v3272, 4
    %v3274 = vadd.f32 %v3272, %v3273
    %v3275 = vrot.slane %v3274, 2
    %v3276 = vadd.f32 %v3274, %v3275
    %v3277 = vrot.slane %v3276, 1
    %v3278 = vadd.f32 %v3276, %v3277
    %3280 = vset.pattern.permute.xlu0 0
    %3281 = vperm.xlu0 %3280, %v349
    %v3282 = vpop.permute.xlu0 %3281
    %3285 = vset.pattern.permute.xlu0 0
    %3286 = vperm.xlu0 %3285, %v350
    %v3287 = vpop.permute.xlu0 %3286
    %3290 = vset.pattern.permute.xlu0 0
    %3291 = vperm.xlu0 %3290, %v351
    %v3292 = vpop.permute.xlu0 %3291
    %3295 = vset.pattern.permute.xlu0 0
    %3296 = vperm.xlu0 %3295, %v352
    %v3297 = vpop.permute.xlu0 %3296
    %3300 = vset.pattern.permute.xlu0 0
    %3301 = vperm.xlu0 %3300, %v353
    %v3302 = vpop.permute.xlu0 %3301
    %3305 = vset.pattern.permute.xlu0 0
    %3306 = vperm.xlu0 %3305, %v354
    %v3307 = vpop.permute.xlu0 %3306
    %3310 = vset.pattern.permute.xlu0 0
    %3311 = vperm.xlu0 %3310, %v355
    %v3312 = vpop.permute.xlu0 %3311
    %3315 = vset.pattern.permute.xlu0 0
    %3316 = vperm.xlu0 %3315, %v356
    %v3317 = vpop.permute.xlu0 %3316
    %3320 = vset.pattern.permute.xlu0 0
    %3321 = vperm.xlu0 %3320, %v357
    %v3322 = vpop.permute.xlu0 %3321
    %3325 = vset.pattern.permute.xlu0 0
    %3326 = vperm.xlu0 %3325, %v358
    %v3327 = vpop.permute.xlu0 %3326
    %3330 = vset.pattern.permute.xlu0 0
    %3331 = vperm.xlu0 %3330, %v359
    %v3332 = vpop.permute.xlu0 %3331
    %3335 = vset.pattern.permute.xlu0 0
    %3336 = vperm.xlu0 %3335, %v360
    %v3337 = vpop.permute.xlu0 %3336
    %3340 = vset.pattern.permute.xlu0 0
    %3341 = vperm.xlu0 %3340, %v361
    %v3342 = vpop.permute.xlu0 %3341
    %3345 = vset.pattern.permute.xlu0 0
    %3346 = vperm.xlu0 %3345, %v362
    %v3347 = vpop.permute.xlu0 %3346
    %3350 = vset.pattern.permute.xlu0 0
    %3351 = vperm.xlu0 %3350, %v363
    %v3352 = vpop.permute.xlu0 %3351
    %3355 = vset.pattern.permute.xlu0 0
    %3356 = vperm.xlu0 %3355, %v364
    %v3357 = vpop.permute.xlu0 %3356
    %3360 = vset.pattern.permute.xlu0 0
    %3361 = vperm.xlu0 %3360, %v365
    %v3362 = vpop.permute.xlu0 %3361
    %3365 = vset.pattern.permute.xlu0 0
    %3366 = vperm.xlu0 %3365, %v366
    %v3367 = vpop.permute.xlu0 %3366
    %3370 = vset.pattern.permute.xlu0 0
    %3371 = vperm.xlu0 %3370, %v367
    %v3372 = vpop.permute.xlu0 %3371
    %3375 = vset.pattern.permute.xlu0 0
    %3376 = vperm.xlu0 %3375, %v368
    %v3377 = vpop.permute.xlu0 %3376
    %3380 = vset.pattern.permute.xlu0 0
    %3381 = vperm.xlu0 %3380, %v369
    %v3382 = vpop.permute.xlu0 %3381
    %3385 = vset.pattern.permute.xlu0 0
    %3386 = vperm.xlu0 %3385, %v370
    %v3387 = vpop.permute.xlu0 %3386
    %3390 = vset.pattern.permute.xlu0 0
    %3391 = vperm.xlu0 %3390, %v371
    %v3392 = vpop.permute.xlu0 %3391
    %3395 = vset.pattern.permute.xlu0 0
    %3396 = vperm.xlu0 %3395, %v372
    %v3397 = vpop.permute.xlu0 %3396
    %3400 = vset.pattern.permute.xlu0 0
    %3401 = vperm.xlu0 %3400, %v373
    %v3402 = vpop.permute.xlu0 %3401
    %3405 = vset.pattern.permute.xlu0 0
    %3406 = vperm.xlu0 %3405, %v374
    %v3407 = vpop.permute.xlu0 %3406
    %3410 = vset.pattern.permute.xlu0 0
    %3411 = vperm.xlu0 %3410, %v375
    %v3412 = vpop.permute.xlu0 %3411
    %3415 = vset.pattern.permute.xlu0 0
    %3416 = vperm.xlu0 %3415, %v376
    %v3417 = vpop.permute.xlu0 %3416
    %3420 = vset.pattern.permute.xlu0 0
    %3421 = vperm.xlu0 %3420, %v377
    %v3422 = vpop.permute.xlu0 %3421
    %3425 = vset.pattern.permute.xlu0 0
    %3426 = vperm.xlu0 %3425, %v378
    %v3427 = vpop.permute.xlu0 %3426
    %3430 = vset.pattern.permute.xlu0 0
    %3431 = vperm.xlu0 %3430, %v379
    %v3432 = vpop.permute.xlu0 %3431
    %3435 = vset.pattern.permute.xlu0 0
    %3436 = vperm.xlu0 %3435, %v380
    %v3437 = vpop.permute.xlu0 %3436
    %3440 = vset.pattern.permute.xlu0 0
    %3441 = vperm.xlu0 %3440, %v381
    %v3442 = vpop.permute.xlu0 %3441
    %3445 = vset.pattern.permute.xlu0 0
    %3446 = vperm.xlu0 %3445, %v382
    %v3447 = vpop.permute.xlu0 %3446
    %3450 = vset.pattern.permute.xlu0 0
    %3451 = vperm.xlu0 %3450, %v383
    %v3452 = vpop.permute.xlu0 %3451
    %3455 = vset.pattern.permute.xlu0 0
    %3456 = vperm.xlu0 %3455, %v384
    %v3457 = vpop.permute.xlu0 %3456
    %3460 = vset.pattern.permute.xlu0 0
    %3461 = vperm.xlu0 %3460, %v385
    %v3462 = vpop.permute.xlu0 %3461
    %3465 = vset.pattern.permute.xlu0 0
    %3466 = vperm.xlu0 %3465, %v386
    %v3467 = vpop.permute.xlu0 %3466
    %3470 = vset.pattern.permute.xlu0 0
    %3471 = vperm.xlu0 %3470, %v387
    %v3472 = vpop.permute.xlu0 %3471
    %3475 = vset.pattern.permute.xlu0 0
    %3476 = vperm.xlu0 %3475, %v388
    %v3477 = vpop.permute.xlu0 %3476
    %3480 = vset.pattern.permute.xlu0 0
    %3481 = vperm.xlu0 %3480, %v389
    %v3482 = vpop.permute.xlu0 %3481
    %3485 = vset.pattern.permute.xlu0 0
    %3486 = vperm.xlu0 %3485, %v390
    %v3487 = vpop.permute.xlu0 %3486
    %3490 = vset.pattern.permute.xlu0 0
    %3491 = vperm.xlu0 %3490, %v391
    %v3492 = vpop.permute.xlu0 %3491
    %3495 = vset.pattern.permute.xlu0 0
    %3496 = vperm.xlu0 %3495, %v392
    %v3497 = vpop.permute.xlu0 %3496
    %3500 = vset.pattern.permute.xlu0 0
    %3501 = vperm.xlu0 %3500, %v393
    %v3502 = vpop.permute.xlu0 %3501
    %3505 = vset.pattern.permute.xlu0 0
    %3506 = vperm.xlu0 %3505, %v394
    %v3507 = vpop.permute.xlu0 %3506
    %3510 = vset.pattern.permute.xlu0 0
    %3511 = vperm.xlu0 %3510, %v395
    %v3512 = vpop.permute.xlu0 %3511
    %3515 = vset.pattern.permute.xlu0 0
    %3516 = vperm.xlu0 %3515, %v396
    %v3517 = vpop.permute.xlu0 %3516
    %3520 = vset.pattern.permute.xlu0 0
    %3521 = vperm.xlu0 %3520, %v397
    %v3522 = vpop.permute.xlu0 %3521
    %3525 = vset.pattern.permute.xlu0 0
    %3526 = vperm.xlu0 %3525, %v398
    %v3527 = vpop.permute.xlu0 %3526
    %3530 = vset.pattern.permute.xlu0 0
    %3531 = vperm.xlu0 %3530, %v399
    %v3532 = vpop.permute.xlu0 %3531
    %3535 = vset.pattern.permute.xlu0 0
    %3536 = vperm.xlu0 %3535, %v400
    %v3537 = vpop.permute.xlu0 %3536
    %3540 = vset.pattern.permute.xlu0 0
    %3541 = vperm.xlu0 %3540, %v401
    %v3542 = vpop.permute.xlu0 %3541
    %3545 = vset.pattern.permute.xlu0 0
    %3546 = vperm.xlu0 %3545, %v402
    %v3547 = vpop.permute.xlu0 %3546
    %3550 = vset.pattern.permute.xlu0 0
    %3551 = vperm.xlu0 %3550, %v403
    %v3552 = vpop.permute.xlu0 %3551
    %3555 = vset.pattern.permute.xlu0 0
    %3556 = vperm.xlu0 %3555, %v404
    %v3557 = vpop.permute.xlu0 %3556
    %3560 = vset.pattern.permute.xlu0 0
    %3561 = vperm.xlu0 %3560, %v405
    %v3562 = vpop.permute.xlu0 %3561
    %3565 = vset.pattern.permute.xlu0 0
    %3566 = vperm.xlu0 %3565, %v406
    %v3567 = vpop.permute.xlu0 %3566
    %3570 = vset.pattern.permute.xlu0 0
    %3571 = vperm.xlu0 %3570, %v407
    %v3572 = vpop.permute.xlu0 %3571
    %3575 = vset.pattern.permute.xlu0 0
    %3576 = vperm.xlu0 %3575, %v408
    %v3577 = vpop.permute.xlu0 %3576
    %3580 = vset.pattern.permute.xlu0 0
    %3581 = vperm.xlu0 %3580, %v409
    %v3582 = vpop.permute.xlu0 %3581
    %3585 = vset.pattern.permute.xlu0 0
    %3586 = vperm.xlu0 %3585, %v410
    %v3587 = vpop.permute.xlu0 %3586
    %3590 = vset.pattern.permute.xlu0 0
    %3591 = vperm.xlu0 %3590, %v411
    %v3592 = vpop.permute.xlu0 %3591
    %3595 = vset.pattern.permute.xlu0 0
    %3596 = vperm.xlu0 %3595, %v412
    %v3597 = vpop.permute.xlu0 %3596
    %v3599 = vmul.f32 %v1265, %v3282
    %v3600 = vmul.f32 %v1266, %v3287
    %v3601 = vmul.f32 %v1267, %v3292
    %v3602 = vmul.f32 %v1268, %v3297
    %v3603 = vmul.f32 %v1269, %v3302
    %v3604 = vmul.f32 %v1270, %v3307
    %v3605 = vmul.f32 %v1271, %v3312
    %v3606 = vmul.f32 %v1272, %v3317
    %v3607 = vmul.f32 %v1273, %v3322
    %v3608 = vmul.f32 %v1274, %v3327
    %v3609 = vmul.f32 %v1275, %v3332
    %v3610 = vmul.f32 %v1276, %v3337
    %v3611 = vmul.f32 %v1277, %v3342
    %v3612 = vmul.f32 %v1278, %v3347
    %v3613 = vmul.f32 %v1279, %v3352
    %v3614 = vmul.f32 %v1280, %v3357
    %v3615 = vmul.f32 %v1281, %v3362
    %v3616 = vmul.f32 %v1282, %v3367
    %v3617 = vmul.f32 %v1283, %v3372
    %v3618 = vmul.f32 %v1284, %v3377
    %v3619 = vmul.f32 %v1285, %v3382
    %v3620 = vmul.f32 %v1286, %v3387
    %v3621 = vmul.f32 %v1287, %v3392
    %v3622 = vmul.f32 %v1288, %v3397
    %v3623 = vmul.f32 %v1289, %v3402
    %v3624 = vmul.f32 %v1290, %v3407
    %v3625 = vmul.f32 %v1291, %v3412
    %v3626 = vmul.f32 %v1292, %v3417
    %v3627 = vmul.f32 %v1293, %v3422
    %v3628 = vmul.f32 %v1294, %v3427
    %v3629 = vmul.f32 %v1295, %v3432
    %v3630 = vmul.f32 %v1296, %v3437
    %v3631 = vmul.f32 %v1297, %v3442
    %v3632 = vmul.f32 %v1298, %v3447
    %v3633 = vmul.f32 %v1299, %v3452
    %v3634 = vmul.f32 %v1300, %v3457
    %v3635 = vmul.f32 %v1301, %v3462
    %v3636 = vmul.f32 %v1302, %v3467
    %v3637 = vmul.f32 %v1303, %v3472
    %v3638 = vmul.f32 %v1304, %v3477
    %v3639 = vmul.f32 %v1305, %v3482
    %v3640 = vmul.f32 %v1306, %v3487
    %v3641 = vmul.f32 %v1307, %v3492
    %v3642 = vmul.f32 %v1308, %v3497
    %v3643 = vmul.f32 %v1309, %v3502
    %v3644 = vmul.f32 %v1310, %v3507
    %v3645 = vmul.f32 %v1311, %v3512
    %v3646 = vmul.f32 %v1312, %v3517
    %v3647 = vmul.f32 %v1313, %v3522
    %v3648 = vmul.f32 %v1314, %v3527
    %v3649 = vmul.f32 %v1315, %v3532
    %v3650 = vmul.f32 %v1316, %v3537
    %v3651 = vmul.f32 %v1317, %v3542
    %v3652 = vmul.f32 %v1318, %v3547
    %v3653 = vmul.f32 %v1319, %v3552
    %v3654 = vmul.f32 %v1320, %v3557
    %v3655 = vmul.f32 %v1321, %v3562
    %v3656 = vmul.f32 %v1322, %v3567
    %v3657 = vmul.f32 %v1323, %v3572
    %v3658 = vmul.f32 %v1324, %v3577
    %v3659 = vmul.f32 %v1325, %v3582
    %v3660 = vmul.f32 %v1326, %v3587
    %v3661 = vmul.f32 %v1327, %v3592
    %v3662 = vmul.f32 %v1328, %v3597
    %v3663 = vmul.f32 %v1329, %v3282
    %v3664 = vmul.f32 %v1330, %v3287
    %v3665 = vmul.f32 %v1331, %v3292
    %v3666 = vmul.f32 %v1332, %v3297
    %v3667 = vmul.f32 %v1333, %v3302
    %v3668 = vmul.f32 %v1334, %v3307
    %v3669 = vmul.f32 %v1335, %v3312
    %v3670 = vmul.f32 %v1336, %v3317
    %v3671 = vmul.f32 %v1337, %v3322
    %v3672 = vmul.f32 %v1338, %v3327
    %v3673 = vmul.f32 %v1339, %v3332
    %v3674 = vmul.f32 %v1340, %v3337
    %v3675 = vmul.f32 %v1341, %v3342
    %v3676 = vmul.f32 %v1342, %v3347
    %v3677 = vmul.f32 %v1343, %v3352
    %v3678 = vmul.f32 %v1344, %v3357
    %v3679 = vmul.f32 %v1345, %v3362
    %v3680 = vmul.f32 %v1346, %v3367
    %v3681 = vmul.f32 %v1347, %v3372
    %v3682 = vmul.f32 %v1348, %v3377
    %v3683 = vmul.f32 %v1349, %v3382
    %v3684 = vmul.f32 %v1350, %v3387
    %v3685 = vmul.f32 %v1351, %v3392
    %v3686 = vmul.f32 %v1352, %v3397
    %v3687 = vmul.f32 %v1353, %v3402
    %v3688 = vmul.f32 %v1354, %v3407
    %v3689 = vmul.f32 %v1355, %v3412
    %v3690 = vmul.f32 %v1356, %v3417
    %v3691 = vmul.f32 %v1357, %v3422
    %v3692 = vmul.f32 %v1358, %v3427
    %v3693 = vmul.f32 %v1359, %v3432
    %v3694 = vmul.f32 %v1360, %v3437
    %v3695 = vmul.f32 %v1361, %v3442
    %v3696 = vmul.f32 %v1362, %v3447
    %v3697 = vmul.f32 %v1363, %v3452
    %v3698 = vmul.f32 %v1364, %v3457
    %v3699 = vmul.f32 %v1365, %v3462
    %v3700 = vmul.f32 %v1366, %v3467
    %v3701 = vmul.f32 %v1367, %v3472
    %v3702 = vmul.f32 %v1368, %v3477
    %v3703 = vmul.f32 %v1369, %v3482
    %v3704 = vmul.f32 %v1370, %v3487
    %v3705 = vmul.f32 %v1371, %v3492
    %v3706 = vmul.f32 %v1372, %v3497
    %v3707 = vmul.f32 %v1373, %v3502
    %v3708 = vmul.f32 %v1374, %v3507
    %v3709 = vmul.f32 %v1375, %v3512
    %v3710 = vmul.f32 %v1376, %v3517
    %v3711 = vmul.f32 %v1377, %v3522
    %v3712 = vmul.f32 %v1378, %v3527
    %v3713 = vmul.f32 %v1379, %v3532
    %v3714 = vmul.f32 %v1380, %v3537
    %v3715 = vmul.f32 %v1381, %v3542
    %v3716 = vmul.f32 %v1382, %v3547
    %v3717 = vmul.f32 %v1383, %v3552
    %v3718 = vmul.f32 %v1384, %v3557
    %v3719 = vmul.f32 %v1385, %v3562
    %v3720 = vmul.f32 %v1386, %v3567
    %v3721 = vmul.f32 %v1387, %v3572
    %v3722 = vmul.f32 %v1388, %v3577
    %v3723 = vmul.f32 %v1389, %v3582
    %v3724 = vmul.f32 %v1390, %v3587
    %v3725 = vmul.f32 %v1391, %v3592
    %v3726 = vmul.f32 %v1392, %v3597
    %v3727 = vmul.f32 %v1393, %v3282
    %v3728 = vmul.f32 %v1394, %v3287
    %v3729 = vmul.f32 %v1395, %v3292
    %v3730 = vmul.f32 %v1396, %v3297
    %v3731 = vmul.f32 %v1397, %v3302
    %v3732 = vmul.f32 %v1398, %v3307
    %v3733 = vmul.f32 %v1399, %v3312
    %v3734 = vmul.f32 %v1400, %v3317
    %v3735 = vmul.f32 %v1401, %v3322
    %v3736 = vmul.f32 %v1402, %v3327
    %v3737 = vmul.f32 %v1403, %v3332
    %v3738 = vmul.f32 %v1404, %v3337
    %v3739 = vmul.f32 %v1405, %v3342
    %v3740 = vmul.f32 %v1406, %v3347
    %v3741 = vmul.f32 %v1407, %v3352
    %v3742 = vmul.f32 %v1408, %v3357
    %v3743 = vmul.f32 %v1409, %v3362
    %v3744 = vmul.f32 %v1410, %v3367
    %v3745 = vmul.f32 %v1411, %v3372
    %v3746 = vmul.f32 %v1412, %v3377
    %v3747 = vmul.f32 %v1413, %v3382
    %v3748 = vmul.f32 %v1414, %v3387
    %v3749 = vmul.f32 %v1415, %v3392
    %v3750 = vmul.f32 %v1416, %v3397
    %v3751 = vmul.f32 %v1417, %v3402
    %v3752 = vmul.f32 %v1418, %v3407
    %v3753 = vmul.f32 %v1419, %v3412
    %v3754 = vmul.f32 %v1420, %v3417
    %v3755 = vmul.f32 %v1421, %v3422
    %v3756 = vmul.f32 %v1422, %v3427
    %v3757 = vmul.f32 %v1423, %v3432
    %v3758 = vmul.f32 %v1424, %v3437
    %v3759 = vmul.f32 %v1425, %v3442
    %v3760 = vmul.f32 %v1426, %v3447
    %v3761 = vmul.f32 %v1427, %v3452
    %v3762 = vmul.f32 %v1428, %v3457
    %v3763 = vmul.f32 %v1429, %v3462
    %v3764 = vmul.f32 %v1430, %v3467
    %v3765 = vmul.f32 %v1431, %v3472
    %v3766 = vmul.f32 %v1432, %v3477
    %v3767 = vmul.f32 %v1433, %v3482
    %v3768 = vmul.f32 %v1434, %v3487
    %v3769 = vmul.f32 %v1435, %v3492
    %v3770 = vmul.f32 %v1436, %v3497
    %v3771 = vmul.f32 %v1437, %v3502
    %v3772 = vmul.f32 %v1438, %v3507
    %v3773 = vmul.f32 %v1439, %v3512
    %v3774 = vmul.f32 %v1440, %v3517
    %v3775 = vmul.f32 %v1441, %v3522
    %v3776 = vmul.f32 %v1442, %v3527
    %v3777 = vmul.f32 %v1443, %v3532
    %v3778 = vmul.f32 %v1444, %v3537
    %v3779 = vmul.f32 %v1445, %v3542
    %v3780 = vmul.f32 %v1446, %v3547
    %v3781 = vmul.f32 %v1447, %v3552
    %v3782 = vmul.f32 %v1448, %v3557
    %v3783 = vmul.f32 %v1449, %v3562
    %v3784 = vmul.f32 %v1450, %v3567
    %v3785 = vmul.f32 %v1451, %v3572
    %v3786 = vmul.f32 %v1452, %v3577
    %v3787 = vmul.f32 %v1453, %v3582
    %v3788 = vmul.f32 %v1454, %v3587
    %v3789 = vmul.f32 %v1455, %v3592
    %v3790 = vmul.f32 %v1456, %v3597
    %v3791 = vsel %vm670, %v3599, 0.0
    %v3792 = vsel %vm670, %v3600, 0.0
    %v3793 = vadd.f32 %v3791, %v3792
    %v3794 = vsel %vm670, %v3601, 0.0
    %v3795 = vadd.f32 %v3793, %v3794
    %v3796 = vsel %vm670, %v3602, 0.0
    %v3797 = vadd.f32 %v3795, %v3796
    %v3798 = vsel %vm670, %v3603, 0.0
    %v3799 = vadd.f32 %v3797, %v3798
    %v3800 = vsel %vm670, %v3604, 0.0
    %v3801 = vadd.f32 %v3799, %v3800
    %v3802 = vsel %vm670, %v3605, 0.0
    %v3803 = vadd.f32 %v3801, %v3802
    %v3804 = vsel %vm670, %v3606, 0.0
    %v3805 = vadd.f32 %v3803, %v3804
    %v3806 = vsel %vm670, %v3607, 0.0
    %v3807 = vadd.f32 %v3805, %v3806
    %v3808 = vsel %vm670, %v3608, 0.0
    %v3809 = vadd.f32 %v3807, %v3808
    %v3810 = vsel %vm670, %v3609, 0.0
    %v3811 = vadd.f32 %v3809, %v3810
    %v3812 = vsel %vm670, %v3610, 0.0
    %v3813 = vadd.f32 %v3811, %v3812
    %v3814 = vsel %vm670, %v3611, 0.0
    %v3815 = vadd.f32 %v3813, %v3814
    %v3816 = vsel %vm670, %v3612, 0.0
    %v3817 = vadd.f32 %v3815, %v3816
    %v3818 = vsel %vm670, %v3613, 0.0
    %v3819 = vadd.f32 %v3817, %v3818
    %v3820 = vsel %vm670, %v3614, 0.0
    %v3821 = vadd.f32 %v3819, %v3820
    %v3822 = vsel %vm670, %v3615, 0.0
    %v3823 = vadd.f32 %v3821, %v3822
    %v3824 = vsel %vm670, %v3616, 0.0
    %v3825 = vadd.f32 %v3823, %v3824
    %v3826 = vsel %vm670, %v3617, 0.0
    %v3827 = vadd.f32 %v3825, %v3826
    %v3828 = vsel %vm670, %v3618, 0.0
    %v3829 = vadd.f32 %v3827, %v3828
    %v3830 = vsel %vm670, %v3619, 0.0
    %v3831 = vadd.f32 %v3829, %v3830
    %v3832 = vsel %vm670, %v3620, 0.0
    %v3833 = vadd.f32 %v3831, %v3832
    %v3834 = vsel %vm670, %v3621, 0.0
    %v3835 = vadd.f32 %v3833, %v3834
    %v3836 = vsel %vm670, %v3622, 0.0
    %v3837 = vadd.f32 %v3835, %v3836
    %v3838 = vsel %vm670, %v3623, 0.0
    %v3839 = vadd.f32 %v3837, %v3838
    %v3840 = vsel %vm670, %v3624, 0.0
    %v3841 = vadd.f32 %v3839, %v3840
    %v3842 = vsel %vm670, %v3625, 0.0
    %v3843 = vadd.f32 %v3841, %v3842
    %v3844 = vsel %vm670, %v3626, 0.0
    %v3845 = vadd.f32 %v3843, %v3844
    %v3846 = vsel %vm670, %v3627, 0.0
    %v3847 = vadd.f32 %v3845, %v3846
    %v3848 = vsel %vm670, %v3628, 0.0
    %v3849 = vadd.f32 %v3847, %v3848
    %v3850 = vsel %vm670, %v3629, 0.0
    %v3851 = vadd.f32 %v3849, %v3850
    %v3852 = vsel %vm670, %v3630, 0.0
    %v3853 = vadd.f32 %v3851, %v3852
    %v3854 = vsel %vm670, %v3631, 0.0
    %v3855 = vadd.f32 %v3853, %v3854
    %v3856 = vsel %vm670, %v3632, 0.0
    %v3857 = vadd.f32 %v3855, %v3856
    %v3858 = vsel %vm670, %v3633, 0.0
    %v3859 = vadd.f32 %v3857, %v3858
    %v3860 = vsel %vm670, %v3634, 0.0
    %v3861 = vadd.f32 %v3859, %v3860
    %v3862 = vsel %vm670, %v3635, 0.0
    %v3863 = vadd.f32 %v3861, %v3862
    %v3864 = vsel %vm670, %v3636, 0.0
    %v3865 = vadd.f32 %v3863, %v3864
    %v3866 = vsel %vm670, %v3637, 0.0
    %v3867 = vadd.f32 %v3865, %v3866
    %v3868 = vsel %vm670, %v3638, 0.0
    %v3869 = vadd.f32 %v3867, %v3868
    %v3870 = vsel %vm670, %v3639, 0.0
    %v3871 = vadd.f32 %v3869, %v3870
    %v3872 = vsel %vm670, %v3640, 0.0
    %v3873 = vadd.f32 %v3871, %v3872
    %v3874 = vsel %vm670, %v3641, 0.0
    %v3875 = vadd.f32 %v3873, %v3874
    %v3876 = vsel %vm670, %v3642, 0.0
    %v3877 = vadd.f32 %v3875, %v3876
    %v3878 = vsel %vm670, %v3643, 0.0
    %v3879 = vadd.f32 %v3877, %v3878
    %v3880 = vsel %vm670, %v3644, 0.0
    %v3881 = vadd.f32 %v3879, %v3880
    %v3882 = vsel %vm670, %v3645, 0.0
    %v3883 = vadd.f32 %v3881, %v3882
    %v3884 = vsel %vm670, %v3646, 0.0
    %v3885 = vadd.f32 %v3883, %v3884
    %v3886 = vsel %vm670, %v3647, 0.0
    %v3887 = vadd.f32 %v3885, %v3886
    %v3888 = vsel %vm670, %v3648, 0.0
    %v3889 = vadd.f32 %v3887, %v3888
    %v3890 = vsel %vm670, %v3649, 0.0
    %v3891 = vadd.f32 %v3889, %v3890
    %v3892 = vsel %vm670, %v3650, 0.0
    %v3893 = vadd.f32 %v3891, %v3892
    %v3894 = vsel %vm670, %v3651, 0.0
    %v3895 = vadd.f32 %v3893, %v3894
    %v3896 = vsel %vm670, %v3652, 0.0
    %v3897 = vadd.f32 %v3895, %v3896
    %v3898 = vsel %vm670, %v3653, 0.0
    %v3899 = vadd.f32 %v3897, %v3898
    %v3900 = vsel %vm670, %v3654, 0.0
    %v3901 = vadd.f32 %v3899, %v3900
    %v3902 = vsel %vm670, %v3655, 0.0
    %v3903 = vadd.f32 %v3901, %v3902
    %v3904 = vsel %vm670, %v3656, 0.0
    %v3905 = vadd.f32 %v3903, %v3904
    %v3906 = vsel %vm670, %v3657, 0.0
    %v3907 = vadd.f32 %v3905, %v3906
    %v3908 = vsel %vm670, %v3658, 0.0
    %v3909 = vadd.f32 %v3907, %v3908
    %v3910 = vsel %vm670, %v3659, 0.0
    %v3911 = vadd.f32 %v3909, %v3910
    %v3912 = vsel %vm670, %v3660, 0.0
    %v3913 = vadd.f32 %v3911, %v3912
    %v3914 = vsel %vm670, %v3661, 0.0
    %v3915 = vadd.f32 %v3913, %v3914
    %v3916 = vsel %vm670, %v3662, 0.0
    %v3917 = vadd.f32 %v3915, %v3916
    %v3918 = vrot.slane %v3917, 4
    %v3919 = vadd.f32 %v3917, %v3918
    %v3920 = vrot.slane %v3919, 2
    %v3921 = vadd.f32 %v3919, %v3920
    %v3922 = vrot.slane %v3921, 1
    %v3923 = vadd.f32 %v3921, %v3922
    %v3924 = vsel %vm670, %v3663, 0.0
    %v3925 = vsel %vm670, %v3664, 0.0
    %v3926 = vadd.f32 %v3924, %v3925
    %v3927 = vsel %vm670, %v3665, 0.0
    %v3928 = vadd.f32 %v3926, %v3927
    %v3929 = vsel %vm670, %v3666, 0.0
    %v3930 = vadd.f32 %v3928, %v3929
    %v3931 = vsel %vm670, %v3667, 0.0
    %v3932 = vadd.f32 %v3930, %v3931
    %v3933 = vsel %vm670, %v3668, 0.0
    %v3934 = vadd.f32 %v3932, %v3933
    %v3935 = vsel %vm670, %v3669, 0.0
    %v3936 = vadd.f32 %v3934, %v3935
    %v3937 = vsel %vm670, %v3670, 0.0
    %v3938 = vadd.f32 %v3936, %v3937
    %v3939 = vsel %vm670, %v3671, 0.0
    %v3940 = vadd.f32 %v3938, %v3939
    %v3941 = vsel %vm670, %v3672, 0.0
    %v3942 = vadd.f32 %v3940, %v3941
    %v3943 = vsel %vm670, %v3673, 0.0
    %v3944 = vadd.f32 %v3942, %v3943
    %v3945 = vsel %vm670, %v3674, 0.0
    %v3946 = vadd.f32 %v3944, %v3945
    %v3947 = vsel %vm670, %v3675, 0.0
    %v3948 = vadd.f32 %v3946, %v3947
    %v3949 = vsel %vm670, %v3676, 0.0
    %v3950 = vadd.f32 %v3948, %v3949
    %v3951 = vsel %vm670, %v3677, 0.0
    %v3952 = vadd.f32 %v3950, %v3951
    %v3953 = vsel %vm670, %v3678, 0.0
    %v3954 = vadd.f32 %v3952, %v3953
    %v3955 = vsel %vm670, %v3679, 0.0
    %v3956 = vadd.f32 %v3954, %v3955
    %v3957 = vsel %vm670, %v3680, 0.0
    %v3958 = vadd.f32 %v3956, %v3957
    %v3959 = vsel %vm670, %v3681, 0.0
    %v3960 = vadd.f32 %v3958, %v3959
    %v3961 = vsel %vm670, %v3682, 0.0
    %v3962 = vadd.f32 %v3960, %v3961
    %v3963 = vsel %vm670, %v3683, 0.0
    %v3964 = vadd.f32 %v3962, %v3963
    %v3965 = vsel %vm670, %v3684, 0.0
    %v3966 = vadd.f32 %v3964, %v3965
    %v3967 = vsel %vm670, %v3685, 0.0
    %v3968 = vadd.f32 %v3966, %v3967
    %v3969 = vsel %vm670, %v3686, 0.0
    %v3970 = vadd.f32 %v3968, %v3969
    %v3971 = vsel %vm670, %v3687, 0.0
    %v3972 = vadd.f32 %v3970, %v3971
    %v3973 = vsel %vm670, %v3688, 0.0
    %v3974 = vadd.f32 %v3972, %v3973
    %v3975 = vsel %vm670, %v3689, 0.0
    %v3976 = vadd.f32 %v3974, %v3975
    %v3977 = vsel %vm670, %v3690, 0.0
    %v3978 = vadd.f32 %v3976, %v3977
    %v3979 = vsel %vm670, %v3691, 0.0
    %v3980 = vadd.f32 %v3978, %v3979
    %v3981 = vsel %vm670, %v3692, 0.0
    %v3982 = vadd.f32 %v3980, %v3981
    %v3983 = vsel %vm670, %v3693, 0.0
    %v3984 = vadd.f32 %v3982, %v3983
    %v3985 = vsel %vm670, %v3694, 0.0
    %v3986 = vadd.f32 %v3984, %v3985
    %v3987 = vsel %vm670, %v3695, 0.0
    %v3988 = vadd.f32 %v3986, %v3987
    %v3989 = vsel %vm670, %v3696, 0.0
    %v3990 = vadd.f32 %v3988, %v3989
    %v3991 = vsel %vm670, %v3697, 0.0
    %v3992 = vadd.f32 %v3990, %v3991
    %v3993 = vsel %vm670, %v3698, 0.0
    %v3994 = vadd.f32 %v3992, %v3993
    %v3995 = vsel %vm670, %v3699, 0.0
    %v3996 = vadd.f32 %v3994, %v3995
    %v3997 = vsel %vm670, %v3700, 0.0
    %v3998 = vadd.f32 %v3996, %v3997
    %v3999 = vsel %vm670, %v3701, 0.0
    %v4000 = vadd.f32 %v3998, %v3999
    %v4001 = vsel %vm670, %v3702, 0.0
    %v4002 = vadd.f32 %v4000, %v4001
    %v4003 = vsel %vm670, %v3703, 0.0
    %v4004 = vadd.f32 %v4002, %v4003
    %v4005 = vsel %vm670, %v3704, 0.0
    %v4006 = vadd.f32 %v4004, %v4005
    %v4007 = vsel %vm670, %v3705, 0.0
    %v4008 = vadd.f32 %v4006, %v4007
    %v4009 = vsel %vm670, %v3706, 0.0
    %v4010 = vadd.f32 %v4008, %v4009
    %v4011 = vsel %vm670, %v3707, 0.0
    %v4012 = vadd.f32 %v4010, %v4011
    %v4013 = vsel %vm670, %v3708, 0.0
    %v4014 = vadd.f32 %v4012, %v4013
    %v4015 = vsel %vm670, %v3709, 0.0
    %v4016 = vadd.f32 %v4014, %v4015
    %v4017 = vsel %vm670, %v3710, 0.0
    %v4018 = vadd.f32 %v4016, %v4017
    %v4019 = vsel %vm670, %v3711, 0.0
    %v4020 = vadd.f32 %v4018, %v4019
    %v4021 = vsel %vm670, %v3712, 0.0
    %v4022 = vadd.f32 %v4020, %v4021
    %v4023 = vsel %vm670, %v3713, 0.0
    %v4024 = vadd.f32 %v4022, %v4023
    %v4025 = vsel %vm670, %v3714, 0.0
    %v4026 = vadd.f32 %v4024, %v4025
    %v4027 = vsel %vm670, %v3715, 0.0
    %v4028 = vadd.f32 %v4026, %v4027
    %v4029 = vsel %vm670, %v3716, 0.0
    %v4030 = vadd.f32 %v4028, %v4029
    %v4031 = vsel %vm670, %v3717, 0.0
    %v4032 = vadd.f32 %v4030, %v4031
    %v4033 = vsel %vm670, %v3718, 0.0
    %v4034 = vadd.f32 %v4032, %v4033
    %v4035 = vsel %vm670, %v3719, 0.0
    %v4036 = vadd.f32 %v4034, %v4035
    %v4037 = vsel %vm670, %v3720, 0.0
    %v4038 = vadd.f32 %v4036, %v4037
    %v4039 = vsel %vm670, %v3721, 0.0
    %v4040 = vadd.f32 %v4038, %v4039
    %v4041 = vsel %vm670, %v3722, 0.0
    %v4042 = vadd.f32 %v4040, %v4041
    %v4043 = vsel %vm670, %v3723, 0.0
    %v4044 = vadd.f32 %v4042, %v4043
    %v4045 = vsel %vm670, %v3724, 0.0
    %v4046 = vadd.f32 %v4044, %v4045
    %v4047 = vsel %vm670, %v3725, 0.0
    %v4048 = vadd.f32 %v4046, %v4047
    %v4049 = vsel %vm670, %v3726, 0.0
    %v4050 = vadd.f32 %v4048, %v4049
    %v4051 = vrot.slane %v4050, 4
    %v4052 = vadd.f32 %v4050, %v4051
    %v4053 = vrot.slane %v4052, 2
    %v4054 = vadd.f32 %v4052, %v4053
    %v4055 = vrot.slane %v4054, 1
    %v4056 = vadd.f32 %v4054, %v4055
    %v4057 = vsel %vm670, %v3727, 0.0
    %v4058 = vsel %vm670, %v3728, 0.0
    %v4059 = vadd.f32 %v4057, %v4058
    %v4060 = vsel %vm670, %v3729, 0.0
    %v4061 = vadd.f32 %v4059, %v4060
    %v4062 = vsel %vm670, %v3730, 0.0
    %v4063 = vadd.f32 %v4061, %v4062
    %v4064 = vsel %vm670, %v3731, 0.0
    %v4065 = vadd.f32 %v4063, %v4064
    %v4066 = vsel %vm670, %v3732, 0.0
    %v4067 = vadd.f32 %v4065, %v4066
    %v4068 = vsel %vm670, %v3733, 0.0
    %v4069 = vadd.f32 %v4067, %v4068
    %v4070 = vsel %vm670, %v3734, 0.0
    %v4071 = vadd.f32 %v4069, %v4070
    %v4072 = vsel %vm670, %v3735, 0.0
    %v4073 = vadd.f32 %v4071, %v4072
    %v4074 = vsel %vm670, %v3736, 0.0
    %v4075 = vadd.f32 %v4073, %v4074
    %v4076 = vsel %vm670, %v3737, 0.0
    %v4077 = vadd.f32 %v4075, %v4076
    %v4078 = vsel %vm670, %v3738, 0.0
    %v4079 = vadd.f32 %v4077, %v4078
    %v4080 = vsel %vm670, %v3739, 0.0
    %v4081 = vadd.f32 %v4079, %v4080
    %v4082 = vsel %vm670, %v3740, 0.0
    %v4083 = vadd.f32 %v4081, %v4082
    %v4084 = vsel %vm670, %v3741, 0.0
    %v4085 = vadd.f32 %v4083, %v4084
    %v4086 = vsel %vm670, %v3742, 0.0
    %v4087 = vadd.f32 %v4085, %v4086
    %v4088 = vsel %vm670, %v3743, 0.0
    %v4089 = vadd.f32 %v4087, %v4088
    %v4090 = vsel %vm670, %v3744, 0.0
    %v4091 = vadd.f32 %v4089, %v4090
    %v4092 = vsel %vm670, %v3745, 0.0
    %v4093 = vadd.f32 %v4091, %v4092
    %v4094 = vsel %vm670, %v3746, 0.0
    %v4095 = vadd.f32 %v4093, %v4094
    %v4096 = vsel %vm670, %v3747, 0.0
    %v4097 = vadd.f32 %v4095, %v4096
    %v4098 = vsel %vm670, %v3748, 0.0
    %v4099 = vadd.f32 %v4097, %v4098
    %v4100 = vsel %vm670, %v3749, 0.0
    %v4101 = vadd.f32 %v4099, %v4100
    %v4102 = vsel %vm670, %v3750, 0.0
    %v4103 = vadd.f32 %v4101, %v4102
    %v4104 = vsel %vm670, %v3751, 0.0
    %v4105 = vadd.f32 %v4103, %v4104
    %v4106 = vsel %vm670, %v3752, 0.0
    %v4107 = vadd.f32 %v4105, %v4106
    %v4108 = vsel %vm670, %v3753, 0.0
    %v4109 = vadd.f32 %v4107, %v4108
    %v4110 = vsel %vm670, %v3754, 0.0
    %v4111 = vadd.f32 %v4109, %v4110
    %v4112 = vsel %vm670, %v3755, 0.0
    %v4113 = vadd.f32 %v4111, %v4112
    %v4114 = vsel %vm670, %v3756, 0.0
    %v4115 = vadd.f32 %v4113, %v4114
    %v4116 = vsel %vm670, %v3757, 0.0
    %v4117 = vadd.f32 %v4115, %v4116
    %v4118 = vsel %vm670, %v3758, 0.0
    %v4119 = vadd.f32 %v4117, %v4118
    %v4120 = vsel %vm670, %v3759, 0.0
    %v4121 = vadd.f32 %v4119, %v4120
    %v4122 = vsel %vm670, %v3760, 0.0
    %v4123 = vadd.f32 %v4121, %v4122
    %v4124 = vsel %vm670, %v3761, 0.0
    %v4125 = vadd.f32 %v4123, %v4124
    %v4126 = vsel %vm670, %v3762, 0.0
    %v4127 = vadd.f32 %v4125, %v4126
    %v4128 = vsel %vm670, %v3763, 0.0
    %v4129 = vadd.f32 %v4127, %v4128
    %v4130 = vsel %vm670, %v3764, 0.0
    %v4131 = vadd.f32 %v4129, %v4130
    %v4132 = vsel %vm670, %v3765, 0.0
    %v4133 = vadd.f32 %v4131, %v4132
    %v4134 = vsel %vm670, %v3766, 0.0
    %v4135 = vadd.f32 %v4133, %v4134
    %v4136 = vsel %vm670, %v3767, 0.0
    %v4137 = vadd.f32 %v4135, %v4136
    %v4138 = vsel %vm670, %v3768, 0.0
    %v4139 = vadd.f32 %v4137, %v4138
    %v4140 = vsel %vm670, %v3769, 0.0
    %v4141 = vadd.f32 %v4139, %v4140
    %v4142 = vsel %vm670, %v3770, 0.0
    %v4143 = vadd.f32 %v4141, %v4142
    %v4144 = vsel %vm670, %v3771, 0.0
    %v4145 = vadd.f32 %v4143, %v4144
    %v4146 = vsel %vm670, %v3772, 0.0
    %v4147 = vadd.f32 %v4145, %v4146
    %v4148 = vsel %vm670, %v3773, 0.0
    %v4149 = vadd.f32 %v4147, %v4148
    %v4150 = vsel %vm670, %v3774, 0.0
    %v4151 = vadd.f32 %v4149, %v4150
    %v4152 = vsel %vm670, %v3775, 0.0
    %v4153 = vadd.f32 %v4151, %v4152
    %v4154 = vsel %vm670, %v3776, 0.0
    %v4155 = vadd.f32 %v4153, %v4154
    %v4156 = vsel %vm670, %v3777, 0.0
    %v4157 = vadd.f32 %v4155, %v4156
    %v4158 = vsel %vm670, %v3778, 0.0
    %v4159 = vadd.f32 %v4157, %v4158
    %v4160 = vsel %vm670, %v3779, 0.0
    %v4161 = vadd.f32 %v4159, %v4160
    %v4162 = vsel %vm670, %v3780, 0.0
    %v4163 = vadd.f32 %v4161, %v4162
    %v4164 = vsel %vm670, %v3781, 0.0
    %v4165 = vadd.f32 %v4163, %v4164
    %v4166 = vsel %vm670, %v3782, 0.0
    %v4167 = vadd.f32 %v4165, %v4166
    %v4168 = vsel %vm670, %v3783, 0.0
    %v4169 = vadd.f32 %v4167, %v4168
    %v4170 = vsel %vm670, %v3784, 0.0
    %v4171 = vadd.f32 %v4169, %v4170
    %v4172 = vsel %vm670, %v3785, 0.0
    %v4173 = vadd.f32 %v4171, %v4172
    %v4174 = vsel %vm670, %v3786, 0.0
    %v4175 = vadd.f32 %v4173, %v4174
    %v4176 = vsel %vm670, %v3787, 0.0
    %v4177 = vadd.f32 %v4175, %v4176
    %v4178 = vsel %vm670, %v3788, 0.0
    %v4179 = vadd.f32 %v4177, %v4178
    %v4180 = vsel %vm670, %v3789, 0.0
    %v4181 = vadd.f32 %v4179, %v4180
    %v4182 = vsel %vm670, %v3790, 0.0
    %v4183 = vadd.f32 %v4181, %v4182
    %v4184 = vrot.slane %v4183, 4
    %v4185 = vadd.f32 %v4183, %v4184
    %v4186 = vrot.slane %v4185, 2
    %v4187 = vadd.f32 %v4185, %v4186
    %v4188 = vrot.slane %v4187, 1
    %v4189 = vadd.f32 %v4187, %v4188
    %v4190 = vmul.f32 %v1265, %v1265
    %v4191 = vmul.f32 %v1266, %v1266
    %v4192 = vmul.f32 %v1267, %v1267
    %v4193 = vmul.f32 %v1268, %v1268
    %v4194 = vmul.f32 %v1269, %v1269
    %v4195 = vmul.f32 %v1270, %v1270
    %v4196 = vmul.f32 %v1271, %v1271
    %v4197 = vmul.f32 %v1272, %v1272
    %v4198 = vmul.f32 %v1273, %v1273
    %v4199 = vmul.f32 %v1274, %v1274
    %v4200 = vmul.f32 %v1275, %v1275
    %v4201 = vmul.f32 %v1276, %v1276
    %v4202 = vmul.f32 %v1277, %v1277
    %v4203 = vmul.f32 %v1278, %v1278
    %v4204 = vmul.f32 %v1279, %v1279
    %v4205 = vmul.f32 %v1280, %v1280
    %v4206 = vmul.f32 %v1281, %v1281
    %v4207 = vmul.f32 %v1282, %v1282
    %v4208 = vmul.f32 %v1283, %v1283
    %v4209 = vmul.f32 %v1284, %v1284
    %v4210 = vmul.f32 %v1285, %v1285
    %v4211 = vmul.f32 %v1286, %v1286
    %v4212 = vmul.f32 %v1287, %v1287
    %v4213 = vmul.f32 %v1288, %v1288
    %v4214 = vmul.f32 %v1289, %v1289
    %v4215 = vmul.f32 %v1290, %v1290
    %v4216 = vmul.f32 %v1291, %v1291
    %v4217 = vmul.f32 %v1292, %v1292
    %v4218 = vmul.f32 %v1293, %v1293
    %v4219 = vmul.f32 %v1294, %v1294
    %v4220 = vmul.f32 %v1295, %v1295
    %v4221 = vmul.f32 %v1296, %v1296
    %v4222 = vmul.f32 %v1297, %v1297
    %v4223 = vmul.f32 %v1298, %v1298
    %v4224 = vmul.f32 %v1299, %v1299
    %v4225 = vmul.f32 %v1300, %v1300
    %v4226 = vmul.f32 %v1301, %v1301
    %v4227 = vmul.f32 %v1302, %v1302
    %v4228 = vmul.f32 %v1303, %v1303
    %v4229 = vmul.f32 %v1304, %v1304
    %v4230 = vmul.f32 %v1305, %v1305
    %v4231 = vmul.f32 %v1306, %v1306
    %v4232 = vmul.f32 %v1307, %v1307
    %v4233 = vmul.f32 %v1308, %v1308
    %v4234 = vmul.f32 %v1309, %v1309
    %v4235 = vmul.f32 %v1310, %v1310
    %v4236 = vmul.f32 %v1311, %v1311
    %v4237 = vmul.f32 %v1312, %v1312
    %v4238 = vmul.f32 %v1313, %v1313
    %v4239 = vmul.f32 %v1314, %v1314
    %v4240 = vmul.f32 %v1315, %v1315
    %v4241 = vmul.f32 %v1316, %v1316
    %v4242 = vmul.f32 %v1317, %v1317
    %v4243 = vmul.f32 %v1318, %v1318
    %v4244 = vmul.f32 %v1319, %v1319
    %v4245 = vmul.f32 %v1320, %v1320
    %v4246 = vmul.f32 %v1321, %v1321
    %v4247 = vmul.f32 %v1322, %v1322
    %v4248 = vmul.f32 %v1323, %v1323
    %v4249 = vmul.f32 %v1324, %v1324
    %v4250 = vmul.f32 %v1325, %v1325
    %v4251 = vmul.f32 %v1326, %v1326
    %v4252 = vmul.f32 %v1327, %v1327
    %v4253 = vmul.f32 %v1328, %v1328
    %v4254 = vmul.f32 %v1329, %v1329
    %v4255 = vmul.f32 %v1330, %v1330
    %v4256 = vmul.f32 %v1331, %v1331
    %v4257 = vmul.f32 %v1332, %v1332
    %v4258 = vmul.f32 %v1333, %v1333
    %v4259 = vmul.f32 %v1334, %v1334
    %v4260 = vmul.f32 %v1335, %v1335
    %v4261 = vmul.f32 %v1336, %v1336
    %v4262 = vmul.f32 %v1337, %v1337
    %v4263 = vmul.f32 %v1338, %v1338
    %v4264 = vmul.f32 %v1339, %v1339
    %v4265 = vmul.f32 %v1340, %v1340
    %v4266 = vmul.f32 %v1341, %v1341
    %v4267 = vmul.f32 %v1342, %v1342
    %v4268 = vmul.f32 %v1343, %v1343
    %v4269 = vmul.f32 %v1344, %v1344
    %v4270 = vmul.f32 %v1345, %v1345
    %v4271 = vmul.f32 %v1346, %v1346
    %v4272 = vmul.f32 %v1347, %v1347
    %v4273 = vmul.f32 %v1348, %v1348
    %v4274 = vmul.f32 %v1349, %v1349
    %v4275 = vmul.f32 %v1350, %v1350
    %v4276 = vmul.f32 %v1351, %v1351
    %v4277 = vmul.f32 %v1352, %v1352
    %v4278 = vmul.f32 %v1353, %v1353
    %v4279 = vmul.f32 %v1354, %v1354
    %v4280 = vmul.f32 %v1355, %v1355
    %v4281 = vmul.f32 %v1356, %v1356
    %v4282 = vmul.f32 %v1357, %v1357
    %v4283 = vmul.f32 %v1358, %v1358
    %v4284 = vmul.f32 %v1359, %v1359
    %v4285 = vmul.f32 %v1360, %v1360
    %v4286 = vmul.f32 %v1361, %v1361
    %v4287 = vmul.f32 %v1362, %v1362
    %v4288 = vmul.f32 %v1363, %v1363
    %v4289 = vmul.f32 %v1364, %v1364
    %v4290 = vmul.f32 %v1365, %v1365
    %v4291 = vmul.f32 %v1366, %v1366
    %v4292 = vmul.f32 %v1367, %v1367
    %v4293 = vmul.f32 %v1368, %v1368
    %v4294 = vmul.f32 %v1369, %v1369
    %v4295 = vmul.f32 %v1370, %v1370
    %v4296 = vmul.f32 %v1371, %v1371
    %v4297 = vmul.f32 %v1372, %v1372
    %v4298 = vmul.f32 %v1373, %v1373
    %v4299 = vmul.f32 %v1374, %v1374
    %v4300 = vmul.f32 %v1375, %v1375
    %v4301 = vmul.f32 %v1376, %v1376
    %v4302 = vmul.f32 %v1377, %v1377
    %v4303 = vmul.f32 %v1378, %v1378
    %v4304 = vmul.f32 %v1379, %v1379
    %v4305 = vmul.f32 %v1380, %v1380
    %v4306 = vmul.f32 %v1381, %v1381
    %v4307 = vmul.f32 %v1382, %v1382
    %v4308 = vmul.f32 %v1383, %v1383
    %v4309 = vmul.f32 %v1384, %v1384
    %v4310 = vmul.f32 %v1385, %v1385
    %v4311 = vmul.f32 %v1386, %v1386
    %v4312 = vmul.f32 %v1387, %v1387
    %v4313 = vmul.f32 %v1388, %v1388
    %v4314 = vmul.f32 %v1389, %v1389
    %v4315 = vmul.f32 %v1390, %v1390
    %v4316 = vmul.f32 %v1391, %v1391
    %v4317 = vmul.f32 %v1392, %v1392
    %v4318 = vmul.f32 %v1393, %v1393
    %v4319 = vmul.f32 %v1394, %v1394
    %v4320 = vmul.f32 %v1395, %v1395
    %v4321 = vmul.f32 %v1396, %v1396
    %v4322 = vmul.f32 %v1397, %v1397
    %v4323 = vmul.f32 %v1398, %v1398
    %v4324 = vmul.f32 %v1399, %v1399
    %v4325 = vmul.f32 %v1400, %v1400
    %v4326 = vmul.f32 %v1401, %v1401
    %v4327 = vmul.f32 %v1402, %v1402
    %v4328 = vmul.f32 %v1403, %v1403
    %v4329 = vmul.f32 %v1404, %v1404
    %v4330 = vmul.f32 %v1405, %v1405
    %v4331 = vmul.f32 %v1406, %v1406
    %v4332 = vmul.f32 %v1407, %v1407
    %v4333 = vmul.f32 %v1408, %v1408
    %v4334 = vmul.f32 %v1409, %v1409
    %v4335 = vmul.f32 %v1410, %v1410
    %v4336 = vmul.f32 %v1411, %v1411
    %v4337 = vmul.f32 %v1412, %v1412
    %v4338 = vmul.f32 %v1413, %v1413
    %v4339 = vmul.f32 %v1414, %v1414
    %v4340 = vmul.f32 %v1415, %v1415
    %v4341 = vmul.f32 %v1416, %v1416
    %v4342 = vmul.f32 %v1417, %v1417
    %v4343 = vmul.f32 %v1418, %v1418
    %v4344 = vmul.f32 %v1419, %v1419
    %v4345 = vmul.f32 %v1420, %v1420
    %v4346 = vmul.f32 %v1421, %v1421
    %v4347 = vmul.f32 %v1422, %v1422
    %v4348 = vmul.f32 %v1423, %v1423
    %v4349 = vmul.f32 %v1424, %v1424
    %v4350 = vmul.f32 %v1425, %v1425
    %v4351 = vmul.f32 %v1426, %v1426
    %v4352 = vmul.f32 %v1427, %v1427
    %v4353 = vmul.f32 %v1428, %v1428
    %v4354 = vmul.f32 %v1429, %v1429
    %v4355 = vmul.f32 %v1430, %v1430
    %v4356 = vmul.f32 %v1431, %v1431
    %v4357 = vmul.f32 %v1432, %v1432
    %v4358 = vmul.f32 %v1433, %v1433
    %v4359 = vmul.f32 %v1434, %v1434
    %v4360 = vmul.f32 %v1435, %v1435
    %v4361 = vmul.f32 %v1436, %v1436
    %v4362 = vmul.f32 %v1437, %v1437
    %v4363 = vmul.f32 %v1438, %v1438
    %v4364 = vmul.f32 %v1439, %v1439
    %v4365 = vmul.f32 %v1440, %v1440
    %v4366 = vmul.f32 %v1441, %v1441
    %v4367 = vmul.f32 %v1442, %v1442
    %v4368 = vmul.f32 %v1443, %v1443
    %v4369 = vmul.f32 %v1444, %v1444
    %v4370 = vmul.f32 %v1445, %v1445
    %v4371 = vmul.f32 %v1446, %v1446
    %v4372 = vmul.f32 %v1447, %v1447
    %v4373 = vmul.f32 %v1448, %v1448
    %v4374 = vmul.f32 %v1449, %v1449
    %v4375 = vmul.f32 %v1450, %v1450
    %v4376 = vmul.f32 %v1451, %v1451
    %v4377 = vmul.f32 %v1452, %v1452
    %v4378 = vmul.f32 %v1453, %v1453
    %v4379 = vmul.f32 %v1454, %v1454
    %v4380 = vmul.f32 %v1455, %v1455
    %v4381 = vmul.f32 %v1456, %v1456
    %v4382 = vsel %vm670, %v4190, 0.0
    %v4383 = vsel %vm670, %v4191, 0.0
    %v4384 = vadd.f32 %v4382, %v4383
    %v4385 = vsel %vm670, %v4192, 0.0
    %v4386 = vadd.f32 %v4384, %v4385
    %v4387 = vsel %vm670, %v4193, 0.0
    %v4388 = vadd.f32 %v4386, %v4387
    %v4389 = vsel %vm670, %v4194, 0.0
    %v4390 = vadd.f32 %v4388, %v4389
    %v4391 = vsel %vm670, %v4195, 0.0
    %v4392 = vadd.f32 %v4390, %v4391
    %v4393 = vsel %vm670, %v4196, 0.0
    %v4394 = vadd.f32 %v4392, %v4393
    %v4395 = vsel %vm670, %v4197, 0.0
    %v4396 = vadd.f32 %v4394, %v4395
    %v4397 = vsel %vm670, %v4198, 0.0
    %v4398 = vadd.f32 %v4396, %v4397
    %v4399 = vsel %vm670, %v4199, 0.0
    %v4400 = vadd.f32 %v4398, %v4399
    %v4401 = vsel %vm670, %v4200, 0.0
    %v4402 = vadd.f32 %v4400, %v4401
    %v4403 = vsel %vm670, %v4201, 0.0
    %v4404 = vadd.f32 %v4402, %v4403
    %v4405 = vsel %vm670, %v4202, 0.0
    %v4406 = vadd.f32 %v4404, %v4405
    %v4407 = vsel %vm670, %v4203, 0.0
    %v4408 = vadd.f32 %v4406, %v4407
    %v4409 = vsel %vm670, %v4204, 0.0
    %v4410 = vadd.f32 %v4408, %v4409
    %v4411 = vsel %vm670, %v4205, 0.0
    %v4412 = vadd.f32 %v4410, %v4411
    %v4413 = vsel %vm670, %v4206, 0.0
    %v4414 = vadd.f32 %v4412, %v4413
    %v4415 = vsel %vm670, %v4207, 0.0
    %v4416 = vadd.f32 %v4414, %v4415
    %v4417 = vsel %vm670, %v4208, 0.0
    %v4418 = vadd.f32 %v4416, %v4417
    %v4419 = vsel %vm670, %v4209, 0.0
    %v4420 = vadd.f32 %v4418, %v4419
    %v4421 = vsel %vm670, %v4210, 0.0
    %v4422 = vadd.f32 %v4420, %v4421
    %v4423 = vsel %vm670, %v4211, 0.0
    %v4424 = vadd.f32 %v4422, %v4423
    %v4425 = vsel %vm670, %v4212, 0.0
    %v4426 = vadd.f32 %v4424, %v4425
    %v4427 = vsel %vm670, %v4213, 0.0
    %v4428 = vadd.f32 %v4426, %v4427
    %v4429 = vsel %vm670, %v4214, 0.0
    %v4430 = vadd.f32 %v4428, %v4429
    %v4431 = vsel %vm670, %v4215, 0.0
    %v4432 = vadd.f32 %v4430, %v4431
    %v4433 = vsel %vm670, %v4216, 0.0
    %v4434 = vadd.f32 %v4432, %v4433
    %v4435 = vsel %vm670, %v4217, 0.0
    %v4436 = vadd.f32 %v4434, %v4435
    %v4437 = vsel %vm670, %v4218, 0.0
    %v4438 = vadd.f32 %v4436, %v4437
    %v4439 = vsel %vm670, %v4219, 0.0
    %v4440 = vadd.f32 %v4438, %v4439
    %v4441 = vsel %vm670, %v4220, 0.0
    %v4442 = vadd.f32 %v4440, %v4441
    %v4443 = vsel %vm670, %v4221, 0.0
    %v4444 = vadd.f32 %v4442, %v4443
    %v4445 = vsel %vm670, %v4222, 0.0
    %v4446 = vadd.f32 %v4444, %v4445
    %v4447 = vsel %vm670, %v4223, 0.0
    %v4448 = vadd.f32 %v4446, %v4447
    %v4449 = vsel %vm670, %v4224, 0.0
    %v4450 = vadd.f32 %v4448, %v4449
    %v4451 = vsel %vm670, %v4225, 0.0
    %v4452 = vadd.f32 %v4450, %v4451
    %v4453 = vsel %vm670, %v4226, 0.0
    %v4454 = vadd.f32 %v4452, %v4453
    %v4455 = vsel %vm670, %v4227, 0.0
    %v4456 = vadd.f32 %v4454, %v4455
    %v4457 = vsel %vm670, %v4228, 0.0
    %v4458 = vadd.f32 %v4456, %v4457
    %v4459 = vsel %vm670, %v4229, 0.0
    %v4460 = vadd.f32 %v4458, %v4459
    %v4461 = vsel %vm670, %v4230, 0.0
    %v4462 = vadd.f32 %v4460, %v4461
    %v4463 = vsel %vm670, %v4231, 0.0
    %v4464 = vadd.f32 %v4462, %v4463
    %v4465 = vsel %vm670, %v4232, 0.0
    %v4466 = vadd.f32 %v4464, %v4465
    %v4467 = vsel %vm670, %v4233, 0.0
    %v4468 = vadd.f32 %v4466, %v4467
    %v4469 = vsel %vm670, %v4234, 0.0
    %v4470 = vadd.f32 %v4468, %v4469
    %v4471 = vsel %vm670, %v4235, 0.0
    %v4472 = vadd.f32 %v4470, %v4471
    %v4473 = vsel %vm670, %v4236, 0.0
    %v4474 = vadd.f32 %v4472, %v4473
    %v4475 = vsel %vm670, %v4237, 0.0
    %v4476 = vadd.f32 %v4474, %v4475
    %v4477 = vsel %vm670, %v4238, 0.0
    %v4478 = vadd.f32 %v4476, %v4477
    %v4479 = vsel %vm670, %v4239, 0.0
    %v4480 = vadd.f32 %v4478, %v4479
    %v4481 = vsel %vm670, %v4240, 0.0
    %v4482 = vadd.f32 %v4480, %v4481
    %v4483 = vsel %vm670, %v4241, 0.0
    %v4484 = vadd.f32 %v4482, %v4483
    %v4485 = vsel %vm670, %v4242, 0.0
    %v4486 = vadd.f32 %v4484, %v4485
    %v4487 = vsel %vm670, %v4243, 0.0
    %v4488 = vadd.f32 %v4486, %v4487
    %v4489 = vsel %vm670, %v4244, 0.0
    %v4490 = vadd.f32 %v4488, %v4489
    %v4491 = vsel %vm670, %v4245, 0.0
    %v4492 = vadd.f32 %v4490, %v4491
    %v4493 = vsel %vm670, %v4246, 0.0
    %v4494 = vadd.f32 %v4492, %v4493
    %v4495 = vsel %vm670, %v4247, 0.0
    %v4496 = vadd.f32 %v4494, %v4495
    %v4497 = vsel %vm670, %v4248, 0.0
    %v4498 = vadd.f32 %v4496, %v4497
    %v4499 = vsel %vm670, %v4249, 0.0
    %v4500 = vadd.f32 %v4498, %v4499
    %v4501 = vsel %vm670, %v4250, 0.0
    %v4502 = vadd.f32 %v4500, %v4501
    %v4503 = vsel %vm670, %v4251, 0.0
    %v4504 = vadd.f32 %v4502, %v4503
    %v4505 = vsel %vm670, %v4252, 0.0
    %v4506 = vadd.f32 %v4504, %v4505
    %v4507 = vsel %vm670, %v4253, 0.0
    %v4508 = vadd.f32 %v4506, %v4507
    %v4509 = vrot.slane %v4508, 4
    %v4510 = vadd.f32 %v4508, %v4509
    %v4511 = vrot.slane %v4510, 2
    %v4512 = vadd.f32 %v4510, %v4511
    %v4513 = vrot.slane %v4512, 1
    %v4514 = vadd.f32 %v4512, %v4513
    %v4515 = vsel %vm670, %v4254, 0.0
    %v4516 = vsel %vm670, %v4255, 0.0
    %v4517 = vadd.f32 %v4515, %v4516
    %v4518 = vsel %vm670, %v4256, 0.0
    %v4519 = vadd.f32 %v4517, %v4518
    %v4520 = vsel %vm670, %v4257, 0.0
    %v4521 = vadd.f32 %v4519, %v4520
    %v4522 = vsel %vm670, %v4258, 0.0
    %v4523 = vadd.f32 %v4521, %v4522
    %v4524 = vsel %vm670, %v4259, 0.0
    %v4525 = vadd.f32 %v4523, %v4524
    %v4526 = vsel %vm670, %v4260, 0.0
    %v4527 = vadd.f32 %v4525, %v4526
    %v4528 = vsel %vm670, %v4261, 0.0
    %v4529 = vadd.f32 %v4527, %v4528
    %v4530 = vsel %vm670, %v4262, 0.0
    %v4531 = vadd.f32 %v4529, %v4530
    %v4532 = vsel %vm670, %v4263, 0.0
    %v4533 = vadd.f32 %v4531, %v4532
    %v4534 = vsel %vm670, %v4264, 0.0
    %v4535 = vadd.f32 %v4533, %v4534
    %v4536 = vsel %vm670, %v4265, 0.0
    %v4537 = vadd.f32 %v4535, %v4536
    %v4538 = vsel %vm670, %v4266, 0.0
    %v4539 = vadd.f32 %v4537, %v4538
    %v4540 = vsel %vm670, %v4267, 0.0
    %v4541 = vadd.f32 %v4539, %v4540
    %v4542 = vsel %vm670, %v4268, 0.0
    %v4543 = vadd.f32 %v4541, %v4542
    %v4544 = vsel %vm670, %v4269, 0.0
    %v4545 = vadd.f32 %v4543, %v4544
    %v4546 = vsel %vm670, %v4270, 0.0
    %v4547 = vadd.f32 %v4545, %v4546
    %v4548 = vsel %vm670, %v4271, 0.0
    %v4549 = vadd.f32 %v4547, %v4548
    %v4550 = vsel %vm670, %v4272, 0.0
    %v4551 = vadd.f32 %v4549, %v4550
    %v4552 = vsel %vm670, %v4273, 0.0
    %v4553 = vadd.f32 %v4551, %v4552
    %v4554 = vsel %vm670, %v4274, 0.0
    %v4555 = vadd.f32 %v4553, %v4554
    %v4556 = vsel %vm670, %v4275, 0.0
    %v4557 = vadd.f32 %v4555, %v4556
    %v4558 = vsel %vm670, %v4276, 0.0
    %v4559 = vadd.f32 %v4557, %v4558
    %v4560 = vsel %vm670, %v4277, 0.0
    %v4561 = vadd.f32 %v4559, %v4560
    %v4562 = vsel %vm670, %v4278, 0.0
    %v4563 = vadd.f32 %v4561, %v4562
    %v4564 = vsel %vm670, %v4279, 0.0
    %v4565 = vadd.f32 %v4563, %v4564
    %v4566 = vsel %vm670, %v4280, 0.0
    %v4567 = vadd.f32 %v4565, %v4566
    %v4568 = vsel %vm670, %v4281, 0.0
    %v4569 = vadd.f32 %v4567, %v4568
    %v4570 = vsel %vm670, %v4282, 0.0
    %v4571 = vadd.f32 %v4569, %v4570
    %v4572 = vsel %vm670, %v4283, 0.0
    %v4573 = vadd.f32 %v4571, %v4572
    %v4574 = vsel %vm670, %v4284, 0.0
    %v4575 = vadd.f32 %v4573, %v4574
    %v4576 = vsel %vm670, %v4285, 0.0
    %v4577 = vadd.f32 %v4575, %v4576
    %v4578 = vsel %vm670, %v4286, 0.0
    %v4579 = vadd.f32 %v4577, %v4578
    %v4580 = vsel %vm670, %v4287, 0.0
    %v4581 = vadd.f32 %v4579, %v4580
    %v4582 = vsel %vm670, %v4288, 0.0
    %v4583 = vadd.f32 %v4581, %v4582
    %v4584 = vsel %vm670, %v4289, 0.0
    %v4585 = vadd.f32 %v4583, %v4584
    %v4586 = vsel %vm670, %v4290, 0.0
    %v4587 = vadd.f32 %v4585, %v4586
    %v4588 = vsel %vm670, %v4291, 0.0
    %v4589 = vadd.f32 %v4587, %v4588
    %v4590 = vsel %vm670, %v4292, 0.0
    %v4591 = vadd.f32 %v4589, %v4590
    %v4592 = vsel %vm670, %v4293, 0.0
    %v4593 = vadd.f32 %v4591, %v4592
    %v4594 = vsel %vm670, %v4294, 0.0
    %v4595 = vadd.f32 %v4593, %v4594
    %v4596 = vsel %vm670, %v4295, 0.0
    %v4597 = vadd.f32 %v4595, %v4596
    %v4598 = vsel %vm670, %v4296, 0.0
    %v4599 = vadd.f32 %v4597, %v4598
    %v4600 = vsel %vm670, %v4297, 0.0
    %v4601 = vadd.f32 %v4599, %v4600
    %v4602 = vsel %vm670, %v4298, 0.0
    %v4603 = vadd.f32 %v4601, %v4602
    %v4604 = vsel %vm670, %v4299, 0.0
    %v4605 = vadd.f32 %v4603, %v4604
    %v4606 = vsel %vm670, %v4300, 0.0
    %v4607 = vadd.f32 %v4605, %v4606
    %v4608 = vsel %vm670, %v4301, 0.0
    %v4609 = vadd.f32 %v4607, %v4608
    %v4610 = vsel %vm670, %v4302, 0.0
    %v4611 = vadd.f32 %v4609, %v4610
    %v4612 = vsel %vm670, %v4303, 0.0
    %v4613 = vadd.f32 %v4611, %v4612
    %v4614 = vsel %vm670, %v4304, 0.0
    %v4615 = vadd.f32 %v4613, %v4614
    %v4616 = vsel %vm670, %v4305, 0.0
    %v4617 = vadd.f32 %v4615, %v4616
    %v4618 = vsel %vm670, %v4306, 0.0
    %v4619 = vadd.f32 %v4617, %v4618
    %v4620 = vsel %vm670, %v4307, 0.0
    %v4621 = vadd.f32 %v4619, %v4620
    %v4622 = vsel %vm670, %v4308, 0.0
    %v4623 = vadd.f32 %v4621, %v4622
    %v4624 = vsel %vm670, %v4309, 0.0
    %v4625 = vadd.f32 %v4623, %v4624
    %v4626 = vsel %vm670, %v4310, 0.0
    %v4627 = vadd.f32 %v4625, %v4626
    %v4628 = vsel %vm670, %v4311, 0.0
    %v4629 = vadd.f32 %v4627, %v4628
    %v4630 = vsel %vm670, %v4312, 0.0
    %v4631 = vadd.f32 %v4629, %v4630
    %v4632 = vsel %vm670, %v4313, 0.0
    %v4633 = vadd.f32 %v4631, %v4632
    %v4634 = vsel %vm670, %v4314, 0.0
    %v4635 = vadd.f32 %v4633, %v4634
    %v4636 = vsel %vm670, %v4315, 0.0
    %v4637 = vadd.f32 %v4635, %v4636
    %v4638 = vsel %vm670, %v4316, 0.0
    %v4639 = vadd.f32 %v4637, %v4638
    %v4640 = vsel %vm670, %v4317, 0.0
    %v4641 = vadd.f32 %v4639, %v4640
    %v4642 = vrot.slane %v4641, 4
    %v4643 = vadd.f32 %v4641, %v4642
    %v4644 = vrot.slane %v4643, 2
    %v4645 = vadd.f32 %v4643, %v4644
    %v4646 = vrot.slane %v4645, 1
    %v4647 = vadd.f32 %v4645, %v4646
    %v4648 = vsel %vm670, %v4318, 0.0
    %v4649 = vsel %vm670, %v4319, 0.0
    %v4650 = vadd.f32 %v4648, %v4649
    %v4651 = vsel %vm670, %v4320, 0.0
    %v4652 = vadd.f32 %v4650, %v4651
    %v4653 = vsel %vm670, %v4321, 0.0
    %v4654 = vadd.f32 %v4652, %v4653
    %v4655 = vsel %vm670, %v4322, 0.0
    %v4656 = vadd.f32 %v4654, %v4655
    %v4657 = vsel %vm670, %v4323, 0.0
    %v4658 = vadd.f32 %v4656, %v4657
    %v4659 = vsel %vm670, %v4324, 0.0
    %v4660 = vadd.f32 %v4658, %v4659
    %v4661 = vsel %vm670, %v4325, 0.0
    %v4662 = vadd.f32 %v4660, %v4661
    %v4663 = vsel %vm670, %v4326, 0.0
    %v4664 = vadd.f32 %v4662, %v4663
    %v4665 = vsel %vm670, %v4327, 0.0
    %v4666 = vadd.f32 %v4664, %v4665
    %v4667 = vsel %vm670, %v4328, 0.0
    %v4668 = vadd.f32 %v4666, %v4667
    %v4669 = vsel %vm670, %v4329, 0.0
    %v4670 = vadd.f32 %v4668, %v4669
    %v4671 = vsel %vm670, %v4330, 0.0
    %v4672 = vadd.f32 %v4670, %v4671
    %v4673 = vsel %vm670, %v4331, 0.0
    %v4674 = vadd.f32 %v4672, %v4673
    %v4675 = vsel %vm670, %v4332, 0.0
    %v4676 = vadd.f32 %v4674, %v4675
    %v4677 = vsel %vm670, %v4333, 0.0
    %v4678 = vadd.f32 %v4676, %v4677
    %v4679 = vsel %vm670, %v4334, 0.0
    %v4680 = vadd.f32 %v4678, %v4679
    %v4681 = vsel %vm670, %v4335, 0.0
    %v4682 = vadd.f32 %v4680, %v4681
    %v4683 = vsel %vm670, %v4336, 0.0
    %v4684 = vadd.f32 %v4682, %v4683
    %v4685 = vsel %vm670, %v4337, 0.0
    %v4686 = vadd.f32 %v4684, %v4685
    %v4687 = vsel %vm670, %v4338, 0.0
    %v4688 = vadd.f32 %v4686, %v4687
    %v4689 = vsel %vm670, %v4339, 0.0
    %v4690 = vadd.f32 %v4688, %v4689
    %v4691 = vsel %vm670, %v4340, 0.0
    %v4692 = vadd.f32 %v4690, %v4691
    %v4693 = vsel %vm670, %v4341, 0.0
    %v4694 = vadd.f32 %v4692, %v4693
    %v4695 = vsel %vm670, %v4342, 0.0
    %v4696 = vadd.f32 %v4694, %v4695
    %v4697 = vsel %vm670, %v4343, 0.0
    %v4698 = vadd.f32 %v4696, %v4697
    %v4699 = vsel %vm670, %v4344, 0.0
    %v4700 = vadd.f32 %v4698, %v4699
    %v4701 = vsel %vm670, %v4345, 0.0
    %v4702 = vadd.f32 %v4700, %v4701
    %v4703 = vsel %vm670, %v4346, 0.0
    %v4704 = vadd.f32 %v4702, %v4703
    %v4705 = vsel %vm670, %v4347, 0.0
    %v4706 = vadd.f32 %v4704, %v4705
    %v4707 = vsel %vm670, %v4348, 0.0
    %v4708 = vadd.f32 %v4706, %v4707
    %v4709 = vsel %vm670, %v4349, 0.0
    %v4710 = vadd.f32 %v4708, %v4709
    %v4711 = vsel %vm670, %v4350, 0.0
    %v4712 = vadd.f32 %v4710, %v4711
    %v4713 = vsel %vm670, %v4351, 0.0
    %v4714 = vadd.f32 %v4712, %v4713
    %v4715 = vsel %vm670, %v4352, 0.0
    %v4716 = vadd.f32 %v4714, %v4715
    %v4717 = vsel %vm670, %v4353, 0.0
    %v4718 = vadd.f32 %v4716, %v4717
    %v4719 = vsel %vm670, %v4354, 0.0
    %v4720 = vadd.f32 %v4718, %v4719
    %v4721 = vsel %vm670, %v4355, 0.0
    %v4722 = vadd.f32 %v4720, %v4721
    %v4723 = vsel %vm670, %v4356, 0.0
    %v4724 = vadd.f32 %v4722, %v4723
    %v4725 = vsel %vm670, %v4357, 0.0
    %v4726 = vadd.f32 %v4724, %v4725
    %v4727 = vsel %vm670, %v4358, 0.0
    %v4728 = vadd.f32 %v4726, %v4727
    %v4729 = vsel %vm670, %v4359, 0.0
    %v4730 = vadd.f32 %v4728, %v4729
    %v4731 = vsel %vm670, %v4360, 0.0
    %v4732 = vadd.f32 %v4730, %v4731
    %v4733 = vsel %vm670, %v4361, 0.0
    %v4734 = vadd.f32 %v4732, %v4733
    %v4735 = vsel %vm670, %v4362, 0.0
    %v4736 = vadd.f32 %v4734, %v4735
    %v4737 = vsel %vm670, %v4363, 0.0
    %v4738 = vadd.f32 %v4736, %v4737
    %v4739 = vsel %vm670, %v4364, 0.0
    %v4740 = vadd.f32 %v4738, %v4739
    %v4741 = vsel %vm670, %v4365, 0.0
    %v4742 = vadd.f32 %v4740, %v4741
    %v4743 = vsel %vm670, %v4366, 0.0
    %v4744 = vadd.f32 %v4742, %v4743
    %v4745 = vsel %vm670, %v4367, 0.0
    %v4746 = vadd.f32 %v4744, %v4745
    %v4747 = vsel %vm670, %v4368, 0.0
    %v4748 = vadd.f32 %v4746, %v4747
    %v4749 = vsel %vm670, %v4369, 0.0
    %v4750 = vadd.f32 %v4748, %v4749
    %v4751 = vsel %vm670, %v4370, 0.0
    %v4752 = vadd.f32 %v4750, %v4751
    %v4753 = vsel %vm670, %v4371, 0.0
    %v4754 = vadd.f32 %v4752, %v4753
    %v4755 = vsel %vm670, %v4372, 0.0
    %v4756 = vadd.f32 %v4754, %v4755
    %v4757 = vsel %vm670, %v4373, 0.0
    %v4758 = vadd.f32 %v4756, %v4757
    %v4759 = vsel %vm670, %v4374, 0.0
    %v4760 = vadd.f32 %v4758, %v4759
    %v4761 = vsel %vm670, %v4375, 0.0
    %v4762 = vadd.f32 %v4760, %v4761
    %v4763 = vsel %vm670, %v4376, 0.0
    %v4764 = vadd.f32 %v4762, %v4763
    %v4765 = vsel %vm670, %v4377, 0.0
    %v4766 = vadd.f32 %v4764, %v4765
    %v4767 = vsel %vm670, %v4378, 0.0
    %v4768 = vadd.f32 %v4766, %v4767
    %v4769 = vsel %vm670, %v4379, 0.0
    %v4770 = vadd.f32 %v4768, %v4769
    %v4771 = vsel %vm670, %v4380, 0.0
    %v4772 = vadd.f32 %v4770, %v4771
    %v4773 = vsel %vm670, %v4381, 0.0
    %v4774 = vadd.f32 %v4772, %v4773
    %v4775 = vrot.slane %v4774, 4
    %v4776 = vadd.f32 %v4774, %v4775
    %v4777 = vrot.slane %v4776, 2
    %v4778 = vadd.f32 %v4776, %v4777
    %v4779 = vrot.slane %v4778, 1
    %v4780 = vadd.f32 %v4778, %v4779
    %v4781 = vsel %vm670, %v4514, 0.0
    %v4782 = vsel %vm670, %v4647, 0.0
    %v4783 = vadd.f32 %v4781, %v4782
    %v4784 = vsel %vm670, %v4780, 0.0
    %v4785 = vadd.f32 %v4783, %v4784
    %v4786 = vmax.f32 %v4785, 1e-12
    %v4787 = vadd.f32 %v2101, %v3145
    %v4788 = vadd.f32 %v4787, %v4189
    %v4789 = vsub.f32 %v4056, %v3278
    %v4790 = vsub.f32 %v2367, %v3923
    %v4791 = vsub.f32 %v3012, %v2234
    %v4792 = vsub.f32 %v2101, %v3145
    %v4793 = vsub.f32 %v4792, %v4189
    %v4794 = vadd.f32 %v3012, %v2234
    %v4795 = vadd.f32 %v3923, %v2367
    %v4796 = vsub.f32 %v3145, %v2101
    %v4797 = vsub.f32 %v4796, %v4189
    %v4798 = vadd.f32 %v4056, %v3278
    %v4799 = vsub.f32 %v4189, %v2101
    %v4800 = vsub.f32 %v4799, %v3145
    %v4801 = vmul.f32 %v4788, %v4788
    %v4802 = vmul.f32 %v4793, %v4793
    %v4803 = vadd.f32 %v4801, %v4802
    %v4804 = vmul.f32 %v4797, %v4797
    %v4805 = vadd.f32 %v4803, %v4804
    %v4806 = vmul.f32 %v4800, %v4800
    %v4807 = vadd.f32 %v4805, %v4806
    %v4808 = vmul.f32 %v4789, %v4789
    %v4809 = vmul.f32 %v4790, %v4790
    %v4810 = vadd.f32 %v4808, %v4809
    %v4811 = vmul.f32 %v4791, %v4791
    %v4812 = vadd.f32 %v4810, %v4811
    %v4813 = vmul.f32 %v4794, %v4794
    %v4814 = vadd.f32 %v4812, %v4813
    %v4815 = vmul.f32 %v4795, %v4795
    %v4816 = vadd.f32 %v4814, %v4815
    %v4817 = vmul.f32 %v4798, %v4798
    %v4818 = vadd.f32 %v4816, %v4817
    %v4819 = vmul.f32 %v4818, 2.0
    %v4820 = vadd.f32 %v4807, %v4819
    %v4821 = vrsqrt.pop %v4820
    %v4822 = vmul.f32 %v4820, %v4821
    %vm4823 = vcmp.eq.f32.partialorder %v4820, inf
    %v4824 = vsel %vm4823, %v4820, %v4822
    %vm4825 = vcmp.eq.f32.partialorder %v4820, 0.0
    %v4826 = vand.u32 %v4820, 2147483648
    %v4827 = vsel %vm4825, %v4826, %v4824
    %v4828 = vadd.f32 %v4827, 1e-06
    %v4829 = vadd.f32 %v4788, %v4828
    %v4830 = vadd.f32 %v4793, %v4828
    %v4831 = vadd.f32 %v4797, %v4828
    %v4832 = vadd.f32 %v4800, %v4828
    %v4833 = vmul.f32 %v4829, 0.8304548
    %v4834 = vmul.f32 %v4789, 0.166091
    %v4835 = vadd.f32 %v4833, %v4834
    %v4836 = vmul.f32 %v4790, -0.2491364
    %v4837 = vadd.f32 %v4835, %v4836
    %v4838 = vmul.f32 %v4791, 0.4650546
    %v4839 = vadd.f32 %v4837, %v4838
    %v4840 = vmul.f32 %v4789, 0.8304548
    %v4841 = vmul.f32 %v4830, 0.166091
    %v4842 = vadd.f32 %v4840, %v4841
    %v4843 = vmul.f32 %v4794, -0.2491364
    %v4844 = vadd.f32 %v4842, %v4843
    %v4845 = vmul.f32 %v4795, 0.4650546
    %v4846 = vadd.f32 %v4844, %v4845
    %v4847 = vmul.f32 %v4790, 0.8304548
    %v4848 = vmul.f32 %v4794, 0.166091
    %v4849 = vadd.f32 %v4847, %v4848
    %v4850 = vmul.f32 %v4831, -0.2491364
    %v4851 = vadd.f32 %v4849, %v4850
    %v4852 = vmul.f32 %v4798, 0.4650546
    %v4853 = vadd.f32 %v4851, %v4852
    %v4854 = vmul.f32 %v4791, 0.8304548
    %v4855 = vmul.f32 %v4795, 0.166091
    %v4856 = vadd.f32 %v4854, %v4855
    %v4857 = vmul.f32 %v4798, -0.2491364
    %v4858 = vadd.f32 %v4856, %v4857
    %v4859 = vmul.f32 %v4832, 0.4650546
    %v4860 = vadd.f32 %v4858, %v4859
    %v4861 = vmul.f32 %v4839, %v4839
    %v4862 = vmul.f32 %v4846, %v4846
    %v4863 = vadd.f32 %v4861, %v4862
    %v4864 = vmul.f32 %v4853, %v4853
    %v4865 = vadd.f32 %v4863, %v4864
    %v4866 = vmul.f32 %v4860, %v4860
    %v4867 = vadd.f32 %v4865, %v4866
    %v4868 = vadd.f32 %v4867, 1e-30
    %v4869 = vrsqrt.pop %v4868
    %v4870 = vmul.f32 %v4839, %v4869
    %v4871 = vmul.f32 %v4846, %v4869
    %v4872 = vmul.f32 %v4853, %v4869
    %v4873 = vmul.f32 %v4860, %v4869
    %v4874 = vmul.f32 %v4829, %v4870
    %v4875 = vmul.f32 %v4789, %v4871
    %v4876 = vadd.f32 %v4874, %v4875
    %v4877 = vmul.f32 %v4790, %v4872
    %v4878 = vadd.f32 %v4876, %v4877
    %v4879 = vmul.f32 %v4791, %v4873
    %v4880 = vadd.f32 %v4878, %v4879
    %v4881 = vmul.f32 %v4789, %v4870
    %v4882 = vmul.f32 %v4830, %v4871
    %v4883 = vadd.f32 %v4881, %v4882
    %v4884 = vmul.f32 %v4794, %v4872
    %v4885 = vadd.f32 %v4883, %v4884
    %v4886 = vmul.f32 %v4795, %v4873
    %v4887 = vadd.f32 %v4885, %v4886
    %v4888 = vmul.f32 %v4790, %v4870
    %v4889 = vmul.f32 %v4794, %v4871
    %v4890 = vadd.f32 %v4888, %v4889
    %v4891 = vmul.f32 %v4831, %v4872
    %v4892 = vadd.f32 %v4890, %v4891
    %v4893 = vmul.f32 %v4798, %v4873
    %v4894 = vadd.f32 %v4892, %v4893
    %v4895 = vmul.f32 %v4791, %v4870
    %v4896 = vmul.f32 %v4795, %v4871
    %v4897 = vadd.f32 %v4895, %v4896
    %v4898 = vmul.f32 %v4798, %v4872
    %v4899 = vadd.f32 %v4897, %v4898
    %v4900 = vmul.f32 %v4832, %v4873
    %v4901 = vadd.f32 %v4899, %v4900
    %v4902 = vmul.f32 %v4880, %v4880
    %v4903 = vmul.f32 %v4887, %v4887
    %v4904 = vadd.f32 %v4902, %v4903
    %v4905 = vmul.f32 %v4894, %v4894
    %v4906 = vadd.f32 %v4904, %v4905
    %v4907 = vmul.f32 %v4901, %v4901
    %v4908 = vadd.f32 %v4906, %v4907
    %v4909 = vadd.f32 %v4908, 1e-30
    %v4910 = vrsqrt.pop %v4909
    %v4911 = vmul.f32 %v4880, %v4910
    %v4912 = vmul.f32 %v4887, %v4910
    %v4913 = vmul.f32 %v4894, %v4910
    %v4914 = vmul.f32 %v4901, %v4910
    %v4915 = vmul.f32 %v4829, %v4911
    %v4916 = vmul.f32 %v4789, %v4912
    %v4917 = vadd.f32 %v4915, %v4916
    %v4918 = vmul.f32 %v4790, %v4913
    %v4919 = vadd.f32 %v4917, %v4918
    %v4920 = vmul.f32 %v4791, %v4914
    %v4921 = vadd.f32 %v4919, %v4920
    %v4922 = vmul.f32 %v4789, %v4911
    %v4923 = vmul.f32 %v4830, %v4912
    %v4924 = vadd.f32 %v4922, %v4923
    %v4925 = vmul.f32 %v4794, %v4913
    %v4926 = vadd.f32 %v4924, %v4925
    %v4927 = vmul.f32 %v4795, %v4914
    %v4928 = vadd.f32 %v4926, %v4927
    %v4929 = vmul.f32 %v4790, %v4911
    %v4930 = vmul.f32 %v4794, %v4912
    %v4931 = vadd.f32 %v4929, %v4930
    %v4932 = vmul.f32 %v4831, %v4913
    %v4933 = vadd.f32 %v4931, %v4932
    %v4934 = vmul.f32 %v4798, %v4914
    %v4935 = vadd.f32 %v4933, %v4934
    %v4936 = vmul.f32 %v4791, %v4911
    %v4937 = vmul.f32 %v4795, %v4912
    %v4938 = vadd.f32 %v4936, %v4937
    %v4939 = vmul.f32 %v4798, %v4913
    %v4940 = vadd.f32 %v4938, %v4939
    %v4941 = vmul.f32 %v4832, %v4914
    %v4942 = vadd.f32 %v4940, %v4941
    %v4943 = vmul.f32 %v4921, %v4921
    %v4944 = vmul.f32 %v4928, %v4928
    %v4945 = vadd.f32 %v4943, %v4944
    %v4946 = vmul.f32 %v4935, %v4935
    %v4947 = vadd.f32 %v4945, %v4946
    %v4948 = vmul.f32 %v4942, %v4942
    %v4949 = vadd.f32 %v4947, %v4948
    %v4950 = vadd.f32 %v4949, 1e-30
    %v4951 = vrsqrt.pop %v4950
    %v4952 = vmul.f32 %v4921, %v4951
    %v4953 = vmul.f32 %v4928, %v4951
    %v4954 = vmul.f32 %v4935, %v4951
    %v4955 = vmul.f32 %v4942, %v4951
    %v4956 = vmul.f32 %v4829, %v4952
    %v4957 = vmul.f32 %v4789, %v4953
    %v4958 = vadd.f32 %v4956, %v4957
    %v4959 = vmul.f32 %v4790, %v4954
    %v4960 = vadd.f32 %v4958, %v4959
    %v4961 = vmul.f32 %v4791, %v4955
    %v4962 = vadd.f32 %v4960, %v4961
    %v4963 = vmul.f32 %v4789, %v4952
    %v4964 = vmul.f32 %v4830, %v4953
    %v4965 = vadd.f32 %v4963, %v4964
    %v4966 = vmul.f32 %v4794, %v4954
    %v4967 = vadd.f32 %v4965, %v4966
    %v4968 = vmul.f32 %v4795, %v4955
    %v4969 = vadd.f32 %v4967, %v4968
    %v4970 = vmul.f32 %v4790, %v4952
    %v4971 = vmul.f32 %v4794, %v4953
    %v4972 = vadd.f32 %v4970, %v4971
    %v4973 = vmul.f32 %v4831, %v4954
    %v4974 = vadd.f32 %v4972, %v4973
    %v4975 = vmul.f32 %v4798, %v4955
    %v4976 = vadd.f32 %v4974, %v4975
    %v4977 = vmul.f32 %v4791, %v4952
    %v4978 = vmul.f32 %v4795, %v4953
    %v4979 = vadd.f32 %v4977, %v4978
    %v4980 = vmul.f32 %v4798, %v4954
    %v4981 = vadd.f32 %v4979, %v4980
    %v4982 = vmul.f32 %v4832, %v4955
    %v4983 = vadd.f32 %v4981, %v4982
    %v4984 = vmul.f32 %v4962, %v4962
    %v4985 = vmul.f32 %v4969, %v4969
    %v4986 = vadd.f32 %v4984, %v4985
    %v4987 = vmul.f32 %v4976, %v4976
    %v4988 = vadd.f32 %v4986, %v4987
    %v4989 = vmul.f32 %v4983, %v4983
    %v4990 = vadd.f32 %v4988, %v4989
    %v4991 = vadd.f32 %v4990, 1e-30
    %v4992 = vrsqrt.pop %v4991
    %v4993 = vmul.f32 %v4962, %v4992
    %v4994 = vmul.f32 %v4969, %v4992
    %v4995 = vmul.f32 %v4976, %v4992
    %v4996 = vmul.f32 %v4983, %v4992
    %v4997 = vmul.f32 %v4829, %v4993
    %v4998 = vmul.f32 %v4789, %v4994
    %v4999 = vadd.f32 %v4997, %v4998
    %v5000 = vmul.f32 %v4790, %v4995
    %v5001 = vadd.f32 %v4999, %v5000
    %v5002 = vmul.f32 %v4791, %v4996
    %v5003 = vadd.f32 %v5001, %v5002
    %v5004 = vmul.f32 %v4789, %v4993
    %v5005 = vmul.f32 %v4830, %v4994
    %v5006 = vadd.f32 %v5004, %v5005
    %v5007 = vmul.f32 %v4794, %v4995
    %v5008 = vadd.f32 %v5006, %v5007
    %v5009 = vmul.f32 %v4795, %v4996
    %v5010 = vadd.f32 %v5008, %v5009
    %v5011 = vmul.f32 %v4790, %v4993
    %v5012 = vmul.f32 %v4794, %v4994
    %v5013 = vadd.f32 %v5011, %v5012
    %v5014 = vmul.f32 %v4831, %v4995
    %v5015 = vadd.f32 %v5013, %v5014
    %v5016 = vmul.f32 %v4798, %v4996
    %v5017 = vadd.f32 %v5015, %v5016
    %v5018 = vmul.f32 %v4791, %v4993
    %v5019 = vmul.f32 %v4795, %v4994
    %v5020 = vadd.f32 %v5018, %v5019
    %v5021 = vmul.f32 %v4798, %v4995
    %v5022 = vadd.f32 %v5020, %v5021
    %v5023 = vmul.f32 %v4832, %v4996
    %v5024 = vadd.f32 %v5022, %v5023
    %v5025 = vmul.f32 %v5003, %v5003
    %v5026 = vmul.f32 %v5010, %v5010
    %v5027 = vadd.f32 %v5025, %v5026
    %v5028 = vmul.f32 %v5017, %v5017
    %v5029 = vadd.f32 %v5027, %v5028
    %v5030 = vmul.f32 %v5024, %v5024
    %v5031 = vadd.f32 %v5029, %v5030
    %v5032 = vadd.f32 %v5031, 1e-30
    %v5033 = vrsqrt.pop %v5032
    %v5034 = vmul.f32 %v5003, %v5033
    %v5035 = vmul.f32 %v5010, %v5033
    %v5036 = vmul.f32 %v5017, %v5033
    %v5037 = vmul.f32 %v5024, %v5033
    %v5038 = vmul.f32 %v4829, %v5034
    %v5039 = vmul.f32 %v4789, %v5035
    %v5040 = vadd.f32 %v5038, %v5039
    %v5041 = vmul.f32 %v4790, %v5036
    %v5042 = vadd.f32 %v5040, %v5041
    %v5043 = vmul.f32 %v4791, %v5037
    %v5044 = vadd.f32 %v5042, %v5043
    %v5045 = vmul.f32 %v4789, %v5034
    %v5046 = vmul.f32 %v4830, %v5035
    %v5047 = vadd.f32 %v5045, %v5046
    %v5048 = vmul.f32 %v4794, %v5036
    %v5049 = vadd.f32 %v5047, %v5048
    %v5050 = vmul.f32 %v4795, %v5037
    %v5051 = vadd.f32 %v5049, %v5050
    %v5052 = vmul.f32 %v4790, %v5034
    %v5053 = vmul.f32 %v4794, %v5035
    %v5054 = vadd.f32 %v5052, %v5053
    %v5055 = vmul.f32 %v4831, %v5036
    %v5056 = vadd.f32 %v5054, %v5055
    %v5057 = vmul.f32 %v4798, %v5037
    %v5058 = vadd.f32 %v5056, %v5057
    %v5059 = vmul.f32 %v4791, %v5034
    %v5060 = vmul.f32 %v4795, %v5035
    %v5061 = vadd.f32 %v5059, %v5060
    %v5062 = vmul.f32 %v4798, %v5036
    %v5063 = vadd.f32 %v5061, %v5062
    %v5064 = vmul.f32 %v4832, %v5037
    %v5065 = vadd.f32 %v5063, %v5064
    %v5066 = vmul.f32 %v5044, %v5044
    %v5067 = vmul.f32 %v5051, %v5051
    %v5068 = vadd.f32 %v5066, %v5067
    %v5069 = vmul.f32 %v5058, %v5058
    %v5070 = vadd.f32 %v5068, %v5069
    %v5071 = vmul.f32 %v5065, %v5065
    %v5072 = vadd.f32 %v5070, %v5071
    %v5073 = vadd.f32 %v5072, 1e-30
    %v5074 = vrsqrt.pop %v5073
    %v5075 = vmul.f32 %v5044, %v5074
    %v5076 = vmul.f32 %v5051, %v5074
    %v5077 = vmul.f32 %v5058, %v5074
    %v5078 = vmul.f32 %v5065, %v5074
    %v5079 = vmul.f32 %v4829, %v5075
    %v5080 = vmul.f32 %v4789, %v5076
    %v5081 = vadd.f32 %v5079, %v5080
    %v5082 = vmul.f32 %v4790, %v5077
    %v5083 = vadd.f32 %v5081, %v5082
    %v5084 = vmul.f32 %v4791, %v5078
    %v5085 = vadd.f32 %v5083, %v5084
    %v5086 = vmul.f32 %v4789, %v5075
    %v5087 = vmul.f32 %v4830, %v5076
    %v5088 = vadd.f32 %v5086, %v5087
    %v5089 = vmul.f32 %v4794, %v5077
    %v5090 = vadd.f32 %v5088, %v5089
    %v5091 = vmul.f32 %v4795, %v5078
    %v5092 = vadd.f32 %v5090, %v5091
    %v5093 = vmul.f32 %v4790, %v5075
    %v5094 = vmul.f32 %v4794, %v5076
    %v5095 = vadd.f32 %v5093, %v5094
    %v5096 = vmul.f32 %v4831, %v5077
    %v5097 = vadd.f32 %v5095, %v5096
    %v5098 = vmul.f32 %v4798, %v5078
    %v5099 = vadd.f32 %v5097, %v5098
    %v5100 = vmul.f32 %v4791, %v5075
    %v5101 = vmul.f32 %v4795, %v5076
    %v5102 = vadd.f32 %v5100, %v5101
    %v5103 = vmul.f32 %v4798, %v5077
    %v5104 = vadd.f32 %v5102, %v5103
    %v5105 = vmul.f32 %v4832, %v5078
    %v5106 = vadd.f32 %v5104, %v5105
    %v5107 = vmul.f32 %v5085, %v5085
    %v5108 = vmul.f32 %v5092, %v5092
    %v5109 = vadd.f32 %v5107, %v5108
    %v5110 = vmul.f32 %v5099, %v5099
    %v5111 = vadd.f32 %v5109, %v5110
    %v5112 = vmul.f32 %v5106, %v5106
    %v5113 = vadd.f32 %v5111, %v5112
    %v5114 = vadd.f32 %v5113, 1e-30
    %v5115 = vrsqrt.pop %v5114
    %v5116 = vmul.f32 %v5085, %v5115
    %v5117 = vmul.f32 %v5092, %v5115
    %v5118 = vmul.f32 %v5099, %v5115
    %v5119 = vmul.f32 %v5106, %v5115
    %v5120 = vmul.f32 %v4829, %v5116
    %v5121 = vmul.f32 %v4789, %v5117
    %v5122 = vadd.f32 %v5120, %v5121
    %v5123 = vmul.f32 %v4790, %v5118
    %v5124 = vadd.f32 %v5122, %v5123
    %v5125 = vmul.f32 %v4791, %v5119
    %v5126 = vadd.f32 %v5124, %v5125
    %v5127 = vmul.f32 %v4789, %v5116
    %v5128 = vmul.f32 %v4830, %v5117
    %v5129 = vadd.f32 %v5127, %v5128
    %v5130 = vmul.f32 %v4794, %v5118
    %v5131 = vadd.f32 %v5129, %v5130
    %v5132 = vmul.f32 %v4795, %v5119
    %v5133 = vadd.f32 %v5131, %v5132
    %v5134 = vmul.f32 %v4790, %v5116
    %v5135 = vmul.f32 %v4794, %v5117
    %v5136 = vadd.f32 %v5134, %v5135
    %v5137 = vmul.f32 %v4831, %v5118
    %v5138 = vadd.f32 %v5136, %v5137
    %v5139 = vmul.f32 %v4798, %v5119
    %v5140 = vadd.f32 %v5138, %v5139
    %v5141 = vmul.f32 %v4791, %v5116
    %v5142 = vmul.f32 %v4795, %v5117
    %v5143 = vadd.f32 %v5141, %v5142
    %v5144 = vmul.f32 %v4798, %v5118
    %v5145 = vadd.f32 %v5143, %v5144
    %v5146 = vmul.f32 %v4832, %v5119
    %v5147 = vadd.f32 %v5145, %v5146
    %v5148 = vmul.f32 %v5126, %v5126
    %v5149 = vmul.f32 %v5133, %v5133
    %v5150 = vadd.f32 %v5148, %v5149
    %v5151 = vmul.f32 %v5140, %v5140
    %v5152 = vadd.f32 %v5150, %v5151
    %v5153 = vmul.f32 %v5147, %v5147
    %v5154 = vadd.f32 %v5152, %v5153
    %v5155 = vadd.f32 %v5154, 1e-30
    %v5156 = vrsqrt.pop %v5155
    %v5157 = vmul.f32 %v5126, %v5156
    %v5158 = vmul.f32 %v5133, %v5156
    %v5159 = vmul.f32 %v5140, %v5156
    %v5160 = vmul.f32 %v5147, %v5156
    %v5161 = vmul.f32 %v4829, %v5157
    %v5162 = vmul.f32 %v4789, %v5158
    %v5163 = vadd.f32 %v5161, %v5162
    %v5164 = vmul.f32 %v4790, %v5159
    %v5165 = vadd.f32 %v5163, %v5164
    %v5166 = vmul.f32 %v4791, %v5160
    %v5167 = vadd.f32 %v5165, %v5166
    %v5168 = vmul.f32 %v4789, %v5157
    %v5169 = vmul.f32 %v4830, %v5158
    %v5170 = vadd.f32 %v5168, %v5169
    %v5171 = vmul.f32 %v4794, %v5159
    %v5172 = vadd.f32 %v5170, %v5171
    %v5173 = vmul.f32 %v4795, %v5160
    %v5174 = vadd.f32 %v5172, %v5173
    %v5175 = vmul.f32 %v4790, %v5157
    %v5176 = vmul.f32 %v4794, %v5158
    %v5177 = vadd.f32 %v5175, %v5176
    %v5178 = vmul.f32 %v4831, %v5159
    %v5179 = vadd.f32 %v5177, %v5178
    %v5180 = vmul.f32 %v4798, %v5160
    %v5181 = vadd.f32 %v5179, %v5180
    %v5182 = vmul.f32 %v4791, %v5157
    %v5183 = vmul.f32 %v4795, %v5158
    %v5184 = vadd.f32 %v5182, %v5183
    %v5185 = vmul.f32 %v4798, %v5159
    %v5186 = vadd.f32 %v5184, %v5185
    %v5187 = vmul.f32 %v4832, %v5160
    %v5188 = vadd.f32 %v5186, %v5187
    %v5189 = vmul.f32 %v5167, %v5167
    %v5190 = vmul.f32 %v5174, %v5174
    %v5191 = vadd.f32 %v5189, %v5190
    %v5192 = vmul.f32 %v5181, %v5181
    %v5193 = vadd.f32 %v5191, %v5192
    %v5194 = vmul.f32 %v5188, %v5188
    %v5195 = vadd.f32 %v5193, %v5194
    %v5196 = vadd.f32 %v5195, 1e-30
    %v5197 = vrsqrt.pop %v5196
    %v5198 = vmul.f32 %v5167, %v5197
    %v5199 = vmul.f32 %v5174, %v5197
    %v5200 = vmul.f32 %v5181, %v5197
    %v5201 = vmul.f32 %v5188, %v5197
    %v5202 = vmul.f32 %v4829, %v5198
    %v5203 = vmul.f32 %v4789, %v5199
    %v5204 = vadd.f32 %v5202, %v5203
    %v5205 = vmul.f32 %v4790, %v5200
    %v5206 = vadd.f32 %v5204, %v5205
    %v5207 = vmul.f32 %v4791, %v5201
    %v5208 = vadd.f32 %v5206, %v5207
    %v5209 = vmul.f32 %v4789, %v5198
    %v5210 = vmul.f32 %v4830, %v5199
    %v5211 = vadd.f32 %v5209, %v5210
    %v5212 = vmul.f32 %v4794, %v5200
    %v5213 = vadd.f32 %v5211, %v5212
    %v5214 = vmul.f32 %v4795, %v5201
    %v5215 = vadd.f32 %v5213, %v5214
    %v5216 = vmul.f32 %v4790, %v5198
    %v5217 = vmul.f32 %v4794, %v5199
    %v5218 = vadd.f32 %v5216, %v5217
    %v5219 = vmul.f32 %v4831, %v5200
    %v5220 = vadd.f32 %v5218, %v5219
    %v5221 = vmul.f32 %v4798, %v5201
    %v5222 = vadd.f32 %v5220, %v5221
    %v5223 = vmul.f32 %v4791, %v5198
    %v5224 = vmul.f32 %v4795, %v5199
    %v5225 = vadd.f32 %v5223, %v5224
    %v5226 = vmul.f32 %v4798, %v5200
    %v5227 = vadd.f32 %v5225, %v5226
    %v5228 = vmul.f32 %v4832, %v5201
    %v5229 = vadd.f32 %v5227, %v5228
    %v5230 = vmul.f32 %v5208, %v5208
    %v5231 = vmul.f32 %v5215, %v5215
    %v5232 = vadd.f32 %v5230, %v5231
    %v5233 = vmul.f32 %v5222, %v5222
    %v5234 = vadd.f32 %v5232, %v5233
    %v5235 = vmul.f32 %v5229, %v5229
    %v5236 = vadd.f32 %v5234, %v5235
    %v5237 = vadd.f32 %v5236, 1e-30
    %v5238 = vrsqrt.pop %v5237
    %v5239 = vmul.f32 %v5208, %v5238
    %v5240 = vmul.f32 %v5215, %v5238
    %v5241 = vmul.f32 %v5222, %v5238
    %v5242 = vmul.f32 %v5229, %v5238
    %v5243 = vmul.f32 %v4829, %v5239
    %v5244 = vmul.f32 %v4789, %v5240
    %v5245 = vadd.f32 %v5243, %v5244
    %v5246 = vmul.f32 %v4790, %v5241
    %v5247 = vadd.f32 %v5245, %v5246
    %v5248 = vmul.f32 %v4791, %v5242
    %v5249 = vadd.f32 %v5247, %v5248
    %v5250 = vmul.f32 %v4789, %v5239
    %v5251 = vmul.f32 %v4830, %v5240
    %v5252 = vadd.f32 %v5250, %v5251
    %v5253 = vmul.f32 %v4794, %v5241
    %v5254 = vadd.f32 %v5252, %v5253
    %v5255 = vmul.f32 %v4795, %v5242
    %v5256 = vadd.f32 %v5254, %v5255
    %v5257 = vmul.f32 %v4790, %v5239
    %v5258 = vmul.f32 %v4794, %v5240
    %v5259 = vadd.f32 %v5257, %v5258
    %v5260 = vmul.f32 %v4831, %v5241
    %v5261 = vadd.f32 %v5259, %v5260
    %v5262 = vmul.f32 %v4798, %v5242
    %v5263 = vadd.f32 %v5261, %v5262
    %v5264 = vmul.f32 %v4791, %v5239
    %v5265 = vmul.f32 %v4795, %v5240
    %v5266 = vadd.f32 %v5264, %v5265
    %v5267 = vmul.f32 %v4798, %v5241
    %v5268 = vadd.f32 %v5266, %v5267
    %v5269 = vmul.f32 %v4832, %v5242
    %v5270 = vadd.f32 %v5268, %v5269
    %v5271 = vmul.f32 %v5249, %v5249
    %v5272 = vmul.f32 %v5256, %v5256
    %v5273 = vadd.f32 %v5271, %v5272
    %v5274 = vmul.f32 %v5263, %v5263
    %v5275 = vadd.f32 %v5273, %v5274
    %v5276 = vmul.f32 %v5270, %v5270
    %v5277 = vadd.f32 %v5275, %v5276
    %v5278 = vadd.f32 %v5277, 1e-30
    %v5279 = vrsqrt.pop %v5278
    %v5280 = vmul.f32 %v5249, %v5279
    %v5281 = vmul.f32 %v5256, %v5279
    %v5282 = vmul.f32 %v5263, %v5279
    %v5283 = vmul.f32 %v5270, %v5279
    %v5284 = vmul.f32 %v4829, %v5280
    %v5285 = vmul.f32 %v4789, %v5281
    %v5286 = vadd.f32 %v5284, %v5285
    %v5287 = vmul.f32 %v4790, %v5282
    %v5288 = vadd.f32 %v5286, %v5287
    %v5289 = vmul.f32 %v4791, %v5283
    %v5290 = vadd.f32 %v5288, %v5289
    %v5291 = vmul.f32 %v4789, %v5280
    %v5292 = vmul.f32 %v4830, %v5281
    %v5293 = vadd.f32 %v5291, %v5292
    %v5294 = vmul.f32 %v4794, %v5282
    %v5295 = vadd.f32 %v5293, %v5294
    %v5296 = vmul.f32 %v4795, %v5283
    %v5297 = vadd.f32 %v5295, %v5296
    %v5298 = vmul.f32 %v4790, %v5280
    %v5299 = vmul.f32 %v4794, %v5281
    %v5300 = vadd.f32 %v5298, %v5299
    %v5301 = vmul.f32 %v4831, %v5282
    %v5302 = vadd.f32 %v5300, %v5301
    %v5303 = vmul.f32 %v4798, %v5283
    %v5304 = vadd.f32 %v5302, %v5303
    %v5305 = vmul.f32 %v4791, %v5280
    %v5306 = vmul.f32 %v4795, %v5281
    %v5307 = vadd.f32 %v5305, %v5306
    %v5308 = vmul.f32 %v4798, %v5282
    %v5309 = vadd.f32 %v5307, %v5308
    %v5310 = vmul.f32 %v4832, %v5283
    %v5311 = vadd.f32 %v5309, %v5310
    %v5312 = vmul.f32 %v5290, %v5290
    %v5313 = vmul.f32 %v5297, %v5297
    %v5314 = vadd.f32 %v5312, %v5313
    %v5315 = vmul.f32 %v5304, %v5304
    %v5316 = vadd.f32 %v5314, %v5315
    %v5317 = vmul.f32 %v5311, %v5311
    %v5318 = vadd.f32 %v5316, %v5317
    %v5319 = vadd.f32 %v5318, 1e-30
    %v5320 = vrsqrt.pop %v5319
    %v5321 = vmul.f32 %v5290, %v5320
    %v5322 = vmul.f32 %v5297, %v5320
    %v5323 = vmul.f32 %v5304, %v5320
    %v5324 = vmul.f32 %v5311, %v5320
    %v5325 = vmul.f32 %v4829, %v5321
    %v5326 = vmul.f32 %v4789, %v5322
    %v5327 = vadd.f32 %v5325, %v5326
    %v5328 = vmul.f32 %v4790, %v5323
    %v5329 = vadd.f32 %v5327, %v5328
    %v5330 = vmul.f32 %v4791, %v5324
    %v5331 = vadd.f32 %v5329, %v5330
    %v5332 = vmul.f32 %v4789, %v5321
    %v5333 = vmul.f32 %v4830, %v5322
    %v5334 = vadd.f32 %v5332, %v5333
    %v5335 = vmul.f32 %v4794, %v5323
    %v5336 = vadd.f32 %v5334, %v5335
    %v5337 = vmul.f32 %v4795, %v5324
    %v5338 = vadd.f32 %v5336, %v5337
    %v5339 = vmul.f32 %v4790, %v5321
    %v5340 = vmul.f32 %v4794, %v5322
    %v5341 = vadd.f32 %v5339, %v5340
    %v5342 = vmul.f32 %v4831, %v5323
    %v5343 = vadd.f32 %v5341, %v5342
    %v5344 = vmul.f32 %v4798, %v5324
    %v5345 = vadd.f32 %v5343, %v5344
    %v5346 = vmul.f32 %v4791, %v5321
    %v5347 = vmul.f32 %v4795, %v5322
    %v5348 = vadd.f32 %v5346, %v5347
    %v5349 = vmul.f32 %v4798, %v5323
    %v5350 = vadd.f32 %v5348, %v5349
    %v5351 = vmul.f32 %v4832, %v5324
    %v5352 = vadd.f32 %v5350, %v5351
    %v5353 = vmul.f32 %v5331, %v5331
    %v5354 = vmul.f32 %v5338, %v5338
    %v5355 = vadd.f32 %v5353, %v5354
    %v5356 = vmul.f32 %v5345, %v5345
    %v5357 = vadd.f32 %v5355, %v5356
    %v5358 = vmul.f32 %v5352, %v5352
    %v5359 = vadd.f32 %v5357, %v5358
    %v5360 = vadd.f32 %v5359, 1e-30
    %v5361 = vrsqrt.pop %v5360
    %v5362 = vmul.f32 %v5331, %v5361
    %v5363 = vmul.f32 %v5338, %v5361
    %v5364 = vmul.f32 %v5345, %v5361
    %v5365 = vmul.f32 %v5352, %v5361
    %v5366 = vmul.f32 %v4829, %v5362
    %v5367 = vmul.f32 %v4789, %v5363
    %v5368 = vadd.f32 %v5366, %v5367
    %v5369 = vmul.f32 %v4790, %v5364
    %v5370 = vadd.f32 %v5368, %v5369
    %v5371 = vmul.f32 %v4791, %v5365
    %v5372 = vadd.f32 %v5370, %v5371
    %v5373 = vmul.f32 %v4789, %v5362
    %v5374 = vmul.f32 %v4830, %v5363
    %v5375 = vadd.f32 %v5373, %v5374
    %v5376 = vmul.f32 %v4794, %v5364
    %v5377 = vadd.f32 %v5375, %v5376
    %v5378 = vmul.f32 %v4795, %v5365
    %v5379 = vadd.f32 %v5377, %v5378
    %v5380 = vmul.f32 %v4790, %v5362
    %v5381 = vmul.f32 %v4794, %v5363
    %v5382 = vadd.f32 %v5380, %v5381
    %v5383 = vmul.f32 %v4831, %v5364
    %v5384 = vadd.f32 %v5382, %v5383
    %v5385 = vmul.f32 %v4798, %v5365
    %v5386 = vadd.f32 %v5384, %v5385
    %v5387 = vmul.f32 %v4791, %v5362
    %v5388 = vmul.f32 %v4795, %v5363
    %v5389 = vadd.f32 %v5387, %v5388
    %v5390 = vmul.f32 %v4798, %v5364
    %v5391 = vadd.f32 %v5389, %v5390
    %v5392 = vmul.f32 %v4832, %v5365
    %v5393 = vadd.f32 %v5391, %v5392
    %v5394 = vmul.f32 %v5372, %v5372
    %v5395 = vmul.f32 %v5379, %v5379
    %v5396 = vadd.f32 %v5394, %v5395
    %v5397 = vmul.f32 %v5386, %v5386
    %v5398 = vadd.f32 %v5396, %v5397
    %v5399 = vmul.f32 %v5393, %v5393
    %v5400 = vadd.f32 %v5398, %v5399
    %v5401 = vadd.f32 %v5400, 1e-30
    %v5402 = vrsqrt.pop %v5401
    %v5403 = vmul.f32 %v5372, %v5402
    %v5404 = vmul.f32 %v5379, %v5402
    %v5405 = vmul.f32 %v5386, %v5402
    %v5406 = vmul.f32 %v5393, %v5402
    %v5407 = vmul.f32 %v4829, %v5403
    %v5408 = vmul.f32 %v4789, %v5404
    %v5409 = vadd.f32 %v5407, %v5408
    %v5410 = vmul.f32 %v4790, %v5405
    %v5411 = vadd.f32 %v5409, %v5410
    %v5412 = vmul.f32 %v4791, %v5406
    %v5413 = vadd.f32 %v5411, %v5412
    %v5414 = vmul.f32 %v4789, %v5403
    %v5415 = vmul.f32 %v4830, %v5404
    %v5416 = vadd.f32 %v5414, %v5415
    %v5417 = vmul.f32 %v4794, %v5405
    %v5418 = vadd.f32 %v5416, %v5417
    %v5419 = vmul.f32 %v4795, %v5406
    %v5420 = vadd.f32 %v5418, %v5419
    %v5421 = vmul.f32 %v4790, %v5403
    %v5422 = vmul.f32 %v4794, %v5404
    %v5423 = vadd.f32 %v5421, %v5422
    %v5424 = vmul.f32 %v4831, %v5405
    %v5425 = vadd.f32 %v5423, %v5424
    %v5426 = vmul.f32 %v4798, %v5406
    %v5427 = vadd.f32 %v5425, %v5426
    %v5428 = vmul.f32 %v4791, %v5403
    %v5429 = vmul.f32 %v4795, %v5404
    %v5430 = vadd.f32 %v5428, %v5429
    %v5431 = vmul.f32 %v4798, %v5405
    %v5432 = vadd.f32 %v5430, %v5431
    %v5433 = vmul.f32 %v4832, %v5406
    %v5434 = vadd.f32 %v5432, %v5433
    %v5435 = vmul.f32 %v5413, %v5413
    %v5436 = vmul.f32 %v5420, %v5420
    %v5437 = vadd.f32 %v5435, %v5436
    %v5438 = vmul.f32 %v5427, %v5427
    %v5439 = vadd.f32 %v5437, %v5438
    %v5440 = vmul.f32 %v5434, %v5434
    %v5441 = vadd.f32 %v5439, %v5440
    %v5442 = vadd.f32 %v5441, 1e-30
    %v5443 = vrsqrt.pop %v5442
    %v5444 = vmul.f32 %v5413, %v5443
    %v5445 = vmul.f32 %v5420, %v5443
    %v5446 = vmul.f32 %v5427, %v5443
    %v5447 = vmul.f32 %v5434, %v5443
    %v5448 = vmul.f32 %v4829, %v5444
    %v5449 = vmul.f32 %v4789, %v5445
    %v5450 = vadd.f32 %v5448, %v5449
    %v5451 = vmul.f32 %v4790, %v5446
    %v5452 = vadd.f32 %v5450, %v5451
    %v5453 = vmul.f32 %v4791, %v5447
    %v5454 = vadd.f32 %v5452, %v5453
    %v5455 = vmul.f32 %v4789, %v5444
    %v5456 = vmul.f32 %v4830, %v5445
    %v5457 = vadd.f32 %v5455, %v5456
    %v5458 = vmul.f32 %v4794, %v5446
    %v5459 = vadd.f32 %v5457, %v5458
    %v5460 = vmul.f32 %v4795, %v5447
    %v5461 = vadd.f32 %v5459, %v5460
    %v5462 = vmul.f32 %v4790, %v5444
    %v5463 = vmul.f32 %v4794, %v5445
    %v5464 = vadd.f32 %v5462, %v5463
    %v5465 = vmul.f32 %v4831, %v5446
    %v5466 = vadd.f32 %v5464, %v5465
    %v5467 = vmul.f32 %v4798, %v5447
    %v5468 = vadd.f32 %v5466, %v5467
    %v5469 = vmul.f32 %v4791, %v5444
    %v5470 = vmul.f32 %v4795, %v5445
    %v5471 = vadd.f32 %v5469, %v5470
    %v5472 = vmul.f32 %v4798, %v5446
    %v5473 = vadd.f32 %v5471, %v5472
    %v5474 = vmul.f32 %v4832, %v5447
    %v5475 = vadd.f32 %v5473, %v5474
    %v5476 = vmul.f32 %v5454, %v5454
    %v5477 = vmul.f32 %v5461, %v5461
    %v5478 = vadd.f32 %v5476, %v5477
    %v5479 = vmul.f32 %v5468, %v5468
    %v5480 = vadd.f32 %v5478, %v5479
    %v5481 = vmul.f32 %v5475, %v5475
    %v5482 = vadd.f32 %v5480, %v5481
    %v5483 = vadd.f32 %v5482, 1e-30
    %v5484 = vrsqrt.pop %v5483
    %v5485 = vmul.f32 %v5454, %v5484
    %v5486 = vmul.f32 %v5461, %v5484
    %v5487 = vmul.f32 %v5468, %v5484
    %v5488 = vmul.f32 %v5475, %v5484
    %v5489 = vmul.f32 %v4829, %v5485
    %v5490 = vmul.f32 %v4789, %v5486
    %v5491 = vadd.f32 %v5489, %v5490
    %v5492 = vmul.f32 %v4790, %v5487
    %v5493 = vadd.f32 %v5491, %v5492
    %v5494 = vmul.f32 %v4791, %v5488
    %v5495 = vadd.f32 %v5493, %v5494
    %v5496 = vmul.f32 %v4789, %v5485
    %v5497 = vmul.f32 %v4830, %v5486
    %v5498 = vadd.f32 %v5496, %v5497
    %v5499 = vmul.f32 %v4794, %v5487
    %v5500 = vadd.f32 %v5498, %v5499
    %v5501 = vmul.f32 %v4795, %v5488
    %v5502 = vadd.f32 %v5500, %v5501
    %v5503 = vmul.f32 %v4790, %v5485
    %v5504 = vmul.f32 %v4794, %v5486
    %v5505 = vadd.f32 %v5503, %v5504
    %v5506 = vmul.f32 %v4831, %v5487
    %v5507 = vadd.f32 %v5505, %v5506
    %v5508 = vmul.f32 %v4798, %v5488
    %v5509 = vadd.f32 %v5507, %v5508
    %v5510 = vmul.f32 %v4791, %v5485
    %v5511 = vmul.f32 %v4795, %v5486
    %v5512 = vadd.f32 %v5510, %v5511
    %v5513 = vmul.f32 %v4798, %v5487
    %v5514 = vadd.f32 %v5512, %v5513
    %v5515 = vmul.f32 %v4832, %v5488
    %v5516 = vadd.f32 %v5514, %v5515
    %v5517 = vmul.f32 %v5495, %v5495
    %v5518 = vmul.f32 %v5502, %v5502
    %v5519 = vadd.f32 %v5517, %v5518
    %v5520 = vmul.f32 %v5509, %v5509
    %v5521 = vadd.f32 %v5519, %v5520
    %v5522 = vmul.f32 %v5516, %v5516
    %v5523 = vadd.f32 %v5521, %v5522
    %v5524 = vadd.f32 %v5523, 1e-30
    %v5525 = vrsqrt.pop %v5524
    %v5526 = vmul.f32 %v5495, %v5525
    %v5527 = vmul.f32 %v5502, %v5525
    %v5528 = vmul.f32 %v5509, %v5525
    %v5529 = vmul.f32 %v5516, %v5525
    %v5530 = vmul.f32 %v4829, %v5526
    %v5531 = vmul.f32 %v4789, %v5527
    %v5532 = vadd.f32 %v5530, %v5531
    %v5533 = vmul.f32 %v4790, %v5528
    %v5534 = vadd.f32 %v5532, %v5533
    %v5535 = vmul.f32 %v4791, %v5529
    %v5536 = vadd.f32 %v5534, %v5535
    %v5537 = vmul.f32 %v4789, %v5526
    %v5538 = vmul.f32 %v4830, %v5527
    %v5539 = vadd.f32 %v5537, %v5538
    %v5540 = vmul.f32 %v4794, %v5528
    %v5541 = vadd.f32 %v5539, %v5540
    %v5542 = vmul.f32 %v4795, %v5529
    %v5543 = vadd.f32 %v5541, %v5542
    %v5544 = vmul.f32 %v4790, %v5526
    %v5545 = vmul.f32 %v4794, %v5527
    %v5546 = vadd.f32 %v5544, %v5545
    %v5547 = vmul.f32 %v4831, %v5528
    %v5548 = vadd.f32 %v5546, %v5547
    %v5549 = vmul.f32 %v4798, %v5529
    %v5550 = vadd.f32 %v5548, %v5549
    %v5551 = vmul.f32 %v4791, %v5526
    %v5552 = vmul.f32 %v4795, %v5527
    %v5553 = vadd.f32 %v5551, %v5552
    %v5554 = vmul.f32 %v4798, %v5528
    %v5555 = vadd.f32 %v5553, %v5554
    %v5556 = vmul.f32 %v4832, %v5529
    %v5557 = vadd.f32 %v5555, %v5556
    %v5558 = vmul.f32 %v5536, %v5536
    %v5559 = vmul.f32 %v5543, %v5543
    %v5560 = vadd.f32 %v5558, %v5559
    %v5561 = vmul.f32 %v5550, %v5550
    %v5562 = vadd.f32 %v5560, %v5561
    %v5563 = vmul.f32 %v5557, %v5557
    %v5564 = vadd.f32 %v5562, %v5563
    %v5565 = vadd.f32 %v5564, 1e-30
    %v5566 = vrsqrt.pop %v5565
    %v5567 = vmul.f32 %v5536, %v5566
    %v5568 = vmul.f32 %v5543, %v5566
    %v5569 = vmul.f32 %v5550, %v5566
    %v5570 = vmul.f32 %v5557, %v5566
    %v5571 = vmul.f32 %v4829, %v5567
    %v5572 = vmul.f32 %v4789, %v5568
    %v5573 = vadd.f32 %v5571, %v5572
    %v5574 = vmul.f32 %v4790, %v5569
    %v5575 = vadd.f32 %v5573, %v5574
    %v5576 = vmul.f32 %v4791, %v5570
    %v5577 = vadd.f32 %v5575, %v5576
    %v5578 = vmul.f32 %v4789, %v5567
    %v5579 = vmul.f32 %v4830, %v5568
    %v5580 = vadd.f32 %v5578, %v5579
    %v5581 = vmul.f32 %v4794, %v5569
    %v5582 = vadd.f32 %v5580, %v5581
    %v5583 = vmul.f32 %v4795, %v5570
    %v5584 = vadd.f32 %v5582, %v5583
    %v5585 = vmul.f32 %v4790, %v5567
    %v5586 = vmul.f32 %v4794, %v5568
    %v5587 = vadd.f32 %v5585, %v5586
    %v5588 = vmul.f32 %v4831, %v5569
    %v5589 = vadd.f32 %v5587, %v5588
    %v5590 = vmul.f32 %v4798, %v5570
    %v5591 = vadd.f32 %v5589, %v5590
    %v5592 = vmul.f32 %v4791, %v5567
    %v5593 = vmul.f32 %v4795, %v5568
    %v5594 = vadd.f32 %v5592, %v5593
    %v5595 = vmul.f32 %v4798, %v5569
    %v5596 = vadd.f32 %v5594, %v5595
    %v5597 = vmul.f32 %v4832, %v5570
    %v5598 = vadd.f32 %v5596, %v5597
    %v5599 = vmul.f32 %v5577, %v5577
    %v5600 = vmul.f32 %v5584, %v5584
    %v5601 = vadd.f32 %v5599, %v5600
    %v5602 = vmul.f32 %v5591, %v5591
    %v5603 = vadd.f32 %v5601, %v5602
    %v5604 = vmul.f32 %v5598, %v5598
    %v5605 = vadd.f32 %v5603, %v5604
    %v5606 = vadd.f32 %v5605, 1e-30
    %v5607 = vrsqrt.pop %v5606
    %v5608 = vmul.f32 %v5577, %v5607
    %v5609 = vmul.f32 %v5584, %v5607
    %v5610 = vmul.f32 %v5591, %v5607
    %v5611 = vmul.f32 %v5598, %v5607
    %v5612 = vmul.f32 %v4829, %v5608
    %v5613 = vmul.f32 %v4789, %v5609
    %v5614 = vadd.f32 %v5612, %v5613
    %v5615 = vmul.f32 %v4790, %v5610
    %v5616 = vadd.f32 %v5614, %v5615
    %v5617 = vmul.f32 %v4791, %v5611
    %v5618 = vadd.f32 %v5616, %v5617
    %v5619 = vmul.f32 %v4789, %v5608
    %v5620 = vmul.f32 %v4830, %v5609
    %v5621 = vadd.f32 %v5619, %v5620
    %v5622 = vmul.f32 %v4794, %v5610
    %v5623 = vadd.f32 %v5621, %v5622
    %v5624 = vmul.f32 %v4795, %v5611
    %v5625 = vadd.f32 %v5623, %v5624
    %v5626 = vmul.f32 %v4790, %v5608
    %v5627 = vmul.f32 %v4794, %v5609
    %v5628 = vadd.f32 %v5626, %v5627
    %v5629 = vmul.f32 %v4831, %v5610
    %v5630 = vadd.f32 %v5628, %v5629
    %v5631 = vmul.f32 %v4798, %v5611
    %v5632 = vadd.f32 %v5630, %v5631
    %v5633 = vmul.f32 %v4791, %v5608
    %v5634 = vmul.f32 %v4795, %v5609
    %v5635 = vadd.f32 %v5633, %v5634
    %v5636 = vmul.f32 %v4798, %v5610
    %v5637 = vadd.f32 %v5635, %v5636
    %v5638 = vmul.f32 %v4832, %v5611
    %v5639 = vadd.f32 %v5637, %v5638
    %v5640 = vmul.f32 %v5618, %v5618
    %v5641 = vmul.f32 %v5625, %v5625
    %v5642 = vadd.f32 %v5640, %v5641
    %v5643 = vmul.f32 %v5632, %v5632
    %v5644 = vadd.f32 %v5642, %v5643
    %v5645 = vmul.f32 %v5639, %v5639
    %v5646 = vadd.f32 %v5644, %v5645
    %v5647 = vadd.f32 %v5646, 1e-30
    %v5648 = vrsqrt.pop %v5647
    %v5649 = vmul.f32 %v5618, %v5648
    %v5650 = vmul.f32 %v5625, %v5648
    %v5651 = vmul.f32 %v5632, %v5648
    %v5652 = vmul.f32 %v5639, %v5648
    %v5653 = vmul.f32 %v4829, %v5649
    %v5654 = vmul.f32 %v4789, %v5650
    %v5655 = vadd.f32 %v5653, %v5654
    %v5656 = vmul.f32 %v4790, %v5651
    %v5657 = vadd.f32 %v5655, %v5656
    %v5658 = vmul.f32 %v4791, %v5652
    %v5659 = vadd.f32 %v5657, %v5658
    %v5660 = vmul.f32 %v4789, %v5649
    %v5661 = vmul.f32 %v4830, %v5650
    %v5662 = vadd.f32 %v5660, %v5661
    %v5663 = vmul.f32 %v4794, %v5651
    %v5664 = vadd.f32 %v5662, %v5663
    %v5665 = vmul.f32 %v4795, %v5652
    %v5666 = vadd.f32 %v5664, %v5665
    %v5667 = vmul.f32 %v4790, %v5649
    %v5668 = vmul.f32 %v4794, %v5650
    %v5669 = vadd.f32 %v5667, %v5668
    %v5670 = vmul.f32 %v4831, %v5651
    %v5671 = vadd.f32 %v5669, %v5670
    %v5672 = vmul.f32 %v4798, %v5652
    %v5673 = vadd.f32 %v5671, %v5672
    %v5674 = vmul.f32 %v4791, %v5649
    %v5675 = vmul.f32 %v4795, %v5650
    %v5676 = vadd.f32 %v5674, %v5675
    %v5677 = vmul.f32 %v4798, %v5651
    %v5678 = vadd.f32 %v5676, %v5677
    %v5679 = vmul.f32 %v4832, %v5652
    %v5680 = vadd.f32 %v5678, %v5679
    %v5681 = vmul.f32 %v5659, %v5659
    %v5682 = vmul.f32 %v5666, %v5666
    %v5683 = vadd.f32 %v5681, %v5682
    %v5684 = vmul.f32 %v5673, %v5673
    %v5685 = vadd.f32 %v5683, %v5684
    %v5686 = vmul.f32 %v5680, %v5680
    %v5687 = vadd.f32 %v5685, %v5686
    %v5688 = vadd.f32 %v5687, 1e-30
    %v5689 = vrsqrt.pop %v5688
    %v5690 = vmul.f32 %v5659, %v5689
    %v5691 = vmul.f32 %v5666, %v5689
    %v5692 = vmul.f32 %v5673, %v5689
    %v5693 = vmul.f32 %v5680, %v5689
    %v5694 = vmul.f32 %v4829, %v5690
    %v5695 = vmul.f32 %v4789, %v5691
    %v5696 = vadd.f32 %v5694, %v5695
    %v5697 = vmul.f32 %v4790, %v5692
    %v5698 = vadd.f32 %v5696, %v5697
    %v5699 = vmul.f32 %v4791, %v5693
    %v5700 = vadd.f32 %v5698, %v5699
    %v5701 = vmul.f32 %v4789, %v5690
    %v5702 = vmul.f32 %v4830, %v5691
    %v5703 = vadd.f32 %v5701, %v5702
    %v5704 = vmul.f32 %v4794, %v5692
    %v5705 = vadd.f32 %v5703, %v5704
    %v5706 = vmul.f32 %v4795, %v5693
    %v5707 = vadd.f32 %v5705, %v5706
    %v5708 = vmul.f32 %v4790, %v5690
    %v5709 = vmul.f32 %v4794, %v5691
    %v5710 = vadd.f32 %v5708, %v5709
    %v5711 = vmul.f32 %v4831, %v5692
    %v5712 = vadd.f32 %v5710, %v5711
    %v5713 = vmul.f32 %v4798, %v5693
    %v5714 = vadd.f32 %v5712, %v5713
    %v5715 = vmul.f32 %v4791, %v5690
    %v5716 = vmul.f32 %v4795, %v5691
    %v5717 = vadd.f32 %v5715, %v5716
    %v5718 = vmul.f32 %v4798, %v5692
    %v5719 = vadd.f32 %v5717, %v5718
    %v5720 = vmul.f32 %v4832, %v5693
    %v5721 = vadd.f32 %v5719, %v5720
    %v5722 = vmul.f32 %v5700, %v5700
    %v5723 = vmul.f32 %v5707, %v5707
    %v5724 = vadd.f32 %v5722, %v5723
    %v5725 = vmul.f32 %v5714, %v5714
    %v5726 = vadd.f32 %v5724, %v5725
    %v5727 = vmul.f32 %v5721, %v5721
    %v5728 = vadd.f32 %v5726, %v5727
    %v5729 = vadd.f32 %v5728, 1e-30
    %v5730 = vrsqrt.pop %v5729
    %v5731 = vmul.f32 %v5700, %v5730
    %v5732 = vmul.f32 %v5707, %v5730
    %v5733 = vmul.f32 %v5714, %v5730
    %v5734 = vmul.f32 %v5721, %v5730
    %v5735 = vmul.f32 %v4829, %v5731
    %v5736 = vmul.f32 %v4789, %v5732
    %v5737 = vadd.f32 %v5735, %v5736
    %v5738 = vmul.f32 %v4790, %v5733
    %v5739 = vadd.f32 %v5737, %v5738
    %v5740 = vmul.f32 %v4791, %v5734
    %v5741 = vadd.f32 %v5739, %v5740
    %v5742 = vmul.f32 %v4789, %v5731
    %v5743 = vmul.f32 %v4830, %v5732
    %v5744 = vadd.f32 %v5742, %v5743
    %v5745 = vmul.f32 %v4794, %v5733
    %v5746 = vadd.f32 %v5744, %v5745
    %v5747 = vmul.f32 %v4795, %v5734
    %v5748 = vadd.f32 %v5746, %v5747
    %v5749 = vmul.f32 %v4790, %v5731
    %v5750 = vmul.f32 %v4794, %v5732
    %v5751 = vadd.f32 %v5749, %v5750
    %v5752 = vmul.f32 %v4831, %v5733
    %v5753 = vadd.f32 %v5751, %v5752
    %v5754 = vmul.f32 %v4798, %v5734
    %v5755 = vadd.f32 %v5753, %v5754
    %v5756 = vmul.f32 %v4791, %v5731
    %v5757 = vmul.f32 %v4795, %v5732
    %v5758 = vadd.f32 %v5756, %v5757
    %v5759 = vmul.f32 %v4798, %v5733
    %v5760 = vadd.f32 %v5758, %v5759
    %v5761 = vmul.f32 %v4832, %v5734
    %v5762 = vadd.f32 %v5760, %v5761
    %v5763 = vmul.f32 %v5741, %v5741
    %v5764 = vmul.f32 %v5748, %v5748
    %v5765 = vadd.f32 %v5763, %v5764
    %v5766 = vmul.f32 %v5755, %v5755
    %v5767 = vadd.f32 %v5765, %v5766
    %v5768 = vmul.f32 %v5762, %v5762
    %v5769 = vadd.f32 %v5767, %v5768
    %v5770 = vadd.f32 %v5769, 1e-30
    %v5771 = vrsqrt.pop %v5770
    %v5772 = vmul.f32 %v5741, %v5771
    %v5773 = vmul.f32 %v5748, %v5771
    %v5774 = vmul.f32 %v5755, %v5771
    %v5775 = vmul.f32 %v5762, %v5771
    %v5776 = vmul.f32 %v4829, %v5772
    %v5777 = vmul.f32 %v4789, %v5773
    %v5778 = vadd.f32 %v5776, %v5777
    %v5779 = vmul.f32 %v4790, %v5774
    %v5780 = vadd.f32 %v5778, %v5779
    %v5781 = vmul.f32 %v4791, %v5775
    %v5782 = vadd.f32 %v5780, %v5781
    %v5783 = vmul.f32 %v4789, %v5772
    %v5784 = vmul.f32 %v4830, %v5773
    %v5785 = vadd.f32 %v5783, %v5784
    %v5786 = vmul.f32 %v4794, %v5774
    %v5787 = vadd.f32 %v5785, %v5786
    %v5788 = vmul.f32 %v4795, %v5775
    %v5789 = vadd.f32 %v5787, %v5788
    %v5790 = vmul.f32 %v4790, %v5772
    %v5791 = vmul.f32 %v4794, %v5773
    %v5792 = vadd.f32 %v5790, %v5791
    %v5793 = vmul.f32 %v4831, %v5774
    %v5794 = vadd.f32 %v5792, %v5793
    %v5795 = vmul.f32 %v4798, %v5775
    %v5796 = vadd.f32 %v5794, %v5795
    %v5797 = vmul.f32 %v4791, %v5772
    %v5798 = vmul.f32 %v4795, %v5773
    %v5799 = vadd.f32 %v5797, %v5798
    %v5800 = vmul.f32 %v4798, %v5774
    %v5801 = vadd.f32 %v5799, %v5800
    %v5802 = vmul.f32 %v4832, %v5775
    %v5803 = vadd.f32 %v5801, %v5802
    %v5804 = vmul.f32 %v5782, %v5782
    %v5805 = vmul.f32 %v5789, %v5789
    %v5806 = vadd.f32 %v5804, %v5805
    %v5807 = vmul.f32 %v5796, %v5796
    %v5808 = vadd.f32 %v5806, %v5807
    %v5809 = vmul.f32 %v5803, %v5803
    %v5810 = vadd.f32 %v5808, %v5809
    %v5811 = vadd.f32 %v5810, 1e-30
    %v5812 = vrsqrt.pop %v5811
    %v5813 = vmul.f32 %v5782, %v5812
    %v5814 = vmul.f32 %v5789, %v5812
    %v5815 = vmul.f32 %v5796, %v5812
    %v5816 = vmul.f32 %v5803, %v5812
    %v5817 = vmul.f32 %v4829, %v5813
    %v5818 = vmul.f32 %v4789, %v5814
    %v5819 = vadd.f32 %v5817, %v5818
    %v5820 = vmul.f32 %v4790, %v5815
    %v5821 = vadd.f32 %v5819, %v5820
    %v5822 = vmul.f32 %v4791, %v5816
    %v5823 = vadd.f32 %v5821, %v5822
    %v5824 = vmul.f32 %v4789, %v5813
    %v5825 = vmul.f32 %v4830, %v5814
    %v5826 = vadd.f32 %v5824, %v5825
    %v5827 = vmul.f32 %v4794, %v5815
    %v5828 = vadd.f32 %v5826, %v5827
    %v5829 = vmul.f32 %v4795, %v5816
    %v5830 = vadd.f32 %v5828, %v5829
    %v5831 = vmul.f32 %v4790, %v5813
    %v5832 = vmul.f32 %v4794, %v5814
    %v5833 = vadd.f32 %v5831, %v5832
    %v5834 = vmul.f32 %v4831, %v5815
    %v5835 = vadd.f32 %v5833, %v5834
    %v5836 = vmul.f32 %v4798, %v5816
    %v5837 = vadd.f32 %v5835, %v5836
    %v5838 = vmul.f32 %v4791, %v5813
    %v5839 = vmul.f32 %v4795, %v5814
    %v5840 = vadd.f32 %v5838, %v5839
    %v5841 = vmul.f32 %v4798, %v5815
    %v5842 = vadd.f32 %v5840, %v5841
    %v5843 = vmul.f32 %v4832, %v5816
    %v5844 = vadd.f32 %v5842, %v5843
    %v5845 = vmul.f32 %v5823, %v5823
    %v5846 = vmul.f32 %v5830, %v5830
    %v5847 = vadd.f32 %v5845, %v5846
    %v5848 = vmul.f32 %v5837, %v5837
    %v5849 = vadd.f32 %v5847, %v5848
    %v5850 = vmul.f32 %v5844, %v5844
    %v5851 = vadd.f32 %v5849, %v5850
    %v5852 = vadd.f32 %v5851, 1e-30
    %v5853 = vrsqrt.pop %v5852
    %v5854 = vmul.f32 %v5823, %v5853
    %v5855 = vmul.f32 %v5830, %v5853
    %v5856 = vmul.f32 %v5837, %v5853
    %v5857 = vmul.f32 %v5844, %v5853
    %v5858 = vmul.f32 %v4829, %v5854
    %v5859 = vmul.f32 %v4789, %v5855
    %v5860 = vadd.f32 %v5858, %v5859
    %v5861 = vmul.f32 %v4790, %v5856
    %v5862 = vadd.f32 %v5860, %v5861
    %v5863 = vmul.f32 %v4791, %v5857
    %v5864 = vadd.f32 %v5862, %v5863
    %v5865 = vmul.f32 %v4789, %v5854
    %v5866 = vmul.f32 %v4830, %v5855
    %v5867 = vadd.f32 %v5865, %v5866
    %v5868 = vmul.f32 %v4794, %v5856
    %v5869 = vadd.f32 %v5867, %v5868
    %v5870 = vmul.f32 %v4795, %v5857
    %v5871 = vadd.f32 %v5869, %v5870
    %v5872 = vmul.f32 %v4790, %v5854
    %v5873 = vmul.f32 %v4794, %v5855
    %v5874 = vadd.f32 %v5872, %v5873
    %v5875 = vmul.f32 %v4831, %v5856
    %v5876 = vadd.f32 %v5874, %v5875
    %v5877 = vmul.f32 %v4798, %v5857
    %v5878 = vadd.f32 %v5876, %v5877
    %v5879 = vmul.f32 %v4791, %v5854
    %v5880 = vmul.f32 %v4795, %v5855
    %v5881 = vadd.f32 %v5879, %v5880
    %v5882 = vmul.f32 %v4798, %v5856
    %v5883 = vadd.f32 %v5881, %v5882
    %v5884 = vmul.f32 %v4832, %v5857
    %v5885 = vadd.f32 %v5883, %v5884
    %v5886 = vmul.f32 %v5864, %v5864
    %v5887 = vmul.f32 %v5871, %v5871
    %v5888 = vadd.f32 %v5886, %v5887
    %v5889 = vmul.f32 %v5878, %v5878
    %v5890 = vadd.f32 %v5888, %v5889
    %v5891 = vmul.f32 %v5885, %v5885
    %v5892 = vadd.f32 %v5890, %v5891
    %v5893 = vadd.f32 %v5892, 1e-30
    %v5894 = vrsqrt.pop %v5893
    %v5895 = vmul.f32 %v5864, %v5894
    %v5896 = vmul.f32 %v5871, %v5894
    %v5897 = vmul.f32 %v5878, %v5894
    %v5898 = vmul.f32 %v5885, %v5894
    %v5899 = vmul.f32 %v4829, %v5895
    %v5900 = vmul.f32 %v4789, %v5896
    %v5901 = vadd.f32 %v5899, %v5900
    %v5902 = vmul.f32 %v4790, %v5897
    %v5903 = vadd.f32 %v5901, %v5902
    %v5904 = vmul.f32 %v4791, %v5898
    %v5905 = vadd.f32 %v5903, %v5904
    %v5906 = vmul.f32 %v4789, %v5895
    %v5907 = vmul.f32 %v4830, %v5896
    %v5908 = vadd.f32 %v5906, %v5907
    %v5909 = vmul.f32 %v4794, %v5897
    %v5910 = vadd.f32 %v5908, %v5909
    %v5911 = vmul.f32 %v4795, %v5898
    %v5912 = vadd.f32 %v5910, %v5911
    %v5913 = vmul.f32 %v4790, %v5895
    %v5914 = vmul.f32 %v4794, %v5896
    %v5915 = vadd.f32 %v5913, %v5914
    %v5916 = vmul.f32 %v4831, %v5897
    %v5917 = vadd.f32 %v5915, %v5916
    %v5918 = vmul.f32 %v4798, %v5898
    %v5919 = vadd.f32 %v5917, %v5918
    %v5920 = vmul.f32 %v4791, %v5895
    %v5921 = vmul.f32 %v4795, %v5896
    %v5922 = vadd.f32 %v5920, %v5921
    %v5923 = vmul.f32 %v4798, %v5897
    %v5924 = vadd.f32 %v5922, %v5923
    %v5925 = vmul.f32 %v4832, %v5898
    %v5926 = vadd.f32 %v5924, %v5925
    %v5927 = vmul.f32 %v5905, %v5905
    %v5928 = vmul.f32 %v5912, %v5912
    %v5929 = vadd.f32 %v5927, %v5928
    %v5930 = vmul.f32 %v5919, %v5919
    %v5931 = vadd.f32 %v5929, %v5930
    %v5932 = vmul.f32 %v5926, %v5926
    %v5933 = vadd.f32 %v5931, %v5932
    %v5934 = vadd.f32 %v5933, 1e-30
    %v5935 = vrsqrt.pop %v5934
    %v5936 = vmul.f32 %v5905, %v5935
    %v5937 = vmul.f32 %v5912, %v5935
    %v5938 = vmul.f32 %v5919, %v5935
    %v5939 = vmul.f32 %v5926, %v5935
    %v5940 = vmul.f32 %v4829, %v5936
    %v5941 = vmul.f32 %v4789, %v5937
    %v5942 = vadd.f32 %v5940, %v5941
    %v5943 = vmul.f32 %v4790, %v5938
    %v5944 = vadd.f32 %v5942, %v5943
    %v5945 = vmul.f32 %v4791, %v5939
    %v5946 = vadd.f32 %v5944, %v5945
    %v5947 = vmul.f32 %v4789, %v5936
    %v5948 = vmul.f32 %v4830, %v5937
    %v5949 = vadd.f32 %v5947, %v5948
    %v5950 = vmul.f32 %v4794, %v5938
    %v5951 = vadd.f32 %v5949, %v5950
    %v5952 = vmul.f32 %v4795, %v5939
    %v5953 = vadd.f32 %v5951, %v5952
    %v5954 = vmul.f32 %v4790, %v5936
    %v5955 = vmul.f32 %v4794, %v5937
    %v5956 = vadd.f32 %v5954, %v5955
    %v5957 = vmul.f32 %v4831, %v5938
    %v5958 = vadd.f32 %v5956, %v5957
    %v5959 = vmul.f32 %v4798, %v5939
    %v5960 = vadd.f32 %v5958, %v5959
    %v5961 = vmul.f32 %v4791, %v5936
    %v5962 = vmul.f32 %v4795, %v5937
    %v5963 = vadd.f32 %v5961, %v5962
    %v5964 = vmul.f32 %v4798, %v5938
    %v5965 = vadd.f32 %v5963, %v5964
    %v5966 = vmul.f32 %v4832, %v5939
    %v5967 = vadd.f32 %v5965, %v5966
    %v5968 = vmul.f32 %v5946, %v5946
    %v5969 = vmul.f32 %v5953, %v5953
    %v5970 = vadd.f32 %v5968, %v5969
    %v5971 = vmul.f32 %v5960, %v5960
    %v5972 = vadd.f32 %v5970, %v5971
    %v5973 = vmul.f32 %v5967, %v5967
    %v5974 = vadd.f32 %v5972, %v5973
    %v5975 = vadd.f32 %v5974, 1e-30
    %v5976 = vrsqrt.pop %v5975
    %v5977 = vmul.f32 %v5946, %v5976
    %v5978 = vmul.f32 %v5953, %v5976
    %v5979 = vmul.f32 %v5960, %v5976
    %v5980 = vmul.f32 %v5967, %v5976
    %v5981 = vmul.f32 %v4829, %v5977
    %v5982 = vmul.f32 %v4789, %v5978
    %v5983 = vadd.f32 %v5981, %v5982
    %v5984 = vmul.f32 %v4790, %v5979
    %v5985 = vadd.f32 %v5983, %v5984
    %v5986 = vmul.f32 %v4791, %v5980
    %v5987 = vadd.f32 %v5985, %v5986
    %v5988 = vmul.f32 %v4789, %v5977
    %v5989 = vmul.f32 %v4830, %v5978
    %v5990 = vadd.f32 %v5988, %v5989
    %v5991 = vmul.f32 %v4794, %v5979
    %v5992 = vadd.f32 %v5990, %v5991
    %v5993 = vmul.f32 %v4795, %v5980
    %v5994 = vadd.f32 %v5992, %v5993
    %v5995 = vmul.f32 %v4790, %v5977
    %v5996 = vmul.f32 %v4794, %v5978
    %v5997 = vadd.f32 %v5995, %v5996
    %v5998 = vmul.f32 %v4831, %v5979
    %v5999 = vadd.f32 %v5997, %v5998
    %v6000 = vmul.f32 %v4798, %v5980
    %v6001 = vadd.f32 %v5999, %v6000
    %v6002 = vmul.f32 %v4791, %v5977
    %v6003 = vmul.f32 %v4795, %v5978
    %v6004 = vadd.f32 %v6002, %v6003
    %v6005 = vmul.f32 %v4798, %v5979
    %v6006 = vadd.f32 %v6004, %v6005
    %v6007 = vmul.f32 %v4832, %v5980
    %v6008 = vadd.f32 %v6006, %v6007
    %v6009 = vmul.f32 %v5987, %v5987
    %v6010 = vmul.f32 %v5994, %v5994
    %v6011 = vadd.f32 %v6009, %v6010
    %v6012 = vmul.f32 %v6001, %v6001
    %v6013 = vadd.f32 %v6011, %v6012
    %v6014 = vmul.f32 %v6008, %v6008
    %v6015 = vadd.f32 %v6013, %v6014
    %v6016 = vadd.f32 %v6015, 1e-30
    %v6017 = vrsqrt.pop %v6016
    %v6018 = vmul.f32 %v5987, %v6017
    %v6019 = vmul.f32 %v5994, %v6017
    %v6020 = vmul.f32 %v6001, %v6017
    %v6021 = vmul.f32 %v6008, %v6017
    %v6022 = vmul.f32 %v4829, %v6018
    %v6023 = vmul.f32 %v4789, %v6019
    %v6024 = vadd.f32 %v6022, %v6023
    %v6025 = vmul.f32 %v4790, %v6020
    %v6026 = vadd.f32 %v6024, %v6025
    %v6027 = vmul.f32 %v4791, %v6021
    %v6028 = vadd.f32 %v6026, %v6027
    %v6029 = vmul.f32 %v4789, %v6018
    %v6030 = vmul.f32 %v4830, %v6019
    %v6031 = vadd.f32 %v6029, %v6030
    %v6032 = vmul.f32 %v4794, %v6020
    %v6033 = vadd.f32 %v6031, %v6032
    %v6034 = vmul.f32 %v4795, %v6021
    %v6035 = vadd.f32 %v6033, %v6034
    %v6036 = vmul.f32 %v4790, %v6018
    %v6037 = vmul.f32 %v4794, %v6019
    %v6038 = vadd.f32 %v6036, %v6037
    %v6039 = vmul.f32 %v4831, %v6020
    %v6040 = vadd.f32 %v6038, %v6039
    %v6041 = vmul.f32 %v4798, %v6021
    %v6042 = vadd.f32 %v6040, %v6041
    %v6043 = vmul.f32 %v4791, %v6018
    %v6044 = vmul.f32 %v4795, %v6019
    %v6045 = vadd.f32 %v6043, %v6044
    %v6046 = vmul.f32 %v4798, %v6020
    %v6047 = vadd.f32 %v6045, %v6046
    %v6048 = vmul.f32 %v4832, %v6021
    %v6049 = vadd.f32 %v6047, %v6048
    %v6050 = vmul.f32 %v6028, %v6028
    %v6051 = vmul.f32 %v6035, %v6035
    %v6052 = vadd.f32 %v6050, %v6051
    %v6053 = vmul.f32 %v6042, %v6042
    %v6054 = vadd.f32 %v6052, %v6053
    %v6055 = vmul.f32 %v6049, %v6049
    %v6056 = vadd.f32 %v6054, %v6055
    %v6057 = vadd.f32 %v6056, 1e-30
    %v6058 = vrsqrt.pop %v6057
    %v6059 = vmul.f32 %v6028, %v6058
    %v6060 = vmul.f32 %v6035, %v6058
    %v6061 = vmul.f32 %v6042, %v6058
    %v6062 = vmul.f32 %v6049, %v6058
    %v6063 = vmul.f32 %v4829, %v6059
    %v6064 = vmul.f32 %v4789, %v6060
    %v6065 = vadd.f32 %v6063, %v6064
    %v6066 = vmul.f32 %v4790, %v6061
    %v6067 = vadd.f32 %v6065, %v6066
    %v6068 = vmul.f32 %v4791, %v6062
    %v6069 = vadd.f32 %v6067, %v6068
    %v6070 = vmul.f32 %v4789, %v6059
    %v6071 = vmul.f32 %v4830, %v6060
    %v6072 = vadd.f32 %v6070, %v6071
    %v6073 = vmul.f32 %v4794, %v6061
    %v6074 = vadd.f32 %v6072, %v6073
    %v6075 = vmul.f32 %v4795, %v6062
    %v6076 = vadd.f32 %v6074, %v6075
    %v6077 = vmul.f32 %v4790, %v6059
    %v6078 = vmul.f32 %v4794, %v6060
    %v6079 = vadd.f32 %v6077, %v6078
    %v6080 = vmul.f32 %v4831, %v6061
    %v6081 = vadd.f32 %v6079, %v6080
    %v6082 = vmul.f32 %v4798, %v6062
    %v6083 = vadd.f32 %v6081, %v6082
    %v6084 = vmul.f32 %v4791, %v6059
    %v6085 = vmul.f32 %v4795, %v6060
    %v6086 = vadd.f32 %v6084, %v6085
    %v6087 = vmul.f32 %v4798, %v6061
    %v6088 = vadd.f32 %v6086, %v6087
    %v6089 = vmul.f32 %v4832, %v6062
    %v6090 = vadd.f32 %v6088, %v6089
    %v6091 = vmul.f32 %v6069, %v6069
    %v6092 = vmul.f32 %v6076, %v6076
    %v6093 = vadd.f32 %v6091, %v6092
    %v6094 = vmul.f32 %v6083, %v6083
    %v6095 = vadd.f32 %v6093, %v6094
    %v6096 = vmul.f32 %v6090, %v6090
    %v6097 = vadd.f32 %v6095, %v6096
    %v6098 = vadd.f32 %v6097, 1e-30
    %v6099 = vrsqrt.pop %v6098
    %v6100 = vmul.f32 %v6069, %v6099
    %v6101 = vmul.f32 %v6076, %v6099
    %v6102 = vmul.f32 %v6083, %v6099
    %v6103 = vmul.f32 %v6090, %v6099
    %v6104 = vmul.f32 %v4829, %v6100
    %v6105 = vmul.f32 %v4789, %v6101
    %v6106 = vadd.f32 %v6104, %v6105
    %v6107 = vmul.f32 %v4790, %v6102
    %v6108 = vadd.f32 %v6106, %v6107
    %v6109 = vmul.f32 %v4791, %v6103
    %v6110 = vadd.f32 %v6108, %v6109
    %v6111 = vmul.f32 %v4789, %v6100
    %v6112 = vmul.f32 %v4830, %v6101
    %v6113 = vadd.f32 %v6111, %v6112
    %v6114 = vmul.f32 %v4794, %v6102
    %v6115 = vadd.f32 %v6113, %v6114
    %v6116 = vmul.f32 %v4795, %v6103
    %v6117 = vadd.f32 %v6115, %v6116
    %v6118 = vmul.f32 %v4790, %v6100
    %v6119 = vmul.f32 %v4794, %v6101
    %v6120 = vadd.f32 %v6118, %v6119
    %v6121 = vmul.f32 %v4831, %v6102
    %v6122 = vadd.f32 %v6120, %v6121
    %v6123 = vmul.f32 %v4798, %v6103
    %v6124 = vadd.f32 %v6122, %v6123
    %v6125 = vmul.f32 %v4791, %v6100
    %v6126 = vmul.f32 %v4795, %v6101
    %v6127 = vadd.f32 %v6125, %v6126
    %v6128 = vmul.f32 %v4798, %v6102
    %v6129 = vadd.f32 %v6127, %v6128
    %v6130 = vmul.f32 %v4832, %v6103
    %v6131 = vadd.f32 %v6129, %v6130
    %v6132 = vmul.f32 %v6110, %v6110
    %v6133 = vmul.f32 %v6117, %v6117
    %v6134 = vadd.f32 %v6132, %v6133
    %v6135 = vmul.f32 %v6124, %v6124
    %v6136 = vadd.f32 %v6134, %v6135
    %v6137 = vmul.f32 %v6131, %v6131
    %v6138 = vadd.f32 %v6136, %v6137
    %v6139 = vadd.f32 %v6138, 1e-30
    %v6140 = vrsqrt.pop %v6139
    %v6141 = vmul.f32 %v6110, %v6140
    %v6142 = vmul.f32 %v6117, %v6140
    %v6143 = vmul.f32 %v6124, %v6140
    %v6144 = vmul.f32 %v6131, %v6140
    %v6145 = vmul.f32 %v4788, %v6141
    %v6146 = vmul.f32 %v4789, %v6142
    %v6147 = vadd.f32 %v6145, %v6146
    %v6148 = vmul.f32 %v4790, %v6143
    %v6149 = vadd.f32 %v6147, %v6148
    %v6150 = vmul.f32 %v4791, %v6144
    %v6151 = vadd.f32 %v6149, %v6150
    %v6152 = vmul.f32 %v4789, %v6141
    %v6153 = vmul.f32 %v4793, %v6142
    %v6154 = vadd.f32 %v6152, %v6153
    %v6155 = vmul.f32 %v4794, %v6143
    %v6156 = vadd.f32 %v6154, %v6155
    %v6157 = vmul.f32 %v4795, %v6144
    %v6158 = vadd.f32 %v6156, %v6157
    %v6159 = vmul.f32 %v4790, %v6141
    %v6160 = vmul.f32 %v4794, %v6142
    %v6161 = vadd.f32 %v6159, %v6160
    %v6162 = vmul.f32 %v4797, %v6143
    %v6163 = vadd.f32 %v6161, %v6162
    %v6164 = vmul.f32 %v4798, %v6144
    %v6165 = vadd.f32 %v6163, %v6164
    %v6166 = vmul.f32 %v4791, %v6141
    %v6167 = vmul.f32 %v4795, %v6142
    %v6168 = vadd.f32 %v6166, %v6167
    %v6169 = vmul.f32 %v4798, %v6143
    %v6170 = vadd.f32 %v6168, %v6169
    %v6171 = vmul.f32 %v4800, %v6144
    %v6172 = vadd.f32 %v6170, %v6171
    %v6173 = vmul.f32 %v6141, %v6151
    %v6174 = vmul.f32 %v6142, %v6158
    %v6175 = vadd.f32 %v6173, %v6174
    %v6176 = vmul.f32 %v6143, %v6165
    %v6177 = vadd.f32 %v6175, %v6176
    %v6178 = vmul.f32 %v6144, %v6172
    %v6179 = vadd.f32 %v6177, %v6178
    %v6180 = vrcp.pop %v4786
    %v6181 = vmul.f32 %v6179, %v6180
    %v6182 = vmul.f32 %v6141, %v6141
    %v6183 = vmul.f32 %v6142, %v6142
    %v6184 = vadd.f32 %v6182, %v6183
    %v6185 = vmul.f32 %v6143, %v6143
    %v6186 = vsub.f32 %v6184, %v6185
    %v6187 = vmul.f32 %v6144, %v6144
    %v6188 = vsub.f32 %v6186, %v6187
    %v6189 = vmul.f32 %v6142, %v6143
    %v6190 = vmul.f32 %v6141, %v6144
    %v6191 = vsub.f32 %v6189, %v6190
    %v6192 = vmul.f32 %v6191, 2.0
    %v6193 = vmul.f32 %v6142, %v6144
    %v6194 = vmul.f32 %v6141, %v6143
    %v6195 = vadd.f32 %v6193, %v6194
    %v6196 = vmul.f32 %v6195, 2.0
    %v6197 = vadd.f32 %v6189, %v6190
    %v6198 = vmul.f32 %v6197, 2.0
    %v6199 = vsub.f32 %v6182, %v6183
    %v6200 = vadd.f32 %v6199, %v6185
    %v6201 = vsub.f32 %v6200, %v6187
    %v6202 = vmul.f32 %v6143, %v6144
    %v6203 = vmul.f32 %v6141, %v6142
    %v6204 = vsub.f32 %v6202, %v6203
    %v6205 = vmul.f32 %v6204, 2.0
    %v6206 = vsub.f32 %v6193, %v6194
    %v6207 = vmul.f32 %v6206, 2.0
    %v6208 = vadd.f32 %v6202, %v6203
    %v6209 = vmul.f32 %v6208, 2.0
    %v6210 = vsub.f32 %v6199, %v6185
    %v6211 = vadd.f32 %v6210, %v6187
    %v6212 = vmul.f32 %v6181, %v6188
    %v6213 = vmul.f32 %v6181, %v6192
    %v6214 = vmul.f32 %v6181, %v6196
    %v6215 = vmul.f32 %v6181, %v6198
    %v6216 = vmul.f32 %v6181, %v6201
    %v6217 = vmul.f32 %v6181, %v6205
    %v6218 = vmul.f32 %v6181, %v6207
    %v6219 = vmul.f32 %v6181, %v6209
    %v6220 = vmul.f32 %v6181, %v6211
    %s6221 = sld [smem:[#allocation2]]
    %v6222 = vmul.f32 %v6212, %v1070
    %v6223 = vmul.f32 %v6213, %v1071
    %v6224 = vadd.f32 %v6222, %v6223
    %v6225 = vmul.f32 %v6214, %v1072
    %v6226 = vadd.f32 %v6224, %v6225
    %v6227 = vstv %s6221
    %v6228 = vsub.f32 %v6227, %v6226
    %s6229 = sld [smem:[#allocation2 + $0x1]]
    %v6230 = vmul.f32 %v6215, %v1070
    %v6231 = vmul.f32 %v6216, %v1071
    %v6232 = vadd.f32 %v6230, %v6231
    %v6233 = vmul.f32 %v6217, %v1072
    %v6234 = vadd.f32 %v6232, %v6233
    %v6235 = vstv %s6229
    %v6236 = vsub.f32 %v6235, %v6234
    %s6237 = sld [smem:[#allocation2 + $0x2]]
    %v6238 = vmul.f32 %v6218, %v1070
    %v6239 = vmul.f32 %v6219, %v1071
    %v6240 = vadd.f32 %v6238, %v6239
    %v6241 = vmul.f32 %v6220, %v1072
    %v6242 = vadd.f32 %v6240, %v6241
    %v6243 = vstv %s6237
    %v6244 = vsub.f32 %v6243, %v6242
    %v6245 = vmul.f32 %v6212, %v29
    %v6246 = vmul.f32 %v6212, %v30
    %v6247 = vmul.f32 %v6212, %v31
    %v6248 = vmul.f32 %v6212, %v32
    %v6249 = vmul.f32 %v6212, %v33
    %v6250 = vmul.f32 %v6212, %v34
    %v6251 = vmul.f32 %v6212, %v35
    %v6252 = vmul.f32 %v6212, %v36
    %v6253 = vmul.f32 %v6212, %v37
    %v6254 = vmul.f32 %v6212, %v38
    %v6255 = vmul.f32 %v6212, %v39
    %v6256 = vmul.f32 %v6212, %v40
    %v6257 = vmul.f32 %v6212, %v41
    %v6258 = vmul.f32 %v6212, %v42
    %v6259 = vmul.f32 %v6212, %v43
    %v6260 = vmul.f32 %v6212, %v44
    %v6261 = vmul.f32 %v6212, %v45
    %v6262 = vmul.f32 %v6212, %v46
    %v6263 = vmul.f32 %v6212, %v47
    %v6264 = vmul.f32 %v6212, %v48
    %v6265 = vmul.f32 %v6212, %v49
    %v6266 = vmul.f32 %v6212, %v50
    %v6267 = vmul.f32 %v6212, %v51
    %v6268 = vmul.f32 %v6212, %v52
    %v6269 = vmul.f32 %v6212, %v53
    %v6270 = vmul.f32 %v6212, %v54
    %v6271 = vmul.f32 %v6212, %v55
    %v6272 = vmul.f32 %v6212, %v56
    %v6273 = vmul.f32 %v6212, %v57
    %v6274 = vmul.f32 %v6212, %v58
    %v6275 = vmul.f32 %v6212, %v59
    %v6276 = vmul.f32 %v6212, %v60
    %v6277 = vmul.f32 %v6212, %v61
    %v6278 = vmul.f32 %v6212, %v62
    %v6279 = vmul.f32 %v6212, %v63
    %v6280 = vmul.f32 %v6212, %v64
    %v6281 = vmul.f32 %v6212, %v65
    %v6282 = vmul.f32 %v6212, %v66
    %v6283 = vmul.f32 %v6212, %v67
    %v6284 = vmul.f32 %v6212, %v68
    %v6285 = vmul.f32 %v6212, %v69
    %v6286 = vmul.f32 %v6212, %v70
    %v6287 = vmul.f32 %v6212, %v71
    %v6288 = vmul.f32 %v6212, %v72
    %v6289 = vmul.f32 %v6212, %v73
    %v6290 = vmul.f32 %v6212, %v74
    %v6291 = vmul.f32 %v6212, %v75
    %v6292 = vmul.f32 %v6212, %v76
    %v6293 = vmul.f32 %v6212, %v77
    %v6294 = vmul.f32 %v6212, %v78
    %v6295 = vmul.f32 %v6212, %v79
    %v6296 = vmul.f32 %v6212, %v80
    %v6297 = vmul.f32 %v6212, %v81
    %v6298 = vmul.f32 %v6212, %v82
    %v6299 = vmul.f32 %v6212, %v83
    %v6300 = vmul.f32 %v6212, %v84
    %v6301 = vmul.f32 %v6212, %v85
    %v6302 = vmul.f32 %v6212, %v86
    %v6303 = vmul.f32 %v6212, %v87
    %v6304 = vmul.f32 %v6212, %v88
    %v6305 = vmul.f32 %v6212, %v89
    %v6306 = vmul.f32 %v6212, %v90
    %v6307 = vmul.f32 %v6212, %v91
    %v6308 = vmul.f32 %v6212, %v92
    %v6309 = vmul.f32 %v6213, %v93
    %v6310 = vmul.f32 %v6213, %v94
    %v6311 = vmul.f32 %v6213, %v95
    %v6312 = vmul.f32 %v6213, %v96
    %v6313 = vmul.f32 %v6213, %v97
    %v6314 = vmul.f32 %v6213, %v98
    %v6315 = vmul.f32 %v6213, %v99
    %v6316 = vmul.f32 %v6213, %v100
    %v6317 = vmul.f32 %v6213, %v101
    %v6318 = vmul.f32 %v6213, %v102
    %v6319 = vmul.f32 %v6213, %v103
    %v6320 = vmul.f32 %v6213, %v104
    %v6321 = vmul.f32 %v6213, %v105
    %v6322 = vmul.f32 %v6213, %v106
    %v6323 = vmul.f32 %v6213, %v107
    %v6324 = vmul.f32 %v6213, %v108
    %v6325 = vmul.f32 %v6213, %v109
    %v6326 = vmul.f32 %v6213, %v110
    %v6327 = vmul.f32 %v6213, %v111
    %v6328 = vmul.f32 %v6213, %v112
    %v6329 = vmul.f32 %v6213, %v113
    %v6330 = vmul.f32 %v6213, %v114
    %v6331 = vmul.f32 %v6213, %v115
    %v6332 = vmul.f32 %v6213, %v116
    %v6333 = vmul.f32 %v6213, %v117
    %v6334 = vmul.f32 %v6213, %v118
    %v6335 = vmul.f32 %v6213, %v119
    %v6336 = vmul.f32 %v6213, %v120
    %v6337 = vmul.f32 %v6213, %v121
    %v6338 = vmul.f32 %v6213, %v122
    %v6339 = vmul.f32 %v6213, %v123
    %v6340 = vmul.f32 %v6213, %v124
    %v6341 = vmul.f32 %v6213, %v125
    %v6342 = vmul.f32 %v6213, %v126
    %v6343 = vmul.f32 %v6213, %v127
    %v6344 = vmul.f32 %v6213, %v128
    %v6345 = vmul.f32 %v6213, %v129
    %v6346 = vmul.f32 %v6213, %v130
    %v6347 = vmul.f32 %v6213, %v131
    %v6348 = vmul.f32 %v6213, %v132
    %v6349 = vmul.f32 %v6213, %v133
    %v6350 = vmul.f32 %v6213, %v134
    %v6351 = vmul.f32 %v6213, %v135
    %v6352 = vmul.f32 %v6213, %v136
    %v6353 = vmul.f32 %v6213, %v137
    %v6354 = vmul.f32 %v6213, %v138
    %v6355 = vmul.f32 %v6213, %v139
    %v6356 = vmul.f32 %v6213, %v140
    %v6357 = vmul.f32 %v6213, %v141
    %v6358 = vmul.f32 %v6213, %v142
    %v6359 = vmul.f32 %v6213, %v143
    %v6360 = vmul.f32 %v6213, %v144
    %v6361 = vmul.f32 %v6213, %v145
    %v6362 = vmul.f32 %v6213, %v146
    %v6363 = vmul.f32 %v6213, %v147
    %v6364 = vmul.f32 %v6213, %v148
    %v6365 = vmul.f32 %v6213, %v149
    %v6366 = vmul.f32 %v6213, %v150
    %v6367 = vmul.f32 %v6213, %v151
    %v6368 = vmul.f32 %v6213, %v152
    %v6369 = vmul.f32 %v6213, %v153
    %v6370 = vmul.f32 %v6213, %v154
    %v6371 = vmul.f32 %v6213, %v155
    %v6372 = vmul.f32 %v6213, %v156
    %v6373 = vadd.f32 %v6245, %v6309
    %v6374 = vadd.f32 %v6246, %v6310
    %v6375 = vadd.f32 %v6247, %v6311
    %v6376 = vadd.f32 %v6248, %v6312
    %v6377 = vadd.f32 %v6249, %v6313
    %v6378 = vadd.f32 %v6250, %v6314
    %v6379 = vadd.f32 %v6251, %v6315
    %v6380 = vadd.f32 %v6252, %v6316
    %v6381 = vadd.f32 %v6253, %v6317
    %v6382 = vadd.f32 %v6254, %v6318
    %v6383 = vadd.f32 %v6255, %v6319
    %v6384 = vadd.f32 %v6256, %v6320
    %v6385 = vadd.f32 %v6257, %v6321
    %v6386 = vadd.f32 %v6258, %v6322
    %v6387 = vadd.f32 %v6259, %v6323
    %v6388 = vadd.f32 %v6260, %v6324
    %v6389 = vadd.f32 %v6261, %v6325
    %v6390 = vadd.f32 %v6262, %v6326
    %v6391 = vadd.f32 %v6263, %v6327
    %v6392 = vadd.f32 %v6264, %v6328
    %v6393 = vadd.f32 %v6265, %v6329
    %v6394 = vadd.f32 %v6266, %v6330
    %v6395 = vadd.f32 %v6267, %v6331
    %v6396 = vadd.f32 %v6268, %v6332
    %v6397 = vadd.f32 %v6269, %v6333
    %v6398 = vadd.f32 %v6270, %v6334
    %v6399 = vadd.f32 %v6271, %v6335
    %v6400 = vadd.f32 %v6272, %v6336
    %v6401 = vadd.f32 %v6273, %v6337
    %v6402 = vadd.f32 %v6274, %v6338
    %v6403 = vadd.f32 %v6275, %v6339
    %v6404 = vadd.f32 %v6276, %v6340
    %v6405 = vadd.f32 %v6277, %v6341
    %v6406 = vadd.f32 %v6278, %v6342
    %v6407 = vadd.f32 %v6279, %v6343
    %v6408 = vadd.f32 %v6280, %v6344
    %v6409 = vadd.f32 %v6281, %v6345
    %v6410 = vadd.f32 %v6282, %v6346
    %v6411 = vadd.f32 %v6283, %v6347
    %v6412 = vadd.f32 %v6284, %v6348
    %v6413 = vadd.f32 %v6285, %v6349
    %v6414 = vadd.f32 %v6286, %v6350
    %v6415 = vadd.f32 %v6287, %v6351
    %v6416 = vadd.f32 %v6288, %v6352
    %v6417 = vadd.f32 %v6289, %v6353
    %v6418 = vadd.f32 %v6290, %v6354
    %v6419 = vadd.f32 %v6291, %v6355
    %v6420 = vadd.f32 %v6292, %v6356
    %v6421 = vadd.f32 %v6293, %v6357
    %v6422 = vadd.f32 %v6294, %v6358
    %v6423 = vadd.f32 %v6295, %v6359
    %v6424 = vadd.f32 %v6296, %v6360
    %v6425 = vadd.f32 %v6297, %v6361
    %v6426 = vadd.f32 %v6298, %v6362
    %v6427 = vadd.f32 %v6299, %v6363
    %v6428 = vadd.f32 %v6300, %v6364
    %v6429 = vadd.f32 %v6301, %v6365
    %v6430 = vadd.f32 %v6302, %v6366
    %v6431 = vadd.f32 %v6303, %v6367
    %v6432 = vadd.f32 %v6304, %v6368
    %v6433 = vadd.f32 %v6305, %v6369
    %v6434 = vadd.f32 %v6306, %v6370
    %v6435 = vadd.f32 %v6307, %v6371
    %v6436 = vadd.f32 %v6308, %v6372
    %v6437 = vmul.f32 %v6214, %v157
    %v6438 = vmul.f32 %v6214, %v158
    %v6439 = vmul.f32 %v6214, %v159
    %v6440 = vmul.f32 %v6214, %v160
    %v6441 = vmul.f32 %v6214, %v161
    %v6442 = vmul.f32 %v6214, %v162
    %v6443 = vmul.f32 %v6214, %v163
    %v6444 = vmul.f32 %v6214, %v164
    %v6445 = vmul.f32 %v6214, %v165
    %v6446 = vmul.f32 %v6214, %v166
    %v6447 = vmul.f32 %v6214, %v167
    %v6448 = vmul.f32 %v6214, %v168
    %v6449 = vmul.f32 %v6214, %v169
    %v6450 = vmul.f32 %v6214, %v170
    %v6451 = vmul.f32 %v6214, %v171
    %v6452 = vmul.f32 %v6214, %v172
    %v6453 = vmul.f32 %v6214, %v173
    %v6454 = vmul.f32 %v6214, %v174
    %v6455 = vmul.f32 %v6214, %v175
    %v6456 = vmul.f32 %v6214, %v176
    %v6457 = vmul.f32 %v6214, %v177
    %v6458 = vmul.f32 %v6214, %v178
    %v6459 = vmul.f32 %v6214, %v179
    %v6460 = vmul.f32 %v6214, %v180
    %v6461 = vmul.f32 %v6214, %v181
    %v6462 = vmul.f32 %v6214, %v182
    %v6463 = vmul.f32 %v6214, %v183
    %v6464 = vmul.f32 %v6214, %v184
    %v6465 = vmul.f32 %v6214, %v185
    %v6466 = vmul.f32 %v6214, %v186
    %v6467 = vmul.f32 %v6214, %v187
    %v6468 = vmul.f32 %v6214, %v188
    %v6469 = vmul.f32 %v6214, %v189
    %v6470 = vmul.f32 %v6214, %v190
    %v6471 = vmul.f32 %v6214, %v191
    %v6472 = vmul.f32 %v6214, %v192
    %v6473 = vmul.f32 %v6214, %v193
    %v6474 = vmul.f32 %v6214, %v194
    %v6475 = vmul.f32 %v6214, %v195
    %v6476 = vmul.f32 %v6214, %v196
    %v6477 = vmul.f32 %v6214, %v197
    %v6478 = vmul.f32 %v6214, %v198
    %v6479 = vmul.f32 %v6214, %v199
    %v6480 = vmul.f32 %v6214, %v200
    %v6481 = vmul.f32 %v6214, %v201
    %v6482 = vmul.f32 %v6214, %v202
    %v6483 = vmul.f32 %v6214, %v203
    %v6484 = vmul.f32 %v6214, %v204
    %v6485 = vmul.f32 %v6214, %v205
    %v6486 = vmul.f32 %v6214, %v206
    %v6487 = vmul.f32 %v6214, %v207
    %v6488 = vmul.f32 %v6214, %v208
    %v6489 = vmul.f32 %v6214, %v209
    %v6490 = vmul.f32 %v6214, %v210
    %v6491 = vmul.f32 %v6214, %v211
    %v6492 = vmul.f32 %v6214, %v212
    %v6493 = vmul.f32 %v6214, %v213
    %v6494 = vmul.f32 %v6214, %v214
    %v6495 = vmul.f32 %v6214, %v215
    %v6496 = vmul.f32 %v6214, %v216
    %v6497 = vmul.f32 %v6214, %v217
    %v6498 = vmul.f32 %v6214, %v218
    %v6499 = vmul.f32 %v6214, %v219
    %v6500 = vmul.f32 %v6214, %v220
    %v6501 = vadd.f32 %v6373, %v6437
    %v6502 = vadd.f32 %v6374, %v6438
    %v6503 = vadd.f32 %v6375, %v6439
    %v6504 = vadd.f32 %v6376, %v6440
    %v6505 = vadd.f32 %v6377, %v6441
    %v6506 = vadd.f32 %v6378, %v6442
    %v6507 = vadd.f32 %v6379, %v6443
    %v6508 = vadd.f32 %v6380, %v6444
    %v6509 = vadd.f32 %v6381, %v6445
    %v6510 = vadd.f32 %v6382, %v6446
    %v6511 = vadd.f32 %v6383, %v6447
    %v6512 = vadd.f32 %v6384, %v6448
    %v6513 = vadd.f32 %v6385, %v6449
    %v6514 = vadd.f32 %v6386, %v6450
    %v6515 = vadd.f32 %v6387, %v6451
    %v6516 = vadd.f32 %v6388, %v6452
    %v6517 = vadd.f32 %v6389, %v6453
    %v6518 = vadd.f32 %v6390, %v6454
    %v6519 = vadd.f32 %v6391, %v6455
    %v6520 = vadd.f32 %v6392, %v6456
    %v6521 = vadd.f32 %v6393, %v6457
    %v6522 = vadd.f32 %v6394, %v6458
    %v6523 = vadd.f32 %v6395, %v6459
    %v6524 = vadd.f32 %v6396, %v6460
    %v6525 = vadd.f32 %v6397, %v6461
    %v6526 = vadd.f32 %v6398, %v6462
    %v6527 = vadd.f32 %v6399, %v6463
    %v6528 = vadd.f32 %v6400, %v6464
    %v6529 = vadd.f32 %v6401, %v6465
    %v6530 = vadd.f32 %v6402, %v6466
    %v6531 = vadd.f32 %v6403, %v6467
    %v6532 = vadd.f32 %v6404, %v6468
    %v6533 = vadd.f32 %v6405, %v6469
    %v6534 = vadd.f32 %v6406, %v6470
    %v6535 = vadd.f32 %v6407, %v6471
    %v6536 = vadd.f32 %v6408, %v6472
    %v6537 = vadd.f32 %v6409, %v6473
    %v6538 = vadd.f32 %v6410, %v6474
    %v6539 = vadd.f32 %v6411, %v6475
    %v6540 = vadd.f32 %v6412, %v6476
    %v6541 = vadd.f32 %v6413, %v6477
    %v6542 = vadd.f32 %v6414, %v6478
    %v6543 = vadd.f32 %v6415, %v6479
    %v6544 = vadd.f32 %v6416, %v6480
    %v6545 = vadd.f32 %v6417, %v6481
    %v6546 = vadd.f32 %v6418, %v6482
    %v6547 = vadd.f32 %v6419, %v6483
    %v6548 = vadd.f32 %v6420, %v6484
    %v6549 = vadd.f32 %v6421, %v6485
    %v6550 = vadd.f32 %v6422, %v6486
    %v6551 = vadd.f32 %v6423, %v6487
    %v6552 = vadd.f32 %v6424, %v6488
    %v6553 = vadd.f32 %v6425, %v6489
    %v6554 = vadd.f32 %v6426, %v6490
    %v6555 = vadd.f32 %v6427, %v6491
    %v6556 = vadd.f32 %v6428, %v6492
    %v6557 = vadd.f32 %v6429, %v6493
    %v6558 = vadd.f32 %v6430, %v6494
    %v6559 = vadd.f32 %v6431, %v6495
    %v6560 = vadd.f32 %v6432, %v6496
    %v6561 = vadd.f32 %v6433, %v6497
    %v6562 = vadd.f32 %v6434, %v6498
    %v6563 = vadd.f32 %v6435, %v6499
    %v6564 = vadd.f32 %v6436, %v6500
    %v6565 = vadd.f32 %v6501, %v6228
    %v6566 = vadd.f32 %v6502, %v6228
    %v6567 = vadd.f32 %v6503, %v6228
    %v6568 = vadd.f32 %v6504, %v6228
    %v6569 = vadd.f32 %v6505, %v6228
    %v6570 = vadd.f32 %v6506, %v6228
    %v6571 = vadd.f32 %v6507, %v6228
    %v6572 = vadd.f32 %v6508, %v6228
    %v6573 = vadd.f32 %v6509, %v6228
    %v6574 = vadd.f32 %v6510, %v6228
    %v6575 = vadd.f32 %v6511, %v6228
    %v6576 = vadd.f32 %v6512, %v6228
    %v6577 = vadd.f32 %v6513, %v6228
    %v6578 = vadd.f32 %v6514, %v6228
    %v6579 = vadd.f32 %v6515, %v6228
    %v6580 = vadd.f32 %v6516, %v6228
    %v6581 = vadd.f32 %v6517, %v6228
    %v6582 = vadd.f32 %v6518, %v6228
    %v6583 = vadd.f32 %v6519, %v6228
    %v6584 = vadd.f32 %v6520, %v6228
    %v6585 = vadd.f32 %v6521, %v6228
    %v6586 = vadd.f32 %v6522, %v6228
    %v6587 = vadd.f32 %v6523, %v6228
    %v6588 = vadd.f32 %v6524, %v6228
    %v6589 = vadd.f32 %v6525, %v6228
    %v6590 = vadd.f32 %v6526, %v6228
    %v6591 = vadd.f32 %v6527, %v6228
    %v6592 = vadd.f32 %v6528, %v6228
    %v6593 = vadd.f32 %v6529, %v6228
    %v6594 = vadd.f32 %v6530, %v6228
    %v6595 = vadd.f32 %v6531, %v6228
    %v6596 = vadd.f32 %v6532, %v6228
    %v6597 = vadd.f32 %v6533, %v6228
    %v6598 = vadd.f32 %v6534, %v6228
    %v6599 = vadd.f32 %v6535, %v6228
    %v6600 = vadd.f32 %v6536, %v6228
    %v6601 = vadd.f32 %v6537, %v6228
    %v6602 = vadd.f32 %v6538, %v6228
    %v6603 = vadd.f32 %v6539, %v6228
    %v6604 = vadd.f32 %v6540, %v6228
    %v6605 = vadd.f32 %v6541, %v6228
    %v6606 = vadd.f32 %v6542, %v6228
    %v6607 = vadd.f32 %v6543, %v6228
    %v6608 = vadd.f32 %v6544, %v6228
    %v6609 = vadd.f32 %v6545, %v6228
    %v6610 = vadd.f32 %v6546, %v6228
    %v6611 = vadd.f32 %v6547, %v6228
    %v6612 = vadd.f32 %v6548, %v6228
    %v6613 = vadd.f32 %v6549, %v6228
    %v6614 = vadd.f32 %v6550, %v6228
    %v6615 = vadd.f32 %v6551, %v6228
    %v6616 = vadd.f32 %v6552, %v6228
    %v6617 = vadd.f32 %v6553, %v6228
    %v6618 = vadd.f32 %v6554, %v6228
    %v6619 = vadd.f32 %v6555, %v6228
    %v6620 = vadd.f32 %v6556, %v6228
    %v6621 = vadd.f32 %v6557, %v6228
    %v6622 = vadd.f32 %v6558, %v6228
    %v6623 = vadd.f32 %v6559, %v6228
    %v6624 = vadd.f32 %v6560, %v6228
    %v6625 = vadd.f32 %v6561, %v6228
    %v6626 = vadd.f32 %v6562, %v6228
    %v6627 = vadd.f32 %v6563, %v6228
    %v6628 = vadd.f32 %v6564, %v6228
    %6629 = vst.msk [vmem:[%s3] sm:$0xff] %vm670, %v6565
    %6630 = vst.msk [vmem:[%s3 + $0x8] sm:$0xff] %vm670, %v6566
    %6631 = vst.msk [vmem:[%s3 + $0x10] sm:$0xff] %vm670, %v6567
    %6632 = vst.msk [vmem:[%s3 + $0x18] sm:$0xff] %vm670, %v6568
    %6633 = vst.msk [vmem:[%s3 + $0x20] sm:$0xff] %vm670, %v6569
    %6634 = vst.msk [vmem:[%s3 + $0x28] sm:$0xff] %vm670, %v6570
    %6635 = vst.msk [vmem:[%s3 + $0x30] sm:$0xff] %vm670, %v6571
    %6636 = vst.msk [vmem:[%s3 + $0x38] sm:$0xff] %vm670, %v6572
    %6637 = vst.msk [vmem:[%s3 + $0x40] sm:$0xff] %vm670, %v6573
    %6638 = vst.msk [vmem:[%s3 + $0x48] sm:$0xff] %vm670, %v6574
    %6639 = vst.msk [vmem:[%s3 + $0x50] sm:$0xff] %vm670, %v6575
    %6640 = vst.msk [vmem:[%s3 + $0x58] sm:$0xff] %vm670, %v6576
    %6641 = vst.msk [vmem:[%s3 + $0x60] sm:$0xff] %vm670, %v6577
    %6642 = vst.msk [vmem:[%s3 + $0x68] sm:$0xff] %vm670, %v6578
    %6643 = vst.msk [vmem:[%s3 + $0x70] sm:$0xff] %vm670, %v6579
    %6644 = vst.msk [vmem:[%s3 + $0x78] sm:$0xff] %vm670, %v6580
    %6645 = vst.msk [vmem:[%s3 + $0x80] sm:$0xff] %vm670, %v6581
    %6646 = vst.msk [vmem:[%s3 + $0x88] sm:$0xff] %vm670, %v6582
    %6647 = vst.msk [vmem:[%s3 + $0x90] sm:$0xff] %vm670, %v6583
    %6648 = vst.msk [vmem:[%s3 + $0x98] sm:$0xff] %vm670, %v6584
    %6649 = vst.msk [vmem:[%s3 + $0xa0] sm:$0xff] %vm670, %v6585
    %6650 = vst.msk [vmem:[%s3 + $0xa8] sm:$0xff] %vm670, %v6586
    %6651 = vst.msk [vmem:[%s3 + $0xb0] sm:$0xff] %vm670, %v6587
    %6652 = vst.msk [vmem:[%s3 + $0xb8] sm:$0xff] %vm670, %v6588
    %6653 = vst.msk [vmem:[%s3 + $0xc0] sm:$0xff] %vm670, %v6589
    %6654 = vst.msk [vmem:[%s3 + $0xc8] sm:$0xff] %vm670, %v6590
    %6655 = vst.msk [vmem:[%s3 + $0xd0] sm:$0xff] %vm670, %v6591
    %6656 = vst.msk [vmem:[%s3 + $0xd8] sm:$0xff] %vm670, %v6592
    %6657 = vst.msk [vmem:[%s3 + $0xe0] sm:$0xff] %vm670, %v6593
    %6658 = vst.msk [vmem:[%s3 + $0xe8] sm:$0xff] %vm670, %v6594
    %6659 = vst.msk [vmem:[%s3 + $0xf0] sm:$0xff] %vm670, %v6595
    %6660 = vst.msk [vmem:[%s3 + $0xf8] sm:$0xff] %vm670, %v6596
    %6661 = vst.msk [vmem:[%s3 + $0x100] sm:$0xff] %vm670, %v6597
    %6662 = vst.msk [vmem:[%s3 + $0x108] sm:$0xff] %vm670, %v6598
    %6663 = vst.msk [vmem:[%s3 + $0x110] sm:$0xff] %vm670, %v6599
    %6664 = vst.msk [vmem:[%s3 + $0x118] sm:$0xff] %vm670, %v6600
    %6665 = vst.msk [vmem:[%s3 + $0x120] sm:$0xff] %vm670, %v6601
    %6666 = vst.msk [vmem:[%s3 + $0x128] sm:$0xff] %vm670, %v6602
    %6667 = vst.msk [vmem:[%s3 + $0x130] sm:$0xff] %vm670, %v6603
    %6668 = vst.msk [vmem:[%s3 + $0x138] sm:$0xff] %vm670, %v6604
    %6669 = vst.msk [vmem:[%s3 + $0x140] sm:$0xff] %vm670, %v6605
    %6670 = vst.msk [vmem:[%s3 + $0x148] sm:$0xff] %vm670, %v6606
    %6671 = vst.msk [vmem:[%s3 + $0x150] sm:$0xff] %vm670, %v6607
    %6672 = vst.msk [vmem:[%s3 + $0x158] sm:$0xff] %vm670, %v6608
    %6673 = vst.msk [vmem:[%s3 + $0x160] sm:$0xff] %vm670, %v6609
    %6674 = vst.msk [vmem:[%s3 + $0x168] sm:$0xff] %vm670, %v6610
    %6675 = vst.msk [vmem:[%s3 + $0x170] sm:$0xff] %vm670, %v6611
    %6676 = vst.msk [vmem:[%s3 + $0x178] sm:$0xff] %vm670, %v6612
    %6677 = vst.msk [vmem:[%s3 + $0x180] sm:$0xff] %vm670, %v6613
    %6678 = vst.msk [vmem:[%s3 + $0x188] sm:$0xff] %vm670, %v6614
    %6679 = vst.msk [vmem:[%s3 + $0x190] sm:$0xff] %vm670, %v6615
    %6680 = vst.msk [vmem:[%s3 + $0x198] sm:$0xff] %vm670, %v6616
    %6681 = vst.msk [vmem:[%s3 + $0x1a0] sm:$0xff] %vm670, %v6617
    %6682 = vst.msk [vmem:[%s3 + $0x1a8] sm:$0xff] %vm670, %v6618
    %6683 = vst.msk [vmem:[%s3 + $0x1b0] sm:$0xff] %vm670, %v6619
    %6684 = vst.msk [vmem:[%s3 + $0x1b8] sm:$0xff] %vm670, %v6620
    %6685 = vst.msk [vmem:[%s3 + $0x1c0] sm:$0xff] %vm670, %v6621
    %6686 = vst.msk [vmem:[%s3 + $0x1c8] sm:$0xff] %vm670, %v6622
    %6687 = vst.msk [vmem:[%s3 + $0x1d0] sm:$0xff] %vm670, %v6623
    %6688 = vst.msk [vmem:[%s3 + $0x1d8] sm:$0xff] %vm670, %v6624
    %6689 = vst.msk [vmem:[%s3 + $0x1e0] sm:$0xff] %vm670, %v6625
    %6690 = vst.msk [vmem:[%s3 + $0x1e8] sm:$0xff] %vm670, %v6626
    %6691 = vst.msk [vmem:[%s3 + $0x1f0] sm:$0xff] %vm670, %v6627
    %6692 = vst.msk [vmem:[%s3 + $0x1f8] sm:$0xff] %vm670, %v6628
    %v6693 = vmul.f32 %v6215, %v29
    %v6694 = vmul.f32 %v6215, %v30
    %v6695 = vmul.f32 %v6215, %v31
    %v6696 = vmul.f32 %v6215, %v32
    %v6697 = vmul.f32 %v6215, %v33
    %v6698 = vmul.f32 %v6215, %v34
    %v6699 = vmul.f32 %v6215, %v35
    %v6700 = vmul.f32 %v6215, %v36
    %v6701 = vmul.f32 %v6215, %v37
    %v6702 = vmul.f32 %v6215, %v38
    %v6703 = vmul.f32 %v6215, %v39
    %v6704 = vmul.f32 %v6215, %v40
    %v6705 = vmul.f32 %v6215, %v41
    %v6706 = vmul.f32 %v6215, %v42
    %v6707 = vmul.f32 %v6215, %v43
    %v6708 = vmul.f32 %v6215, %v44
    %v6709 = vmul.f32 %v6215, %v45
    %v6710 = vmul.f32 %v6215, %v46
    %v6711 = vmul.f32 %v6215, %v47
    %v6712 = vmul.f32 %v6215, %v48
    %v6713 = vmul.f32 %v6215, %v49
    %v6714 = vmul.f32 %v6215, %v50
    %v6715 = vmul.f32 %v6215, %v51
    %v6716 = vmul.f32 %v6215, %v52
    %v6717 = vmul.f32 %v6215, %v53
    %v6718 = vmul.f32 %v6215, %v54
    %v6719 = vmul.f32 %v6215, %v55
    %v6720 = vmul.f32 %v6215, %v56
    %v6721 = vmul.f32 %v6215, %v57
    %v6722 = vmul.f32 %v6215, %v58
    %v6723 = vmul.f32 %v6215, %v59
    %v6724 = vmul.f32 %v6215, %v60
    %v6725 = vmul.f32 %v6215, %v61
    %v6726 = vmul.f32 %v6215, %v62
    %v6727 = vmul.f32 %v6215, %v63
    %v6728 = vmul.f32 %v6215, %v64
    %v6729 = vmul.f32 %v6215, %v65
    %v6730 = vmul.f32 %v6215, %v66
    %v6731 = vmul.f32 %v6215, %v67
    %v6732 = vmul.f32 %v6215, %v68
    %v6733 = vmul.f32 %v6215, %v69
    %v6734 = vmul.f32 %v6215, %v70
    %v6735 = vmul.f32 %v6215, %v71
    %v6736 = vmul.f32 %v6215, %v72
    %v6737 = vmul.f32 %v6215, %v73
    %v6738 = vmul.f32 %v6215, %v74
    %v6739 = vmul.f32 %v6215, %v75
    %v6740 = vmul.f32 %v6215, %v76
    %v6741 = vmul.f32 %v6215, %v77
    %v6742 = vmul.f32 %v6215, %v78
    %v6743 = vmul.f32 %v6215, %v79
    %v6744 = vmul.f32 %v6215, %v80
    %v6745 = vmul.f32 %v6215, %v81
    %v6746 = vmul.f32 %v6215, %v82
    %v6747 = vmul.f32 %v6215, %v83
    %v6748 = vmul.f32 %v6215, %v84
    %v6749 = vmul.f32 %v6215, %v85
    %v6750 = vmul.f32 %v6215, %v86
    %v6751 = vmul.f32 %v6215, %v87
    %v6752 = vmul.f32 %v6215, %v88
    %v6753 = vmul.f32 %v6215, %v89
    %v6754 = vmul.f32 %v6215, %v90
    %v6755 = vmul.f32 %v6215, %v91
    %v6756 = vmul.f32 %v6215, %v92
    %v6757 = vmul.f32 %v6216, %v93
    %v6758 = vmul.f32 %v6216, %v94
    %v6759 = vmul.f32 %v6216, %v95
    %v6760 = vmul.f32 %v6216, %v96
    %v6761 = vmul.f32 %v6216, %v97
    %v6762 = vmul.f32 %v6216, %v98
    %v6763 = vmul.f32 %v6216, %v99
    %v6764 = vmul.f32 %v6216, %v100
    %v6765 = vmul.f32 %v6216, %v101
    %v6766 = vmul.f32 %v6216, %v102
    %v6767 = vmul.f32 %v6216, %v103
    %v6768 = vmul.f32 %v6216, %v104
    %v6769 = vmul.f32 %v6216, %v105
    %v6770 = vmul.f32 %v6216, %v106
    %v6771 = vmul.f32 %v6216, %v107
    %v6772 = vmul.f32 %v6216, %v108
    %v6773 = vmul.f32 %v6216, %v109
    %v6774 = vmul.f32 %v6216, %v110
    %v6775 = vmul.f32 %v6216, %v111
    %v6776 = vmul.f32 %v6216, %v112
    %v6777 = vmul.f32 %v6216, %v113
    %v6778 = vmul.f32 %v6216, %v114
    %v6779 = vmul.f32 %v6216, %v115
    %v6780 = vmul.f32 %v6216, %v116
    %v6781 = vmul.f32 %v6216, %v117
    %v6782 = vmul.f32 %v6216, %v118
    %v6783 = vmul.f32 %v6216, %v119
    %v6784 = vmul.f32 %v6216, %v120
    %v6785 = vmul.f32 %v6216, %v121
    %v6786 = vmul.f32 %v6216, %v122
    %v6787 = vmul.f32 %v6216, %v123
    %v6788 = vmul.f32 %v6216, %v124
    %v6789 = vmul.f32 %v6216, %v125
    %v6790 = vmul.f32 %v6216, %v126
    %v6791 = vmul.f32 %v6216, %v127
    %v6792 = vmul.f32 %v6216, %v128
    %v6793 = vmul.f32 %v6216, %v129
    %v6794 = vmul.f32 %v6216, %v130
    %v6795 = vmul.f32 %v6216, %v131
    %v6796 = vmul.f32 %v6216, %v132
    %v6797 = vmul.f32 %v6216, %v133
    %v6798 = vmul.f32 %v6216, %v134
    %v6799 = vmul.f32 %v6216, %v135
    %v6800 = vmul.f32 %v6216, %v136
    %v6801 = vmul.f32 %v6216, %v137
    %v6802 = vmul.f32 %v6216, %v138
    %v6803 = vmul.f32 %v6216, %v139
    %v6804 = vmul.f32 %v6216, %v140
    %v6805 = vmul.f32 %v6216, %v141
    %v6806 = vmul.f32 %v6216, %v142
    %v6807 = vmul.f32 %v6216, %v143
    %v6808 = vmul.f32 %v6216, %v144
    %v6809 = vmul.f32 %v6216, %v145
    %v6810 = vmul.f32 %v6216, %v146
    %v6811 = vmul.f32 %v6216, %v147
    %v6812 = vmul.f32 %v6216, %v148
    %v6813 = vmul.f32 %v6216, %v149
    %v6814 = vmul.f32 %v6216, %v150
    %v6815 = vmul.f32 %v6216, %v151
    %v6816 = vmul.f32 %v6216, %v152
    %v6817 = vmul.f32 %v6216, %v153
    %v6818 = vmul.f32 %v6216, %v154
    %v6819 = vmul.f32 %v6216, %v155
    %v6820 = vmul.f32 %v6216, %v156
    %v6821 = vadd.f32 %v6693, %v6757
    %v6822 = vadd.f32 %v6694, %v6758
    %v6823 = vadd.f32 %v6695, %v6759
    %v6824 = vadd.f32 %v6696, %v6760
    %v6825 = vadd.f32 %v6697, %v6761
    %v6826 = vadd.f32 %v6698, %v6762
    %v6827 = vadd.f32 %v6699, %v6763
    %v6828 = vadd.f32 %v6700, %v6764
    %v6829 = vadd.f32 %v6701, %v6765
    %v6830 = vadd.f32 %v6702, %v6766
    %v6831 = vadd.f32 %v6703, %v6767
    %v6832 = vadd.f32 %v6704, %v6768
    %v6833 = vadd.f32 %v6705, %v6769
    %v6834 = vadd.f32 %v6706, %v6770
    %v6835 = vadd.f32 %v6707, %v6771
    %v6836 = vadd.f32 %v6708, %v6772
    %v6837 = vadd.f32 %v6709, %v6773
    %v6838 = vadd.f32 %v6710, %v6774
    %v6839 = vadd.f32 %v6711, %v6775
    %v6840 = vadd.f32 %v6712, %v6776
    %v6841 = vadd.f32 %v6713, %v6777
    %v6842 = vadd.f32 %v6714, %v6778
    %v6843 = vadd.f32 %v6715, %v6779
    %v6844 = vadd.f32 %v6716, %v6780
    %v6845 = vadd.f32 %v6717, %v6781
    %v6846 = vadd.f32 %v6718, %v6782
    %v6847 = vadd.f32 %v6719, %v6783
    %v6848 = vadd.f32 %v6720, %v6784
    %v6849 = vadd.f32 %v6721, %v6785
    %v6850 = vadd.f32 %v6722, %v6786
    %v6851 = vadd.f32 %v6723, %v6787
    %v6852 = vadd.f32 %v6724, %v6788
    %v6853 = vadd.f32 %v6725, %v6789
    %v6854 = vadd.f32 %v6726, %v6790
    %v6855 = vadd.f32 %v6727, %v6791
    %v6856 = vadd.f32 %v6728, %v6792
    %v6857 = vadd.f32 %v6729, %v6793
    %v6858 = vadd.f32 %v6730, %v6794
    %v6859 = vadd.f32 %v6731, %v6795
    %v6860 = vadd.f32 %v6732, %v6796
    %v6861 = vadd.f32 %v6733, %v6797
    %v6862 = vadd.f32 %v6734, %v6798
    %v6863 = vadd.f32 %v6735, %v6799
    %v6864 = vadd.f32 %v6736, %v6800
    %v6865 = vadd.f32 %v6737, %v6801
    %v6866 = vadd.f32 %v6738, %v6802
    %v6867 = vadd.f32 %v6739, %v6803
    %v6868 = vadd.f32 %v6740, %v6804
    %v6869 = vadd.f32 %v6741, %v6805
    %v6870 = vadd.f32 %v6742, %v6806
    %v6871 = vadd.f32 %v6743, %v6807
    %v6872 = vadd.f32 %v6744, %v6808
    %v6873 = vadd.f32 %v6745, %v6809
    %v6874 = vadd.f32 %v6746, %v6810
    %v6875 = vadd.f32 %v6747, %v6811
    %v6876 = vadd.f32 %v6748, %v6812
    %v6877 = vadd.f32 %v6749, %v6813
    %v6878 = vadd.f32 %v6750, %v6814
    %v6879 = vadd.f32 %v6751, %v6815
    %v6880 = vadd.f32 %v6752, %v6816
    %v6881 = vadd.f32 %v6753, %v6817
    %v6882 = vadd.f32 %v6754, %v6818
    %v6883 = vadd.f32 %v6755, %v6819
    %v6884 = vadd.f32 %v6756, %v6820
    %v6885 = vmul.f32 %v6217, %v157
    %v6886 = vmul.f32 %v6217, %v158
    %v6887 = vmul.f32 %v6217, %v159
    %v6888 = vmul.f32 %v6217, %v160
    %v6889 = vmul.f32 %v6217, %v161
    %v6890 = vmul.f32 %v6217, %v162
    %v6891 = vmul.f32 %v6217, %v163
    %v6892 = vmul.f32 %v6217, %v164
    %v6893 = vmul.f32 %v6217, %v165
    %v6894 = vmul.f32 %v6217, %v166
    %v6895 = vmul.f32 %v6217, %v167
    %v6896 = vmul.f32 %v6217, %v168
    %v6897 = vmul.f32 %v6217, %v169
    %v6898 = vmul.f32 %v6217, %v170
    %v6899 = vmul.f32 %v6217, %v171
    %v6900 = vmul.f32 %v6217, %v172
    %v6901 = vmul.f32 %v6217, %v173
    %v6902 = vmul.f32 %v6217, %v174
    %v6903 = vmul.f32 %v6217, %v175
    %v6904 = vmul.f32 %v6217, %v176
    %v6905 = vmul.f32 %v6217, %v177
    %v6906 = vmul.f32 %v6217, %v178
    %v6907 = vmul.f32 %v6217, %v179
    %v6908 = vmul.f32 %v6217, %v180
    %v6909 = vmul.f32 %v6217, %v181
    %v6910 = vmul.f32 %v6217, %v182
    %v6911 = vmul.f32 %v6217, %v183
    %v6912 = vmul.f32 %v6217, %v184
    %v6913 = vmul.f32 %v6217, %v185
    %v6914 = vmul.f32 %v6217, %v186
    %v6915 = vmul.f32 %v6217, %v187
    %v6916 = vmul.f32 %v6217, %v188
    %v6917 = vmul.f32 %v6217, %v189
    %v6918 = vmul.f32 %v6217, %v190
    %v6919 = vmul.f32 %v6217, %v191
    %v6920 = vmul.f32 %v6217, %v192
    %v6921 = vmul.f32 %v6217, %v193
    %v6922 = vmul.f32 %v6217, %v194
    %v6923 = vmul.f32 %v6217, %v195
    %v6924 = vmul.f32 %v6217, %v196
    %v6925 = vmul.f32 %v6217, %v197
    %v6926 = vmul.f32 %v6217, %v198
    %v6927 = vmul.f32 %v6217, %v199
    %v6928 = vmul.f32 %v6217, %v200
    %v6929 = vmul.f32 %v6217, %v201
    %v6930 = vmul.f32 %v6217, %v202
    %v6931 = vmul.f32 %v6217, %v203
    %v6932 = vmul.f32 %v6217, %v204
    %v6933 = vmul.f32 %v6217, %v205
    %v6934 = vmul.f32 %v6217, %v206
    %v6935 = vmul.f32 %v6217, %v207
    %v6936 = vmul.f32 %v6217, %v208
    %v6937 = vmul.f32 %v6217, %v209
    %v6938 = vmul.f32 %v6217, %v210
    %v6939 = vmul.f32 %v6217, %v211
    %v6940 = vmul.f32 %v6217, %v212
    %v6941 = vmul.f32 %v6217, %v213
    %v6942 = vmul.f32 %v6217, %v214
    %v6943 = vmul.f32 %v6217, %v215
    %v6944 = vmul.f32 %v6217, %v216
    %v6945 = vmul.f32 %v6217, %v217
    %v6946 = vmul.f32 %v6217, %v218
    %v6947 = vmul.f32 %v6217, %v219
    %v6948 = vmul.f32 %v6217, %v220
    %v6949 = vadd.f32 %v6821, %v6885
    %v6950 = vadd.f32 %v6822, %v6886
    %v6951 = vadd.f32 %v6823, %v6887
    %v6952 = vadd.f32 %v6824, %v6888
    %v6953 = vadd.f32 %v6825, %v6889
    %v6954 = vadd.f32 %v6826, %v6890
    %v6955 = vadd.f32 %v6827, %v6891
    %v6956 = vadd.f32 %v6828, %v6892
    %v6957 = vadd.f32 %v6829, %v6893
    %v6958 = vadd.f32 %v6830, %v6894
    %v6959 = vadd.f32 %v6831, %v6895
    %v6960 = vadd.f32 %v6832, %v6896
    %v6961 = vadd.f32 %v6833, %v6897
    %v6962 = vadd.f32 %v6834, %v6898
    %v6963 = vadd.f32 %v6835, %v6899
    %v6964 = vadd.f32 %v6836, %v6900
    %v6965 = vadd.f32 %v6837, %v6901
    %v6966 = vadd.f32 %v6838, %v6902
    %v6967 = vadd.f32 %v6839, %v6903
    %v6968 = vadd.f32 %v6840, %v6904
    %v6969 = vadd.f32 %v6841, %v6905
    %v6970 = vadd.f32 %v6842, %v6906
    %v6971 = vadd.f32 %v6843, %v6907
    %v6972 = vadd.f32 %v6844, %v6908
    %v6973 = vadd.f32 %v6845, %v6909
    %v6974 = vadd.f32 %v6846, %v6910
    %v6975 = vadd.f32 %v6847, %v6911
    %v6976 = vadd.f32 %v6848, %v6912
    %v6977 = vadd.f32 %v6849, %v6913
    %v6978 = vadd.f32 %v6850, %v6914
    %v6979 = vadd.f32 %v6851, %v6915
    %v6980 = vadd.f32 %v6852, %v6916
    %v6981 = vadd.f32 %v6853, %v6917
    %v6982 = vadd.f32 %v6854, %v6918
    %v6983 = vadd.f32 %v6855, %v6919
    %v6984 = vadd.f32 %v6856, %v6920
    %v6985 = vadd.f32 %v6857, %v6921
    %v6986 = vadd.f32 %v6858, %v6922
    %v6987 = vadd.f32 %v6859, %v6923
    %v6988 = vadd.f32 %v6860, %v6924
    %v6989 = vadd.f32 %v6861, %v6925
    %v6990 = vadd.f32 %v6862, %v6926
    %v6991 = vadd.f32 %v6863, %v6927
    %v6992 = vadd.f32 %v6864, %v6928
    %v6993 = vadd.f32 %v6865, %v6929
    %v6994 = vadd.f32 %v6866, %v6930
    %v6995 = vadd.f32 %v6867, %v6931
    %v6996 = vadd.f32 %v6868, %v6932
    %v6997 = vadd.f32 %v6869, %v6933
    %v6998 = vadd.f32 %v6870, %v6934
    %v6999 = vadd.f32 %v6871, %v6935
    %v7000 = vadd.f32 %v6872, %v6936
    %v7001 = vadd.f32 %v6873, %v6937
    %v7002 = vadd.f32 %v6874, %v6938
    %v7003 = vadd.f32 %v6875, %v6939
    %v7004 = vadd.f32 %v6876, %v6940
    %v7005 = vadd.f32 %v6877, %v6941
    %v7006 = vadd.f32 %v6878, %v6942
    %v7007 = vadd.f32 %v6879, %v6943
    %v7008 = vadd.f32 %v6880, %v6944
    %v7009 = vadd.f32 %v6881, %v6945
    %v7010 = vadd.f32 %v6882, %v6946
    %v7011 = vadd.f32 %v6883, %v6947
    %v7012 = vadd.f32 %v6884, %v6948
    %v7013 = vadd.f32 %v6949, %v6236
    %v7014 = vadd.f32 %v6950, %v6236
    %v7015 = vadd.f32 %v6951, %v6236
    %v7016 = vadd.f32 %v6952, %v6236
    %v7017 = vadd.f32 %v6953, %v6236
    %v7018 = vadd.f32 %v6954, %v6236
    %v7019 = vadd.f32 %v6955, %v6236
    %v7020 = vadd.f32 %v6956, %v6236
    %v7021 = vadd.f32 %v6957, %v6236
    %v7022 = vadd.f32 %v6958, %v6236
    %v7023 = vadd.f32 %v6959, %v6236
    %v7024 = vadd.f32 %v6960, %v6236
    %v7025 = vadd.f32 %v6961, %v6236
    %v7026 = vadd.f32 %v6962, %v6236
    %v7027 = vadd.f32 %v6963, %v6236
    %v7028 = vadd.f32 %v6964, %v6236
    %v7029 = vadd.f32 %v6965, %v6236
    %v7030 = vadd.f32 %v6966, %v6236
    %v7031 = vadd.f32 %v6967, %v6236
    %v7032 = vadd.f32 %v6968, %v6236
    %v7033 = vadd.f32 %v6969, %v6236
    %v7034 = vadd.f32 %v6970, %v6236
    %v7035 = vadd.f32 %v6971, %v6236
    %v7036 = vadd.f32 %v6972, %v6236
    %v7037 = vadd.f32 %v6973, %v6236
    %v7038 = vadd.f32 %v6974, %v6236
    %v7039 = vadd.f32 %v6975, %v6236
    %v7040 = vadd.f32 %v6976, %v6236
    %v7041 = vadd.f32 %v6977, %v6236
    %v7042 = vadd.f32 %v6978, %v6236
    %v7043 = vadd.f32 %v6979, %v6236
    %v7044 = vadd.f32 %v6980, %v6236
    %v7045 = vadd.f32 %v6981, %v6236
    %v7046 = vadd.f32 %v6982, %v6236
    %v7047 = vadd.f32 %v6983, %v6236
    %v7048 = vadd.f32 %v6984, %v6236
    %v7049 = vadd.f32 %v6985, %v6236
    %v7050 = vadd.f32 %v6986, %v6236
    %v7051 = vadd.f32 %v6987, %v6236
    %v7052 = vadd.f32 %v6988, %v6236
    %v7053 = vadd.f32 %v6989, %v6236
    %v7054 = vadd.f32 %v6990, %v6236
    %v7055 = vadd.f32 %v6991, %v6236
    %v7056 = vadd.f32 %v6992, %v6236
    %v7057 = vadd.f32 %v6993, %v6236
    %v7058 = vadd.f32 %v6994, %v6236
    %v7059 = vadd.f32 %v6995, %v6236
    %v7060 = vadd.f32 %v6996, %v6236
    %v7061 = vadd.f32 %v6997, %v6236
    %v7062 = vadd.f32 %v6998, %v6236
    %v7063 = vadd.f32 %v6999, %v6236
    %v7064 = vadd.f32 %v7000, %v6236
    %v7065 = vadd.f32 %v7001, %v6236
    %v7066 = vadd.f32 %v7002, %v6236
    %v7067 = vadd.f32 %v7003, %v6236
    %v7068 = vadd.f32 %v7004, %v6236
    %v7069 = vadd.f32 %v7005, %v6236
    %v7070 = vadd.f32 %v7006, %v6236
    %v7071 = vadd.f32 %v7007, %v6236
    %v7072 = vadd.f32 %v7008, %v6236
    %v7073 = vadd.f32 %v7009, %v6236
    %v7074 = vadd.f32 %v7010, %v6236
    %v7075 = vadd.f32 %v7011, %v6236
    %v7076 = vadd.f32 %v7012, %v6236
    %s7077 = scalar_lea.vmem %s3, 512
    %7078 = vst.msk [vmem:[%s7077] sm:$0xff] %vm670, %v7013
    %7079 = vst.msk [vmem:[%s7077 + $0x8] sm:$0xff] %vm670, %v7014
    %7080 = vst.msk [vmem:[%s7077 + $0x10] sm:$0xff] %vm670, %v7015
    %7081 = vst.msk [vmem:[%s7077 + $0x18] sm:$0xff] %vm670, %v7016
    %7082 = vst.msk [vmem:[%s7077 + $0x20] sm:$0xff] %vm670, %v7017
    %7083 = vst.msk [vmem:[%s7077 + $0x28] sm:$0xff] %vm670, %v7018
    %7084 = vst.msk [vmem:[%s7077 + $0x30] sm:$0xff] %vm670, %v7019
    %7085 = vst.msk [vmem:[%s7077 + $0x38] sm:$0xff] %vm670, %v7020
    %7086 = vst.msk [vmem:[%s7077 + $0x40] sm:$0xff] %vm670, %v7021
    %7087 = vst.msk [vmem:[%s7077 + $0x48] sm:$0xff] %vm670, %v7022
    %7088 = vst.msk [vmem:[%s7077 + $0x50] sm:$0xff] %vm670, %v7023
    %7089 = vst.msk [vmem:[%s7077 + $0x58] sm:$0xff] %vm670, %v7024
    %7090 = vst.msk [vmem:[%s7077 + $0x60] sm:$0xff] %vm670, %v7025
    %7091 = vst.msk [vmem:[%s7077 + $0x68] sm:$0xff] %vm670, %v7026
    %7092 = vst.msk [vmem:[%s7077 + $0x70] sm:$0xff] %vm670, %v7027
    %7093 = vst.msk [vmem:[%s7077 + $0x78] sm:$0xff] %vm670, %v7028
    %7094 = vst.msk [vmem:[%s7077 + $0x80] sm:$0xff] %vm670, %v7029
    %7095 = vst.msk [vmem:[%s7077 + $0x88] sm:$0xff] %vm670, %v7030
    %7096 = vst.msk [vmem:[%s7077 + $0x90] sm:$0xff] %vm670, %v7031
    %7097 = vst.msk [vmem:[%s7077 + $0x98] sm:$0xff] %vm670, %v7032
    %7098 = vst.msk [vmem:[%s7077 + $0xa0] sm:$0xff] %vm670, %v7033
    %7099 = vst.msk [vmem:[%s7077 + $0xa8] sm:$0xff] %vm670, %v7034
    %7100 = vst.msk [vmem:[%s7077 + $0xb0] sm:$0xff] %vm670, %v7035
    %7101 = vst.msk [vmem:[%s7077 + $0xb8] sm:$0xff] %vm670, %v7036
    %7102 = vst.msk [vmem:[%s7077 + $0xc0] sm:$0xff] %vm670, %v7037
    %7103 = vst.msk [vmem:[%s7077 + $0xc8] sm:$0xff] %vm670, %v7038
    %7104 = vst.msk [vmem:[%s7077 + $0xd0] sm:$0xff] %vm670, %v7039
    %7105 = vst.msk [vmem:[%s7077 + $0xd8] sm:$0xff] %vm670, %v7040
    %7106 = vst.msk [vmem:[%s7077 + $0xe0] sm:$0xff] %vm670, %v7041
    %7107 = vst.msk [vmem:[%s7077 + $0xe8] sm:$0xff] %vm670, %v7042
    %7108 = vst.msk [vmem:[%s7077 + $0xf0] sm:$0xff] %vm670, %v7043
    %7109 = vst.msk [vmem:[%s7077 + $0xf8] sm:$0xff] %vm670, %v7044
    %7110 = vst.msk [vmem:[%s7077 + $0x100] sm:$0xff] %vm670, %v7045
    %7111 = vst.msk [vmem:[%s7077 + $0x108] sm:$0xff] %vm670, %v7046
    %7112 = vst.msk [vmem:[%s7077 + $0x110] sm:$0xff] %vm670, %v7047
    %7113 = vst.msk [vmem:[%s7077 + $0x118] sm:$0xff] %vm670, %v7048
    %7114 = vst.msk [vmem:[%s7077 + $0x120] sm:$0xff] %vm670, %v7049
    %7115 = vst.msk [vmem:[%s7077 + $0x128] sm:$0xff] %vm670, %v7050
    %7116 = vst.msk [vmem:[%s7077 + $0x130] sm:$0xff] %vm670, %v7051
    %7117 = vst.msk [vmem:[%s7077 + $0x138] sm:$0xff] %vm670, %v7052
    %7118 = vst.msk [vmem:[%s7077 + $0x140] sm:$0xff] %vm670, %v7053
    %7119 = vst.msk [vmem:[%s7077 + $0x148] sm:$0xff] %vm670, %v7054
    %7120 = vst.msk [vmem:[%s7077 + $0x150] sm:$0xff] %vm670, %v7055
    %7121 = vst.msk [vmem:[%s7077 + $0x158] sm:$0xff] %vm670, %v7056
    %7122 = vst.msk [vmem:[%s7077 + $0x160] sm:$0xff] %vm670, %v7057
    %7123 = vst.msk [vmem:[%s7077 + $0x168] sm:$0xff] %vm670, %v7058
    %7124 = vst.msk [vmem:[%s7077 + $0x170] sm:$0xff] %vm670, %v7059
    %7125 = vst.msk [vmem:[%s7077 + $0x178] sm:$0xff] %vm670, %v7060
    %7126 = vst.msk [vmem:[%s7077 + $0x180] sm:$0xff] %vm670, %v7061
    %7127 = vst.msk [vmem:[%s7077 + $0x188] sm:$0xff] %vm670, %v7062
    %7128 = vst.msk [vmem:[%s7077 + $0x190] sm:$0xff] %vm670, %v7063
    %7129 = vst.msk [vmem:[%s7077 + $0x198] sm:$0xff] %vm670, %v7064
    %7130 = vst.msk [vmem:[%s7077 + $0x1a0] sm:$0xff] %vm670, %v7065
    %7131 = vst.msk [vmem:[%s7077 + $0x1a8] sm:$0xff] %vm670, %v7066
    %7132 = vst.msk [vmem:[%s7077 + $0x1b0] sm:$0xff] %vm670, %v7067
    %7133 = vst.msk [vmem:[%s7077 + $0x1b8] sm:$0xff] %vm670, %v7068
    %7134 = vst.msk [vmem:[%s7077 + $0x1c0] sm:$0xff] %vm670, %v7069
    %7135 = vst.msk [vmem:[%s7077 + $0x1c8] sm:$0xff] %vm670, %v7070
    %7136 = vst.msk [vmem:[%s7077 + $0x1d0] sm:$0xff] %vm670, %v7071
    %7137 = vst.msk [vmem:[%s7077 + $0x1d8] sm:$0xff] %vm670, %v7072
    %7138 = vst.msk [vmem:[%s7077 + $0x1e0] sm:$0xff] %vm670, %v7073
    %7139 = vst.msk [vmem:[%s7077 + $0x1e8] sm:$0xff] %vm670, %v7074
    %7140 = vst.msk [vmem:[%s7077 + $0x1f0] sm:$0xff] %vm670, %v7075
    %7141 = vst.msk [vmem:[%s7077 + $0x1f8] sm:$0xff] %vm670, %v7076
    %v7142 = vmul.f32 %v6218, %v29
    %v7143 = vmul.f32 %v6218, %v30
    %v7144 = vmul.f32 %v6218, %v31
    %v7145 = vmul.f32 %v6218, %v32
    %v7146 = vmul.f32 %v6218, %v33
    %v7147 = vmul.f32 %v6218, %v34
    %v7148 = vmul.f32 %v6218, %v35
    %v7149 = vmul.f32 %v6218, %v36
    %v7150 = vmul.f32 %v6218, %v37
    %v7151 = vmul.f32 %v6218, %v38
    %v7152 = vmul.f32 %v6218, %v39
    %v7153 = vmul.f32 %v6218, %v40
    %v7154 = vmul.f32 %v6218, %v41
    %v7155 = vmul.f32 %v6218, %v42
    %v7156 = vmul.f32 %v6218, %v43
    %v7157 = vmul.f32 %v6218, %v44
    %v7158 = vmul.f32 %v6218, %v45
    %v7159 = vmul.f32 %v6218, %v46
    %v7160 = vmul.f32 %v6218, %v47
    %v7161 = vmul.f32 %v6218, %v48
    %v7162 = vmul.f32 %v6218, %v49
    %v7163 = vmul.f32 %v6218, %v50
    %v7164 = vmul.f32 %v6218, %v51
    %v7165 = vmul.f32 %v6218, %v52
    %v7166 = vmul.f32 %v6218, %v53
    %v7167 = vmul.f32 %v6218, %v54
    %v7168 = vmul.f32 %v6218, %v55
    %v7169 = vmul.f32 %v6218, %v56
    %v7170 = vmul.f32 %v6218, %v57
    %v7171 = vmul.f32 %v6218, %v58
    %v7172 = vmul.f32 %v6218, %v59
    %v7173 = vmul.f32 %v6218, %v60
    %v7174 = vmul.f32 %v6218, %v61
    %v7175 = vmul.f32 %v6218, %v62
    %v7176 = vmul.f32 %v6218, %v63
    %v7177 = vmul.f32 %v6218, %v64
    %v7178 = vmul.f32 %v6218, %v65
    %v7179 = vmul.f32 %v6218, %v66
    %v7180 = vmul.f32 %v6218, %v67
    %v7181 = vmul.f32 %v6218, %v68
    %v7182 = vmul.f32 %v6218, %v69
    %v7183 = vmul.f32 %v6218, %v70
    %v7184 = vmul.f32 %v6218, %v71
    %v7185 = vmul.f32 %v6218, %v72
    %v7186 = vmul.f32 %v6218, %v73
    %v7187 = vmul.f32 %v6218, %v74
    %v7188 = vmul.f32 %v6218, %v75
    %v7189 = vmul.f32 %v6218, %v76
    %v7190 = vmul.f32 %v6218, %v77
    %v7191 = vmul.f32 %v6218, %v78
    %v7192 = vmul.f32 %v6218, %v79
    %v7193 = vmul.f32 %v6218, %v80
    %v7194 = vmul.f32 %v6218, %v81
    %v7195 = vmul.f32 %v6218, %v82
    %v7196 = vmul.f32 %v6218, %v83
    %v7197 = vmul.f32 %v6218, %v84
    %v7198 = vmul.f32 %v6218, %v85
    %v7199 = vmul.f32 %v6218, %v86
    %v7200 = vmul.f32 %v6218, %v87
    %v7201 = vmul.f32 %v6218, %v88
    %v7202 = vmul.f32 %v6218, %v89
    %v7203 = vmul.f32 %v6218, %v90
    %v7204 = vmul.f32 %v6218, %v91
    %v7205 = vmul.f32 %v6218, %v92
    %v7206 = vmul.f32 %v6219, %v93
    %v7207 = vmul.f32 %v6219, %v94
    %v7208 = vmul.f32 %v6219, %v95
    %v7209 = vmul.f32 %v6219, %v96
    %v7210 = vmul.f32 %v6219, %v97
    %v7211 = vmul.f32 %v6219, %v98
    %v7212 = vmul.f32 %v6219, %v99
    %v7213 = vmul.f32 %v6219, %v100
    %v7214 = vmul.f32 %v6219, %v101
    %v7215 = vmul.f32 %v6219, %v102
    %v7216 = vmul.f32 %v6219, %v103
    %v7217 = vmul.f32 %v6219, %v104
    %v7218 = vmul.f32 %v6219, %v105
    %v7219 = vmul.f32 %v6219, %v106
    %v7220 = vmul.f32 %v6219, %v107
    %v7221 = vmul.f32 %v6219, %v108
    %v7222 = vmul.f32 %v6219, %v109
    %v7223 = vmul.f32 %v6219, %v110
    %v7224 = vmul.f32 %v6219, %v111
    %v7225 = vmul.f32 %v6219, %v112
    %v7226 = vmul.f32 %v6219, %v113
    %v7227 = vmul.f32 %v6219, %v114
    %v7228 = vmul.f32 %v6219, %v115
    %v7229 = vmul.f32 %v6219, %v116
    %v7230 = vmul.f32 %v6219, %v117
    %v7231 = vmul.f32 %v6219, %v118
    %v7232 = vmul.f32 %v6219, %v119
    %v7233 = vmul.f32 %v6219, %v120
    %v7234 = vmul.f32 %v6219, %v121
    %v7235 = vmul.f32 %v6219, %v122
    %v7236 = vmul.f32 %v6219, %v123
    %v7237 = vmul.f32 %v6219, %v124
    %v7238 = vmul.f32 %v6219, %v125
    %v7239 = vmul.f32 %v6219, %v126
    %v7240 = vmul.f32 %v6219, %v127
    %v7241 = vmul.f32 %v6219, %v128
    %v7242 = vmul.f32 %v6219, %v129
    %v7243 = vmul.f32 %v6219, %v130
    %v7244 = vmul.f32 %v6219, %v131
    %v7245 = vmul.f32 %v6219, %v132
    %v7246 = vmul.f32 %v6219, %v133
    %v7247 = vmul.f32 %v6219, %v134
    %v7248 = vmul.f32 %v6219, %v135
    %v7249 = vmul.f32 %v6219, %v136
    %v7250 = vmul.f32 %v6219, %v137
    %v7251 = vmul.f32 %v6219, %v138
    %v7252 = vmul.f32 %v6219, %v139
    %v7253 = vmul.f32 %v6219, %v140
    %v7254 = vmul.f32 %v6219, %v141
    %v7255 = vmul.f32 %v6219, %v142
    %v7256 = vmul.f32 %v6219, %v143
    %v7257 = vmul.f32 %v6219, %v144
    %v7258 = vmul.f32 %v6219, %v145
    %v7259 = vmul.f32 %v6219, %v146
    %v7260 = vmul.f32 %v6219, %v147
    %v7261 = vmul.f32 %v6219, %v148
    %v7262 = vmul.f32 %v6219, %v149
    %v7263 = vmul.f32 %v6219, %v150
    %v7264 = vmul.f32 %v6219, %v151
    %v7265 = vmul.f32 %v6219, %v152
    %v7266 = vmul.f32 %v6219, %v153
    %v7267 = vmul.f32 %v6219, %v154
    %v7268 = vmul.f32 %v6219, %v155
    %v7269 = vmul.f32 %v6219, %v156
    %v7270 = vadd.f32 %v7142, %v7206
    %v7271 = vadd.f32 %v7143, %v7207
    %v7272 = vadd.f32 %v7144, %v7208
    %v7273 = vadd.f32 %v7145, %v7209
    %v7274 = vadd.f32 %v7146, %v7210
    %v7275 = vadd.f32 %v7147, %v7211
    %v7276 = vadd.f32 %v7148, %v7212
    %v7277 = vadd.f32 %v7149, %v7213
    %v7278 = vadd.f32 %v7150, %v7214
    %v7279 = vadd.f32 %v7151, %v7215
    %v7280 = vadd.f32 %v7152, %v7216
    %v7281 = vadd.f32 %v7153, %v7217
    %v7282 = vadd.f32 %v7154, %v7218
    %v7283 = vadd.f32 %v7155, %v7219
    %v7284 = vadd.f32 %v7156, %v7220
    %v7285 = vadd.f32 %v7157, %v7221
    %v7286 = vadd.f32 %v7158, %v7222
    %v7287 = vadd.f32 %v7159, %v7223
    %v7288 = vadd.f32 %v7160, %v7224
    %v7289 = vadd.f32 %v7161, %v7225
    %v7290 = vadd.f32 %v7162, %v7226
    %v7291 = vadd.f32 %v7163, %v7227
    %v7292 = vadd.f32 %v7164, %v7228
    %v7293 = vadd.f32 %v7165, %v7229
    %v7294 = vadd.f32 %v7166, %v7230
    %v7295 = vadd.f32 %v7167, %v7231
    %v7296 = vadd.f32 %v7168, %v7232
    %v7297 = vadd.f32 %v7169, %v7233
    %v7298 = vadd.f32 %v7170, %v7234
    %v7299 = vadd.f32 %v7171, %v7235
    %v7300 = vadd.f32 %v7172, %v7236
    %v7301 = vadd.f32 %v7173, %v7237
    %v7302 = vadd.f32 %v7174, %v7238
    %v7303 = vadd.f32 %v7175, %v7239
    %v7304 = vadd.f32 %v7176, %v7240
    %v7305 = vadd.f32 %v7177, %v7241
    %v7306 = vadd.f32 %v7178, %v7242
    %v7307 = vadd.f32 %v7179, %v7243
    %v7308 = vadd.f32 %v7180, %v7244
    %v7309 = vadd.f32 %v7181, %v7245
    %v7310 = vadd.f32 %v7182, %v7246
    %v7311 = vadd.f32 %v7183, %v7247
    %v7312 = vadd.f32 %v7184, %v7248
    %v7313 = vadd.f32 %v7185, %v7249
    %v7314 = vadd.f32 %v7186, %v7250
    %v7315 = vadd.f32 %v7187, %v7251
    %v7316 = vadd.f32 %v7188, %v7252
    %v7317 = vadd.f32 %v7189, %v7253
    %v7318 = vadd.f32 %v7190, %v7254
    %v7319 = vadd.f32 %v7191, %v7255
    %v7320 = vadd.f32 %v7192, %v7256
    %v7321 = vadd.f32 %v7193, %v7257
    %v7322 = vadd.f32 %v7194, %v7258
    %v7323 = vadd.f32 %v7195, %v7259
    %v7324 = vadd.f32 %v7196, %v7260
    %v7325 = vadd.f32 %v7197, %v7261
    %v7326 = vadd.f32 %v7198, %v7262
    %v7327 = vadd.f32 %v7199, %v7263
    %v7328 = vadd.f32 %v7200, %v7264
    %v7329 = vadd.f32 %v7201, %v7265
    %v7330 = vadd.f32 %v7202, %v7266
    %v7331 = vadd.f32 %v7203, %v7267
    %v7332 = vadd.f32 %v7204, %v7268
    %v7333 = vadd.f32 %v7205, %v7269
    %v7334 = vmul.f32 %v6220, %v157
    %v7335 = vmul.f32 %v6220, %v158
    %v7336 = vmul.f32 %v6220, %v159
    %v7337 = vmul.f32 %v6220, %v160
    %v7338 = vmul.f32 %v6220, %v161
    %v7339 = vmul.f32 %v6220, %v162
    %v7340 = vmul.f32 %v6220, %v163
    %v7341 = vmul.f32 %v6220, %v164
    %v7342 = vmul.f32 %v6220, %v165
    %v7343 = vmul.f32 %v6220, %v166
    %v7344 = vmul.f32 %v6220, %v167
    %v7345 = vmul.f32 %v6220, %v168
    %v7346 = vmul.f32 %v6220, %v169
    %v7347 = vmul.f32 %v6220, %v170
    %v7348 = vmul.f32 %v6220, %v171
    %v7349 = vmul.f32 %v6220, %v172
    %v7350 = vmul.f32 %v6220, %v173
    %v7351 = vmul.f32 %v6220, %v174
    %v7352 = vmul.f32 %v6220, %v175
    %v7353 = vmul.f32 %v6220, %v176
    %v7354 = vmul.f32 %v6220, %v177
    %v7355 = vmul.f32 %v6220, %v178
    %v7356 = vmul.f32 %v6220, %v179
    %v7357 = vmul.f32 %v6220, %v180
    %v7358 = vmul.f32 %v6220, %v181
    %v7359 = vmul.f32 %v6220, %v182
    %v7360 = vmul.f32 %v6220, %v183
    %v7361 = vmul.f32 %v6220, %v184
    %v7362 = vmul.f32 %v6220, %v185
    %v7363 = vmul.f32 %v6220, %v186
    %v7364 = vmul.f32 %v6220, %v187
    %v7365 = vmul.f32 %v6220, %v188
    %v7366 = vmul.f32 %v6220, %v189
    %v7367 = vmul.f32 %v6220, %v190
    %v7368 = vmul.f32 %v6220, %v191
    %v7369 = vmul.f32 %v6220, %v192
    %v7370 = vmul.f32 %v6220, %v193
    %v7371 = vmul.f32 %v6220, %v194
    %v7372 = vmul.f32 %v6220, %v195
    %v7373 = vmul.f32 %v6220, %v196
    %v7374 = vmul.f32 %v6220, %v197
    %v7375 = vmul.f32 %v6220, %v198
    %v7376 = vmul.f32 %v6220, %v199
    %v7377 = vmul.f32 %v6220, %v200
    %v7378 = vmul.f32 %v6220, %v201
    %v7379 = vmul.f32 %v6220, %v202
    %v7380 = vmul.f32 %v6220, %v203
    %v7381 = vmul.f32 %v6220, %v204
    %v7382 = vmul.f32 %v6220, %v205
    %v7383 = vmul.f32 %v6220, %v206
    %v7384 = vmul.f32 %v6220, %v207
    %v7385 = vmul.f32 %v6220, %v208
    %v7386 = vmul.f32 %v6220, %v209
    %v7387 = vmul.f32 %v6220, %v210
    %v7388 = vmul.f32 %v6220, %v211
    %v7389 = vmul.f32 %v6220, %v212
    %v7390 = vmul.f32 %v6220, %v213
    %v7391 = vmul.f32 %v6220, %v214
    %v7392 = vmul.f32 %v6220, %v215
    %v7393 = vmul.f32 %v6220, %v216
    %v7394 = vmul.f32 %v6220, %v217
    %v7395 = vmul.f32 %v6220, %v218
    %v7396 = vmul.f32 %v6220, %v219
    %v7397 = vmul.f32 %v6220, %v220
    %v7398 = vadd.f32 %v7270, %v7334
    %v7399 = vadd.f32 %v7271, %v7335
    %v7400 = vadd.f32 %v7272, %v7336
    %v7401 = vadd.f32 %v7273, %v7337
    %v7402 = vadd.f32 %v7274, %v7338
    %v7403 = vadd.f32 %v7275, %v7339
    %v7404 = vadd.f32 %v7276, %v7340
    %v7405 = vadd.f32 %v7277, %v7341
    %v7406 = vadd.f32 %v7278, %v7342
    %v7407 = vadd.f32 %v7279, %v7343
    %v7408 = vadd.f32 %v7280, %v7344
    %v7409 = vadd.f32 %v7281, %v7345
    %v7410 = vadd.f32 %v7282, %v7346
    %v7411 = vadd.f32 %v7283, %v7347
    %v7412 = vadd.f32 %v7284, %v7348
    %v7413 = vadd.f32 %v7285, %v7349
    %v7414 = vadd.f32 %v7286, %v7350
    %v7415 = vadd.f32 %v7287, %v7351
    %v7416 = vadd.f32 %v7288, %v7352
    %v7417 = vadd.f32 %v7289, %v7353
    %v7418 = vadd.f32 %v7290, %v7354
    %v7419 = vadd.f32 %v7291, %v7355
    %v7420 = vadd.f32 %v7292, %v7356
    %v7421 = vadd.f32 %v7293, %v7357
    %v7422 = vadd.f32 %v7294, %v7358
    %v7423 = vadd.f32 %v7295, %v7359
    %v7424 = vadd.f32 %v7296, %v7360
    %v7425 = vadd.f32 %v7297, %v7361
    %v7426 = vadd.f32 %v7298, %v7362
    %v7427 = vadd.f32 %v7299, %v7363
    %v7428 = vadd.f32 %v7300, %v7364
    %v7429 = vadd.f32 %v7301, %v7365
    %v7430 = vadd.f32 %v7302, %v7366
    %v7431 = vadd.f32 %v7303, %v7367
    %v7432 = vadd.f32 %v7304, %v7368
    %v7433 = vadd.f32 %v7305, %v7369
    %v7434 = vadd.f32 %v7306, %v7370
    %v7435 = vadd.f32 %v7307, %v7371
    %v7436 = vadd.f32 %v7308, %v7372
    %v7437 = vadd.f32 %v7309, %v7373
    %v7438 = vadd.f32 %v7310, %v7374
    %v7439 = vadd.f32 %v7311, %v7375
    %v7440 = vadd.f32 %v7312, %v7376
    %v7441 = vadd.f32 %v7313, %v7377
    %v7442 = vadd.f32 %v7314, %v7378
    %v7443 = vadd.f32 %v7315, %v7379
    %v7444 = vadd.f32 %v7316, %v7380
    %v7445 = vadd.f32 %v7317, %v7381
    %v7446 = vadd.f32 %v7318, %v7382
    %v7447 = vadd.f32 %v7319, %v7383
    %v7448 = vadd.f32 %v7320, %v7384
    %v7449 = vadd.f32 %v7321, %v7385
    %v7450 = vadd.f32 %v7322, %v7386
    %v7451 = vadd.f32 %v7323, %v7387
    %v7452 = vadd.f32 %v7324, %v7388
    %v7453 = vadd.f32 %v7325, %v7389
    %v7454 = vadd.f32 %v7326, %v7390
    %v7455 = vadd.f32 %v7327, %v7391
    %v7456 = vadd.f32 %v7328, %v7392
    %v7457 = vadd.f32 %v7329, %v7393
    %v7458 = vadd.f32 %v7330, %v7394
    %v7459 = vadd.f32 %v7331, %v7395
    %v7460 = vadd.f32 %v7332, %v7396
    %v7461 = vadd.f32 %v7333, %v7397
    %v7462 = vadd.f32 %v7398, %v6244
    %v7463 = vadd.f32 %v7399, %v6244
    %v7464 = vadd.f32 %v7400, %v6244
    %v7465 = vadd.f32 %v7401, %v6244
    %v7466 = vadd.f32 %v7402, %v6244
    %v7467 = vadd.f32 %v7403, %v6244
    %v7468 = vadd.f32 %v7404, %v6244
    %v7469 = vadd.f32 %v7405, %v6244
    %v7470 = vadd.f32 %v7406, %v6244
    %v7471 = vadd.f32 %v7407, %v6244
    %v7472 = vadd.f32 %v7408, %v6244
    %v7473 = vadd.f32 %v7409, %v6244
    %v7474 = vadd.f32 %v7410, %v6244
    %v7475 = vadd.f32 %v7411, %v6244
    %v7476 = vadd.f32 %v7412, %v6244
    %v7477 = vadd.f32 %v7413, %v6244
    %v7478 = vadd.f32 %v7414, %v6244
    %v7479 = vadd.f32 %v7415, %v6244
    %v7480 = vadd.f32 %v7416, %v6244
    %v7481 = vadd.f32 %v7417, %v6244
    %v7482 = vadd.f32 %v7418, %v6244
    %v7483 = vadd.f32 %v7419, %v6244
    %v7484 = vadd.f32 %v7420, %v6244
    %v7485 = vadd.f32 %v7421, %v6244
    %v7486 = vadd.f32 %v7422, %v6244
    %v7487 = vadd.f32 %v7423, %v6244
    %v7488 = vadd.f32 %v7424, %v6244
    %v7489 = vadd.f32 %v7425, %v6244
    %v7490 = vadd.f32 %v7426, %v6244
    %v7491 = vadd.f32 %v7427, %v6244
    %v7492 = vadd.f32 %v7428, %v6244
    %v7493 = vadd.f32 %v7429, %v6244
    %v7494 = vadd.f32 %v7430, %v6244
    %v7495 = vadd.f32 %v7431, %v6244
    %v7496 = vadd.f32 %v7432, %v6244
    %v7497 = vadd.f32 %v7433, %v6244
    %v7498 = vadd.f32 %v7434, %v6244
    %v7499 = vadd.f32 %v7435, %v6244
    %v7500 = vadd.f32 %v7436, %v6244
    %v7501 = vadd.f32 %v7437, %v6244
    %v7502 = vadd.f32 %v7438, %v6244
    %v7503 = vadd.f32 %v7439, %v6244
    %v7504 = vadd.f32 %v7440, %v6244
    %v7505 = vadd.f32 %v7441, %v6244
    %v7506 = vadd.f32 %v7442, %v6244
    %v7507 = vadd.f32 %v7443, %v6244
    %v7508 = vadd.f32 %v7444, %v6244
    %v7509 = vadd.f32 %v7445, %v6244
    %v7510 = vadd.f32 %v7446, %v6244
    %v7511 = vadd.f32 %v7447, %v6244
    %v7512 = vadd.f32 %v7448, %v6244
    %v7513 = vadd.f32 %v7449, %v6244
    %v7514 = vadd.f32 %v7450, %v6244
    %v7515 = vadd.f32 %v7451, %v6244
    %v7516 = vadd.f32 %v7452, %v6244
    %v7517 = vadd.f32 %v7453, %v6244
    %v7518 = vadd.f32 %v7454, %v6244
    %v7519 = vadd.f32 %v7455, %v6244
    %v7520 = vadd.f32 %v7456, %v6244
    %v7521 = vadd.f32 %v7457, %v6244
    %v7522 = vadd.f32 %v7458, %v6244
    %v7523 = vadd.f32 %v7459, %v6244
    %v7524 = vadd.f32 %v7460, %v6244
    %v7525 = vadd.f32 %v7461, %v6244
    %s7526 = scalar_lea.vmem %s3, 1024
    %7527 = vst.msk [vmem:[%s7526] sm:$0xff] %vm670, %v7462
    %7528 = vst.msk [vmem:[%s7526 + $0x8] sm:$0xff] %vm670, %v7463
    %7529 = vst.msk [vmem:[%s7526 + $0x10] sm:$0xff] %vm670, %v7464
    %7530 = vst.msk [vmem:[%s7526 + $0x18] sm:$0xff] %vm670, %v7465
    %7531 = vst.msk [vmem:[%s7526 + $0x20] sm:$0xff] %vm670, %v7466
    %7532 = vst.msk [vmem:[%s7526 + $0x28] sm:$0xff] %vm670, %v7467
    %7533 = vst.msk [vmem:[%s7526 + $0x30] sm:$0xff] %vm670, %v7468
    %7534 = vst.msk [vmem:[%s7526 + $0x38] sm:$0xff] %vm670, %v7469
    %7535 = vst.msk [vmem:[%s7526 + $0x40] sm:$0xff] %vm670, %v7470
    %7536 = vst.msk [vmem:[%s7526 + $0x48] sm:$0xff] %vm670, %v7471
    %7537 = vst.msk [vmem:[%s7526 + $0x50] sm:$0xff] %vm670, %v7472
    %7538 = vst.msk [vmem:[%s7526 + $0x58] sm:$0xff] %vm670, %v7473
    %7539 = vst.msk [vmem:[%s7526 + $0x60] sm:$0xff] %vm670, %v7474
    %7540 = vst.msk [vmem:[%s7526 + $0x68] sm:$0xff] %vm670, %v7475
    %7541 = vst.msk [vmem:[%s7526 + $0x70] sm:$0xff] %vm670, %v7476
    %7542 = vst.msk [vmem:[%s7526 + $0x78] sm:$0xff] %vm670, %v7477
    %7543 = vst.msk [vmem:[%s7526 + $0x80] sm:$0xff] %vm670, %v7478
    %7544 = vst.msk [vmem:[%s7526 + $0x88] sm:$0xff] %vm670, %v7479
    %7545 = vst.msk [vmem:[%s7526 + $0x90] sm:$0xff] %vm670, %v7480
    %7546 = vst.msk [vmem:[%s7526 + $0x98] sm:$0xff] %vm670, %v7481
    %7547 = vst.msk [vmem:[%s7526 + $0xa0] sm:$0xff] %vm670, %v7482
    %7548 = vst.msk [vmem:[%s7526 + $0xa8] sm:$0xff] %vm670, %v7483
    %7549 = vst.msk [vmem:[%s7526 + $0xb0] sm:$0xff] %vm670, %v7484
    %7550 = vst.msk [vmem:[%s7526 + $0xb8] sm:$0xff] %vm670, %v7485
    %7551 = vst.msk [vmem:[%s7526 + $0xc0] sm:$0xff] %vm670, %v7486
    %7552 = vst.msk [vmem:[%s7526 + $0xc8] sm:$0xff] %vm670, %v7487
    %7553 = vst.msk [vmem:[%s7526 + $0xd0] sm:$0xff] %vm670, %v7488
    %7554 = vst.msk [vmem:[%s7526 + $0xd8] sm:$0xff] %vm670, %v7489
    %7555 = vst.msk [vmem:[%s7526 + $0xe0] sm:$0xff] %vm670, %v7490
    %7556 = vst.msk [vmem:[%s7526 + $0xe8] sm:$0xff] %vm670, %v7491
    %7557 = vst.msk [vmem:[%s7526 + $0xf0] sm:$0xff] %vm670, %v7492
    %7558 = vst.msk [vmem:[%s7526 + $0xf8] sm:$0xff] %vm670, %v7493
    %7559 = vst.msk [vmem:[%s7526 + $0x100] sm:$0xff] %vm670, %v7494
    %7560 = vst.msk [vmem:[%s7526 + $0x108] sm:$0xff] %vm670, %v7495
    %7561 = vst.msk [vmem:[%s7526 + $0x110] sm:$0xff] %vm670, %v7496
    %7562 = vst.msk [vmem:[%s7526 + $0x118] sm:$0xff] %vm670, %v7497
    %7563 = vst.msk [vmem:[%s7526 + $0x120] sm:$0xff] %vm670, %v7498
    %7564 = vst.msk [vmem:[%s7526 + $0x128] sm:$0xff] %vm670, %v7499
    %7565 = vst.msk [vmem:[%s7526 + $0x130] sm:$0xff] %vm670, %v7500
    %7566 = vst.msk [vmem:[%s7526 + $0x138] sm:$0xff] %vm670, %v7501
    %7567 = vst.msk [vmem:[%s7526 + $0x140] sm:$0xff] %vm670, %v7502
    %7568 = vst.msk [vmem:[%s7526 + $0x148] sm:$0xff] %vm670, %v7503
    %7569 = vst.msk [vmem:[%s7526 + $0x150] sm:$0xff] %vm670, %v7504
    %7570 = vst.msk [vmem:[%s7526 + $0x158] sm:$0xff] %vm670, %v7505
    %7571 = vst.msk [vmem:[%s7526 + $0x160] sm:$0xff] %vm670, %v7506
    %7572 = vst.msk [vmem:[%s7526 + $0x168] sm:$0xff] %vm670, %v7507
    %7573 = vst.msk [vmem:[%s7526 + $0x170] sm:$0xff] %vm670, %v7508
    %7574 = vst.msk [vmem:[%s7526 + $0x178] sm:$0xff] %vm670, %v7509
    %7575 = vst.msk [vmem:[%s7526 + $0x180] sm:$0xff] %vm670, %v7510
    %7576 = vst.msk [vmem:[%s7526 + $0x188] sm:$0xff] %vm670, %v7511
    %7577 = vst.msk [vmem:[%s7526 + $0x190] sm:$0xff] %vm670, %v7512
    %7578 = vst.msk [vmem:[%s7526 + $0x198] sm:$0xff] %vm670, %v7513
    %7579 = vst.msk [vmem:[%s7526 + $0x1a0] sm:$0xff] %vm670, %v7514
    %7580 = vst.msk [vmem:[%s7526 + $0x1a8] sm:$0xff] %vm670, %v7515
    %7581 = vst.msk [vmem:[%s7526 + $0x1b0] sm:$0xff] %vm670, %v7516
    %7582 = vst.msk [vmem:[%s7526 + $0x1b8] sm:$0xff] %vm670, %v7517
    %7583 = vst.msk [vmem:[%s7526 + $0x1c0] sm:$0xff] %vm670, %v7518
    %7584 = vst.msk [vmem:[%s7526 + $0x1c8] sm:$0xff] %vm670, %v7519
    %7585 = vst.msk [vmem:[%s7526 + $0x1d0] sm:$0xff] %vm670, %v7520
    %7586 = vst.msk [vmem:[%s7526 + $0x1d8] sm:$0xff] %vm670, %v7521
    %7587 = vst.msk [vmem:[%s7526 + $0x1e0] sm:$0xff] %vm670, %v7522
    %7588 = vst.msk [vmem:[%s7526 + $0x1e8] sm:$0xff] %vm670, %v7523
    %7589 = vst.msk [vmem:[%s7526 + $0x1f0] sm:$0xff] %vm670, %v7524
    %7590 = vst.msk [vmem:[%s7526 + $0x1f8] sm:$0xff] %vm670, %v7525
    %vm7591 = vcmask 1040384
    %v7592 = vsel %vm7591, %v6212, %v6213
    %vm7593 = vcmask 1041408
    %v7594 = vsel %vm7593, %v7592, %v6214
    %vm7595 = vcmask 1042432
    %v7596 = vsel %vm7595, %v7594, %v6228
    %vm7597 = vcmask 1043456
    %v7598 = vsel %vm7597, %v7596, %v6215
    %vm7599 = vcmask 1044480
    %v7600 = vsel %vm7599, %v7598, %v6216
    %vm7601 = vcmask 1045504
    %v7602 = vsel %vm7601, %v7600, %v6217
    %vm7603 = vcmask 1046528
    %v7604 = vsel %vm7603, %v7602, %v6236
    %v7605 = vsel %vm7591, %v6218, %v6219
    %v7606 = vsel %vm7593, %v7605, %v6220
    %v7607 = vsel %vm7595, %v7606, %v6244
    %v7608 = vsel %vm7597, %v7607, 0.0
    %v7609 = vsel %vm7599, %v7608, 0.0
    %v7610 = vsel %vm7601, %v7609, 0.0
    %v7611 = vsel %vm7603, %v7610, 1.0
    %7612 = vst.msk [vmem:[%s4] sm:$0xff] %vm670, %v7604
    %7613 = vst.msk [vmem:[%s4 + $0x8] sm:$0xff] %vm670, %v7611
    // Predicated region
    $region18: #{tpu_custom_call.1} parent=1 // pred_check
      _
    $region19: #{tpu_custom_call.1} parent=1 // pred_check_branch
      %7615 = sbr.rel (0) target = $region21
    $region20: #{tpu_custom_call.1} parent=1 // pred_region
      _
    $region21: #{tpu_custom_call.1} parent=1 // pred_fallthru
      _
    // Predicated region
    $region22: #{tpu_custom_call.1} parent=1 // pred_check
      _
    $region23: #{tpu_custom_call.1} parent=1 // pred_check_branch
      %7617 = sbr.rel (0) target = $region25
    $region24: #{tpu_custom_call.1} parent=1 // pred_region
      _
    $region25: #{tpu_custom_call.1} parent=1 // pred_fallthru
      _
    // Predicated region
    $region26: #{tpu_custom_call.1} parent=1 // pred_check
      _
    $region27: #{tpu_custom_call.1} parent=1 // pred_check_branch
      %7619 = sbr.rel (0) target = $region29
    $region28: #{tpu_custom_call.1} parent=1 // pred_region
      _
    $region29: #{tpu_custom_call.1} parent=1 // pred_fallthru
      _
    // Predicated region
    $region30: #{tpu_custom_call.1} parent=1 // pred_check
      _
    $region31: #{tpu_custom_call.1} parent=1 // pred_check_branch
      %7621 = sbr.rel (0) target = $region33
    $region32: #{tpu_custom_call.1} parent=1 // pred_region
      _
    $region33: #{tpu_custom_call.1} parent=1 // pred_fallthru
      _
    %7622 = vsyncpa [#allocation3], 1

</llo_original>
